<compile_context>
chip_gen: v6e
topology: v6e:2x2x1
jax: 0.10.0
libtpu: 0.0.40
codegen_flags: <defaults>
</compile_context>

<pallas_src>
import jax
import jax.numpy as jnp
from jax import lax
from jax.experimental import pallas as pl
from jax.experimental.pallas import tpu as pltpu

BN_EPS = 1e-5
LANES = 128


# ---------------------------------------------------------------------------
# Parameter construction (BN folding, re-param of RepConvN) -- plain JAX.
# ---------------------------------------------------------------------------
def _round_up(v, m):
    return ((v + m - 1) // m) * m


def _bn_fold(w, gamma, beta, mean, var):
    scale = gamma / jnp.sqrt(var + BN_EPS)
    return w * scale[:, None, None, None], beta - mean * scale


def _init_conv(key, cout, cin_per_group, kh, kw):
    fan_in = cin_per_group * kh * kw
    std = (2.0 / fan_in) ** 0.5
    return std * jax.random.normal(key, (cout, cin_per_group, kh, kw),
                                   jnp.float32)


def _init_bn(c):
    return dict(gamma=jnp.ones((c,), jnp.float32),
                beta=jnp.zeros((c,), jnp.float32),
                mean=jnp.zeros((c,), jnp.float32),
                var=jnp.ones((c,), jnp.float32))


def make_repconv_params(key, cin, cout, groups=1):
    # RepConvN: BN(conv3x3) + BN(conv1x1), re-parameterized into one 3x3 conv.
    k3, k1 = jax.random.split(key)
    w3 = _init_conv(k3, cout, cin // groups, 3, 3)
    w1 = _init_conv(k1, cout, cin // groups, 1, 1)
    w3f, b3f = _bn_fold(w3, **_init_bn(cout))
    w1f, b1f = _bn_fold(w1, **_init_bn(cout))
    wf = w3f + jnp.pad(w1f, ((0, 0), (0, 0), (1, 1), (1, 1)))
    return wf, b3f + b1f                     # (cout, cin//groups, 3, 3), (cout,)


def make_cna_params(key, cin, cout):
    # ConvNormAct 1x1: conv + folded BN (ReLU applied in-kernel).
    w = _init_conv(key, cout, cin, 1, 1)
    return _bn_fold(w, **_init_bn(cout))


def _taps_dense(w, b, cin_p, cout_p):
    # (cout, cin, 3, 3) -> (9, cin_p, cout_p) per-tap matmul weights.
    cout, cin, kh, kw = w.shape
    wt = jnp.transpose(w, (2, 3, 1, 0)).reshape(kh * kw, cin, cout)
    wt = jnp.pad(wt, ((0, 0), (0, cin_p - cin), (0, cout_p - cout)))
    bt = jnp.pad(b, (0, cout_p - cout)).reshape(1, cout_p)
    return wt, bt


def _taps_depthwise(w, b, c_p):
    # (c, 1, 3, 3) -> (9, 1, c_p) per-tap per-channel scales (VPU path).
    c = w.shape[0]
    wt = jnp.transpose(w[:, 0], (1, 2, 0)).reshape(9, c)
    wt = jnp.pad(wt, ((0, 0), (0, c_p - c)))[:, None, :]
    bt = jnp.pad(b, (0, c_p - c)).reshape(1, c_p)
    return wt, bt


def _mat_1x1(w, b, cin_p, cout_p):
    # (cout, cin, 1, 1) -> (cin_p, cout_p).
    cout, cin = w.shape[0], w.shape[1]
    wm = jnp.pad(jnp.transpose(w[:, :, 0, 0]),
                 ((0, cin_p - cin), (0, cout_p - cout)))
    bm = jnp.pad(b, (0, cout_p - cout)).reshape(1, cout_p)
    return wm, bm


def edge_expansion_init(key, cin, cout, stride):
    cmid = cin * 6
    cp = _round_up(cin, LANES)
    cm_p = _round_up(cmid, LANES)
    co_p = _round_up(cout, LANES)
    keys = jax.random.split(key, 5)
    w3, b3 = make_repconv_params(keys[0], cin, cmid)
    wdw, bdw = make_repconv_params(keys[1], cmid, cmid)     # groups=1 per spec
    w1, b1 = make_cna_params(keys[2], cmid, cout)
    params = dict(
        stride=stride, cin=cin, cout=cout,
        cp=cp, cm_p=cm_p, co_p=co_p,
        identity_sc=(stride == 1 and cin == cout),
        w3=_taps_dense(w3, b3, cp, cm_p),
        wdw=_taps_dense(wdw, bdw, cm_p, cm_p),
        w1=_mat_1x1(w1, b1, cm_p, co_p),
    )
    if not params["identity_sc"]:
        wsd, bsd = make_repconv_params(keys[3], cin, cin, groups=cin)
        wsp, bsp = make_cna_params(keys[4], cin, cout)
        params["wsd"] = _taps_depthwise(wsd, bsd, cp)
        params["wsp"] = _mat_1x1(wsp, bsp, cp, co_p)
    return params


# ---------------------------------------------------------------------------
# Input layout prep: channel pad to 128 lanes, conv padding, space-to-depth
# (row/col parity split) for the stride, +1 over-pad on each spatial side so
# the in-kernel halo slicing never needs clamping.
# ---------------------------------------------------------------------------
def _prep_input(x_nhwc, c_pad, s):
    b, h, w, c = x_nhwc.shape
    x = jnp.pad(x_nhwc, ((0, 0), (1, 1), (1, 1), (0, c_pad - c)))
    hp, wp = h + 2, w + 2
    hq, wq = -(-hp // s), -(-wp // s)
    x = jnp.pad(x, ((0, 0), (0, hq * s - hp), (0, wq * s - wp), (0, 0)))
    x = x.reshape(b, hq, s, wq, s, c_pad)
    x = jnp.transpose(x, (0, 1, 2, 4, 3, 5))        # (b, hq, pr, pc, wq, c)
    x = jnp.pad(x, ((0, 0), (1, 1), (0, 0), (0, 0), (1, 1), (0, 0)))
    return x                                        # (b, hq+2, s, s, wq+2, c)


# ---------------------------------------------------------------------------
# The fused Pallas kernel.
# ---------------------------------------------------------------------------
def _make_edge_kernel(*, s, th, thq, w_out, h_out, cp, cm, co, has_sc):
    th_e = th + 2                 # extended rows (halo for the fused 3x3)
    w_e = w_out + 2               # extended cols
    m_e = th_e * w_e
    m = th * w_out

    def _silu(v):
        return v * pl.reciprocal(1.0 + jnp.exp(-v), approx=True)

    def kernel(*refs):
        if has_sc:
            (x_hbm, w3, b3, wdw, bdw, w1, b1, wsd, bsd, wsp, bsp,
             o_ref, xbuf, sem) = refs
        else:
            (x_hbm, w3, b3, wdw, bdw, w1, b1, o_ref, xbuf, sem) = refs

        n = pl.program_id(0)
        t = pl.program_id(1)
        r0 = t * th

        # Manual halo fetch of the space-to-depth input rows for this tile.
        # TODO(synk): double-buffer this DMA across grid steps to hide latency.
        cpy = pltpu.make_async_copy(x_hbm.at[n, pl.ds(r0, thq)], xbuf,
                                    sem.at[0])
        cpy.start()
        cpy.wait()

        # ---- RepConvN conv3: 3x3 stride-s conv (+folded BN) + SiLU.
        # Computed on (th+2, w_out+2) extended rows/cols so the next 3x3 conv
        # finds its zero-padding / halo in VMEM.  In-kernel im2col: 9 matmuls.
        acc3 = jnp.zeros((m_e, cm), jnp.float32)
        for di in range(3):
            for dj in range(3):
                a = xbuf[di // s:di // s + th_e, di % s, dj % s,
                         dj // s:dj // s + w_e, :]
                acc3 = acc3 + jnp.dot(a.reshape(m_e, cp), w3[di * 3 + dj],
                                      preferred_element_type=jnp.float32)
        a1 = _silu(acc3 + b3[...]).reshape(th_e, w_e, cm)
        rows = lax.broadcasted_iota(jnp.int32, (th_e, 1, 1), 0) + (r0 - 1)
        cols = lax.broadcasted_iota(jnp.int32, (1, w_e, 1), 1) - 1
        valid = ((rows >= 0) & (rows < h_out) & (cols >= 0) & (cols < w_out))
        a1 = jnp.where(valid, a1, 0.0)       # zero ring = conv3dw's padding

        # ---- RepConvN conv3dw: dense 3x3 stride-1 conv (+folded BN), no act.
        accd = jnp.zeros((m, cm), jnp.float32)
        for di in range(3):
            for dj in range(3):
                a = a1[di:di + th, dj:dj + w_out, :]
                accd = accd + jnp.dot(a.reshape(m, cm), wdw[di * 3 + dj],
                                      preferred_element_type=jnp.float32)
        a2 = accd + bdw[...]

        # ---- ConvNormAct conv1: 1x1 conv (+folded BN) + ReLU.
        main = jnp.maximum(
            jnp.dot(a2, w1[...], preferred_element_type=jnp.float32) + b1[...],
            0.0)

        # ---- Shortcut branch.
        if has_sc:
            # Depthwise 3x3 stride-s RepConvN on the VPU (channels in lanes).
            accs = jnp.zeros((th, w_out, cp), jnp.float32)
            for di in range(3):
                for dj in range(3):
                    xs = xbuf[1 + di // s:1 + di // s + th, di % s, dj % s,
                              1 + dj // s:1 + dj // s + w_out, :]
                    accs = accs + xs * wsd[di * 3 + dj]
            s1 = _silu(accs + bsd[...])                         # SiLU (act=True)
            resid = jnp.maximum(
                jnp.dot(s1.reshape(m, cp), wsp[...],
                        preferred_element_type=jnp.float32) + bsp[...],
                0.0)                                            # 1x1 + BN + ReLU
        else:
            resid = xbuf[2:2 + th, 0, 0, 2:2 + w_out, :].reshape(m, co)

        # TODO(synk): StochasticDepth(p=0.1, mode='row') is identity in eval
        # mode; training-mode row dropping is not implemented.
        o_ref[...] = jnp.maximum(main + resid, 0.0).reshape(1, th, w_out, co)

    return kernel


# ---------------------------------------------------------------------------
# Forward pass.
# ---------------------------------------------------------------------------
def edge_expansion_forward(params, x_nchw):
    s = params["stride"]
    b, _, h, w = x_nchw.shape
    cp, cm, co = params["cp"], params["cm_p"], params["co_p"]
    cout = params["cout"]
    h_out = (h - 1) // s + 1
    w_out = (w - 1) // s + 1

    x_prep = _prep_input(jnp.transpose(x_nchw, (0, 2, 3, 1)), cp, s)
    wq_x = x_prep.shape[4]

    # Output-row tile: largest divisor of h_out keeping the matmul M-dim
    # (rows per step) at <= ~512, so per-step VMEM stays bounded.
    th = 1
    for d in range(1, h_out + 1):
        if h_out % d == 0 and d * w_out <= max(512, w_out):
            th = d
    t_tiles = h_out // th
    thq = th + (2 // s) + 2

    has_sc = not params["identity_sc"]
    weight_args = [params["w3"][0], params["w3"][1],
                   params["wdw"][0], params["wdw"][1],
                   params["w1"][0], params["w1"][1]]
    if has_sc:
        weight_args += [params["wsd"][0], params["wsd"][1],
                        params["wsp"][0], params["wsp"][1]]

    kernel = _make_edge_kernel(s=s, th=th, thq=thq, w_out=w_out, h_out=h_out,
                               cp=cp, cm=cm, co=co, has_sc=has_sc)

    in_specs = [pl.BlockSpec(memory_space=pl.ANY)]       # raw HBM, manual DMA
    for a in weight_args:
        zeros = (0,) * a.ndim
        in_specs.append(pl.BlockSpec(a.shape, lambda n, t, z=zeros: z))

    out = pl.pallas_call(
        kernel,
        out_shape=jax.ShapeDtypeStruct((b, h_out, w_out, co), jnp.float32),
        grid_spec=pltpu.PrefetchScalarGridSpec(
            num_scalar_prefetch=0,
            grid=(b, t_tiles),
            in_specs=in_specs,
            out_specs=pl.BlockSpec((1, th, w_out, co),
                                   lambda n, t: (n, t, 0, 0)),
            scratch_shapes=[pltpu.VMEM((thq, s, s, wq_x, cp), jnp.float32),
                            pltpu.SemaphoreType.DMA((1,))]),
        compiler_params=pltpu.CompilerParams(
            dimension_semantics=("parallel", "parallel")),
    )(x_prep, *weight_args)

    out = out[..., :cout]                               # drop lane padding
    return jnp.transpose(out, (0, 3, 1, 2))             # NHWC -> NCHW


if __name__ == "__main__":
    key = jax.random.PRNGKey(0)
    k_x, k_p = jax.random.split(key)

    batch, in_channels, out_channels, spatial, stride = 2, 4, 8, 16, 2
    x_nchw = jax.random.normal(k_x, (batch, in_channels, spatial, spatial),
                               jnp.float32)

    params = edge_expansion_init(k_p, in_channels, out_channels, stride)
    out_nchw = edge_expansion_forward(params, x_nchw)
    jax.block_until_ready(out_nchw)

    assert out_nchw.shape == (batch, out_channels, spatial // stride,
                              spatial // stride)
    print("KERNEL_OK")
</pallas_src>

<mosaic_0001>
module attributes {stable_mosaic.version = 11 : i64} {
  func.func @kernel(%arg0: i32, %arg1: i32, %arg2: memref<2x11x2x2x11x128xf32, #tpu.memory_space<any>>, %arg3: memref<9x128x128xf32, #tpu.memory_space<vmem>>, %arg4: memref<1x128xf32, #tpu.memory_space<vmem>>, %arg5: memref<9x128x128xf32, #tpu.memory_space<vmem>>, %arg6: memref<1x128xf32, #tpu.memory_space<vmem>>, %arg7: memref<128x128xf32, #tpu.memory_space<vmem>>, %arg8: memref<1x128xf32, #tpu.memory_space<vmem>>, %arg9: memref<9x1x128xf32, #tpu.memory_space<vmem>>, %arg10: memref<1x128xf32, #tpu.memory_space<vmem>>, %arg11: memref<128x128xf32, #tpu.memory_space<vmem>>, %arg12: memref<1x128xf32, #tpu.memory_space<vmem>>, %arg13: memref<1x8x8x128xf32, #tpu.memory_space<vmem>>, %arg14: memref<11x2x2x11x128xf32, #tpu.memory_space<vmem>>, %arg15: memref<1x!tpu.dma_semaphore, #tpu.memory_space<semaphore_mem>>) attributes {dimension_semantics = [#tpu.dimension_semantics<parallel>, #tpu.dimension_semantics<parallel>], iteration_bounds = array<i64: 2, 1>, scalar_prefetch = 0 : i64, scratch_operands = 2 : i64, tpu.core_type = #tpu.core_type<tc>, window_params = [{}, {pipeline_mode = #tpu.pipeline_mode<synchronous>, transform_indices = @transform_1, window_bounds = array<i64: 9, 128, 128>}, {pipeline_mode = #tpu.pipeline_mode<synchronous>, transform_indices = @transform_2, window_bounds = array<i64: 1, 128>}, {pipeline_mode = #tpu.pipeline_mode<synchronous>, transform_indices = @transform_3, window_bounds = array<i64: 9, 128, 128>}, {pipeline_mode = #tpu.pipeline_mode<synchronous>, transform_indices = @transform_4, window_bounds = array<i64: 1, 128>}, {pipeline_mode = #tpu.pipeline_mode<synchronous>, transform_indices = @transform_5, window_bounds = array<i64: 128, 128>}, {pipeline_mode = #tpu.pipeline_mode<synchronous>, transform_indices = @transform_6, window_bounds = array<i64: 1, 128>}, {pipeline_mode = #tpu.pipeline_mode<synchronous>, transform_indices = @transform_7, window_bounds = array<i64: 9, 1, 128>}, {pipeline_mode = #tpu.pipeline_mode<synchronous>, transform_indices = @transform_8, window_bounds = array<i64: 1, 128>}, {pipeline_mode = #tpu.pipeline_mode<synchronous>, transform_indices = @transform_9, window_bounds = array<i64: 128, 128>}, {pipeline_mode = #tpu.pipeline_mode<synchronous>, transform_indices = @transform_10, window_bounds = array<i64: 1, 128>}, {transform_indices = @transform_11, window_bounds = array<i64: 1, 8, 8, 128>}]} {
    %c8_i32 = arith.constant 8 : i32
    %0 = arith.muli %arg1, %c8_i32 : i32
    %c0_i32 = arith.constant 0 : i32
    %c0_i32_0 = arith.constant 0 : i32
    %c0_i32_1 = arith.constant 0 : i32
    %c0_i32_2 = arith.constant 0 : i32
    %c0_i32_3 = arith.constant 0 : i32
    %1 = tpu.memref_slice %arg2[%arg0, %0, %c0_i32_0, %c0_i32_1, %c0_i32_2, %c0_i32_3] : memref<2x11x2x2x11x128xf32, #tpu.memory_space<any>> -> memref<1x11x2x2x11x128xf32, #tpu.memory_space<any>>
    %2 = tpu.memref_squeeze %1 : memref<1x11x2x2x11x128xf32, #tpu.memory_space<any>> -> memref<11x2x2x11x128xf32, #tpu.memory_space<any>>
    %3 = tpu.memref_slice %arg15[%c0_i32] : memref<1x!tpu.dma_semaphore, #tpu.memory_space<semaphore_mem>> -> memref<1x!tpu.dma_semaphore, #tpu.memory_space<semaphore_mem>>
    %4 = tpu.memref_squeeze %3 : memref<1x!tpu.dma_semaphore, #tpu.memory_space<semaphore_mem>> -> memref<!tpu.dma_semaphore, #tpu.memory_space<semaphore_mem>>
    tpu.enqueue_dma source(%2 : memref<11x2x2x11x128xf32, #tpu.memory_space<any>>) target(%arg14 : memref<11x2x2x11x128xf32, #tpu.memory_space<vmem>>) target_semaphore(%4 : memref<!tpu.dma_semaphore, #tpu.memory_space<semaphore_mem>>)
    %c0_i32_4 = arith.constant 0 : i32
    %c0_i32_5 = arith.constant 0 : i32
    %c0_i32_6 = arith.constant 0 : i32
    %c0_i32_7 = arith.constant 0 : i32
    %c0_i32_8 = arith.constant 0 : i32
    %5 = tpu.memref_slice %arg2[%arg0, %0, %c0_i32_5, %c0_i32_6, %c0_i32_7, %c0_i32_8] : memref<2x11x2x2x11x128xf32, #tpu.memory_space<any>> -> memref<1x11x2x2x11x128xf32, #tpu.memory_space<any>>
    %6 = tpu.memref_squeeze %5 : memref<1x11x2x2x11x128xf32, #tpu.memory_space<any>> -> memref<11x2x2x11x128xf32, #tpu.memory_space<any>>
    %7 = tpu.memref_slice %arg15[%c0_i32_4] : memref<1x!tpu.dma_semaphore, #tpu.memory_space<semaphore_mem>> -> memref<1x!tpu.dma_semaphore, #tpu.memory_space<semaphore_mem>>
    %8 = tpu.memref_squeeze %7 : memref<1x!tpu.dma_semaphore, #tpu.memory_space<semaphore_mem>> -> memref<!tpu.dma_semaphore, #tpu.memory_space<semaphore_mem>>
    tpu.wait_dma2 semaphore(%8 : memref<!tpu.dma_semaphore, #tpu.memory_space<semaphore_mem>>) src(%6 : memref<11x2x2x11x128xf32, #tpu.memory_space<any>>) dst(%arg14 : memref<11x2x2x11x128xf32, #tpu.memory_space<vmem>>)
    %cst = arith.constant 0.000000e+00 : f32
    %9 = vector.broadcast %cst : f32 to vector<100x128xf32>
    %c0 = arith.constant 0 : index
    %c0_9 = arith.constant 0 : index
    %c0_10 = arith.constant 0 : index
    %c0_11 = arith.constant 0 : index
    %c0_12 = arith.constant 0 : index
    %10 = vector.load %arg14[%c0, %c0_9, %c0_10, %c0_11, %c0_12] : memref<11x2x2x11x128xf32, #tpu.memory_space<vmem>>, vector<10x1x1x10x128xf32>
    %11 = vector.shape_cast %10 : vector<10x1x1x10x128xf32> to vector<10x10x128xf32>
    %12 = vector.shape_cast %11 : vector<10x10x128xf32> to vector<100x128xf32>
    %c0_13 = arith.constant 0 : index
    %c0_14 = arith.constant 0 : index
    %c0_15 = arith.constant 0 : index
    %13 = vector.load %arg3[%c0_13, %c0_14, %c0_15] : memref<9x128x128xf32, #tpu.memory_space<vmem>>, vector<1x128x128xf32>
    %14 = vector.shape_cast %13 : vector<1x128x128xf32> to vector<128x128xf32>
    %cst_16 = arith.constant dense<0.000000e+00> : vector<100x128xf32>
    %15 = tpu.matmul %12, %14, %cst_16 {dimension_numbers = #tpu.dot_dimension_numbers<[1], [0], [0], [1], [0, 0, 1, 1], [], []>} : vector<100x128xf32>, vector<128x128xf32>, vector<100x128xf32> -> vector<100x128xf32>
    %16 = arith.addf %9, %15 : vector<100x128xf32>
    %c0_17 = arith.constant 0 : index
    %c0_18 = arith.constant 0 : index
    %c1 = arith.constant 1 : index
    %c0_19 = arith.constant 0 : index
    %c0_20 = arith.constant 0 : index
    %17 = vector.load %arg14[%c0_17, %c0_18, %c1, %c0_19, %c0_20] : memref<11x2x2x11x128xf32, #tpu.memory_space<vmem>>, vector<10x1x1x10x128xf32>
    %18 = vector.shape_cast %17 : vector<10x1x1x10x128xf32> to vector<10x10x128xf32>
    %19 = vector.shape_cast %18 : vector<10x10x128xf32> to vector<100x128xf32>
    %c1_21 = arith.constant 1 : index
    %c0_22 = arith.constant 0 : index
    %c0_23 = arith.constant 0 : index
    %20 = vector.load %arg3[%c1_21, %c0_22, %c0_23] : memref<9x128x128xf32, #tpu.memory_space<vmem>>, vector<1x128x128xf32>
    %21 = vector.shape_cast %20 : vector<1x128x128xf32> to vector<128x128xf32>
    %cst_24 = arith.constant dense<0.000000e+00> : vector<100x128xf32>
    %22 = tpu.matmul %19, %21, %cst_24 {dimension_numbers = #tpu.dot_dimension_numbers<[1], [0], [0], [1], [0, 0, 1, 1], [], []>} : vector<100x128xf32>, vector<128x128xf32>, vector<100x128xf32> -> vector<100x128xf32>
    %23 = arith.addf %16, %22 : vector<100x128xf32>
    %c0_25 = arith.constant 0 : index
    %c0_26 = arith.constant 0 : index
    %c0_27 = arith.constant 0 : index
    %c1_28 = arith.constant 1 : index
    %c0_29 = arith.constant 0 : index
    %24 = vector.load %arg14[%c0_25, %c0_26, %c0_27, %c1_28, %c0_29] : memref<11x2x2x11x128xf32, #tpu.memory_space<vmem>>, vector<10x1x1x10x128xf32>
    %25 = vector.shape_cast %24 : vector<10x1x1x10x128xf32> to vector<10x10x128xf32>
    %26 = vector.shape_cast %25 : vector<10x10x128xf32> to vector<100x128xf32>
    %c2 = arith.constant 2 : index
    %c0_30 = arith.constant 0 : index
    %c0_31 = arith.constant 0 : index
    %27 = vector.load %arg3[%c2, %c0_30, %c0_31] : memref<9x128x128xf32, #tpu.memory_space<vmem>>, vector<1x128x128xf32>
    %28 = vector.shape_cast %27 : vector<1x128x128xf32> to vector<128x128xf32>
    %cst_32 = arith.constant dense<0.000000e+00> : vector<100x128xf32>
    %29 = tpu.matmul %26, %28, %cst_32 {dimension_numbers = #tpu.dot_dimension_numbers<[1], [0], [0], [1], [0, 0, 1, 1], [], []>} : vector<100x128xf32>, vector<128x128xf32>, vector<100x128xf32> -> vector<100x128xf32>
    %30 = arith.addf %23, %29 : vector<100x128xf32>
    %c0_33 = arith.constant 0 : index
    %c1_34 = arith.constant 1 : index
    %c0_35 = arith.constant 0 : index
    %c0_36 = arith.constant 0 : index
    %c0_37 = arith.constant 0 : index
    %31 = vector.load %arg14[%c0_33, %c1_34, %c0_35, %c0_36, %c0_37] : memref<11x2x2x11x128xf32, #tpu.memory_space<vmem>>, vector<10x1x1x10x128xf32>
    %32 = vector.shape_cast %31 : vector<10x1x1x10x128xf32> to vector<10x10x128xf32>
    %33 = vector.shape_cast %32 : vector<10x10x128xf32> to vector<100x128xf32>
    %c3 = arith.constant 3 : index
    %c0_38 = arith.constant 0 : index
    %c0_39 = arith.constant 0 : index
    %34 = vector.load %arg3[%c3, %c0_38, %c0_39] : memref<9x128x128xf32, #tpu.memory_space<vmem>>, vector<1x128x128xf32>
    %35 = vector.shape_cast %34 : vector<1x128x128xf32> to vector<128x128xf32>
    %cst_40 = arith.constant dense<0.000000e+00> : vector<100x128xf32>
    %36 = tpu.matmul %33, %35, %cst_40 {dimension_numbers = #tpu.dot_dimension_numbers<[1], [0], [0], [1], [0, 0, 1, 1], [], []>} : vector<100x128xf32>, vector<128x128xf32>, vector<100x128xf32> -> vector<100x128xf32>
    %37 = arith.addf %30, %36 : vector<100x128xf32>
    %c0_41 = arith.constant 0 : index
    %c1_42 = arith.constant 1 : index
    %c1_43 = arith.constant 1 : index
    %c0_44 = arith.constant 0 : index
    %c0_45 = arith.constant 0 : index
    %38 = vector.load %arg14[%c0_41, %c1_42, %c1_43, %c0_44, %c0_45] : memref<11x2x2x11x128xf32, #tpu.memory_space<vmem>>, vector<10x1x1x10x128xf32>
    %39 = vector.shape_cast %38 : vector<10x1x1x10x128xf32> to vector<10x10x128xf32>
    %40 = vector.shape_cast %39 : vector<10x10x128xf32> to vector<100x128xf32>
    %c4 = arith.constant 4 : index
    %c0_46 = arith.constant 0 : index
    %c0_47 = arith.constant 0 : index
    %41 = vector.load %arg3[%c4, %c0_46, %c0_47] : memref<9x128x128xf32, #tpu.memory_space<vmem>>, vector<1x128x128xf32>
    %42 = vector.shape_cast %41 : vector<1x128x128xf32> to vector<128x128xf32>
    %cst_48 = arith.constant dense<0.000000e+00> : vector<100x128xf32>
    %43 = tpu.matmul %40, %42, %cst_48 {dimension_numbers = #tpu.dot_dimension_numbers<[1], [0], [0], [1], [0, 0, 1, 1], [], []>} : vector<100x128xf32>, vector<128x128xf32>, vector<100x128xf32> -> vector<100x128xf32>
    %44 = arith.addf %37, %43 : vector<100x128xf32>
    %c0_49 = arith.constant 0 : index
    %c1_50 = arith.constant 1 : index
    %c0_51 = arith.constant 0 : index
    %c1_52 = arith.constant 1 : index
    %c0_53 = arith.constant 0 : index
    %45 = vector.load %arg14[%c0_49, %c1_50, %c0_51, %c1_52, %c0_53] : memref<11x2x2x11x128xf32, #tpu.memory_space<vmem>>, vector<10x1x1x10x128xf32>
    %46 = vector.shape_cast %45 : vector<10x1x1x10x128xf32> to vector<10x10x128xf32>
    %47 = vector.shape_cast %46 : vector<10x10x128xf32> to vector<100x128xf32>
    %c5 = arith.constant 5 : index
    %c0_54 = arith.constant 0 : index
    %c0_55 = arith.constant 0 : index
    %48 = vector.load %arg3[%c5, %c0_54, %c0_55] : memref<9x128x128xf32, #tpu.memory_space<vmem>>, vector<1x128x128xf32>
    %49 = vector.shape_cast %48 : vector<1x128x128xf32> to vector<128x128xf32>
    %cst_56 = arith.constant dense<0.000000e+00> : vector<100x128xf32>
    %50 = tpu.matmul %47, %49, %cst_56 {dimension_numbers = #tpu.dot_dimension_numbers<[1], [0], [0], [1], [0, 0, 1, 1], [], []>} : vector<100x128xf32>, vector<128x128xf32>, vector<100x128xf32> -> vector<100x128xf32>
    %51 = arith.addf %44, %50 : vector<100x128xf32>
    %c1_57 = arith.constant 1 : index
    %c0_58 = arith.constant 0 : index
    %c0_59 = arith.constant 0 : index
    %c0_60 = arith.constant 0 : index
    %c0_61 = arith.constant 0 : index
    %52 = vector.load %arg14[%c1_57, %c0_58, %c0_59, %c0_60, %c0_61] : memref<11x2x2x11x128xf32, #tpu.memory_space<vmem>>, vector<10x1x1x10x128xf32>
    %53 = vector.shape_cast %52 : vector<10x1x1x10x128xf32> to vector<10x10x128xf32>
    %54 = vector.shape_cast %53 : vector<10x10x128xf32> to vector<100x128xf32>
    %c6 = arith.constant 6 : index
    %c0_62 = arith.constant 0 : index
    %c0_63 = arith.constant 0 : index
    %55 = vector.load %arg3[%c6, %c0_62, %c0_63] : memref<9x128x128xf32, #tpu.memory_space<vmem>>, vector<1x128x128xf32>
    %56 = vector.shape_cast %55 : vector<1x128x128xf32> to vector<128x128xf32>
    %cst_64 = arith.constant dense<0.000000e+00> : vector<100x128xf32>
    %57 = tpu.matmul %54, %56, %cst_64 {dimension_numbers = #tpu.dot_dimension_numbers<[1], [0], [0], [1], [0, 0, 1, 1], [], []>} : vector<100x128xf32>, vector<128x128xf32>, vector<100x128xf32> -> vector<100x128xf32>
    %58 = arith.addf %51, %57 : vector<100x128xf32>
    %c1_65 = arith.constant 1 : index
    %c0_66 = arith.constant 0 : index
    %c1_67 = arith.constant 1 : index
    %c0_68 = arith.constant 0 : index
    %c0_69 = arith.constant 0 : index
    %59 = vector.load %arg14[%c1_65, %c0_66, %c1_67, %c0_68, %c0_69] : memref<11x2x2x11x128xf32, #tpu.memory_space<vmem>>, vector<10x1x1x10x128xf32>
    %60 = vector.shape_cast %59 : vector<10x1x1x10x128xf32> to vector<10x10x128xf32>
    %61 = vector.shape_cast %60 : vector<10x10x128xf32> to vector<100x128xf32>
    %c7 = arith.constant 7 : index
    %c0_70 = arith.constant 0 : index
    %c0_71 = arith.constant 0 : index
    %62 = vector.load %arg3[%c7, %c0_70, %c0_71] : memref<9x128x128xf32, #tpu.memory_space<vmem>>, vector<1x128x128xf32>
    %63 = vector.shape_cast %62 : vector<1x128x128xf32> to vector<128x128xf32>
    %cst_72 = arith.constant dense<0.000000e+00> : vector<100x128xf32>
    %64 = tpu.matmul %61, %63, %cst_72 {dimension_numbers = #tpu.dot_dimension_numbers<[1], [0], [0], [1], [0, 0, 1, 1], [], []>} : vector<100x128xf32>, vector<128x128xf32>, vector<100x128xf32> -> vector<100x128xf32>
    %65 = arith.addf %58, %64 : vector<100x128xf32>
    %c1_73 = arith.constant 1 : index
    %c0_74 = arith.constant 0 : index
    %c0_75 = arith.constant 0 : index
    %c1_76 = arith.constant 1 : index
    %c0_77 = arith.constant 0 : index
    %66 = vector.load %arg14[%c1_73, %c0_74, %c0_75, %c1_76, %c0_77] : memref<11x2x2x11x128xf32, #tpu.memory_space<vmem>>, vector<10x1x1x10x128xf32>
    %67 = vector.shape_cast %66 : vector<10x1x1x10x128xf32> to vector<10x10x128xf32>
    %68 = vector.shape_cast %67 : vector<10x10x128xf32> to vector<100x128xf32>
    %c8 = arith.constant 8 : index
    %c0_78 = arith.constant 0 : index
    %c0_79 = arith.constant 0 : index
    %69 = vector.load %arg3[%c8, %c0_78, %c0_79] : memref<9x128x128xf32, #tpu.memory_space<vmem>>, vector<1x128x128xf32>
    %70 = vector.shape_cast %69 : vector<1x128x128xf32> to vector<128x128xf32>
    %cst_80 = arith.constant dense<0.000000e+00> : vector<100x128xf32>
    %71 = tpu.matmul %68, %70, %cst_80 {dimension_numbers = #tpu.dot_dimension_numbers<[1], [0], [0], [1], [0, 0, 1, 1], [], []>} : vector<100x128xf32>, vector<128x128xf32>, vector<100x128xf32> -> vector<100x128xf32>
    %72 = arith.addf %65, %71 : vector<100x128xf32>
    %c0_81 = arith.constant 0 : index
    %c0_82 = arith.constant 0 : index
    %73 = vector.load %arg4[%c0_81, %c0_82] : memref<1x128xf32, #tpu.memory_space<vmem>>, vector<1x128xf32>
    %74 = vector.broadcast %73 : vector<1x128xf32> to vector<100x128xf32>
    %75 = arith.addf %72, %74 : vector<100x128xf32>
    %cst_83 = arith.constant 0.000000e+00 : f32
    %76 = vector.broadcast %cst_83 : f32 to vector<100x128xf32>
    %77 = arith.subf %76, %75 : vector<100x128xf32>
    %78 = math.exp %77 : vector<100x128xf32>
    %cst_84 = arith.constant 1.000000e+00 : f32
    %79 = vector.broadcast %cst_84 : f32 to vector<100x128xf32>
    %80 = arith.addf %79, %78 : vector<100x128xf32>
    %81 = tpu.reciprocal %80 {approx = true} : vector<100x128xf32> -> vector<100x128xf32>
    %82 = arith.mulf %75, %81 : vector<100x128xf32>
    %83 = vector.shape_cast %82 : vector<100x128xf32> to vector<10x10x128xf32>
    %84 = tpu.iota {dimensions = array<i32: 0>} : vector<10x1x1xi32>
    %c1_i32 = arith.constant 1 : i32
    %85 = arith.subi %0, %c1_i32 : i32
    %86 = vector.broadcast %85 : i32 to vector<10x1x1xi32>
    %87 = arith.addi %84, %86 : vector<10x1x1xi32>
    %88 = tpu.iota {dimensions = array<i32: 1>} : vector<1x10x1xi32>
    %c1_i32_85 = arith.constant 1 : i32
    %89 = vector.broadcast %c1_i32_85 : i32 to vector<1x10x1xi32>
    %90 = arith.subi %88, %89 : vector<1x10x1xi32>
    %c0_i32_86 = arith.constant 0 : i32
    %91 = vector.broadcast %c0_i32_86 : i32 to vector<10x1x1xi32>
    %92 = arith.cmpi sge, %87, %91 : vector<10x1x1xi32>
    %c8_i32_87 = arith.constant 8 : i32
    %93 = vector.broadcast %c8_i32_87 : i32 to vector<10x1x1xi32>
    %94 = arith.cmpi slt, %87, %93 : vector<10x1x1xi32>
    %95 = arith.andi %92, %94 : vector<10x1x1xi1>
    %c0_i32_88 = arith.constant 0 : i32
    %96 = vector.broadcast %c0_i32_88 : i32 to vector<1x10x1xi32>
    %97 = arith.cmpi sge, %90, %96 : vector<1x10x1xi32>
    %98 = vector.broadcast %95 : vector<10x1x1xi1> to vector<10x10x1xi1>
    %99 = vector.broadcast %97 : vector<1x10x1xi1> to vector<10x10x1xi1>
    %100 = arith.andi %98, %99 : vector<10x10x1xi1>
    %c8_i32_89 = arith.constant 8 : i32
    %101 = vector.broadcast %c8_i32_89 : i32 to vector<1x10x1xi32>
    %102 = arith.cmpi slt, %90, %101 : vector<1x10x1xi32>
    %103 = vector.broadcast %102 : vector<1x10x1xi1> to vector<10x10x1xi1>
    %104 = arith.andi %100, %103 : vector<10x10x1xi1>
    %cst_90 = arith.constant 0.000000e+00 : f32
    %105 = vector.shape_cast %104 : vector<10x10x1xi1> to vector<10x10x1xi1>
    %106 = vector.broadcast %105 : vector<10x10x1xi1> to vector<10x10x128xi1>
    %107 = vector.broadcast %cst_90 : f32 to vector<10x10x128xf32>
    %108 = arith.select %106, %83, %107 : vector<10x10x128xi1>, vector<10x10x128xf32>
    %cst_91 = arith.constant 0.000000e+00 : f32
    %109 = vector.broadcast %cst_91 : f32 to vector<64x128xf32>
    %110 = vector.extract_strided_slice %108 {offsets = [0, 0, 0], sizes = [8, 8, 128], strides = [1, 1, 1]} : vector<10x10x128xf32> to vector<8x8x128xf32>
    %111 = vector.shape_cast %110 : vector<8x8x128xf32> to vector<64x128xf32>
    %c0_92 = arith.constant 0 : index
    %c0_93 = arith.constant 0 : index
    %c0_94 = arith.constant 0 : index
    %112 = vector.load %arg5[%c0_92, %c0_93, %c0_94] : memref<9x128x128xf32, #tpu.memory_space<vmem>>, vector<1x128x128xf32>
    %113 = vector.shape_cast %112 : vector<1x128x128xf32> to vector<128x128xf32>
    %cst_95 = arith.constant dense<0.000000e+00> : vector<64x128xf32>
    %114 = tpu.matmul %111, %113, %cst_95 {dimension_numbers = #tpu.dot_dimension_numbers<[1], [0], [0], [1], [0, 0, 1, 1], [], []>} : vector<64x128xf32>, vector<128x128xf32>, vector<64x128xf32> -> vector<64x128xf32>
    %115 = arith.addf %109, %114 : vector<64x128xf32>
    %116 = vector.extract_strided_slice %108 {offsets = [0, 1, 0], sizes = [8, 8, 128], strides = [1, 1, 1]} : vector<10x10x128xf32> to vector<8x8x128xf32>
    %117 = vector.shape_cast %116 : vector<8x8x128xf32> to vector<64x128xf32>
    %c1_96 = arith.constant 1 : index
    %c0_97 = arith.constant 0 : index
    %c0_98 = arith.constant 0 : index
    %118 = vector.load %arg5[%c1_96, %c0_97, %c0_98] : memref<9x128x128xf32, #tpu.memory_space<vmem>>, vector<1x128x128xf32>
    %119 = vector.shape_cast %118 : vector<1x128x128xf32> to vector<128x128xf32>
    %cst_99 = arith.constant dense<0.000000e+00> : vector<64x128xf32>
    %120 = tpu.matmul %117, %119, %cst_99 {dimension_numbers = #tpu.dot_dimension_numbers<[1], [0], [0], [1], [0, 0, 1, 1], [], []>} : vector<64x128xf32>, vector<128x128xf32>, vector<64x128xf32> -> vector<64x128xf32>
    %121 = arith.addf %115, %120 : vector<64x128xf32>
    %122 = vector.extract_strided_slice %108 {offsets = [0, 2, 0], sizes = [8, 8, 128], strides = [1, 1, 1]} : vector<10x10x128xf32> to vector<8x8x128xf32>
    %123 = vector.shape_cast %122 : vector<8x8x128xf32> to vector<64x128xf32>
    %c2_100 = arith.constant 2 : index
    %c0_101 = arith.constant 0 : index
    %c0_102 = arith.constant 0 : index
    %124 = vector.load %arg5[%c2_100, %c0_101, %c0_102] : memref<9x128x128xf32, #tpu.memory_space<vmem>>, vector<1x128x128xf32>
    %125 = vector.shape_cast %124 : vector<1x128x128xf32> to vector<128x128xf32>
    %cst_103 = arith.constant dense<0.000000e+00> : vector<64x128xf32>
    %126 = tpu.matmul %123, %125, %cst_103 {dimension_numbers = #tpu.dot_dimension_numbers<[1], [0], [0], [1], [0, 0, 1, 1], [], []>} : vector<64x128xf32>, vector<128x128xf32>, vector<64x128xf32> -> vector<64x128xf32>
    %127 = arith.addf %121, %126 : vector<64x128xf32>
    %128 = vector.extract_strided_slice %108 {offsets = [1, 0, 0], sizes = [8, 8, 128], strides = [1, 1, 1]} : vector<10x10x128xf32> to vector<8x8x128xf32>
    %129 = vector.shape_cast %128 : vector<8x8x128xf32> to vector<64x128xf32>
    %c3_104 = arith.constant 3 : index
    %c0_105 = arith.constant 0 : index
    %c0_106 = arith.constant 0 : index
    %130 = vector.load %arg5[%c3_104, %c0_105, %c0_106] : memref<9x128x128xf32, #tpu.memory_space<vmem>>, vector<1x128x128xf32>
    %131 = vector.shape_cast %130 : vector<1x128x128xf32> to vector<128x128xf32>
    %cst_107 = arith.constant dense<0.000000e+00> : vector<64x128xf32>
    %132 = tpu.matmul %129, %131, %cst_107 {dimension_numbers = #tpu.dot_dimension_numbers<[1], [0], [0], [1], [0, 0, 1, 1], [], []>} : vector<64x128xf32>, vector<128x128xf32>, vector<64x128xf32> -> vector<64x128xf32>
    %133 = arith.addf %127, %132 : vector<64x128xf32>
    %134 = vector.extract_strided_slice %108 {offsets = [1, 1, 0], sizes = [8, 8, 128], strides = [1, 1, 1]} : vector<10x10x128xf32> to vector<8x8x128xf32>
    %135 = vector.shape_cast %134 : vector<8x8x128xf32> to vector<64x128xf32>
    %c4_108 = arith.constant 4 : index
    %c0_109 = arith.constant 0 : index
    %c0_110 = arith.constant 0 : index
    %136 = vector.load %arg5[%c4_108, %c0_109, %c0_110] : memref<9x128x128xf32, #tpu.memory_space<vmem>>, vector<1x128x128xf32>
    %137 = vector.shape_cast %136 : vector<1x128x128xf32> to vector<128x128xf32>
    %cst_111 = arith.constant dense<0.000000e+00> : vector<64x128xf32>
    %138 = tpu.matmul %135, %137, %cst_111 {dimension_numbers = #tpu.dot_dimension_numbers<[1], [0], [0], [1], [0, 0, 1, 1], [], []>} : vector<64x128xf32>, vector<128x128xf32>, vector<64x128xf32> -> vector<64x128xf32>
    %139 = arith.addf %133, %138 : vector<64x128xf32>
    %140 = vector.extract_strided_slice %108 {offsets = [1, 2, 0], sizes = [8, 8, 128], strides = [1, 1, 1]} : vector<10x10x128xf32> to vector<8x8x128xf32>
    %141 = vector.shape_cast %140 : vector<8x8x128xf32> to vector<64x128xf32>
    %c5_112 = arith.constant 5 : index
    %c0_113 = arith.constant 0 : index
    %c0_114 = arith.constant 0 : index
    %142 = vector.load %arg5[%c5_112, %c0_113, %c0_114] : memref<9x128x128xf32, #tpu.memory_space<vmem>>, vector<1x128x128xf32>
    %143 = vector.shape_cast %142 : vector<1x128x128xf32> to vector<128x128xf32>
    %cst_115 = arith.constant dense<0.000000e+00> : vector<64x128xf32>
    %144 = tpu.matmul %141, %143, %cst_115 {dimension_numbers = #tpu.dot_dimension_numbers<[1], [0], [0], [1], [0, 0, 1, 1], [], []>} : vector<64x128xf32>, vector<128x128xf32>, vector<64x128xf32> -> vector<64x128xf32>
    %145 = arith.addf %139, %144 : vector<64x128xf32>
    %146 = vector.extract_strided_slice %108 {offsets = [2, 0, 0], sizes = [8, 8, 128], strides = [1, 1, 1]} : vector<10x10x128xf32> to vector<8x8x128xf32>
    %147 = vector.shape_cast %146 : vector<8x8x128xf32> to vector<64x128xf32>
    %c6_116 = arith.constant 6 : index
    %c0_117 = arith.constant 0 : index
    %c0_118 = arith.constant 0 : index
    %148 = vector.load %arg5[%c6_116, %c0_117, %c0_118] : memref<9x128x128xf32, #tpu.memory_space<vmem>>, vector<1x128x128xf32>
    %149 = vector.shape_cast %148 : vector<1x128x128xf32> to vector<128x128xf32>
    %cst_119 = arith.constant dense<0.000000e+00> : vector<64x128xf32>
    %150 = tpu.matmul %147, %149, %cst_119 {dimension_numbers = #tpu.dot_dimension_numbers<[1], [0], [0], [1], [0, 0, 1, 1], [], []>} : vector<64x128xf32>, vector<128x128xf32>, vector<64x128xf32> -> vector<64x128xf32>
    %151 = arith.addf %145, %150 : vector<64x128xf32>
    %152 = vector.extract_strided_slice %108 {offsets = [2, 1, 0], sizes = [8, 8, 128], strides = [1, 1, 1]} : vector<10x10x128xf32> to vector<8x8x128xf32>
    %153 = vector.shape_cast %152 : vector<8x8x128xf32> to vector<64x128xf32>
    %c7_120 = arith.constant 7 : index
    %c0_121 = arith.constant 0 : index
    %c0_122 = arith.constant 0 : index
    %154 = vector.load %arg5[%c7_120, %c0_121, %c0_122] : memref<9x128x128xf32, #tpu.memory_space<vmem>>, vector<1x128x128xf32>
    %155 = vector.shape_cast %154 : vector<1x128x128xf32> to vector<128x128xf32>
    %cst_123 = arith.constant dense<0.000000e+00> : vector<64x128xf32>
    %156 = tpu.matmul %153, %155, %cst_123 {dimension_numbers = #tpu.dot_dimension_numbers<[1], [0], [0], [1], [0, 0, 1, 1], [], []>} : vector<64x128xf32>, vector<128x128xf32>, vector<64x128xf32> -> vector<64x128xf32>
    %157 = arith.addf %151, %156 : vector<64x128xf32>
    %158 = vector.extract_strided_slice %108 {offsets = [2, 2, 0], sizes = [8, 8, 128], strides = [1, 1, 1]} : vector<10x10x128xf32> to vector<8x8x128xf32>
    %159 = vector.shape_cast %158 : vector<8x8x128xf32> to vector<64x128xf32>
    %c8_124 = arith.constant 8 : index
    %c0_125 = arith.constant 0 : index
    %c0_126 = arith.constant 0 : index
    %160 = vector.load %arg5[%c8_124, %c0_125, %c0_126] : memref<9x128x128xf32, #tpu.memory_space<vmem>>, vector<1x128x128xf32>
    %161 = vector.shape_cast %160 : vector<1x128x128xf32> to vector<128x128xf32>
    %cst_127 = arith.constant dense<0.000000e+00> : vector<64x128xf32>
    %162 = tpu.matmul %159, %161, %cst_127 {dimension_numbers = #tpu.dot_dimension_numbers<[1], [0], [0], [1], [0, 0, 1, 1], [], []>} : vector<64x128xf32>, vector<128x128xf32>, vector<64x128xf32> -> vector<64x128xf32>
    %163 = arith.addf %157, %162 : vector<64x128xf32>
    %c0_128 = arith.constant 0 : index
    %c0_129 = arith.constant 0 : index
    %164 = vector.load %arg6[%c0_128, %c0_129] : memref<1x128xf32, #tpu.memory_space<vmem>>, vector<1x128xf32>
    %165 = vector.broadcast %164 : vector<1x128xf32> to vector<64x128xf32>
    %166 = arith.addf %163, %165 : vector<64x128xf32>
    %c0_130 = arith.constant 0 : index
    %c0_131 = arith.constant 0 : index
    %167 = vector.load %arg7[%c0_130, %c0_131] : memref<128x128xf32, #tpu.memory_space<vmem>>, vector<128x128xf32>
    %cst_132 = arith.constant dense<0.000000e+00> : vector<64x128xf32>
    %168 = tpu.matmul %166, %167, %cst_132 {dimension_numbers = #tpu.dot_dimension_numbers<[1], [0], [0], [1], [0, 0, 1, 1], [], []>} : vector<64x128xf32>, vector<128x128xf32>, vector<64x128xf32> -> vector<64x128xf32>
    %c0_133 = arith.constant 0 : index
    %c0_134 = arith.constant 0 : index
    %169 = vector.load %arg8[%c0_133, %c0_134] : memref<1x128xf32, #tpu.memory_space<vmem>>, vector<1x128xf32>
    %170 = vector.broadcast %169 : vector<1x128xf32> to vector<64x128xf32>
    %171 = arith.addf %168, %170 : vector<64x128xf32>
    %cst_135 = arith.constant 0.000000e+00 : f32
    %172 = vector.broadcast %cst_135 : f32 to vector<64x128xf32>
    %173 = arith.maximumf %171, %172 : vector<64x128xf32>
    %cst_136 = arith.constant 0.000000e+00 : f32
    %174 = vector.broadcast %cst_136 : f32 to vector<8x8x128xf32>
    %c1_137 = arith.constant 1 : index
    %c0_138 = arith.constant 0 : index
    %c0_139 = arith.constant 0 : index
    %c1_140 = arith.constant 1 : index
    %c0_141 = arith.constant 0 : index
    %175 = vector.load %arg14[%c1_137, %c0_138, %c0_139, %c1_140, %c0_141] : memref<11x2x2x11x128xf32, #tpu.memory_space<vmem>>, vector<8x1x1x8x128xf32>
    %176 = vector.shape_cast %175 : vector<8x1x1x8x128xf32> to vector<8x8x128xf32>
    %c0_142 = arith.constant 0 : index
    %c0_143 = arith.constant 0 : index
    %c0_144 = arith.constant 0 : index
    %177 = vector.load %arg9[%c0_142, %c0_143, %c0_144] : memref<9x1x128xf32, #tpu.memory_space<vmem>>, vector<1x1x128xf32>
    %178 = vector.shape_cast %177 : vector<1x1x128xf32> to vector<1x128xf32>
    %179 = vector.shape_cast %178 : vector<1x128xf32> to vector<1x1x128xf32>
    %180 = vector.broadcast %179 : vector<1x1x128xf32> to vector<8x8x128xf32>
    %181 = arith.mulf %176, %180 : vector<8x8x128xf32>
    %182 = arith.addf %174, %181 : vector<8x8x128xf32>
    %c1_145 = arith.constant 1 : index
    %c0_146 = arith.constant 0 : index
    %c1_147 = arith.constant 1 : index
    %c1_148 = arith.constant 1 : index
    %c0_149 = arith.constant 0 : index
    %183 = vector.load %arg14[%c1_145, %c0_146, %c1_147, %c1_148, %c0_149] : memref<11x2x2x11x128xf32, #tpu.memory_space<vmem>>, vector<8x1x1x8x128xf32>
    %184 = vector.shape_cast %183 : vector<8x1x1x8x128xf32> to vector<8x8x128xf32>
    %c1_150 = arith.constant 1 : index
    %c0_151 = arith.constant 0 : index
    %c0_152 = arith.constant 0 : index
    %185 = vector.load %arg9[%c1_150, %c0_151, %c0_152] : memref<9x1x128xf32, #tpu.memory_space<vmem>>, vector<1x1x128xf32>
    %186 = vector.shape_cast %185 : vector<1x1x128xf32> to vector<1x128xf32>
    %187 = vector.shape_cast %186 : vector<1x128xf32> to vector<1x1x128xf32>
    %188 = vector.broadcast %187 : vector<1x1x128xf32> to vector<8x8x128xf32>
    %189 = arith.mulf %184, %188 : vector<8x8x128xf32>
    %190 = arith.addf %182, %189 : vector<8x8x128xf32>
    %c1_153 = arith.constant 1 : index
    %c0_154 = arith.constant 0 : index
    %c0_155 = arith.constant 0 : index
    %c2_156 = arith.constant 2 : index
    %c0_157 = arith.constant 0 : index
    %191 = vector.load %arg14[%c1_153, %c0_154, %c0_155, %c2_156, %c0_157] : memref<11x2x2x11x128xf32, #tpu.memory_space<vmem>>, vector<8x1x1x8x128xf32>
    %192 = vector.shape_cast %191 : vector<8x1x1x8x128xf32> to vector<8x8x128xf32>
    %c2_158 = arith.constant 2 : index
    %c0_159 = arith.constant 0 : index
    %c0_160 = arith.constant 0 : index
    %193 = vector.load %arg9[%c2_158, %c0_159, %c0_160] : memref<9x1x128xf32, #tpu.memory_space<vmem>>, vector<1x1x128xf32>
    %194 = vector.shape_cast %193 : vector<1x1x128xf32> to vector<1x128xf32>
    %195 = vector.shape_cast %194 : vector<1x128xf32> to vector<1x1x128xf32>
    %196 = vector.broadcast %195 : vector<1x1x128xf32> to vector<8x8x128xf32>
    %197 = arith.mulf %192, %196 : vector<8x8x128xf32>
    %198 = arith.addf %190, %197 : vector<8x8x128xf32>
    %c1_161 = arith.constant 1 : index
    %c1_162 = arith.constant 1 : index
    %c0_163 = arith.constant 0 : index
    %c1_164 = arith.constant 1 : index
    %c0_165 = arith.constant 0 : index
    %199 = vector.load %arg14[%c1_161, %c1_162, %c0_163, %c1_164, %c0_165] : memref<11x2x2x11x128xf32, #tpu.memory_space<vmem>>, vector<8x1x1x8x128xf32>
    %200 = vector.shape_cast %199 : vector<8x1x1x8x128xf32> to vector<8x8x128xf32>
    %c3_166 = arith.constant 3 : index
    %c0_167 = arith.constant 0 : index
    %c0_168 = arith.constant 0 : index
    %201 = vector.load %arg9[%c3_166, %c0_167, %c0_168] : memref<9x1x128xf32, #tpu.memory_space<vmem>>, vector<1x1x128xf32>
    %202 = vector.shape_cast %201 : vector<1x1x128xf32> to vector<1x128xf32>
    %203 = vector.shape_cast %202 : vector<1x128xf32> to vector<1x1x128xf32>
    %204 = vector.broadcast %203 : vector<1x1x128xf32> to vector<8x8x128xf32>
    %205 = arith.mulf %200, %204 : vector<8x8x128xf32>
    %206 = arith.addf %198, %205 : vector<8x8x128xf32>
    %c1_169 = arith.constant 1 : index
    %c1_170 = arith.constant 1 : index
    %c1_171 = arith.constant 1 : index
    %c1_172 = arith.constant 1 : index
    %c0_173 = arith.constant 0 : index
    %207 = vector.load %arg14[%c1_169, %c1_170, %c1_171, %c1_172, %c0_173] : memref<11x2x2x11x128xf32, #tpu.memory_space<vmem>>, vector<8x1x1x8x128xf32>
    %208 = vector.shape_cast %207 : vector<8x1x1x8x128xf32> to vector<8x8x128xf32>
    %c4_174 = arith.constant 4 : index
    %c0_175 = arith.constant 0 : index
    %c0_176 = arith.constant 0 : index
    %209 = vector.load %arg9[%c4_174, %c0_175, %c0_176] : memref<9x1x128xf32, #tpu.memory_space<vmem>>, vector<1x1x128xf32>
    %210 = vector.shape_cast %209 : vector<1x1x128xf32> to vector<1x128xf32>
    %211 = vector.shape_cast %210 : vector<1x128xf32> to vector<1x1x128xf32>
    %212 = vector.broadcast %211 : vector<1x1x128xf32> to vector<8x8x128xf32>
    %213 = arith.mulf %208, %212 : vector<8x8x128xf32>
    %214 = arith.addf %206, %213 : vector<8x8x128xf32>
    %c1_177 = arith.constant 1 : index
    %c1_178 = arith.constant 1 : index
    %c0_179 = arith.constant 0 : index
    %c2_180 = arith.constant 2 : index
    %c0_181 = arith.constant 0 : index
    %215 = vector.load %arg14[%c1_177, %c1_178, %c0_179, %c2_180, %c0_181] : memref<11x2x2x11x128xf32, #tpu.memory_space<vmem>>, vector<8x1x1x8x128xf32>
    %216 = vector.shape_cast %215 : vector<8x1x1x8x128xf32> to vector<8x8x128xf32>
    %c5_182 = arith.constant 5 : index
    %c0_183 = arith.constant 0 : index
    %c0_184 = arith.constant 0 : index
    %217 = vector.load %arg9[%c5_182, %c0_183, %c0_184] : memref<9x1x128xf32, #tpu.memory_space<vmem>>, vector<1x1x128xf32>
    %218 = vector.shape_cast %217 : vector<1x1x128xf32> to vector<1x128xf32>
    %219 = vector.shape_cast %218 : vector<1x128xf32> to vector<1x1x128xf32>
    %220 = vector.broadcast %219 : vector<1x1x128xf32> to vector<8x8x128xf32>
    %221 = arith.mulf %216, %220 : vector<8x8x128xf32>
    %222 = arith.addf %214, %221 : vector<8x8x128xf32>
    %c2_185 = arith.constant 2 : index
    %c0_186 = arith.constant 0 : index
    %c0_187 = arith.constant 0 : index
    %c1_188 = arith.constant 1 : index
    %c0_189 = arith.constant 0 : index
    %223 = vector.load %arg14[%c2_185, %c0_186, %c0_187, %c1_188, %c0_189] : memref<11x2x2x11x128xf32, #tpu.memory_space<vmem>>, vector<8x1x1x8x128xf32>
    %224 = vector.shape_cast %223 : vector<8x1x1x8x128xf32> to vector<8x8x128xf32>
    %c6_190 = arith.constant 6 : index
    %c0_191 = arith.constant 0 : index
    %c0_192 = arith.constant 0 : index
    %225 = vector.load %arg9[%c6_190, %c0_191, %c0_192] : memref<9x1x128xf32, #tpu.memory_space<vmem>>, vector<1x1x128xf32>
    %226 = vector.shape_cast %225 : vector<1x1x128xf32> to vector<1x128xf32>
    %227 = vector.shape_cast %226 : vector<1x128xf32> to vector<1x1x128xf32>
    %228 = vector.broadcast %227 : vector<1x1x128xf32> to vector<8x8x128xf32>
    %229 = arith.mulf %224, %228 : vector<8x8x128xf32>
    %230 = arith.addf %222, %229 : vector<8x8x128xf32>
    %c2_193 = arith.constant 2 : index
    %c0_194 = arith.constant 0 : index
    %c1_195 = arith.constant 1 : index
    %c1_196 = arith.constant 1 : index
    %c0_197 = arith.constant 0 : index
    %231 = vector.load %arg14[%c2_193, %c0_194, %c1_195, %c1_196, %c0_197] : memref<11x2x2x11x128xf32, #tpu.memory_space<vmem>>, vector<8x1x1x8x128xf32>
    %232 = vector.shape_cast %231 : vector<8x1x1x8x128xf32> to vector<8x8x128xf32>
    %c7_198 = arith.constant 7 : index
    %c0_199 = arith.constant 0 : index
    %c0_200 = arith.constant 0 : index
    %233 = vector.load %arg9[%c7_198, %c0_199, %c0_200] : memref<9x1x128xf32, #tpu.memory_space<vmem>>, vector<1x1x128xf32>
    %234 = vector.shape_cast %233 : vector<1x1x128xf32> to vector<1x128xf32>
    %235 = vector.shape_cast %234 : vector<1x128xf32> to vector<1x1x128xf32>
    %236 = vector.broadcast %235 : vector<1x1x128xf32> to vector<8x8x128xf32>
    %237 = arith.mulf %232, %236 : vector<8x8x128xf32>
    %238 = arith.addf %230, %237 : vector<8x8x128xf32>
    %c2_201 = arith.constant 2 : index
    %c0_202 = arith.constant 0 : index
    %c0_203 = arith.constant 0 : index
    %c2_204 = arith.constant 2 : index
    %c0_205 = arith.constant 0 : index
    %239 = vector.load %arg14[%c2_201, %c0_202, %c0_203, %c2_204, %c0_205] : memref<11x2x2x11x128xf32, #tpu.memory_space<vmem>>, vector<8x1x1x8x128xf32>
    %240 = vector.shape_cast %239 : vector<8x1x1x8x128xf32> to vector<8x8x128xf32>
    %c8_206 = arith.constant 8 : index
    %c0_207 = arith.constant 0 : index
    %c0_208 = arith.constant 0 : index
    %241 = vector.load %arg9[%c8_206, %c0_207, %c0_208] : memref<9x1x128xf32, #tpu.memory_space<vmem>>, vector<1x1x128xf32>
    %242 = vector.shape_cast %241 : vector<1x1x128xf32> to vector<1x128xf32>
    %243 = vector.shape_cast %242 : vector<1x128xf32> to vector<1x1x128xf32>
    %244 = vector.broadcast %243 : vector<1x1x128xf32> to vector<8x8x128xf32>
    %245 = arith.mulf %240, %244 : vector<8x8x128xf32>
    %246 = arith.addf %238, %245 : vector<8x8x128xf32>
    %c0_209 = arith.constant 0 : index
    %c0_210 = arith.constant 0 : index
    %247 = vector.load %arg10[%c0_209, %c0_210] : memref<1x128xf32, #tpu.memory_space<vmem>>, vector<1x128xf32>
    %248 = vector.shape_cast %247 : vector<1x128xf32> to vector<1x1x128xf32>
    %249 = vector.broadcast %248 : vector<1x1x128xf32> to vector<8x8x128xf32>
    %250 = arith.addf %246, %249 : vector<8x8x128xf32>
    %cst_211 = arith.constant 0.000000e+00 : f32
    %251 = vector.broadcast %cst_211 : f32 to vector<8x8x128xf32>
    %252 = arith.subf %251, %250 : vector<8x8x128xf32>
    %253 = math.exp %252 : vector<8x8x128xf32>
    %cst_212 = arith.constant 1.000000e+00 : f32
    %254 = vector.broadcast %cst_212 : f32 to vector<8x8x128xf32>
    %255 = arith.addf %254, %253 : vector<8x8x128xf32>
    %256 = tpu.reciprocal %255 {approx = true} : vector<8x8x128xf32> -> vector<8x8x128xf32>
    %257 = arith.mulf %250, %256 : vector<8x8x128xf32>
    %258 = vector.shape_cast %257 : vector<8x8x128xf32> to vector<64x128xf32>
    %c0_213 = arith.constant 0 : index
    %c0_214 = arith.constant 0 : index
    %259 = vector.load %arg11[%c0_213, %c0_214] : memref<128x128xf32, #tpu.memory_space<vmem>>, vector<128x128xf32>
    %cst_215 = arith.constant dense<0.000000e+00> : vector<64x128xf32>
    %260 = tpu.matmul %258, %259, %cst_215 {dimension_numbers = #tpu.dot_dimension_numbers<[1], [0], [0], [1], [0, 0, 1, 1], [], []>} : vector<64x128xf32>, vector<128x128xf32>, vector<64x128xf32> -> vector<64x128xf32>
    %c0_216 = arith.constant 0 : index
    %c0_217 = arith.constant 0 : index
    %261 = vector.load %arg12[%c0_216, %c0_217] : memref<1x128xf32, #tpu.memory_space<vmem>>, vector<1x128xf32>
    %262 = vector.broadcast %261 : vector<1x128xf32> to vector<64x128xf32>
    %263 = arith.addf %260, %262 : vector<64x128xf32>
    %cst_218 = arith.constant 0.000000e+00 : f32
    %264 = vector.broadcast %cst_218 : f32 to vector<64x128xf32>
    %265 = arith.maximumf %263, %264 : vector<64x128xf32>
    %266 = arith.addf %173, %265 : vector<64x128xf32>
    %cst_219 = arith.constant 0.000000e+00 : f32
    %267 = vector.broadcast %cst_219 : f32 to vector<64x128xf32>
    %268 = arith.maximumf %266, %267 : vector<64x128xf32>
    %269 = vector.shape_cast %268 : vector<64x128xf32> to vector<1x8x8x128xf32>
    %c0_220 = arith.constant 0 : index
    %c0_221 = arith.constant 0 : index
    %c0_222 = arith.constant 0 : index
    %c0_223 = arith.constant 0 : index
    %270 = vector.load %arg13[%c0_220, %c0_221, %c0_222, %c0_223] : memref<1x8x8x128xf32, #tpu.memory_space<vmem>>, vector<1x8x8x128xf32>
    tpu.vector_store %arg13[%c0_220, %c0_221, %c0_222, %c0_223], %269 {strides = array<i32>} : memref<1x8x8x128xf32, #tpu.memory_space<vmem>>, vector<1x8x8x128xf32>,
    return
  }
  func.func @transform_1(%arg0: i32, %arg1: i32) -> (i32, i32, i32) {
    %c0_i32 = arith.constant 0 : i32
    %c0_i32_0 = arith.constant 0 : i32
    %c0_i32_1 = arith.constant 0 : i32
    %c0_i32_2 = arith.constant 0 : i32
    return %c0_i32, %c0_i32_0, %c0_i32_1 : i32, i32, i32
  }
  func.func @transform_2(%arg0: i32, %arg1: i32) -> (i32, i32) {
    %c0_i32 = arith.constant 0 : i32
    %c0_i32_0 = arith.constant 0 : i32
    %c0_i32_1 = arith.constant 0 : i32
    return %c0_i32, %c0_i32_0 : i32, i32
  }
  func.func @transform_3(%arg0: i32, %arg1: i32) -> (i32, i32, i32) {
    %c0_i32 = arith.constant 0 : i32
    %c0_i32_0 = arith.constant 0 : i32
    %c0_i32_1 = arith.constant 0 : i32
    %c0_i32_2 = arith.constant 0 : i32
    return %c0_i32, %c0_i32_0, %c0_i32_1 : i32, i32, i32
  }
  func.func @transform_4(%arg0: i32, %arg1: i32) -> (i32, i32) {
    %c0_i32 = arith.constant 0 : i32
    %c0_i32_0 = arith.constant 0 : i32
    %c0_i32_1 = arith.constant 0 : i32
    return %c0_i32, %c0_i32_0 : i32, i32
  }
  func.func @transform_5(%arg0: i32, %arg1: i32) -> (i32, i32) {
    %c0_i32 = arith.constant 0 : i32
    %c0_i32_0 = arith.constant 0 : i32
    %c0_i32_1 = arith.constant 0 : i32
    return %c0_i32, %c0_i32_0 : i32, i32
  }
  func.func @transform_6(%arg0: i32, %arg1: i32) -> (i32, i32) {
    %c0_i32 = arith.constant 0 : i32
    %c0_i32_0 = arith.constant 0 : i32
    %c0_i32_1 = arith.constant 0 : i32
    return %c0_i32, %c0_i32_0 : i32, i32
  }
  func.func @transform_7(%arg0: i32, %arg1: i32) -> (i32, i32, i32) {
    %c0_i32 = arith.constant 0 : i32
    %c0_i32_0 = arith.constant 0 : i32
    %c0_i32_1 = arith.constant 0 : i32
    %c0_i32_2 = arith.constant 0 : i32
    return %c0_i32, %c0_i32_0, %c0_i32_1 : i32, i32, i32
  }
  func.func @transform_8(%arg0: i32, %arg1: i32) -> (i32, i32) {
    %c0_i32 = arith.constant 0 : i32
    %c0_i32_0 = arith.constant 0 : i32
    %c0_i32_1 = arith.constant 0 : i32
    return %c0_i32, %c0_i32_0 : i32, i32
  }
  func.func @transform_9(%arg0: i32, %arg1: i32) -> (i32, i32) {
    %c0_i32 = arith.constant 0 : i32
    %c0_i32_0 = arith.constant 0 : i32
    %c0_i32_1 = arith.constant 0 : i32
    return %c0_i32, %c0_i32_0 : i32, i32
  }
  func.func @transform_10(%arg0: i32, %arg1: i32) -> (i32, i32) {
    %c0_i32 = arith.constant 0 : i32
    %c0_i32_0 = arith.constant 0 : i32
    %c0_i32_1 = arith.constant 0 : i32
    return %c0_i32, %c0_i32_0 : i32, i32
  }
  func.func @transform_11(%arg0: i32, %arg1: i32) -> (i32, i32, i32, i32) {
    %c0_i32 = arith.constant 0 : i32
    %c0_i32_0 = arith.constant 0 : i32
    %c0_i32_1 = arith.constant 0 : i32
    return %arg0, %arg1, %c0_i32, %c0_i32_0 : i32, i32, i32, i32
  }
}

</mosaic_0001>

<llo_original>
// kernel: tpu_custom_call.1
$region0: #{tpu_custom_call.1}
  #allocation0 [shape = 'u32[]', space=smem, size = 0x4, offset = 0x4, fixed_abs, tag = 'smem constant byte address 0x4 - core index']
  #allocation1 [shape = 'u32[144,128]{1,0:T(1,128)}', space=vmem, size = 0x12000, scoped, tag = 'internal scratch']
  #allocation2 [shape = 'f32[11,2,2,11,128]{4,3,2,1,0:T(8,128)}', space=vmem, size = 0x58000, scoped, tag = 'scratch operand']
  #allocation3 [shape = 's32[1]{0}', space=sflag, size = 0x4, scoped, tag = 'scratch operand']
  #allocation10 [shape = 's32[]', space=sflag, size = 0x4, offset = 0, fixed_abs, tag = 'sflag constant byte address 0x0 - dummy sync flag']
  %s0 = inlined_call_operand.vmem [shape: f32[2,11,2,2,11,128], index: 0, kind: input, shape index: {}]
  %s1 = inlined_call_operand.vmem [shape: f32[9,128,128], index: 1, kind: input, shape index: {}]
  %s2 = inlined_call_operand.vmem [shape: f32[1,128], index: 2, kind: input, shape index: {}]
  %s3 = inlined_call_operand.vmem [shape: f32[9,128,128], index: 3, kind: input, shape index: {}]
  %s4 = inlined_call_operand.vmem [shape: f32[1,128], index: 4, kind: input, shape index: {}]
  %s5 = inlined_call_operand.hbm [shape: f32[128,128], index: 5, kind: input, shape index: {}]
  %s6 = inlined_call_operand.vmem [shape: f32[1,128], index: 6, kind: input, shape index: {}]
  %s7 = inlined_call_operand.vmem [shape: f32[9,1,128], index: 7, kind: input, shape index: {}]
  %s8 = inlined_call_operand.vmem [shape: f32[1,128], index: 8, kind: input, shape index: {}]
  %s9 = inlined_call_operand.hbm [shape: f32[128,128], index: 9, kind: input, shape index: {}]
  %s10 = inlined_call_operand.vmem [shape: f32[1,128], index: 10, kind: input, shape index: {}]
  %s11 = inlined_call_operand.hbm [shape: f32[2,8,8,128], index: 11, kind: output, shape index: {}]
  %s12 = sld [smem:[#allocation0]]
  $region118: #{tpu_custom_call.1} parent=0
    _
  %s14 = ssub.s32 1, %s12
  %s15 = scalar_select 0, %s14, %s12
  $region1: #{tpu_custom_call.1} parent=0
    #allocation4 [shape = 'u8[65536]{0}', space=vmem, size = 0x10000, scoped, tag = 'input window, operand 5, single buffered']
    #allocation5 [shape = 's32[2]{0}', space=sflag, size = 0x8, scoped, tag = 'scoped memory for tpu_custom_call.1']
    #allocation6 [shape = 's32[2]{0}', space=sflag, size = 0x8, scoped, tag = 'scoped memory for tpu_custom_call.1']
    #allocation7 [shape = 'u8[65536]{0}', space=vmem, size = 0x10000, scoped, tag = 'input window, operand 9, single buffered']
    #allocation8 [shape = 's32[1]{0}', space=sflag, size = 0x4, scoped, tag = 'scoped memory for tpu_custom_call.1']
    #allocation9 [shape = 'u8[65536]{0}', space=vmem, size = 0x10000, scoped, tag = 'output window, operand 0']
    %16 = vsyncpa [#allocation5], 0
    %17 = vsyncpa [#allocation8], 0
    %18 = vsyncpa [#allocation6], 0
    %s19 = scalar_lea.sflag [#allocation6], 1
    %20 = vsyncpa %s19, 0
    loop: start=0, step=1, limit=4
    $region2: #{tpu_custom_call.1} parent=1 // loop_pre_header
      _
    $region3: #{tpu_custom_call.1} parent=1 // loop_header
      %s22 = sphi 0, %s26
      %p23 = scmp.ge.s32.totalorder %s22, 4
      %s29 = sphi 0, %s41
      %s30 = sphi 0, %s37
      %s31 = sphi 0, %s29
      %s32 = sphi 0, %s30
      %s33 = sphi 0, %s31
      %s34 = sphi 0, %s32
      %s42 = sphi 0, %s42
      %s44 = sphi 0, %s42
      %s45 = sphi 0, %s44
      %s59 = sphi 0, %s45
      %s63 = sphi 0, %s63
      %s65 = sphi 0, %s63
      %s66 = sphi 0, %s65
      %s80 = sphi 0, %s66
      %s84 = sphi 0, %s84
      %s86 = sphi 0, %s84
      %s87 = sphi 0, %s86
      %s101 = sphi 0, %s87
      %s105 = sphi 0, %s105
      %s107 = sphi 0, %s105
      %s108 = sphi 0, %s107
      %s122 = sphi 0, %s108
      %s126 = sphi 0, %s126
      %s128 = sphi 0, %s126
      %s129 = sphi 0, %s128
      %s143 = sphi 0, %s129
      %s147 = sphi 0, %s147
      %s149 = sphi 0, %s147
      %s150 = sphi 0, %s149
      %s164 = sphi 0, %s150
      %s168 = sphi 0, %s168
      %s170 = sphi 0, %s168
      %s171 = sphi 0, %s170
      %s185 = sphi 0, %s171
      %s189 = sphi 0, %s189
      %s191 = sphi 0, %s189
      %s192 = sphi 0, %s191
      %s206 = sphi 0, %s192
      %s210 = sphi 0, %s210
      %s212 = sphi 0, %s210
      %s213 = sphi 0, %s212
      %s227 = sphi 0, %s213
      %s231 = sphi 0, %s231
      %s233 = sphi 0, %s231
      %s234 = sphi 0, %s233
      %s248 = sphi 0, %s234
      %s256 = sphi 0, %s258
      %s259 = sphi 0, %s256
      %s260 = sphi 0, %s259
      %s276 = sphi 0, %s260
    $region4: #{tpu_custom_call.1} parent=1 // loop_header_branch
      %25 = sbr.rel (%p23) target = $region8
    $region5: #{tpu_custom_call.1} parent=1 // loop_body
      %s27 = ssub.s32 %s22, 1
      %s28 = ssub.s32 %s22, 2
      %s35 = sadd.s32 1, %s30
      %p36 = scmp.ge.s32.totalorder %s35, 1
      %s37 = scalar_select %p36, 0, %s35
      %s38 = sadd.s32 1, %s29
      %s39 = scalar_select %p36, %s38, %s29
      %p40 = scmp.ge.s32.totalorder %s39, 2
      %s41 = scalar_select %p40, 0, %s39
      %s43 = sadd.s32 %s42, 1
      %p46 = scmp.eq.s32.totalorder %s22, 1
      %p47 = scmp.ne.s32.totalorder %s42, %s44
      %p48 = scmp.eq.s32.totalorder %s22, 0
      %p49 = por %p47, %p48
      %p50 = scmp.ne.s32.totalorder %s42, %s44
      %p51 = scmp.eq.s32.totalorder %s27, 1
      %p52 = por %p50, %p51
      %p53 = scmp.ne.s32.totalorder %s44, %s45
      %p54 = scmp.eq.s32.totalorder %s27, 0
      %p55 = por %p53, %p54
      %p56 = scmp.ne.s32.totalorder %s44, %s45
      %p57 = scmp.eq.s32.totalorder %s28, 1
      %p58 = por %p56, %p57
      %p60 = scmp.ne.s32.totalorder %s45, %s59
      %p61 = scmp.eq.s32.totalorder %s28, 0
      %p62 = por %p60, %p61
      %s64 = sadd.s32 %s63, 1
      %p67 = scmp.eq.s32.totalorder %s22, 1
      %p68 = scmp.ne.s32.totalorder %s63, %s65
      %p69 = scmp.eq.s32.totalorder %s22, 0
      %p70 = por %p68, %p69
      %p71 = scmp.ne.s32.totalorder %s63, %s65
      %p72 = scmp.eq.s32.totalorder %s27, 1
      %p73 = por %p71, %p72
      %p74 = scmp.ne.s32.totalorder %s65, %s66
      %p75 = scmp.eq.s32.totalorder %s27, 0
      %p76 = por %p74, %p75
      %p77 = scmp.ne.s32.totalorder %s65, %s66
      %p78 = scmp.eq.s32.totalorder %s28, 1
      %p79 = por %p77, %p78
      %p81 = scmp.ne.s32.totalorder %s66, %s80
      %p82 = scmp.eq.s32.totalorder %s28, 0
      %p83 = por %p81, %p82
      %s85 = sadd.s32 %s84, 1
      %p88 = scmp.eq.s32.totalorder %s22, 1
      %p89 = scmp.ne.s32.totalorder %s84, %s86
      %p90 = scmp.eq.s32.totalorder %s22, 0
      %p91 = por %p89, %p90
      %p92 = scmp.ne.s32.totalorder %s84, %s86
      %p93 = scmp.eq.s32.totalorder %s27, 1
      %p94 = por %p92, %p93
      %p95 = scmp.ne.s32.totalorder %s86, %s87
      %p96 = scmp.eq.s32.totalorder %s27, 0
      %p97 = por %p95, %p96
      %p98 = scmp.ne.s32.totalorder %s86, %s87
      %p99 = scmp.eq.s32.totalorder %s28, 1
      %p100 = por %p98, %p99
      %p102 = scmp.ne.s32.totalorder %s87, %s101
      %p103 = scmp.eq.s32.totalorder %s28, 0
      %p104 = por %p102, %p103
      %s106 = sadd.s32 %s105, 1
      %p109 = scmp.eq.s32.totalorder %s22, 1
      %p110 = scmp.ne.s32.totalorder %s105, %s107
      %p111 = scmp.eq.s32.totalorder %s22, 0
      %p112 = por %p110, %p111
      %p113 = scmp.ne.s32.totalorder %s105, %s107
      %p114 = scmp.eq.s32.totalorder %s27, 1
      %p115 = por %p113, %p114
      %p116 = scmp.ne.s32.totalorder %s107, %s108
      %p117 = scmp.eq.s32.totalorder %s27, 0
      %p118 = por %p116, %p117
      %p119 = scmp.ne.s32.totalorder %s107, %s108
      %p120 = scmp.eq.s32.totalorder %s28, 1
      %p121 = por %p119, %p120
      %p123 = scmp.ne.s32.totalorder %s108, %s122
      %p124 = scmp.eq.s32.totalorder %s28, 0
      %p125 = por %p123, %p124
      %s127 = sadd.s32 %s126, 1
      %p130 = scmp.eq.s32.totalorder %s22, 1
      %p131 = scmp.ne.s32.totalorder %s126, %s128
      %p132 = scmp.eq.s32.totalorder %s22, 0
      %p133 = por %p131, %p132
      %p134 = scmp.ne.s32.totalorder %s126, %s128
      %p135 = scmp.eq.s32.totalorder %s27, 1
      %p136 = por %p134, %p135
      %p137 = scmp.ne.s32.totalorder %s128, %s129
      %p138 = scmp.eq.s32.totalorder %s27, 0
      %p139 = por %p137, %p138
      %p140 = scmp.ne.s32.totalorder %s128, %s129
      %p141 = scmp.eq.s32.totalorder %s28, 1
      %p142 = por %p140, %p141
      %p144 = scmp.ne.s32.totalorder %s129, %s143
      %p145 = scmp.eq.s32.totalorder %s28, 0
      %p146 = por %p144, %p145
      %s148 = sadd.s32 %s147, 1
      %p151 = scmp.eq.s32.totalorder %s22, 1
      %p152 = scmp.ne.s32.totalorder %s147, %s149
      %p153 = scmp.eq.s32.totalorder %s22, 0
      %p154 = por %p152, %p153
      %p155 = scmp.ne.s32.totalorder %s147, %s149
      %p156 = scmp.eq.s32.totalorder %s27, 1
      %p157 = por %p155, %p156
      %p158 = scmp.ne.s32.totalorder %s149, %s150
      %p159 = scmp.eq.s32.totalorder %s27, 0
      %p160 = por %p158, %p159
      %p161 = scmp.ne.s32.totalorder %s149, %s150
      %p162 = scmp.eq.s32.totalorder %s28, 1
      %p163 = por %p161, %p162
      %p165 = scmp.ne.s32.totalorder %s150, %s164
      %p166 = scmp.eq.s32.totalorder %s28, 0
      %p167 = por %p165, %p166
      %s169 = sadd.s32 %s168, 1
      %p172 = scmp.eq.s32.totalorder %s22, 1
      %p173 = scmp.ne.s32.totalorder %s168, %s170
      %p174 = scmp.eq.s32.totalorder %s22, 0
      %p175 = por %p173, %p174
      %p176 = scmp.ne.s32.totalorder %s168, %s170
      %p177 = scmp.eq.s32.totalorder %s27, 1
      %p178 = por %p176, %p177
      %p179 = scmp.ne.s32.totalorder %s170, %s171
      %p180 = scmp.eq.s32.totalorder %s27, 0
      %p181 = por %p179, %p180
      %p182 = scmp.ne.s32.totalorder %s170, %s171
      %p183 = scmp.eq.s32.totalorder %s28, 1
      %p184 = por %p182, %p183
      %p186 = scmp.ne.s32.totalorder %s171, %s185
      %p187 = scmp.eq.s32.totalorder %s28, 0
      %p188 = por %p186, %p187
      %s190 = sadd.s32 %s189, 1
      %p193 = scmp.eq.s32.totalorder %s22, 1
      %p194 = scmp.ne.s32.totalorder %s189, %s191
      %p195 = scmp.eq.s32.totalorder %s22, 0
      %p196 = por %p194, %p195
      %p197 = scmp.ne.s32.totalorder %s189, %s191
      %p198 = scmp.eq.s32.totalorder %s27, 1
      %p199 = por %p197, %p198
      %p200 = scmp.ne.s32.totalorder %s191, %s192
      %p201 = scmp.eq.s32.totalorder %s27, 0
      %p202 = por %p200, %p201
      %p203 = scmp.ne.s32.totalorder %s191, %s192
      %p204 = scmp.eq.s32.totalorder %s28, 1
      %p205 = por %p203, %p204
      %p207 = scmp.ne.s32.totalorder %s192, %s206
      %p208 = scmp.eq.s32.totalorder %s28, 0
      %p209 = por %p207, %p208
      %s211 = sadd.s32 %s210, 1
      %p214 = scmp.eq.s32.totalorder %s22, 1
      %p215 = scmp.ne.s32.totalorder %s210, %s212
      %p216 = scmp.eq.s32.totalorder %s22, 0
      %p217 = por %p215, %p216
      %p218 = scmp.ne.s32.totalorder %s210, %s212
      %p219 = scmp.eq.s32.totalorder %s27, 1
      %p220 = por %p218, %p219
      %p221 = scmp.ne.s32.totalorder %s212, %s213
      %p222 = scmp.eq.s32.totalorder %s27, 0
      %p223 = por %p221, %p222
      %p224 = scmp.ne.s32.totalorder %s212, %s213
      %p225 = scmp.eq.s32.totalorder %s28, 1
      %p226 = por %p224, %p225
      %p228 = scmp.ne.s32.totalorder %s213, %s227
      %p229 = scmp.eq.s32.totalorder %s28, 0
      %p230 = por %p228, %p229
      %s232 = sadd.s32 %s231, 1
      %p235 = scmp.eq.s32.totalorder %s22, 1
      %p236 = scmp.ne.s32.totalorder %s231, %s233
      %p237 = scmp.eq.s32.totalorder %s22, 0
      %p238 = por %p236, %p237
      %p239 = scmp.ne.s32.totalorder %s231, %s233
      %p240 = scmp.eq.s32.totalorder %s27, 1
      %p241 = por %p239, %p240
      %p242 = scmp.ne.s32.totalorder %s233, %s234
      %p243 = scmp.eq.s32.totalorder %s27, 0
      %p244 = por %p242, %p243
      %p245 = scmp.ne.s32.totalorder %s233, %s234
      %p246 = scmp.eq.s32.totalorder %s28, 1
      %p247 = por %p245, %p246
      %p249 = scmp.ne.s32.totalorder %s234, %s248
      %p250 = scmp.eq.s32.totalorder %s28, 0
      %p251 = por %p249, %p250
      %s252 = ssub.s32 %s29, %s41
      %s253 = ssub.s32 %s30, %s37
      %s254 = sor.u32 %s252, %s253
      %p255 = scmp.eq.s32.totalorder %s254, 0
      %s257 = sadd.s32 %s256, 1
      %s258 = scalar_select %p255, %s256, %s257
      %p261 = pneg %p255
      %p262 = scmp.eq.s32.totalorder %s22, 1
      %p263 = por %p261, %p262
      %p264 = scmp.ne.s32.totalorder %s256, %s259
      %p265 = scmp.eq.s32.totalorder %s22, 0
      %p266 = por %p264, %p265
      %p267 = scmp.ne.s32.totalorder %s256, %s259
      %p268 = scmp.eq.s32.totalorder %s27, 1
      %p269 = por %p267, %p268
      %p270 = scmp.ne.s32.totalorder %s259, %s260
      %p271 = scmp.eq.s32.totalorder %s27, 0
      %p272 = por %p270, %p271
      %p273 = scmp.ne.s32.totalorder %s259, %s260
      %p274 = scmp.eq.s32.totalorder %s28, 1
      %p275 = por %p273, %p274
      %p277 = scmp.ne.s32.totalorder %s260, %s276
      %p278 = scmp.eq.s32.totalorder %s28, 0
      %p279 = por %p277, %p278
      %p280 = scmp.le.s32.totalorder 1, %s22
      %p281 = scmp.lt.s32.totalorder %s22, 3
      %p282 = pnand %p280, %p281
      %p283 = pneg %p282
      // Predicated region
      $region9: #{tpu_custom_call.1} parent=5 // pred_check
        _
      $region10: #{tpu_custom_call.1} parent=5 // pred_check_branch
        %285 = sbr.rel (%p282) target = $region12
      $region11: #{tpu_custom_call.1} parent=5 // pred_region
        %s286 = ssub.s32 %s22, 1
        // Predicated region
        $region13: #{tpu_custom_call.1} parent=11 // pred_check
          %p287 = pneg %p55
        $region14: #{tpu_custom_call.1} parent=11 // pred_check_branch
          %289 = sbr.rel (%p287) target = $region16
        $region15: #{tpu_custom_call.1} parent=11 // pred_region
          _
        $region16: #{tpu_custom_call.1} parent=11 // pred_fallthru
          _
        // Predicated region
        $region17: #{tpu_custom_call.1} parent=11 // pred_check
          %p290 = pneg %p76
        $region18: #{tpu_custom_call.1} parent=11 // pred_check_branch
          %292 = sbr.rel (%p290) target = $region20
        $region19: #{tpu_custom_call.1} parent=11 // pred_region
          _
        $region20: #{tpu_custom_call.1} parent=11 // pred_fallthru
          _
        // Predicated region
        $region21: #{tpu_custom_call.1} parent=11 // pred_check
          %p293 = pneg %p97
        $region22: #{tpu_custom_call.1} parent=11 // pred_check_branch
          %295 = sbr.rel (%p293) target = $region24
        $region23: #{tpu_custom_call.1} parent=11 // pred_region
          _
        $region24: #{tpu_custom_call.1} parent=11 // pred_fallthru
          _
        // Predicated region
        $region25: #{tpu_custom_call.1} parent=11 // pred_check
          %p296 = pneg %p118
        $region26: #{tpu_custom_call.1} parent=11 // pred_check_branch
          %298 = sbr.rel (%p296) target = $region28
        $region27: #{tpu_custom_call.1} parent=11 // pred_region
          _
        $region28: #{tpu_custom_call.1} parent=11 // pred_fallthru
          _
        // Predicated region
        $region29: #{tpu_custom_call.1} parent=11 // pred_check
          %p299 = pneg %p139
        $region30: #{tpu_custom_call.1} parent=11 // pred_check_branch
          %301 = sbr.rel (%p299) target = $region32
        $region31: #{tpu_custom_call.1} parent=11 // pred_region
          %s303 = ssub.s32 2048, 2048
          %304 = vsyncadd [#allocation5], %s303
          %s305 = sshll.u32 [#allocation4], 4
          %s306 = int_to_ptr.vmem [resolvable:$true] %s305
          %311 = dma.hbm_to_vmem [thread:$0]  %s5, 2048, %s306, [#allocation5], 128, 128, 8
        $region32: #{tpu_custom_call.1} parent=11 // pred_fallthru
          _
        // Predicated region
        $region33: #{tpu_custom_call.1} parent=11 // pred_check
          %p312 = pneg %p160
        $region34: #{tpu_custom_call.1} parent=11 // pred_check_branch
          %314 = sbr.rel (%p312) target = $region36
        $region35: #{tpu_custom_call.1} parent=11 // pred_region
          _
        $region36: #{tpu_custom_call.1} parent=11 // pred_fallthru
          _
        // Predicated region
        $region37: #{tpu_custom_call.1} parent=11 // pred_check
          %p315 = pneg %p181
        $region38: #{tpu_custom_call.1} parent=11 // pred_check_branch
          %317 = sbr.rel (%p315) target = $region40
        $region39: #{tpu_custom_call.1} parent=11 // pred_region
          _
        $region40: #{tpu_custom_call.1} parent=11 // pred_fallthru
          _
        // Predicated region
        $region41: #{tpu_custom_call.1} parent=11 // pred_check
          %p318 = pneg %p202
        $region42: #{tpu_custom_call.1} parent=11 // pred_check_branch
          %320 = sbr.rel (%p318) target = $region44
        $region43: #{tpu_custom_call.1} parent=11 // pred_region
          _
        $region44: #{tpu_custom_call.1} parent=11 // pred_fallthru
          _
        // Predicated region
        $region45: #{tpu_custom_call.1} parent=11 // pred_check
          %p321 = pneg %p223
        $region46: #{tpu_custom_call.1} parent=11 // pred_check_branch
          %323 = sbr.rel (%p321) target = $region48
        $region47: #{tpu_custom_call.1} parent=11 // pred_region
          %s325 = ssub.s32 2048, 2048
          %326 = vsyncadd [#allocation8], %s325
          %s327 = sshll.u32 [#allocation7], 4
          %s328 = int_to_ptr.vmem [resolvable:$true] %s327
          %333 = dma.hbm_to_vmem [thread:$0]  %s9, 2048, %s328, [#allocation8], 128, 128, 8
        $region48: #{tpu_custom_call.1} parent=11 // pred_fallthru
          _
        // Predicated region
        $region49: #{tpu_custom_call.1} parent=11 // pred_check
          %p334 = pneg %p244
        $region50: #{tpu_custom_call.1} parent=11 // pred_check_branch
          %336 = sbr.rel (%p334) target = $region52
        $region51: #{tpu_custom_call.1} parent=11 // pred_region
          _
        $region52: #{tpu_custom_call.1} parent=11 // pred_fallthru
          _
      $region12: #{tpu_custom_call.1} parent=5 // pred_fallthru
        _
      %p337 = scmp.lt.s32.totalorder %s22, 2
      // Predicated region
      $region53: #{tpu_custom_call.1} parent=5 // pred_check
        %p338 = pneg %p337
      $region54: #{tpu_custom_call.1} parent=5 // pred_check_branch
        %340 = sbr.rel (%p338) target = $region56
      $region55: #{tpu_custom_call.1} parent=5 // pred_region
        _
      $region56: #{tpu_custom_call.1} parent=5 // pred_fallthru
        _
      %p341 = scmp.le.s32.totalorder 1, %s22
      %p342 = scmp.lt.s32.totalorder %s22, 3
      %p343 = pnand %p341, %p342
      %p344 = pneg %p343
      // Predicated region
      $region57: #{tpu_custom_call.1} parent=5 // pred_check
        _
      $region58: #{tpu_custom_call.1} parent=5 // pred_check_branch
        %346 = sbr.rel (%p343) target = $region60
      $region59: #{tpu_custom_call.1} parent=5 // pred_region
        %s347 = ssub.s32 %s22, 1
        // Predicated region
        $region61: #{tpu_custom_call.1} parent=59 // pred_check
          %p348 = pneg %p139
        $region62: #{tpu_custom_call.1} parent=59 // pred_check_branch
          %350 = sbr.rel (%p348) target = $region64
        $region63: #{tpu_custom_call.1} parent=59 // pred_region
          %351 = dma.done [#allocation5], 2048
        $region64: #{tpu_custom_call.1} parent=59 // pred_fallthru
          _
        // Predicated region
        $region65: #{tpu_custom_call.1} parent=59 // pred_check
          %p352 = pneg %p223
        $region66: #{tpu_custom_call.1} parent=59 // pred_check_branch
          %354 = sbr.rel (%p352) target = $region68
        $region67: #{tpu_custom_call.1} parent=59 // pred_region
          %355 = dma.done [#allocation8], 2048
        $region68: #{tpu_custom_call.1} parent=59 // pred_fallthru
          _
        %p356 = pneg %p55
        %p357 = pneg %p52
        %p358 = pneg %p76
        %p359 = pneg %p73
        %p360 = pneg %p97
        %p361 = pneg %p94
        %p362 = pneg %p118
        %p363 = pneg %p115
        %p364 = pneg %p139
        %p365 = pneg %p136
        %p366 = pneg %p160
        %p367 = pneg %p157
        %p368 = pneg %p181
        %p369 = pneg %p178
        %p370 = pneg %p202
        %p371 = pneg %p199
        %p372 = pneg %p223
        %p373 = pneg %p220
        %p374 = pneg %p244
        %p375 = pneg %p241
        %p376 = pneg %p272
        %p377 = pneg %p269
        %s378 = sand.u32 %s259, 1
        %s379 = scalar_lea.sflag [#allocation6], %s378
        %s380 = sand.u32 %s259, 1
        %s381 = smul.addr %s380, 64
        %s382 = scalar_lea.vmem [#allocation9], %s381
        %s383 = smul.u32 8, %s32
        %s384 = smul.u32 %s32, 8
        %s385 = smul.u32 %s384, 64
        %s386 = smul.u32 %s31, 704
        %s387 = sadd.s32 %s385, %s386
        %s388 = scalar_lea.vmem %s0, %s387
        %p390 = scmp.lt.u32.totalorder 11, 8
        %p391 = pneg %p390
        // Predicated region
        $region69: #{tpu_custom_call.1} parent=59 // pred_check
          _
        $region70: #{tpu_custom_call.1} parent=59 // pred_check_branch
          %393 = sbr.rel (%p390) target = $region72
        $region71: #{tpu_custom_call.1} parent=59 // pred_region
          %s495 = sand.u32 11, 7
          %p496 = scmp.eq.s32.totalorder %s495, 0
          %p497 = pneg %p496
          // Predicated region
          $region84: #{tpu_custom_call.1} parent=71 // pred_check
            _
          $region85: #{tpu_custom_call.1} parent=71 // pred_check_branch
            %499 = sbr.rel (%p496) target = $region87
          $region86: #{tpu_custom_call.1} parent=71 // pred_region
            %s500 = sand.u32 11, 7
            %s501 = ssub.s32 11, %s500
            %s502 = scalar_lea.vmem %s388, %s501
            %s503 = ssub.s32 11, %s500
            %s504 = scalar_lea.vmem [#allocation2], %s503
            loop: start=0, step=1, limit=1
            $region88: #{tpu_custom_call.1} parent=86 // loop_pre_header
              _
            $region89: #{tpu_custom_call.1} parent=86 // loop_header
              %s506 = sphi 0, %s510
              %p507 = scmp.ge.s32.totalorder %s506, 1
              %s511 = sphi %s388, %s388
              %s512 = sphi [#allocation2], [#allocation2]
            $region90: #{tpu_custom_call.1} parent=86 // loop_header_branch
              %509 = sbr.rel (%p507) target = $region94
            $region91: #{tpu_custom_call.1} parent=86 // loop_body
              %v513 = vld [vmem:[%s511] sm:$0xff]
              %514 = vst [vmem:[%s512] sm:$0xff] %v513
              %v515 = vld [vmem:[%s511 + $0x10] sm:$0xff]
              %516 = vst [vmem:[%s512 + $0x10] sm:$0xff] %v515
              %v517 = vld [vmem:[%s511 + $0x20] sm:$0xff]
              %518 = vst [vmem:[%s512 + $0x20] sm:$0xff] %v517
              %v519 = vld [vmem:[%s511 + $0x30] sm:$0xff]
              %520 = vst [vmem:[%s512 + $0x30] sm:$0xff] %v519
              %v521 = vld [vmem:[%s511 + $0x40] sm:$0xff]
              %522 = vst [vmem:[%s512 + $0x40] sm:$0xff] %v521
              %v523 = vld [vmem:[%s511 + $0x50] sm:$0xff]
              %524 = vst [vmem:[%s512 + $0x50] sm:$0xff] %v523
              %v525 = vld [vmem:[%s511 + $0x60] sm:$0xff]
              %526 = vst [vmem:[%s512 + $0x60] sm:$0xff] %v525
              %v527 = vld [vmem:[%s511 + $0x70] sm:$0xff]
              %528 = vst [vmem:[%s512 + $0x70] sm:$0xff] %v527
              %v529 = vld [vmem:[%s511 + $0x80] sm:$0xff]
              %530 = vst [vmem:[%s512 + $0x80] sm:$0xff] %v529
              %v531 = vld [vmem:[%s511 + $0x90] sm:$0xff]
              %532 = vst [vmem:[%s512 + $0x90] sm:$0xff] %v531
              %v533 = vld [vmem:[%s511 + $0xa0] sm:$0xff]
              %534 = vst [vmem:[%s512 + $0xa0] sm:$0xff] %v533
              %v535 = vld [vmem:[%s511 + $0xb0] sm:$0xff]
              %536 = vst [vmem:[%s512 + $0xb0] sm:$0xff] %v535
              %v537 = vld [vmem:[%s511 + $0xc0] sm:$0xff]
              %538 = vst [vmem:[%s512 + $0xc0] sm:$0xff] %v537
              %v539 = vld [vmem:[%s511 + $0xd0] sm:$0xff]
              %540 = vst [vmem:[%s512 + $0xd0] sm:$0xff] %v539
              %v541 = vld [vmem:[%s511 + $0xe0] sm:$0xff]
              %542 = vst [vmem:[%s512 + $0xe0] sm:$0xff] %v541
              %v543 = vld [vmem:[%s511 + $0xf0] sm:$0xff]
              %544 = vst [vmem:[%s512 + $0xf0] sm:$0xff] %v543
              %v545 = vld [vmem:[%s511 + $0x100] sm:$0xff]
              %546 = vst [vmem:[%s512 + $0x100] sm:$0xff] %v545
              %v547 = vld [vmem:[%s511 + $0x110] sm:$0xff]
              %548 = vst [vmem:[%s512 + $0x110] sm:$0xff] %v547
              %v549 = vld [vmem:[%s511 + $0x120] sm:$0xff]
              %550 = vst [vmem:[%s512 + $0x120] sm:$0xff] %v549
              %v551 = vld [vmem:[%s511 + $0x130] sm:$0xff]
              %552 = vst [vmem:[%s512 + $0x130] sm:$0xff] %v551
              %v553 = vld [vmem:[%s511 + $0x140] sm:$0xff]
              %554 = vst [vmem:[%s512 + $0x140] sm:$0xff] %v553
              %v555 = vld [vmem:[%s511 + $0x150] sm:$0xff]
              %556 = vst [vmem:[%s512 + $0x150] sm:$0xff] %v555
              %v557 = vld [vmem:[%s511 + $0x160] sm:$0xff]
              %558 = vst [vmem:[%s512 + $0x160] sm:$0xff] %v557
              %v559 = vld [vmem:[%s511 + $0x170] sm:$0xff]
              %560 = vst [vmem:[%s512 + $0x170] sm:$0xff] %v559
              %v561 = vld [vmem:[%s511 + $0x180] sm:$0xff]
              %562 = vst [vmem:[%s512 + $0x180] sm:$0xff] %v561
              %v563 = vld [vmem:[%s511 + $0x190] sm:$0xff]
              %564 = vst [vmem:[%s512 + $0x190] sm:$0xff] %v563
              %v565 = vld [vmem:[%s511 + $0x1a0] sm:$0xff]
              %566 = vst [vmem:[%s512 + $0x1a0] sm:$0xff] %v565
              %v567 = vld [vmem:[%s511 + $0x1b0] sm:$0xff]
              %568 = vst [vmem:[%s512 + $0x1b0] sm:$0xff] %v567
              %v569 = vld [vmem:[%s511 + $0x1c0] sm:$0xff]
              %570 = vst [vmem:[%s512 + $0x1c0] sm:$0xff] %v569
              %v571 = vld [vmem:[%s511 + $0x1d0] sm:$0xff]
              %572 = vst [vmem:[%s512 + $0x1d0] sm:$0xff] %v571
              %v573 = vld [vmem:[%s511 + $0x1e0] sm:$0xff]
              %574 = vst [vmem:[%s512 + $0x1e0] sm:$0xff] %v573
              %v575 = vld [vmem:[%s511 + $0x1f0] sm:$0xff]
              %576 = vst [vmem:[%s512 + $0x1f0] sm:$0xff] %v575
              %v577 = vld [vmem:[%s511 + $0x200] sm:$0xff]
              %578 = vst [vmem:[%s512 + $0x200] sm:$0xff] %v577
              %v579 = vld [vmem:[%s511 + $0x210] sm:$0xff]
              %580 = vst [vmem:[%s512 + $0x210] sm:$0xff] %v579
              %v581 = vld [vmem:[%s511 + $0x220] sm:$0xff]
              %582 = vst [vmem:[%s512 + $0x220] sm:$0xff] %v581
              %v583 = vld [vmem:[%s511 + $0x230] sm:$0xff]
              %584 = vst [vmem:[%s512 + $0x230] sm:$0xff] %v583
              %v585 = vld [vmem:[%s511 + $0x240] sm:$0xff]
              %586 = vst [vmem:[%s512 + $0x240] sm:$0xff] %v585
              %v587 = vld [vmem:[%s511 + $0x250] sm:$0xff]
              %588 = vst [vmem:[%s512 + $0x250] sm:$0xff] %v587
              %v589 = vld [vmem:[%s511 + $0x260] sm:$0xff]
              %590 = vst [vmem:[%s512 + $0x260] sm:$0xff] %v589
              %v591 = vld [vmem:[%s511 + $0x270] sm:$0xff]
              %592 = vst [vmem:[%s512 + $0x270] sm:$0xff] %v591
              %v593 = vld [vmem:[%s511 + $0x280] sm:$0xff]
              %594 = vst [vmem:[%s512 + $0x280] sm:$0xff] %v593
              %v595 = vld [vmem:[%s511 + $0x290] sm:$0xff]
              %596 = vst [vmem:[%s512 + $0x290] sm:$0xff] %v595
              %v597 = vld [vmem:[%s511 + $0x2a0] sm:$0xff]
              %598 = vst [vmem:[%s512 + $0x2a0] sm:$0xff] %v597
              %v599 = vld [vmem:[%s511 + $0x2b0] sm:$0xff]
              %600 = vst [vmem:[%s512 + $0x2b0] sm:$0xff] %v599
            $region92: #{tpu_custom_call.1} parent=86 // loop_footer
              %s510 = sadd.s32 1, %s506
            $region93: #{tpu_custom_call.1} parent=86 // loop_footer_branch
              %505 = sbr.rel target = $region89
            $region94: #{tpu_custom_call.1} parent=86 // loop_exit
              _
            %s601 = sshll.u32 1, %s500
            %s602 = ssub.s32 %s601, 1
            loop: start=0, step=1, limit=1
            $region95: #{tpu_custom_call.1} parent=86 // loop_pre_header
              _
            $region96: #{tpu_custom_call.1} parent=86 // loop_header
              %s604 = sphi 0, %s608
              %p605 = scmp.ge.s32.totalorder %s604, 1
              %s609 = sphi %s502, %s502
              %s610 = sphi %s504, %s504
            $region97: #{tpu_custom_call.1} parent=86 // loop_header_branch
              %607 = sbr.rel (%p605) target = $region101
            $region98: #{tpu_custom_call.1} parent=86 // loop_body
              %v611 = vld [vmem:[%s609] sm:%s602]
              %612 = vst [vmem:[%s610] sm:%s602] %v611
              %v613 = vld [vmem:[%s609 + $0x10] sm:%s602]
              %614 = vst [vmem:[%s610 + $0x10] sm:%s602] %v613
              %v615 = vld [vmem:[%s609 + $0x20] sm:%s602]
              %616 = vst [vmem:[%s610 + $0x20] sm:%s602] %v615
              %v617 = vld [vmem:[%s609 + $0x30] sm:%s602]
              %618 = vst [vmem:[%s610 + $0x30] sm:%s602] %v617
              %v619 = vld [vmem:[%s609 + $0x40] sm:%s602]
              %620 = vst [vmem:[%s610 + $0x40] sm:%s602] %v619
              %v621 = vld [vmem:[%s609 + $0x50] sm:%s602]
              %622 = vst [vmem:[%s610 + $0x50] sm:%s602] %v621
              %v623 = vld [vmem:[%s609 + $0x60] sm:%s602]
              %624 = vst [vmem:[%s610 + $0x60] sm:%s602] %v623
              %v625 = vld [vmem:[%s609 + $0x70] sm:%s602]
              %626 = vst [vmem:[%s610 + $0x70] sm:%s602] %v625
              %v627 = vld [vmem:[%s609 + $0x80] sm:%s602]
              %628 = vst [vmem:[%s610 + $0x80] sm:%s602] %v627
              %v629 = vld [vmem:[%s609 + $0x90] sm:%s602]
              %630 = vst [vmem:[%s610 + $0x90] sm:%s602] %v629
              %v631 = vld [vmem:[%s609 + $0xa0] sm:%s602]
              %632 = vst [vmem:[%s610 + $0xa0] sm:%s602] %v631
              %v633 = vld [vmem:[%s609 + $0xb0] sm:%s602]
              %634 = vst [vmem:[%s610 + $0xb0] sm:%s602] %v633
              %v635 = vld [vmem:[%s609 + $0xc0] sm:%s602]
              %636 = vst [vmem:[%s610 + $0xc0] sm:%s602] %v635
              %v637 = vld [vmem:[%s609 + $0xd0] sm:%s602]
              %638 = vst [vmem:[%s610 + $0xd0] sm:%s602] %v637
              %v639 = vld [vmem:[%s609 + $0xe0] sm:%s602]
              %640 = vst [vmem:[%s610 + $0xe0] sm:%s602] %v639
              %v641 = vld [vmem:[%s609 + $0xf0] sm:%s602]
              %642 = vst [vmem:[%s610 + $0xf0] sm:%s602] %v641
              %v643 = vld [vmem:[%s609 + $0x100] sm:%s602]
              %644 = vst [vmem:[%s610 + $0x100] sm:%s602] %v643
              %v645 = vld [vmem:[%s609 + $0x110] sm:%s602]
              %646 = vst [vmem:[%s610 + $0x110] sm:%s602] %v645
              %v647 = vld [vmem:[%s609 + $0x120] sm:%s602]
              %648 = vst [vmem:[%s610 + $0x120] sm:%s602] %v647
              %v649 = vld [vmem:[%s609 + $0x130] sm:%s602]
              %650 = vst [vmem:[%s610 + $0x130] sm:%s602] %v649
              %v651 = vld [vmem:[%s609 + $0x140] sm:%s602]
              %652 = vst [vmem:[%s610 + $0x140] sm:%s602] %v651
              %v653 = vld [vmem:[%s609 + $0x150] sm:%s602]
              %654 = vst [vmem:[%s610 + $0x150] sm:%s602] %v653
              %v655 = vld [vmem:[%s609 + $0x160] sm:%s602]
              %656 = vst [vmem:[%s610 + $0x160] sm:%s602] %v655
              %v657 = vld [vmem:[%s609 + $0x170] sm:%s602]
              %658 = vst [vmem:[%s610 + $0x170] sm:%s602] %v657
              %v659 = vld [vmem:[%s609 + $0x180] sm:%s602]
              %660 = vst [vmem:[%s610 + $0x180] sm:%s602] %v659
              %v661 = vld [vmem:[%s609 + $0x190] sm:%s602]
              %662 = vst [vmem:[%s610 + $0x190] sm:%s602] %v661
              %v663 = vld [vmem:[%s609 + $0x1a0] sm:%s602]
              %664 = vst [vmem:[%s610 + $0x1a0] sm:%s602] %v663
              %v665 = vld [vmem:[%s609 + $0x1b0] sm:%s602]
              %666 = vst [vmem:[%s610 + $0x1b0] sm:%s602] %v665
              %v667 = vld [vmem:[%s609 + $0x1c0] sm:%s602]
              %668 = vst [vmem:[%s610 + $0x1c0] sm:%s602] %v667
              %v669 = vld [vmem:[%s609 + $0x1d0] sm:%s602]
              %670 = vst [vmem:[%s610 + $0x1d0] sm:%s602] %v669
              %v671 = vld [vmem:[%s609 + $0x1e0] sm:%s602]
              %672 = vst [vmem:[%s610 + $0x1e0] sm:%s602] %v671
              %v673 = vld [vmem:[%s609 + $0x1f0] sm:%s602]
              %674 = vst [vmem:[%s610 + $0x1f0] sm:%s602] %v673
              %v675 = vld [vmem:[%s609 + $0x200] sm:%s602]
              %676 = vst [vmem:[%s610 + $0x200] sm:%s602] %v675
              %v677 = vld [vmem:[%s609 + $0x210] sm:%s602]
              %678 = vst [vmem:[%s610 + $0x210] sm:%s602] %v677
              %v679 = vld [vmem:[%s609 + $0x220] sm:%s602]
              %680 = vst [vmem:[%s610 + $0x220] sm:%s602] %v679
              %v681 = vld [vmem:[%s609 + $0x230] sm:%s602]
              %682 = vst [vmem:[%s610 + $0x230] sm:%s602] %v681
              %v683 = vld [vmem:[%s609 + $0x240] sm:%s602]
              %684 = vst [vmem:[%s610 + $0x240] sm:%s602] %v683
              %v685 = vld [vmem:[%s609 + $0x250] sm:%s602]
              %686 = vst [vmem:[%s610 + $0x250] sm:%s602] %v685
              %v687 = vld [vmem:[%s609 + $0x260] sm:%s602]
              %688 = vst [vmem:[%s610 + $0x260] sm:%s602] %v687
              %v689 = vld [vmem:[%s609 + $0x270] sm:%s602]
              %690 = vst [vmem:[%s610 + $0x270] sm:%s602] %v689
              %v691 = vld [vmem:[%s609 + $0x280] sm:%s602]
              %692 = vst [vmem:[%s610 + $0x280] sm:%s602] %v691
              %v693 = vld [vmem:[%s609 + $0x290] sm:%s602]
              %694 = vst [vmem:[%s610 + $0x290] sm:%s602] %v693
              %v695 = vld [vmem:[%s609 + $0x2a0] sm:%s602]
              %696 = vst [vmem:[%s610 + $0x2a0] sm:%s602] %v695
              %v697 = vld [vmem:[%s609 + $0x2b0] sm:%s602]
              %698 = vst [vmem:[%s610 + $0x2b0] sm:%s602] %v697
            $region99: #{tpu_custom_call.1} parent=86 // loop_footer
              %s608 = sadd.s32 1, %s604
            $region100: #{tpu_custom_call.1} parent=86 // loop_footer_branch
              %603 = sbr.rel target = $region96
            $region101: #{tpu_custom_call.1} parent=86 // loop_exit
              _
          $region87: #{tpu_custom_call.1} parent=71 // pred_fallthru
            _
        $region72: #{tpu_custom_call.1} parent=59 // pred_fallthru
          _
        // Predicated region
        $region73: #{tpu_custom_call.1} parent=59 // pred_check
          %p394 = pneg %p390
        $region74: #{tpu_custom_call.1} parent=59 // pred_check_branch
          %396 = sbr.rel (%p394) target = $region76
        $region75: #{tpu_custom_call.1} parent=59 // pred_region
          %s397 = sshll.u32 1, 11
          %s398 = ssub.s32 %s397, 1
          loop: start=0, step=1, limit=1
          $region77: #{tpu_custom_call.1} parent=75 // loop_pre_header
            _
          $region78: #{tpu_custom_call.1} parent=75 // loop_header
            %s400 = sphi 0, %s404
            %p401 = scmp.ge.s32.totalorder %s400, 1
            %s405 = sphi %s388, %s388
            %s406 = sphi [#allocation2], [#allocation2]
          $region79: #{tpu_custom_call.1} parent=75 // loop_header_branch
            %403 = sbr.rel (%p401) target = $region83
          $region80: #{tpu_custom_call.1} parent=75 // loop_body
            %v407 = vld [vmem:[%s405] sm:%s398]
            %408 = vst [vmem:[%s406] sm:%s398] %v407
            %v409 = vld [vmem:[%s405 + $0x10] sm:%s398]
            %410 = vst [vmem:[%s406 + $0x10] sm:%s398] %v409
            %v411 = vld [vmem:[%s405 + $0x20] sm:%s398]
            %412 = vst [vmem:[%s406 + $0x20] sm:%s398] %v411
            %v413 = vld [vmem:[%s405 + $0x30] sm:%s398]
            %414 = vst [vmem:[%s406 + $0x30] sm:%s398] %v413
            %v415 = vld [vmem:[%s405 + $0x40] sm:%s398]
            %416 = vst [vmem:[%s406 + $0x40] sm:%s398] %v415
            %v417 = vld [vmem:[%s405 + $0x50] sm:%s398]
            %418 = vst [vmem:[%s406 + $0x50] sm:%s398] %v417
            %v419 = vld [vmem:[%s405 + $0x60] sm:%s398]
            %420 = vst [vmem:[%s406 + $0x60] sm:%s398] %v419
            %v421 = vld [vmem:[%s405 + $0x70] sm:%s398]
            %422 = vst [vmem:[%s406 + $0x70] sm:%s398] %v421
            %v423 = vld [vmem:[%s405 + $0x80] sm:%s398]
            %424 = vst [vmem:[%s406 + $0x80] sm:%s398] %v423
            %v425 = vld [vmem:[%s405 + $0x90] sm:%s398]
            %426 = vst [vmem:[%s406 + $0x90] sm:%s398] %v425
            %v427 = vld [vmem:[%s405 + $0xa0] sm:%s398]
            %428 = vst [vmem:[%s406 + $0xa0] sm:%s398] %v427
            %v429 = vld [vmem:[%s405 + $0xb0] sm:%s398]
            %430 = vst [vmem:[%s406 + $0xb0] sm:%s398] %v429
            %v431 = vld [vmem:[%s405 + $0xc0] sm:%s398]
            %432 = vst [vmem:[%s406 + $0xc0] sm:%s398] %v431
            %v433 = vld [vmem:[%s405 + $0xd0] sm:%s398]
            %434 = vst [vmem:[%s406 + $0xd0] sm:%s398] %v433
            %v435 = vld [vmem:[%s405 + $0xe0] sm:%s398]
            %436 = vst [vmem:[%s406 + $0xe0] sm:%s398] %v435
            %v437 = vld [vmem:[%s405 + $0xf0] sm:%s398]
            %438 = vst [vmem:[%s406 + $0xf0] sm:%s398] %v437
            %v439 = vld [vmem:[%s405 + $0x100] sm:%s398]
            %440 = vst [vmem:[%s406 + $0x100] sm:%s398] %v439
            %v441 = vld [vmem:[%s405 + $0x110] sm:%s398]
            %442 = vst [vmem:[%s406 + $0x110] sm:%s398] %v441
            %v443 = vld [vmem:[%s405 + $0x120] sm:%s398]
            %444 = vst [vmem:[%s406 + $0x120] sm:%s398] %v443
            %v445 = vld [vmem:[%s405 + $0x130] sm:%s398]
            %446 = vst [vmem:[%s406 + $0x130] sm:%s398] %v445
            %v447 = vld [vmem:[%s405 + $0x140] sm:%s398]
            %448 = vst [vmem:[%s406 + $0x140] sm:%s398] %v447
            %v449 = vld [vmem:[%s405 + $0x150] sm:%s398]
            %450 = vst [vmem:[%s406 + $0x150] sm:%s398] %v449
            %v451 = vld [vmem:[%s405 + $0x160] sm:%s398]
            %452 = vst [vmem:[%s406 + $0x160] sm:%s398] %v451
            %v453 = vld [vmem:[%s405 + $0x170] sm:%s398]
            %454 = vst [vmem:[%s406 + $0x170] sm:%s398] %v453
            %v455 = vld [vmem:[%s405 + $0x180] sm:%s398]
            %456 = vst [vmem:[%s406 + $0x180] sm:%s398] %v455
            %v457 = vld [vmem:[%s405 + $0x190] sm:%s398]
            %458 = vst [vmem:[%s406 + $0x190] sm:%s398] %v457
            %v459 = vld [vmem:[%s405 + $0x1a0] sm:%s398]
            %460 = vst [vmem:[%s406 + $0x1a0] sm:%s398] %v459
            %v461 = vld [vmem:[%s405 + $0x1b0] sm:%s398]
            %462 = vst [vmem:[%s406 + $0x1b0] sm:%s398] %v461
            %v463 = vld [vmem:[%s405 + $0x1c0] sm:%s398]
            %464 = vst [vmem:[%s406 + $0x1c0] sm:%s398] %v463
            %v465 = vld [vmem:[%s405 + $0x1d0] sm:%s398]
            %466 = vst [vmem:[%s406 + $0x1d0] sm:%s398] %v465
            %v467 = vld [vmem:[%s405 + $0x1e0] sm:%s398]
            %468 = vst [vmem:[%s406 + $0x1e0] sm:%s398] %v467
            %v469 = vld [vmem:[%s405 + $0x1f0] sm:%s398]
            %470 = vst [vmem:[%s406 + $0x1f0] sm:%s398] %v469
            %v471 = vld [vmem:[%s405 + $0x200] sm:%s398]
            %472 = vst [vmem:[%s406 + $0x200] sm:%s398] %v471
            %v473 = vld [vmem:[%s405 + $0x210] sm:%s398]
            %474 = vst [vmem:[%s406 + $0x210] sm:%s398] %v473
            %v475 = vld [vmem:[%s405 + $0x220] sm:%s398]
            %476 = vst [vmem:[%s406 + $0x220] sm:%s398] %v475
            %v477 = vld [vmem:[%s405 + $0x230] sm:%s398]
            %478 = vst [vmem:[%s406 + $0x230] sm:%s398] %v477
            %v479 = vld [vmem:[%s405 + $0x240] sm:%s398]
            %480 = vst [vmem:[%s406 + $0x240] sm:%s398] %v479
            %v481 = vld [vmem:[%s405 + $0x250] sm:%s398]
            %482 = vst [vmem:[%s406 + $0x250] sm:%s398] %v481
            %v483 = vld [vmem:[%s405 + $0x260] sm:%s398]
            %484 = vst [vmem:[%s406 + $0x260] sm:%s398] %v483
            %v485 = vld [vmem:[%s405 + $0x270] sm:%s398]
            %486 = vst [vmem:[%s406 + $0x270] sm:%s398] %v485
            %v487 = vld [vmem:[%s405 + $0x280] sm:%s398]
            %488 = vst [vmem:[%s406 + $0x280] sm:%s398] %v487
            %v489 = vld [vmem:[%s405 + $0x290] sm:%s398]
            %490 = vst [vmem:[%s406 + $0x290] sm:%s398] %v489
            %v491 = vld [vmem:[%s405 + $0x2a0] sm:%s398]
            %492 = vst [vmem:[%s406 + $0x2a0] sm:%s398] %v491
            %v493 = vld [vmem:[%s405 + $0x2b0] sm:%s398]
            %494 = vst [vmem:[%s406 + $0x2b0] sm:%s398] %v493
          $region81: #{tpu_custom_call.1} parent=75 // loop_footer
            %s404 = sadd.s32 1, %s400
          $region82: #{tpu_custom_call.1} parent=75 // loop_footer_branch
            %399 = sbr.rel target = $region78
          $region83: #{tpu_custom_call.1} parent=75 // loop_exit
            _
        $region76: #{tpu_custom_call.1} parent=59 // pred_fallthru
          _
        // Predicated region
        $region102: #{tpu_custom_call.1} parent=59 // pred_check
          _
        $region103: #{tpu_custom_call.1} parent=59 // pred_check_branch
          %701 = sbr.rel (0) target = $region105
        $region104: #{tpu_custom_call.1} parent=59 // pred_region
          %702 = vsyncadd [#allocation3], 7744
        $region105: #{tpu_custom_call.1} parent=59 // pred_fallthru
          _
        %s703 = smul.u32 11, 2
        %s704 = smul.u32 %s703, 2
        %s705 = smul.u32 %s704, 11
        %s706 = smul.u32 %s705, 1
        %s707 = sshll.u32 %s706, 4
        %708 = dma.done [#allocation3], %s707
        %v709 = vld [vmem:[#allocation2] sm:$0xff]
        %v710 = vld [vmem:[#allocation2 + $0x8] sm:$0x3]
        %v711 = vld [vmem:[#allocation2 + $0x40] sm:$0xff]
        %v712 = vld [vmem:[#allocation2 + $0x48] sm:$0x3]
        %v713 = vld [vmem:[#allocation2 + $0x80] sm:$0xff]
        %v714 = vld [vmem:[#allocation2 + $0x88] sm:$0x3]
        %v715 = vld [vmem:[#allocation2 + $0xc0] sm:$0xff]
        %v716 = vld [vmem:[#allocation2 + $0xc8] sm:$0x3]
        %v717 = vld [vmem:[#allocation2 + $0x100] sm:$0xff]
        %v718 = vld [vmem:[#allocation2 + $0x108] sm:$0x3]
        %v719 = vld [vmem:[#allocation2 + $0x140] sm:$0xff]
        %v720 = vld [vmem:[#allocation2 + $0x148] sm:$0x3]
        %v721 = vld [vmem:[#allocation2 + $0x180] sm:$0xff]
        %v722 = vld [vmem:[#allocation2 + $0x188] sm:$0x3]
        %v723 = vld [vmem:[#allocation2 + $0x1c0] sm:$0xff]
        %v724 = vld [vmem:[#allocation2 + $0x1c8] sm:$0x3]
        %v725 = vld [vmem:[#allocation2 + $0x200] sm:$0xff]
        %v726 = vld [vmem:[#allocation2 + $0x208] sm:$0x3]
        %v727 = vld [vmem:[#allocation2 + $0x240] sm:$0xff]
        %v728 = vld [vmem:[#allocation2 + $0x248] sm:$0x3]
        %v749 = vcombine.high %v709, %v709
        %v751 = vunpack.c.l.s4 1983009808
        %v752 = vunpack.c.0.s8 %v751
        %v753 = vlaneseq
        %v754 = vshrl.u32 %v753, 7
        %v755 = vsub.s32 %v752, %v754
        %v756 = vrot.slane %v709, %v755
        %v758 = vunpack.c.l.s4 1983009808
        %v759 = vunpack.c.0.s8 %v758
        %v760 = vlaneseq
        %v761 = vshrl.u32 %v760, 7
        %v762 = vsub.s32 %v759, %v761
        %v763 = vrot.slane %v749, %v762
        %v764 = vcombine.high %v756, %v756
        %v765 = vcombine.high %v763, %v763
        %v767 = vunpack.c.l.s4 1983009808
        %v768 = vunpack.c.0.s8 %v767
        %v769 = vlaneseq
        %v770 = vshrl.u32 %v769, 7
        %v771 = vsub.s32 %v768, %v770
        %v772 = vrot.slane %v710, %v771
        %v773 = vcombine.high %v711, %v711
        %v775 = vunpack.c.l.s4 1983009808
        %v776 = vunpack.c.0.s8 %v775
        %v777 = vlaneseq
        %v778 = vshrl.u32 %v777, 7
        %v779 = vsub.s32 %v776, %v778
        %v780 = vrot.slane %v711, %v779
        %v782 = vunpack.c.l.s4 1983009808
        %v783 = vunpack.c.0.s8 %v782
        %v784 = vlaneseq
        %v785 = vshrl.u32 %v784, 7
        %v786 = vsub.s32 %v783, %v785
        %v787 = vrot.slane %v773, %v786
        %v788 = vcombine.high %v780, %v780
        %v789 = vcombine.high %v787, %v787
        %v791 = vunpack.c.l.s4 1983009808
        %v792 = vunpack.c.0.s8 %v791
        %v793 = vlaneseq
        %v794 = vshrl.u32 %v793, 7
        %v795 = vsub.s32 %v792, %v794
        %v796 = vrot.slane %v712, %v795
        %v797 = vcombine.high %v713, %v713
        %v799 = vunpack.c.l.s4 1983009808
        %v800 = vunpack.c.0.s8 %v799
        %v801 = vlaneseq
        %v802 = vshrl.u32 %v801, 7
        %v803 = vsub.s32 %v800, %v802
        %v804 = vrot.slane %v713, %v803
        %v806 = vunpack.c.l.s4 1983009808
        %v807 = vunpack.c.0.s8 %v806
        %v808 = vlaneseq
        %v809 = vshrl.u32 %v808, 7
        %v810 = vsub.s32 %v807, %v809
        %v811 = vrot.slane %v797, %v810
        %v812 = vcombine.high %v804, %v804
        %v813 = vcombine.high %v811, %v811
        %v815 = vunpack.c.l.s4 1983009808
        %v816 = vunpack.c.0.s8 %v815
        %v817 = vlaneseq
        %v818 = vshrl.u32 %v817, 7
        %v819 = vsub.s32 %v816, %v818
        %v820 = vrot.slane %v714, %v819
        %v821 = vcombine.high %v715, %v715
        %v823 = vunpack.c.l.s4 1983009808
        %v824 = vunpack.c.0.s8 %v823
        %v825 = vlaneseq
        %v826 = vshrl.u32 %v825, 7
        %v827 = vsub.s32 %v824, %v826
        %v828 = vrot.slane %v715, %v827
        %v830 = vunpack.c.l.s4 1983009808
        %v831 = vunpack.c.0.s8 %v830
        %v832 = vlaneseq
        %v833 = vshrl.u32 %v832, 7
        %v834 = vsub.s32 %v831, %v833
        %v835 = vrot.slane %v821, %v834
        %v836 = vcombine.high %v828, %v828
        %v837 = vcombine.high %v835, %v835
        %v839 = vunpack.c.l.s4 1983009808
        %v840 = vunpack.c.0.s8 %v839
        %v841 = vlaneseq
        %v842 = vshrl.u32 %v841, 7
        %v843 = vsub.s32 %v840, %v842
        %v844 = vrot.slane %v716, %v843
        %v845 = vcombine.high %v717, %v717
        %v847 = vunpack.c.l.s4 1983009808
        %v848 = vunpack.c.0.s8 %v847
        %v849 = vlaneseq
        %v850 = vshrl.u32 %v849, 7
        %v851 = vsub.s32 %v848, %v850
        %v852 = vrot.slane %v717, %v851
        %v854 = vunpack.c.l.s4 1983009808
        %v855 = vunpack.c.0.s8 %v854
        %v856 = vlaneseq
        %v857 = vshrl.u32 %v856, 7
        %v858 = vsub.s32 %v855, %v857
        %v859 = vrot.slane %v845, %v858
        %v860 = vcombine.high %v852, %v852
        %v861 = vcombine.high %v859, %v859
        %v863 = vunpack.c.l.s4 1983009808
        %v864 = vunpack.c.0.s8 %v863
        %v865 = vlaneseq
        %v866 = vshrl.u32 %v865, 7
        %v867 = vsub.s32 %v864, %v866
        %v868 = vrot.slane %v718, %v867
        %v869 = vcombine.high %v719, %v719
        %v871 = vunpack.c.l.s4 1983009808
        %v872 = vunpack.c.0.s8 %v871
        %v873 = vlaneseq
        %v874 = vshrl.u32 %v873, 7
        %v875 = vsub.s32 %v872, %v874
        %v876 = vrot.slane %v719, %v875
        %v878 = vunpack.c.l.s4 1983009808
        %v879 = vunpack.c.0.s8 %v878
        %v880 = vlaneseq
        %v881 = vshrl.u32 %v880, 7
        %v882 = vsub.s32 %v879, %v881
        %v883 = vrot.slane %v869, %v882
        %v884 = vcombine.high %v876, %v876
        %v885 = vcombine.high %v883, %v883
        %v887 = vunpack.c.l.s4 1983009808
        %v888 = vunpack.c.0.s8 %v887
        %v889 = vlaneseq
        %v890 = vshrl.u32 %v889, 7
        %v891 = vsub.s32 %v888, %v890
        %v892 = vrot.slane %v720, %v891
        %v893 = vcombine.high %v721, %v721
        %v895 = vunpack.c.l.s4 1983009808
        %v896 = vunpack.c.0.s8 %v895
        %v897 = vlaneseq
        %v898 = vshrl.u32 %v897, 7
        %v899 = vsub.s32 %v896, %v898
        %v900 = vrot.slane %v721, %v899
        %v902 = vunpack.c.l.s4 1983009808
        %v903 = vunpack.c.0.s8 %v902
        %v904 = vlaneseq
        %v905 = vshrl.u32 %v904, 7
        %v906 = vsub.s32 %v903, %v905
        %v907 = vrot.slane %v893, %v906
        %v908 = vcombine.high %v900, %v900
        %v909 = vcombine.high %v907, %v907
        %v911 = vunpack.c.l.s4 1983009808
        %v912 = vunpack.c.0.s8 %v911
        %v913 = vlaneseq
        %v914 = vshrl.u32 %v913, 7
        %v915 = vsub.s32 %v912, %v914
        %v916 = vrot.slane %v722, %v915
        %v917 = vcombine.high %v723, %v723
        %v919 = vunpack.c.l.s4 1983009808
        %v920 = vunpack.c.0.s8 %v919
        %v921 = vlaneseq
        %v922 = vshrl.u32 %v921, 7
        %v923 = vsub.s32 %v920, %v922
        %v924 = vrot.slane %v723, %v923
        %v926 = vunpack.c.l.s4 1983009808
        %v927 = vunpack.c.0.s8 %v926
        %v928 = vlaneseq
        %v929 = vshrl.u32 %v928, 7
        %v930 = vsub.s32 %v927, %v929
        %v931 = vrot.slane %v917, %v930
        %v932 = vcombine.high %v924, %v924
        %v933 = vcombine.high %v931, %v931
        %v935 = vunpack.c.l.s4 1983009808
        %v936 = vunpack.c.0.s8 %v935
        %v937 = vlaneseq
        %v938 = vshrl.u32 %v937, 7
        %v939 = vsub.s32 %v936, %v938
        %v940 = vrot.slane %v724, %v939
        %v941 = vcombine.high %v725, %v725
        %v943 = vunpack.c.l.s4 1983009808
        %v944 = vunpack.c.0.s8 %v943
        %v945 = vlaneseq
        %v946 = vshrl.u32 %v945, 7
        %v947 = vsub.s32 %v944, %v946
        %v948 = vrot.slane %v725, %v947
        %v950 = vunpack.c.l.s4 1983009808
        %v951 = vunpack.c.0.s8 %v950
        %v952 = vlaneseq
        %v953 = vshrl.u32 %v952, 7
        %v954 = vsub.s32 %v951, %v953
        %v955 = vrot.slane %v941, %v954
        %v956 = vcombine.high %v948, %v948
        %v957 = vcombine.high %v955, %v955
        %v959 = vunpack.c.l.s4 1983009808
        %v960 = vunpack.c.0.s8 %v959
        %v961 = vlaneseq
        %v962 = vshrl.u32 %v961, 7
        %v963 = vsub.s32 %v960, %v962
        %v964 = vrot.slane %v726, %v963
        %v965 = vcombine.high %v727, %v727
        %v967 = vunpack.c.l.s4 1983009808
        %v968 = vunpack.c.0.s8 %v967
        %v969 = vlaneseq
        %v970 = vshrl.u32 %v969, 7
        %v971 = vsub.s32 %v968, %v970
        %v972 = vrot.slane %v727, %v971
        %v974 = vunpack.c.l.s4 1983009808
        %v975 = vunpack.c.0.s8 %v974
        %v976 = vlaneseq
        %v977 = vshrl.u32 %v976, 7
        %v978 = vsub.s32 %v975, %v977
        %v979 = vrot.slane %v965, %v978
        %v980 = vcombine.high %v972, %v972
        %v981 = vcombine.high %v979, %v979
        %v983 = vunpack.c.l.s4 1983009808
        %v984 = vunpack.c.0.s8 %v983
        %v985 = vlaneseq
        %v986 = vshrl.u32 %v985, 7
        %v987 = vsub.s32 %v984, %v986
        %v988 = vrot.slane %v728, %v987
        %v989 = vld [vmem:[%s1] sm:$0xff]
        %v990 = vld [vmem:[%s1 + $0x8] sm:$0xff]
        %v991 = vld [vmem:[%s1 + $0x10] sm:$0xff]
        %v992 = vld [vmem:[%s1 + $0x18] sm:$0xff]
        %v993 = vld [vmem:[%s1 + $0x20] sm:$0xff]
        %v994 = vld [vmem:[%s1 + $0x28] sm:$0xff]
        %v995 = vld [vmem:[%s1 + $0x30] sm:$0xff]
        %v996 = vld [vmem:[%s1 + $0x38] sm:$0xff]
        %v997 = vld [vmem:[%s1 + $0x40] sm:$0xff]
        %v998 = vld [vmem:[%s1 + $0x48] sm:$0xff]
        %v999 = vld [vmem:[%s1 + $0x50] sm:$0xff]
        %v1000 = vld [vmem:[%s1 + $0x58] sm:$0xff]
        %v1001 = vld [vmem:[%s1 + $0x60] sm:$0xff]
        %v1002 = vld [vmem:[%s1 + $0x68] sm:$0xff]
        %v1003 = vld [vmem:[%s1 + $0x70] sm:$0xff]
        %v1004 = vld [vmem:[%s1 + $0x78] sm:$0xff]
        %s1005 = scalar_lea.vmem [#allocation2], 16
        %v1006 = vld [vmem:[%s1005] sm:$0xff]
        %v1007 = vld [vmem:[%s1005 + $0x8] sm:$0x3]
        %v1008 = vld [vmem:[%s1005 + $0x40] sm:$0xff]
        %v1009 = vld [vmem:[%s1005 + $0x48] sm:$0x3]
        %v1010 = vld [vmem:[%s1005 + $0x80] sm:$0xff]
        %v1011 = vld [vmem:[%s1005 + $0x88] sm:$0x3]
        %v1012 = vld [vmem:[%s1005 + $0xc0] sm:$0xff]
        %v1013 = vld [vmem:[%s1005 + $0xc8] sm:$0x3]
        %v1014 = vld [vmem:[%s1005 + $0x100] sm:$0xff]
        %v1015 = vld [vmem:[%s1005 + $0x108] sm:$0x3]
        %v1016 = vld [vmem:[%s1005 + $0x140] sm:$0xff]
        %v1017 = vld [vmem:[%s1005 + $0x148] sm:$0x3]
        %v1018 = vld [vmem:[%s1005 + $0x180] sm:$0xff]
        %v1019 = vld [vmem:[%s1005 + $0x188] sm:$0x3]
        %v1020 = vld [vmem:[%s1005 + $0x1c0] sm:$0xff]
        %v1021 = vld [vmem:[%s1005 + $0x1c8] sm:$0x3]
        %v1022 = vld [vmem:[%s1005 + $0x200] sm:$0xff]
        %v1023 = vld [vmem:[%s1005 + $0x208] sm:$0x3]
        %v1024 = vld [vmem:[%s1005 + $0x240] sm:$0xff]
        %v1025 = vld [vmem:[%s1005 + $0x248] sm:$0x3]
        %v1046 = vcombine.high %v1006, %v1006
        %v1048 = vunpack.c.l.s4 1983009808
        %v1049 = vunpack.c.0.s8 %v1048
        %v1050 = vlaneseq
        %v1051 = vshrl.u32 %v1050, 7
        %v1052 = vsub.s32 %v1049, %v1051
        %v1053 = vrot.slane %v1006, %v1052
        %v1055 = vunpack.c.l.s4 1983009808
        %v1056 = vunpack.c.0.s8 %v1055
        %v1057 = vlaneseq
        %v1058 = vshrl.u32 %v1057, 7
        %v1059 = vsub.s32 %v1056, %v1058
        %v1060 = vrot.slane %v1046, %v1059
        %v1061 = vcombine.high %v1053, %v1053
        %v1062 = vcombine.high %v1060, %v1060
        %v1064 = vunpack.c.l.s4 1983009808
        %v1065 = vunpack.c.0.s8 %v1064
        %v1066 = vlaneseq
        %v1067 = vshrl.u32 %v1066, 7
        %v1068 = vsub.s32 %v1065, %v1067
        %v1069 = vrot.slane %v1007, %v1068
        %v1070 = vcombine.high %v1008, %v1008
        %v1072 = vunpack.c.l.s4 1983009808
        %v1073 = vunpack.c.0.s8 %v1072
        %v1074 = vlaneseq
        %v1075 = vshrl.u32 %v1074, 7
        %v1076 = vsub.s32 %v1073, %v1075
        %v1077 = vrot.slane %v1008, %v1076
        %v1079 = vunpack.c.l.s4 1983009808
        %v1080 = vunpack.c.0.s8 %v1079
        %v1081 = vlaneseq
        %v1082 = vshrl.u32 %v1081, 7
        %v1083 = vsub.s32 %v1080, %v1082
        %v1084 = vrot.slane %v1070, %v1083
        %v1085 = vcombine.high %v1077, %v1077
        %v1086 = vcombine.high %v1084, %v1084
        %v1088 = vunpack.c.l.s4 1983009808
        %v1089 = vunpack.c.0.s8 %v1088
        %v1090 = vlaneseq
        %v1091 = vshrl.u32 %v1090, 7
        %v1092 = vsub.s32 %v1089, %v1091
        %v1093 = vrot.slane %v1009, %v1092
        %v1094 = vcombine.high %v1010, %v1010
        %v1096 = vunpack.c.l.s4 1983009808
        %v1097 = vunpack.c.0.s8 %v1096
        %v1098 = vlaneseq
        %v1099 = vshrl.u32 %v1098, 7
        %v1100 = vsub.s32 %v1097, %v1099
        %v1101 = vrot.slane %v1010, %v1100
        %v1103 = vunpack.c.l.s4 1983009808
        %v1104 = vunpack.c.0.s8 %v1103
        %v1105 = vlaneseq
        %v1106 = vshrl.u32 %v1105, 7
        %v1107 = vsub.s32 %v1104, %v1106
        %v1108 = vrot.slane %v1094, %v1107
        %v1109 = vcombine.high %v1101, %v1101
        %v1110 = vcombine.high %v1108, %v1108
        %v1112 = vunpack.c.l.s4 1983009808
        %v1113 = vunpack.c.0.s8 %v1112
        %v1114 = vlaneseq
        %v1115 = vshrl.u32 %v1114, 7
        %v1116 = vsub.s32 %v1113, %v1115
        %v1117 = vrot.slane %v1011, %v1116
        %v1118 = vcombine.high %v1012, %v1012
        %v1120 = vunpack.c.l.s4 1983009808
        %v1121 = vunpack.c.0.s8 %v1120
        %v1122 = vlaneseq
        %v1123 = vshrl.u32 %v1122, 7
        %v1124 = vsub.s32 %v1121, %v1123
        %v1125 = vrot.slane %v1012, %v1124
        %v1127 = vunpack.c.l.s4 1983009808
        %v1128 = vunpack.c.0.s8 %v1127
        %v1129 = vlaneseq
        %v1130 = vshrl.u32 %v1129, 7
        %v1131 = vsub.s32 %v1128, %v1130
        %v1132 = vrot.slane %v1118, %v1131
        %v1133 = vcombine.high %v1125, %v1125
        %v1134 = vcombine.high %v1132, %v1132
        %v1136 = vunpack.c.l.s4 1983009808
        %v1137 = vunpack.c.0.s8 %v1136
        %v1138 = vlaneseq
        %v1139 = vshrl.u32 %v1138, 7
        %v1140 = vsub.s32 %v1137, %v1139
        %v1141 = vrot.slane %v1013, %v1140
        %v1142 = vcombine.high %v1014, %v1014
        %v1144 = vunpack.c.l.s4 1983009808
        %v1145 = vunpack.c.0.s8 %v1144
        %v1146 = vlaneseq
        %v1147 = vshrl.u32 %v1146, 7
        %v1148 = vsub.s32 %v1145, %v1147
        %v1149 = vrot.slane %v1014, %v1148
        %v1151 = vunpack.c.l.s4 1983009808
        %v1152 = vunpack.c.0.s8 %v1151
        %v1153 = vlaneseq
        %v1154 = vshrl.u32 %v1153, 7
        %v1155 = vsub.s32 %v1152, %v1154
        %v1156 = vrot.slane %v1142, %v1155
        %v1157 = vcombine.high %v1149, %v1149
        %v1158 = vcombine.high %v1156, %v1156
        %v1160 = vunpack.c.l.s4 1983009808
        %v1161 = vunpack.c.0.s8 %v1160
        %v1162 = vlaneseq
        %v1163 = vshrl.u32 %v1162, 7
        %v1164 = vsub.s32 %v1161, %v1163
        %v1165 = vrot.slane %v1015, %v1164
        %v1166 = vcombine.high %v1016, %v1016
        %v1168 = vunpack.c.l.s4 1983009808
        %v1169 = vunpack.c.0.s8 %v1168
        %v1170 = vlaneseq
        %v1171 = vshrl.u32 %v1170, 7
        %v1172 = vsub.s32 %v1169, %v1171
        %v1173 = vrot.slane %v1016, %v1172
        %v1175 = vunpack.c.l.s4 1983009808
        %v1176 = vunpack.c.0.s8 %v1175
        %v1177 = vlaneseq
        %v1178 = vshrl.u32 %v1177, 7
        %v1179 = vsub.s32 %v1176, %v1178
        %v1180 = vrot.slane %v1166, %v1179
        %v1181 = vcombine.high %v1173, %v1173
        %v1182 = vcombine.high %v1180, %v1180
        %v1184 = vunpack.c.l.s4 1983009808
        %v1185 = vunpack.c.0.s8 %v1184
        %v1186 = vlaneseq
        %v1187 = vshrl.u32 %v1186, 7
        %v1188 = vsub.s32 %v1185, %v1187
        %v1189 = vrot.slane %v1017, %v1188
        %v1190 = vcombine.high %v1018, %v1018
        %v1192 = vunpack.c.l.s4 1983009808
        %v1193 = vunpack.c.0.s8 %v1192
        %v1194 = vlaneseq
        %v1195 = vshrl.u32 %v1194, 7
        %v1196 = vsub.s32 %v1193, %v1195
        %v1197 = vrot.slane %v1018, %v1196
        %v1199 = vunpack.c.l.s4 1983009808
        %v1200 = vunpack.c.0.s8 %v1199
        %v1201 = vlaneseq
        %v1202 = vshrl.u32 %v1201, 7
        %v1203 = vsub.s32 %v1200, %v1202
        %v1204 = vrot.slane %v1190, %v1203
        %v1205 = vcombine.high %v1197, %v1197
        %v1206 = vcombine.high %v1204, %v1204
        %v1208 = vunpack.c.l.s4 1983009808
        %v1209 = vunpack.c.0.s8 %v1208
        %v1210 = vlaneseq
        %v1211 = vshrl.u32 %v1210, 7
        %v1212 = vsub.s32 %v1209, %v1211
        %v1213 = vrot.slane %v1019, %v1212
        %v1214 = vcombine.high %v1020, %v1020
        %v1216 = vunpack.c.l.s4 1983009808
        %v1217 = vunpack.c.0.s8 %v1216
        %v1218 = vlaneseq
        %v1219 = vshrl.u32 %v1218, 7
        %v1220 = vsub.s32 %v1217, %v1219
        %v1221 = vrot.slane %v1020, %v1220
        %v1223 = vunpack.c.l.s4 1983009808
        %v1224 = vunpack.c.0.s8 %v1223
        %v1225 = vlaneseq
        %v1226 = vshrl.u32 %v1225, 7
        %v1227 = vsub.s32 %v1224, %v1226
        %v1228 = vrot.slane %v1214, %v1227
        %v1229 = vcombine.high %v1221, %v1221
        %v1230 = vcombine.high %v1228, %v1228
        %v1232 = vunpack.c.l.s4 1983009808
        %v1233 = vunpack.c.0.s8 %v1232
        %v1234 = vlaneseq
        %v1235 = vshrl.u32 %v1234, 7
        %v1236 = vsub.s32 %v1233, %v1235
        %v1237 = vrot.slane %v1021, %v1236
        %v1238 = vcombine.high %v1022, %v1022
        %v1240 = vunpack.c.l.s4 1983009808
        %v1241 = vunpack.c.0.s8 %v1240
        %v1242 = vlaneseq
        %v1243 = vshrl.u32 %v1242, 7
        %v1244 = vsub.s32 %v1241, %v1243
        %v1245 = vrot.slane %v1022, %v1244
        %v1247 = vunpack.c.l.s4 1983009808
        %v1248 = vunpack.c.0.s8 %v1247
        %v1249 = vlaneseq
        %v1250 = vshrl.u32 %v1249, 7
        %v1251 = vsub.s32 %v1248, %v1250
        %v1252 = vrot.slane %v1238, %v1251
        %v1253 = vcombine.high %v1245, %v1245
        %v1254 = vcombine.high %v1252, %v1252
        %v1256 = vunpack.c.l.s4 1983009808
        %v1257 = vunpack.c.0.s8 %v1256
        %v1258 = vlaneseq
        %v1259 = vshrl.u32 %v1258, 7
        %v1260 = vsub.s32 %v1257, %v1259
        %v1261 = vrot.slane %v1023, %v1260
        %v1262 = vcombine.high %v1024, %v1024
        %v1264 = vunpack.c.l.s4 1983009808
        %v1265 = vunpack.c.0.s8 %v1264
        %v1266 = vlaneseq
        %v1267 = vshrl.u32 %v1266, 7
        %v1268 = vsub.s32 %v1265, %v1267
        %v1269 = vrot.slane %v1024, %v1268
        %v1271 = vunpack.c.l.s4 1983009808
        %v1272 = vunpack.c.0.s8 %v1271
        %v1273 = vlaneseq
        %v1274 = vshrl.u32 %v1273, 7
        %v1275 = vsub.s32 %v1272, %v1274
        %v1276 = vrot.slane %v1262, %v1275
        %v1277 = vcombine.high %v1269, %v1269
        %v1278 = vcombine.high %v1276, %v1276
        %v1280 = vunpack.c.l.s4 1983009808
        %v1281 = vunpack.c.0.s8 %v1280
        %v1282 = vlaneseq
        %v1283 = vshrl.u32 %v1282, 7
        %v1284 = vsub.s32 %v1281, %v1283
        %v1285 = vrot.slane %v1025, %v1284
        %s1286 = scalar_lea.vmem %s1, 128
        %v1287 = vld [vmem:[%s1286] sm:$0xff]
        %v1288 = vld [vmem:[%s1286 + $0x8] sm:$0xff]
        %v1289 = vld [vmem:[%s1286 + $0x10] sm:$0xff]
        %v1290 = vld [vmem:[%s1286 + $0x18] sm:$0xff]
        %v1291 = vld [vmem:[%s1286 + $0x20] sm:$0xff]
        %v1292 = vld [vmem:[%s1286 + $0x28] sm:$0xff]
        %v1293 = vld [vmem:[%s1286 + $0x30] sm:$0xff]
        %v1294 = vld [vmem:[%s1286 + $0x38] sm:$0xff]
        %v1295 = vld [vmem:[%s1286 + $0x40] sm:$0xff]
        %v1296 = vld [vmem:[%s1286 + $0x48] sm:$0xff]
        %v1297 = vld [vmem:[%s1286 + $0x50] sm:$0xff]
        %v1298 = vld [vmem:[%s1286 + $0x58] sm:$0xff]
        %v1299 = vld [vmem:[%s1286 + $0x60] sm:$0xff]
        %v1300 = vld [vmem:[%s1286 + $0x68] sm:$0xff]
        %v1301 = vld [vmem:[%s1286 + $0x70] sm:$0xff]
        %v1302 = vld [vmem:[%s1286 + $0x78] sm:$0xff]
        %v1303 = vcombine.low %v1053, %v1061
        %v1304 = vcombine.low %v1060, %v1062
        %v1306 = vunpack.c.l.s4 1983009808
        %v1307 = vunpack.c.0.s8 %v1306
        %v1308 = vlaneseq
        %v1309 = vshrl.u32 %v1308, 7
        %v1310 = vsub.s32 %v1307, %v1309
        %v1311 = vrot.slane %v1303, %v1310
        %v1313 = vunpack.c.l.s4 1983009808
        %v1314 = vunpack.c.0.s8 %v1313
        %v1315 = vlaneseq
        %v1316 = vshrl.u32 %v1315, 7
        %v1317 = vsub.s32 %v1314, %v1316
        %v1318 = vrot.slane %v1304, %v1317
        %v1319 = vcombine.low %v1311, %v1318
        %v1320 = vcombine.low %v1069, %v1077
        %v1321 = vcombine.low %v1085, %v1084
        %v1323 = vunpack.c.l.s4 1983009808
        %v1324 = vunpack.c.0.s8 %v1323
        %v1325 = vlaneseq
        %v1326 = vshrl.u32 %v1325, 7
        %v1327 = vsub.s32 %v1324, %v1326
        %v1328 = vrot.slane %v1320, %v1327
        %v1330 = vunpack.c.l.s4 1983009808
        %v1331 = vunpack.c.0.s8 %v1330
        %v1332 = vlaneseq
        %v1333 = vshrl.u32 %v1332, 7
        %v1334 = vsub.s32 %v1331, %v1333
        %v1335 = vrot.slane %v1321, %v1334
        %v1336 = vcombine.low %v1328, %v1335
        %v1337 = vcombine.low %v1086, %v1093
        %v1338 = vcombine.low %v1101, %v1109
        %v1340 = vunpack.c.l.s4 1983009808
        %v1341 = vunpack.c.0.s8 %v1340
        %v1342 = vlaneseq
        %v1343 = vshrl.u32 %v1342, 7
        %v1344 = vsub.s32 %v1341, %v1343
        %v1345 = vrot.slane %v1337, %v1344
        %v1347 = vunpack.c.l.s4 1983009808
        %v1348 = vunpack.c.0.s8 %v1347
        %v1349 = vlaneseq
        %v1350 = vshrl.u32 %v1349, 7
        %v1351 = vsub.s32 %v1348, %v1350
        %v1352 = vrot.slane %v1338, %v1351
        %v1353 = vcombine.low %v1345, %v1352
        %v1354 = vcombine.low %v1108, %v1110
        %v1355 = vcombine.low %v1117, %v1125
        %v1357 = vunpack.c.l.s4 1983009808
        %v1358 = vunpack.c.0.s8 %v1357
        %v1359 = vlaneseq
        %v1360 = vshrl.u32 %v1359, 7
        %v1361 = vsub.s32 %v1358, %v1360
        %v1362 = vrot.slane %v1354, %v1361
        %v1364 = vunpack.c.l.s4 1983009808
        %v1365 = vunpack.c.0.s8 %v1364
        %v1366 = vlaneseq
        %v1367 = vshrl.u32 %v1366, 7
        %v1368 = vsub.s32 %v1365, %v1367
        %v1369 = vrot.slane %v1355, %v1368
        %v1370 = vcombine.low %v1362, %v1369
        %v1371 = vcombine.low %v1133, %v1132
        %v1372 = vcombine.low %v1134, %v1141
        %v1374 = vunpack.c.l.s4 1983009808
        %v1375 = vunpack.c.0.s8 %v1374
        %v1376 = vlaneseq
        %v1377 = vshrl.u32 %v1376, 7
        %v1378 = vsub.s32 %v1375, %v1377
        %v1379 = vrot.slane %v1371, %v1378
        %v1381 = vunpack.c.l.s4 1983009808
        %v1382 = vunpack.c.0.s8 %v1381
        %v1383 = vlaneseq
        %v1384 = vshrl.u32 %v1383, 7
        %v1385 = vsub.s32 %v1382, %v1384
        %v1386 = vrot.slane %v1372, %v1385
        %v1387 = vcombine.low %v1379, %v1386
        %v1388 = vcombine.low %v1149, %v1157
        %v1389 = vcombine.low %v1156, %v1158
        %v1391 = vunpack.c.l.s4 1983009808
        %v1392 = vunpack.c.0.s8 %v1391
        %v1393 = vlaneseq
        %v1394 = vshrl.u32 %v1393, 7
        %v1395 = vsub.s32 %v1392, %v1394
        %v1396 = vrot.slane %v1388, %v1395
        %v1398 = vunpack.c.l.s4 1983009808
        %v1399 = vunpack.c.0.s8 %v1398
        %v1400 = vlaneseq
        %v1401 = vshrl.u32 %v1400, 7
        %v1402 = vsub.s32 %v1399, %v1401
        %v1403 = vrot.slane %v1389, %v1402
        %v1404 = vcombine.low %v1396, %v1403
        %v1405 = vcombine.low %v1165, %v1173
        %v1406 = vcombine.low %v1181, %v1180
        %v1408 = vunpack.c.l.s4 1983009808
        %v1409 = vunpack.c.0.s8 %v1408
        %v1410 = vlaneseq
        %v1411 = vshrl.u32 %v1410, 7
        %v1412 = vsub.s32 %v1409, %v1411
        %v1413 = vrot.slane %v1405, %v1412
        %v1415 = vunpack.c.l.s4 1983009808
        %v1416 = vunpack.c.0.s8 %v1415
        %v1417 = vlaneseq
        %v1418 = vshrl.u32 %v1417, 7
        %v1419 = vsub.s32 %v1416, %v1418
        %v1420 = vrot.slane %v1406, %v1419
        %v1421 = vcombine.low %v1413, %v1420
        %v1422 = vcombine.low %v1182, %v1189
        %v1423 = vcombine.low %v1197, %v1205
        %v1425 = vunpack.c.l.s4 1983009808
        %v1426 = vunpack.c.0.s8 %v1425
        %v1427 = vlaneseq
        %v1428 = vshrl.u32 %v1427, 7
        %v1429 = vsub.s32 %v1426, %v1428
        %v1430 = vrot.slane %v1422, %v1429
        %v1432 = vunpack.c.l.s4 1983009808
        %v1433 = vunpack.c.0.s8 %v1432
        %v1434 = vlaneseq
        %v1435 = vshrl.u32 %v1434, 7
        %v1436 = vsub.s32 %v1433, %v1435
        %v1437 = vrot.slane %v1423, %v1436
        %v1438 = vcombine.low %v1430, %v1437
        %v1439 = vcombine.low %v1204, %v1206
        %v1440 = vcombine.low %v1213, %v1221
        %v1442 = vunpack.c.l.s4 1983009808
        %v1443 = vunpack.c.0.s8 %v1442
        %v1444 = vlaneseq
        %v1445 = vshrl.u32 %v1444, 7
        %v1446 = vsub.s32 %v1443, %v1445
        %v1447 = vrot.slane %v1439, %v1446
        %v1449 = vunpack.c.l.s4 1983009808
        %v1450 = vunpack.c.0.s8 %v1449
        %v1451 = vlaneseq
        %v1452 = vshrl.u32 %v1451, 7
        %v1453 = vsub.s32 %v1450, %v1452
        %v1454 = vrot.slane %v1440, %v1453
        %v1455 = vcombine.low %v1447, %v1454
        %v1456 = vcombine.low %v1229, %v1228
        %v1457 = vcombine.low %v1230, %v1237
        %v1459 = vunpack.c.l.s4 1983009808
        %v1460 = vunpack.c.0.s8 %v1459
        %v1461 = vlaneseq
        %v1462 = vshrl.u32 %v1461, 7
        %v1463 = vsub.s32 %v1460, %v1462
        %v1464 = vrot.slane %v1456, %v1463
        %v1466 = vunpack.c.l.s4 1983009808
        %v1467 = vunpack.c.0.s8 %v1466
        %v1468 = vlaneseq
        %v1469 = vshrl.u32 %v1468, 7
        %v1470 = vsub.s32 %v1467, %v1469
        %v1471 = vrot.slane %v1457, %v1470
        %v1472 = vcombine.low %v1464, %v1471
        %v1473 = vcombine.low %v1245, %v1253
        %v1474 = vcombine.low %v1252, %v1254
        %v1476 = vunpack.c.l.s4 1983009808
        %v1477 = vunpack.c.0.s8 %v1476
        %v1478 = vlaneseq
        %v1479 = vshrl.u32 %v1478, 7
        %v1480 = vsub.s32 %v1477, %v1479
        %v1481 = vrot.slane %v1473, %v1480
        %v1483 = vunpack.c.l.s4 1983009808
        %v1484 = vunpack.c.0.s8 %v1483
        %v1485 = vlaneseq
        %v1486 = vshrl.u32 %v1485, 7
        %v1487 = vsub.s32 %v1484, %v1486
        %v1488 = vrot.slane %v1474, %v1487
        %v1489 = vcombine.low %v1481, %v1488
        %v1490 = vcombine.low %v1261, %v1269
        %v1491 = vcombine.low %v1277, %v1276
        %v1493 = vunpack.c.l.s4 1983009808
        %v1494 = vunpack.c.0.s8 %v1493
        %v1495 = vlaneseq
        %v1496 = vshrl.u32 %v1495, 7
        %v1497 = vsub.s32 %v1494, %v1496
        %v1498 = vrot.slane %v1490, %v1497
        %v1500 = vunpack.c.l.s4 1983009808
        %v1501 = vunpack.c.0.s8 %v1500
        %v1502 = vlaneseq
        %v1503 = vshrl.u32 %v1502, 7
        %v1504 = vsub.s32 %v1501, %v1503
        %v1505 = vrot.slane %v1491, %v1504
        %v1506 = vcombine.low %v1498, %v1505
        %v1507 = vcombine.low %v1278, %v1285
        %v1509 = vunpack.c.l.s4 1983009808
        %v1510 = vunpack.c.0.s8 %v1509
        %v1511 = vlaneseq
        %v1512 = vshrl.u32 %v1511, 7
        %v1513 = vsub.s32 %v1510, %v1512
        %v1514 = vrot.slane %v1507, %v1513
        %1528 = vmatprep.subr.mxu0 0.0
        %1529 = vmatpush1.msra.mxu0 %v1302
        %1530 = vmatprep.subr.mxu0 0.0
        %1531 = vmatpush1.msra.mxu0 %v1301
        %1532 = vmatprep.subr.mxu0 0.0
        %1533 = vmatpush1.msra.mxu0 %v1300
        %1534 = vmatprep.subr.mxu0 0.0
        %1535 = vmatpush1.msra.mxu0 %v1299
        %1536 = vmatprep.subr.mxu0 0.0
        %1537 = vmatpush1.msra.mxu0 %v1298
        %1538 = vmatprep.subr.mxu0 0.0
        %1539 = vmatpush1.msra.mxu0 %v1297
        %1540 = vmatprep.subr.mxu0 0.0
        %1541 = vmatpush1.msra.mxu0 %v1296
        %1542 = vmatprep.subr.mxu0 0.0
        %1543 = vmatpush1.msra.mxu0 %v1295
        %1544 = vmatprep.subr.mxu0 0.0
        %1545 = vmatpush1.msra.mxu0 %v1294
        %1546 = vmatprep.subr.mxu0 0.0
        %1547 = vmatpush1.msra.mxu0 %v1293
        %1548 = vmatprep.subr.mxu0 0.0
        %1549 = vmatpush1.msra.mxu0 %v1292
        %1550 = vmatprep.subr.mxu0 0.0
        %1551 = vmatpush1.msra.mxu0 %v1291
        %1552 = vmatprep.subr.mxu0 0.0
        %1553 = vmatpush1.msra.mxu0 %v1290
        %1554 = vmatprep.subr.mxu0 0.0
        %1555 = vmatpush1.msra.mxu0 %v1289
        %1556 = vmatprep.subr.mxu0 0.0
        %1557 = vmatpush1.msra.mxu0 %v1288
        %1558 = vmatprep.subr.mxu0 0.0
        %1559 = vmatpush1.msra.mxu0 %v1287
        %1560 = vmatprep.subr.mxu0 0.0
        %1561 = vmatpush2.msra.mxu0 0.0
        %1562 = vmatprep.subr.mxu0 0.0
        %1563 = vmatpush2.msra.mxu0 0.0
        %1564 = vmatprep.subr.mxu0 0.0
        %1565 = vmatpush2.msra.mxu0 0.0
        %1566 = vmatprep.subr.mxu0 0.0
        %1567 = vmatpush2.msra.mxu0 0.0
        %1568 = vmatprep.subr.mxu0 0.0
        %1569 = vmatpush2.msra.mxu0 0.0
        %1570 = vmatprep.subr.mxu0 0.0
        %1571 = vmatpush2.msra.mxu0 0.0
        %1572 = vmatprep.subr.mxu0 0.0
        %1573 = vmatpush2.msra.mxu0 0.0
        %1574 = vmatprep.subr.mxu0 0.0
        %1575 = vmatpush2.msra.mxu0 0.0
        %1576 = vmatprep.subr.mxu0 0.0
        %1577 = vmatpush2.msra.mxu0 0.0
        %1578 = vmatprep.subr.mxu0 0.0
        %1579 = vmatpush2.msra.mxu0 0.0
        %1580 = vmatprep.subr.mxu0 0.0
        %1581 = vmatpush2.msra.mxu0 0.0
        %1582 = vmatprep.subr.mxu0 0.0
        %1583 = vmatpush2.msra.mxu0 0.0
        %1584 = vmatprep.subr.mxu0 0.0
        %1585 = vmatpush2.msra.mxu0 0.0
        %1586 = vmatprep.subr.mxu0 0.0
        %1587 = vmatpush2.msra.mxu0 0.0
        %1588 = vmatprep.subr.mxu0 0.0
        %1589 = vmatpush2.msra.mxu0 0.0
        %1590 = vmatprep.subr.mxu0 0.0
        %1591 = vmatpush2.msra.mxu0 0.0
        %1592 = vmatprep.mubr.f32.mxu0 0.0
        %1593 = vmatmul.mubr.f32.gmra.mxu0 %v1319
        %v1594 = vpop.f32.mrf.mxu0
        %v1595 = vadd.f32 0.0, %v1594
        %v1596 = vpop.f32.mrf.mxu0
        %1597 = vmatprep.mubr.f32.mxu0 0.0
        %1598 = vmatmul.mubr.f32.gmra.mxu0 %v1336
        %v1599 = vpop.f32.mrf.mxu0
        %v1600 = vadd.f32 0.0, %v1599
        %v1601 = vpop.f32.mrf.mxu0
        %1602 = vmatprep.mubr.f32.mxu0 0.0
        %1603 = vmatmul.mubr.f32.gmra.mxu0 %v1353
        %v1604 = vpop.f32.mrf.mxu0
        %v1605 = vadd.f32 0.0, %v1604
        %v1606 = vpop.f32.mrf.mxu0
        %1607 = vmatprep.mubr.f32.mxu0 0.0
        %1608 = vmatmul.mubr.f32.gmra.mxu0 %v1370
        %v1609 = vpop.f32.mrf.mxu0
        %v1610 = vadd.f32 0.0, %v1609
        %v1611 = vpop.f32.mrf.mxu0
        %1612 = vmatprep.mubr.f32.mxu0 0.0
        %1613 = vmatmul.mubr.f32.gmra.mxu0 %v1387
        %v1614 = vpop.f32.mrf.mxu0
        %v1615 = vadd.f32 0.0, %v1614
        %v1616 = vpop.f32.mrf.mxu0
        %1617 = vmatprep.mubr.f32.mxu0 0.0
        %1618 = vmatmul.mubr.f32.gmra.mxu0 %v1404
        %v1619 = vpop.f32.mrf.mxu0
        %v1620 = vadd.f32 0.0, %v1619
        %v1621 = vpop.f32.mrf.mxu0
        %1622 = vmatprep.mubr.f32.mxu0 0.0
        %1623 = vmatmul.mubr.f32.gmra.mxu0 %v1421
        %v1624 = vpop.f32.mrf.mxu0
        %v1625 = vadd.f32 0.0, %v1624
        %v1626 = vpop.f32.mrf.mxu0
        %1627 = vmatprep.mubr.f32.mxu0 0.0
        %1628 = vmatmul.mubr.f32.gmra.mxu0 %v1438
        %v1629 = vpop.f32.mrf.mxu0
        %v1630 = vadd.f32 0.0, %v1629
        %v1631 = vpop.f32.mrf.mxu0
        %1632 = vmatprep.mubr.f32.mxu0 0.0
        %1633 = vmatmul.mubr.f32.gmra.mxu0 %v1455
        %v1634 = vpop.f32.mrf.mxu0
        %v1635 = vadd.f32 0.0, %v1634
        %v1636 = vpop.f32.mrf.mxu0
        %1637 = vmatprep.mubr.f32.mxu0 0.0
        %1638 = vmatmul.mubr.f32.gmra.mxu0 %v1472
        %v1639 = vpop.f32.mrf.mxu0
        %v1640 = vadd.f32 0.0, %v1639
        %v1641 = vpop.f32.mrf.mxu0
        %1642 = vmatprep.mubr.f32.mxu0 0.0
        %1643 = vmatmul.mubr.f32.gmra.mxu0 %v1489
        %v1644 = vpop.f32.mrf.mxu0
        %v1645 = vadd.f32 0.0, %v1644
        %v1646 = vpop.f32.mrf.mxu0
        %1647 = vmatprep.mubr.f32.mxu0 0.0
        %1648 = vmatmul.mubr.f32.gmra.mxu0 %v1506
        %v1649 = vpop.f32.mrf.mxu0
        %v1650 = vadd.f32 0.0, %v1649
        %v1651 = vpop.f32.mrf.mxu0
        %1652 = vmatprep.mubr.f32.mxu0 0.0
        %1653 = vmatmul.mubr.f32.gmra.mxu0 %v1514
        %v1654 = vpop.f32.mrf.mxu0
        %v1655 = vadd.f32 0.0, %v1654
        %v1656 = vpop.f32.mrf.mxu0
        %1657 = vdwg.mxu0
        %v1658 = vcombine.low %v756, %v764
        %v1659 = vcombine.low %v763, %v765
        %v1661 = vunpack.c.l.s4 1983009808
        %v1662 = vunpack.c.0.s8 %v1661
        %v1663 = vlaneseq
        %v1664 = vshrl.u32 %v1663, 7
        %v1665 = vsub.s32 %v1662, %v1664
        %v1666 = vrot.slane %v1658, %v1665
        %v1668 = vunpack.c.l.s4 1983009808
        %v1669 = vunpack.c.0.s8 %v1668
        %v1670 = vlaneseq
        %v1671 = vshrl.u32 %v1670, 7
        %v1672 = vsub.s32 %v1669, %v1671
        %v1673 = vrot.slane %v1659, %v1672
        %v1674 = vcombine.low %v1666, %v1673
        %v1675 = vcombine.low %v772, %v780
        %v1676 = vcombine.low %v788, %v787
        %v1678 = vunpack.c.l.s4 1983009808
        %v1679 = vunpack.c.0.s8 %v1678
        %v1680 = vlaneseq
        %v1681 = vshrl.u32 %v1680, 7
        %v1682 = vsub.s32 %v1679, %v1681
        %v1683 = vrot.slane %v1675, %v1682
        %v1685 = vunpack.c.l.s4 1983009808
        %v1686 = vunpack.c.0.s8 %v1685
        %v1687 = vlaneseq
        %v1688 = vshrl.u32 %v1687, 7
        %v1689 = vsub.s32 %v1686, %v1688
        %v1690 = vrot.slane %v1676, %v1689
        %v1691 = vcombine.low %v1683, %v1690
        %v1692 = vcombine.low %v789, %v796
        %v1693 = vcombine.low %v804, %v812
        %v1695 = vunpack.c.l.s4 1983009808
        %v1696 = vunpack.c.0.s8 %v1695
        %v1697 = vlaneseq
        %v1698 = vshrl.u32 %v1697, 7
        %v1699 = vsub.s32 %v1696, %v1698
        %v1700 = vrot.slane %v1692, %v1699
        %v1702 = vunpack.c.l.s4 1983009808
        %v1703 = vunpack.c.0.s8 %v1702
        %v1704 = vlaneseq
        %v1705 = vshrl.u32 %v1704, 7
        %v1706 = vsub.s32 %v1703, %v1705
        %v1707 = vrot.slane %v1693, %v1706
        %v1708 = vcombine.low %v1700, %v1707
        %v1709 = vcombine.low %v811, %v813
        %v1710 = vcombine.low %v820, %v828
        %v1712 = vunpack.c.l.s4 1983009808
        %v1713 = vunpack.c.0.s8 %v1712
        %v1714 = vlaneseq
        %v1715 = vshrl.u32 %v1714, 7
        %v1716 = vsub.s32 %v1713, %v1715
        %v1717 = vrot.slane %v1709, %v1716
        %v1719 = vunpack.c.l.s4 1983009808
        %v1720 = vunpack.c.0.s8 %v1719
        %v1721 = vlaneseq
        %v1722 = vshrl.u32 %v1721, 7
        %v1723 = vsub.s32 %v1720, %v1722
        %v1724 = vrot.slane %v1710, %v1723
        %v1725 = vcombine.low %v1717, %v1724
        %v1726 = vcombine.low %v836, %v835
        %v1727 = vcombine.low %v837, %v844
        %v1729 = vunpack.c.l.s4 1983009808
        %v1730 = vunpack.c.0.s8 %v1729
        %v1731 = vlaneseq
        %v1732 = vshrl.u32 %v1731, 7
        %v1733 = vsub.s32 %v1730, %v1732
        %v1734 = vrot.slane %v1726, %v1733
        %v1736 = vunpack.c.l.s4 1983009808
        %v1737 = vunpack.c.0.s8 %v1736
        %v1738 = vlaneseq
        %v1739 = vshrl.u32 %v1738, 7
        %v1740 = vsub.s32 %v1737, %v1739
        %v1741 = vrot.slane %v1727, %v1740
        %v1742 = vcombine.low %v1734, %v1741
        %v1743 = vcombine.low %v852, %v860
        %v1744 = vcombine.low %v859, %v861
        %v1746 = vunpack.c.l.s4 1983009808
        %v1747 = vunpack.c.0.s8 %v1746
        %v1748 = vlaneseq
        %v1749 = vshrl.u32 %v1748, 7
        %v1750 = vsub.s32 %v1747, %v1749
        %v1751 = vrot.slane %v1743, %v1750
        %v1753 = vunpack.c.l.s4 1983009808
        %v1754 = vunpack.c.0.s8 %v1753
        %v1755 = vlaneseq
        %v1756 = vshrl.u32 %v1755, 7
        %v1757 = vsub.s32 %v1754, %v1756
        %v1758 = vrot.slane %v1744, %v1757
        %v1759 = vcombine.low %v1751, %v1758
        %v1760 = vcombine.low %v868, %v876
        %v1761 = vcombine.low %v884, %v883
        %v1763 = vunpack.c.l.s4 1983009808
        %v1764 = vunpack.c.0.s8 %v1763
        %v1765 = vlaneseq
        %v1766 = vshrl.u32 %v1765, 7
        %v1767 = vsub.s32 %v1764, %v1766
        %v1768 = vrot.slane %v1760, %v1767
        %v1770 = vunpack.c.l.s4 1983009808
        %v1771 = vunpack.c.0.s8 %v1770
        %v1772 = vlaneseq
        %v1773 = vshrl.u32 %v1772, 7
        %v1774 = vsub.s32 %v1771, %v1773
        %v1775 = vrot.slane %v1761, %v1774
        %v1776 = vcombine.low %v1768, %v1775
        %v1777 = vcombine.low %v885, %v892
        %v1778 = vcombine.low %v900, %v908
        %v1780 = vunpack.c.l.s4 1983009808
        %v1781 = vunpack.c.0.s8 %v1780
        %v1782 = vlaneseq
        %v1783 = vshrl.u32 %v1782, 7
        %v1784 = vsub.s32 %v1781, %v1783
        %v1785 = vrot.slane %v1777, %v1784
        %v1787 = vunpack.c.l.s4 1983009808
        %v1788 = vunpack.c.0.s8 %v1787
        %v1789 = vlaneseq
        %v1790 = vshrl.u32 %v1789, 7
        %v1791 = vsub.s32 %v1788, %v1790
        %v1792 = vrot.slane %v1778, %v1791
        %v1793 = vcombine.low %v1785, %v1792
        %v1794 = vcombine.low %v907, %v909
        %v1795 = vcombine.low %v916, %v924
        %v1797 = vunpack.c.l.s4 1983009808
        %v1798 = vunpack.c.0.s8 %v1797
        %v1799 = vlaneseq
        %v1800 = vshrl.u32 %v1799, 7
        %v1801 = vsub.s32 %v1798, %v1800
        %v1802 = vrot.slane %v1794, %v1801
        %v1804 = vunpack.c.l.s4 1983009808
        %v1805 = vunpack.c.0.s8 %v1804
        %v1806 = vlaneseq
        %v1807 = vshrl.u32 %v1806, 7
        %v1808 = vsub.s32 %v1805, %v1807
        %v1809 = vrot.slane %v1795, %v1808
        %v1810 = vcombine.low %v1802, %v1809
        %v1811 = vcombine.low %v932, %v931
        %v1812 = vcombine.low %v933, %v940
        %v1814 = vunpack.c.l.s4 1983009808
        %v1815 = vunpack.c.0.s8 %v1814
        %v1816 = vlaneseq
        %v1817 = vshrl.u32 %v1816, 7
        %v1818 = vsub.s32 %v1815, %v1817
        %v1819 = vrot.slane %v1811, %v1818
        %v1821 = vunpack.c.l.s4 1983009808
        %v1822 = vunpack.c.0.s8 %v1821
        %v1823 = vlaneseq
        %v1824 = vshrl.u32 %v1823, 7
        %v1825 = vsub.s32 %v1822, %v1824
        %v1826 = vrot.slane %v1812, %v1825
        %v1827 = vcombine.low %v1819, %v1826
        %v1828 = vcombine.low %v948, %v956
        %v1829 = vcombine.low %v955, %v957
        %v1831 = vunpack.c.l.s4 1983009808
        %v1832 = vunpack.c.0.s8 %v1831
        %v1833 = vlaneseq
        %v1834 = vshrl.u32 %v1833, 7
        %v1835 = vsub.s32 %v1832, %v1834
        %v1836 = vrot.slane %v1828, %v1835
        %v1838 = vunpack.c.l.s4 1983009808
        %v1839 = vunpack.c.0.s8 %v1838
        %v1840 = vlaneseq
        %v1841 = vshrl.u32 %v1840, 7
        %v1842 = vsub.s32 %v1839, %v1841
        %v1843 = vrot.slane %v1829, %v1842
        %v1844 = vcombine.low %v1836, %v1843
        %v1845 = vcombine.low %v964, %v972
        %v1846 = vcombine.low %v980, %v979
        %v1848 = vunpack.c.l.s4 1983009808
        %v1849 = vunpack.c.0.s8 %v1848
        %v1850 = vlaneseq
        %v1851 = vshrl.u32 %v1850, 7
        %v1852 = vsub.s32 %v1849, %v1851
        %v1853 = vrot.slane %v1845, %v1852
        %v1855 = vunpack.c.l.s4 1983009808
        %v1856 = vunpack.c.0.s8 %v1855
        %v1857 = vlaneseq
        %v1858 = vshrl.u32 %v1857, 7
        %v1859 = vsub.s32 %v1856, %v1858
        %v1860 = vrot.slane %v1846, %v1859
        %v1861 = vcombine.low %v1853, %v1860
        %v1862 = vcombine.low %v981, %v988
        %v1864 = vunpack.c.l.s4 1983009808
        %v1865 = vunpack.c.0.s8 %v1864
        %v1866 = vlaneseq
        %v1867 = vshrl.u32 %v1866, 7
        %v1868 = vsub.s32 %v1865, %v1867
        %v1869 = vrot.slane %v1862, %v1868
        %1883 = vmatprep.subr.mxu0 0.0
        %1884 = vmatpush1.msra.mxu0 %v1004
        %1885 = vmatprep.subr.mxu0 0.0
        %1886 = vmatpush1.msra.mxu0 %v1003
        %1887 = vmatprep.subr.mxu0 0.0
        %1888 = vmatpush1.msra.mxu0 %v1002
        %1889 = vmatprep.subr.mxu0 0.0
        %1890 = vmatpush1.msra.mxu0 %v1001
        %1891 = vmatprep.subr.mxu0 0.0
        %1892 = vmatpush1.msra.mxu0 %v1000
        %1893 = vmatprep.subr.mxu0 0.0
        %1894 = vmatpush1.msra.mxu0 %v999
        %1895 = vmatprep.subr.mxu0 0.0
        %1896 = vmatpush1.msra.mxu0 %v998
        %1897 = vmatprep.subr.mxu0 0.0
        %1898 = vmatpush1.msra.mxu0 %v997
        %1899 = vmatprep.subr.mxu0 0.0
        %1900 = vmatpush1.msra.mxu0 %v996
        %1901 = vmatprep.subr.mxu0 0.0
        %1902 = vmatpush1.msra.mxu0 %v995
        %1903 = vmatprep.subr.mxu0 0.0
        %1904 = vmatpush1.msra.mxu0 %v994
        %1905 = vmatprep.subr.mxu0 0.0
        %1906 = vmatpush1.msra.mxu0 %v993
        %1907 = vmatprep.subr.mxu0 0.0
        %1908 = vmatpush1.msra.mxu0 %v992
        %1909 = vmatprep.subr.mxu0 0.0
        %1910 = vmatpush1.msra.mxu0 %v991
        %1911 = vmatprep.subr.mxu0 0.0
        %1912 = vmatpush1.msra.mxu0 %v990
        %1913 = vmatprep.subr.mxu0 0.0
        %1914 = vmatpush1.msra.mxu0 %v989
        %1915 = vmatprep.subr.mxu0 0.0
        %1916 = vmatpush2.msra.mxu0 0.0
        %1917 = vmatprep.subr.mxu0 0.0
        %1918 = vmatpush2.msra.mxu0 0.0
        %1919 = vmatprep.subr.mxu0 0.0
        %1920 = vmatpush2.msra.mxu0 0.0
        %1921 = vmatprep.subr.mxu0 0.0
        %1922 = vmatpush2.msra.mxu0 0.0
        %1923 = vmatprep.subr.mxu0 0.0
        %1924 = vmatpush2.msra.mxu0 0.0
        %1925 = vmatprep.subr.mxu0 0.0
        %1926 = vmatpush2.msra.mxu0 0.0
        %1927 = vmatprep.subr.mxu0 0.0
        %1928 = vmatpush2.msra.mxu0 0.0
        %1929 = vmatprep.subr.mxu0 0.0
        %1930 = vmatpush2.msra.mxu0 0.0
        %1931 = vmatprep.subr.mxu0 0.0
        %1932 = vmatpush2.msra.mxu0 0.0
        %1933 = vmatprep.subr.mxu0 0.0
        %1934 = vmatpush2.msra.mxu0 0.0
        %1935 = vmatprep.subr.mxu0 0.0
        %1936 = vmatpush2.msra.mxu0 0.0
        %1937 = vmatprep.subr.mxu0 0.0
        %1938 = vmatpush2.msra.mxu0 0.0
        %1939 = vmatprep.subr.mxu0 0.0
        %1940 = vmatpush2.msra.mxu0 0.0
        %1941 = vmatprep.subr.mxu0 0.0
        %1942 = vmatpush2.msra.mxu0 0.0
        %1943 = vmatprep.subr.mxu0 0.0
        %1944 = vmatpush2.msra.mxu0 0.0
        %1945 = vmatprep.subr.mxu0 0.0
        %1946 = vmatpush2.msra.mxu0 0.0
        %1947 = vmatprep.mubr.f32.mxu0 0.0
        %1948 = vmatmul.mubr.f32.gmra.mxu0 %v1674
        %v1949 = vpop.f32.mrf.mxu0
        %v1950 = vadd.f32 %v1595, %v1949
        %v1951 = vpop.f32.mrf.mxu0
        %1952 = vmatprep.mubr.f32.mxu0 0.0
        %1953 = vmatmul.mubr.f32.gmra.mxu0 %v1691
        %v1954 = vpop.f32.mrf.mxu0
        %v1955 = vadd.f32 %v1600, %v1954
        %v1956 = vpop.f32.mrf.mxu0
        %1957 = vmatprep.mubr.f32.mxu0 0.0
        %1958 = vmatmul.mubr.f32.gmra.mxu0 %v1708
        %v1959 = vpop.f32.mrf.mxu0
        %v1960 = vadd.f32 %v1605, %v1959
        %v1961 = vpop.f32.mrf.mxu0
        %1962 = vmatprep.mubr.f32.mxu0 0.0
        %1963 = vmatmul.mubr.f32.gmra.mxu0 %v1725
        %v1964 = vpop.f32.mrf.mxu0
        %v1965 = vadd.f32 %v1610, %v1964
        %v1966 = vpop.f32.mrf.mxu0
        %1967 = vmatprep.mubr.f32.mxu0 0.0
        %1968 = vmatmul.mubr.f32.gmra.mxu0 %v1742
        %v1969 = vpop.f32.mrf.mxu0
        %v1970 = vadd.f32 %v1615, %v1969
        %v1971 = vpop.f32.mrf.mxu0
        %1972 = vmatprep.mubr.f32.mxu0 0.0
        %1973 = vmatmul.mubr.f32.gmra.mxu0 %v1759
        %v1974 = vpop.f32.mrf.mxu0
        %v1975 = vadd.f32 %v1620, %v1974
        %v1976 = vpop.f32.mrf.mxu0
        %1977 = vmatprep.mubr.f32.mxu0 0.0
        %1978 = vmatmul.mubr.f32.gmra.mxu0 %v1776
        %v1979 = vpop.f32.mrf.mxu0
        %v1980 = vadd.f32 %v1625, %v1979
        %v1981 = vpop.f32.mrf.mxu0
        %1982 = vmatprep.mubr.f32.mxu0 0.0
        %1983 = vmatmul.mubr.f32.gmra.mxu0 %v1793
        %v1984 = vpop.f32.mrf.mxu0
        %v1985 = vadd.f32 %v1630, %v1984
        %v1986 = vpop.f32.mrf.mxu0
        %1987 = vmatprep.mubr.f32.mxu0 0.0
        %1988 = vmatmul.mubr.f32.gmra.mxu0 %v1810
        %v1989 = vpop.f32.mrf.mxu0
        %v1990 = vadd.f32 %v1635, %v1989
        %v1991 = vpop.f32.mrf.mxu0
        %1992 = vmatprep.mubr.f32.mxu0 0.0
        %1993 = vmatmul.mubr.f32.gmra.mxu0 %v1827
        %v1994 = vpop.f32.mrf.mxu0
        %v1995 = vadd.f32 %v1640, %v1994
        %v1996 = vpop.f32.mrf.mxu0
        %1997 = vmatprep.mubr.f32.mxu0 0.0
        %1998 = vmatmul.mubr.f32.gmra.mxu0 %v1844
        %v1999 = vpop.f32.mrf.mxu0
        %v2000 = vadd.f32 %v1645, %v1999
        %v2001 = vpop.f32.mrf.mxu0
        %2002 = vmatprep.mubr.f32.mxu0 0.0
        %2003 = vmatmul.mubr.f32.gmra.mxu0 %v1861
        %v2004 = vpop.f32.mrf.mxu0
        %v2005 = vadd.f32 %v1650, %v2004
        %v2006 = vpop.f32.mrf.mxu0
        %2007 = vmatprep.mubr.f32.mxu0 0.0
        %2008 = vmatmul.mubr.f32.gmra.mxu0 %v1869
        %v2009 = vpop.f32.mrf.mxu0
        %v2010 = vadd.f32 %v1655, %v2009
        %v2011 = vpop.f32.mrf.mxu0
        %2012 = vdwg.mxu0
        %v2013 = vld [vmem:[#allocation2 + $0x1] sm:$0xff]
        %v2014 = vld [vmem:[#allocation2 + $0x9] sm:$0x3]
        %v2015 = vld [vmem:[#allocation2 + $0x41] sm:$0xff]
        %v2016 = vld [vmem:[#allocation2 + $0x49] sm:$0x3]
        %v2017 = vld [vmem:[#allocation2 + $0x81] sm:$0xff]
        %v2018 = vld [vmem:[#allocation2 + $0x89] sm:$0x3]
        %v2019 = vld [vmem:[#allocation2 + $0xc1] sm:$0xff]
        %v2020 = vld [vmem:[#allocation2 + $0xc9] sm:$0x3]
        %v2021 = vld [vmem:[#allocation2 + $0x101] sm:$0xff]
        %v2022 = vld [vmem:[#allocation2 + $0x109] sm:$0x3]
        %v2023 = vld [vmem:[#allocation2 + $0x141] sm:$0xff]
        %v2024 = vld [vmem:[#allocation2 + $0x149] sm:$0x3]
        %v2025 = vld [vmem:[#allocation2 + $0x181] sm:$0xff]
        %v2026 = vld [vmem:[#allocation2 + $0x189] sm:$0x3]
        %v2027 = vld [vmem:[#allocation2 + $0x1c1] sm:$0xff]
        %v2028 = vld [vmem:[#allocation2 + $0x1c9] sm:$0x3]
        %v2029 = vld [vmem:[#allocation2 + $0x201] sm:$0xff]
        %v2030 = vld [vmem:[#allocation2 + $0x209] sm:$0x3]
        %v2031 = vld [vmem:[#allocation2 + $0x241] sm:$0xff]
        %v2032 = vld [vmem:[#allocation2 + $0x249] sm:$0x3]
        %v2053 = vcombine.high %v2013, %v2013
        %v2055 = vunpack.c.l.s4 1983009808
        %v2056 = vunpack.c.0.s8 %v2055
        %v2057 = vlaneseq
        %v2058 = vshrl.u32 %v2057, 7
        %v2059 = vsub.s32 %v2056, %v2058
        %v2060 = vrot.slane %v2013, %v2059
        %v2062 = vunpack.c.l.s4 1983009808
        %v2063 = vunpack.c.0.s8 %v2062
        %v2064 = vlaneseq
        %v2065 = vshrl.u32 %v2064, 7
        %v2066 = vsub.s32 %v2063, %v2065
        %v2067 = vrot.slane %v2053, %v2066
        %v2068 = vcombine.high %v2060, %v2060
        %v2069 = vcombine.high %v2067, %v2067
        %v2071 = vunpack.c.l.s4 1983009808
        %v2072 = vunpack.c.0.s8 %v2071
        %v2073 = vlaneseq
        %v2074 = vshrl.u32 %v2073, 7
        %v2075 = vsub.s32 %v2072, %v2074
        %v2076 = vrot.slane %v2014, %v2075
        %v2077 = vcombine.high %v2015, %v2015
        %v2079 = vunpack.c.l.s4 1983009808
        %v2080 = vunpack.c.0.s8 %v2079
        %v2081 = vlaneseq
        %v2082 = vshrl.u32 %v2081, 7
        %v2083 = vsub.s32 %v2080, %v2082
        %v2084 = vrot.slane %v2015, %v2083
        %v2086 = vunpack.c.l.s4 1983009808
        %v2087 = vunpack.c.0.s8 %v2086
        %v2088 = vlaneseq
        %v2089 = vshrl.u32 %v2088, 7
        %v2090 = vsub.s32 %v2087, %v2089
        %v2091 = vrot.slane %v2077, %v2090
        %v2092 = vcombine.high %v2084, %v2084
        %v2093 = vcombine.high %v2091, %v2091
        %v2095 = vunpack.c.l.s4 1983009808
        %v2096 = vunpack.c.0.s8 %v2095
        %v2097 = vlaneseq
        %v2098 = vshrl.u32 %v2097, 7
        %v2099 = vsub.s32 %v2096, %v2098
        %v2100 = vrot.slane %v2016, %v2099
        %v2101 = vcombine.high %v2017, %v2017
        %v2103 = vunpack.c.l.s4 1983009808
        %v2104 = vunpack.c.0.s8 %v2103
        %v2105 = vlaneseq
        %v2106 = vshrl.u32 %v2105, 7
        %v2107 = vsub.s32 %v2104, %v2106
        %v2108 = vrot.slane %v2017, %v2107
        %v2110 = vunpack.c.l.s4 1983009808
        %v2111 = vunpack.c.0.s8 %v2110
        %v2112 = vlaneseq
        %v2113 = vshrl.u32 %v2112, 7
        %v2114 = vsub.s32 %v2111, %v2113
        %v2115 = vrot.slane %v2101, %v2114
        %v2116 = vcombine.high %v2108, %v2108
        %v2117 = vcombine.high %v2115, %v2115
        %v2119 = vunpack.c.l.s4 1983009808
        %v2120 = vunpack.c.0.s8 %v2119
        %v2121 = vlaneseq
        %v2122 = vshrl.u32 %v2121, 7
        %v2123 = vsub.s32 %v2120, %v2122
        %v2124 = vrot.slane %v2018, %v2123
        %v2125 = vcombine.high %v2019, %v2019
        %v2127 = vunpack.c.l.s4 1983009808
        %v2128 = vunpack.c.0.s8 %v2127
        %v2129 = vlaneseq
        %v2130 = vshrl.u32 %v2129, 7
        %v2131 = vsub.s32 %v2128, %v2130
        %v2132 = vrot.slane %v2019, %v2131
        %v2134 = vunpack.c.l.s4 1983009808
        %v2135 = vunpack.c.0.s8 %v2134
        %v2136 = vlaneseq
        %v2137 = vshrl.u32 %v2136, 7
        %v2138 = vsub.s32 %v2135, %v2137
        %v2139 = vrot.slane %v2125, %v2138
        %v2140 = vcombine.high %v2132, %v2132
        %v2141 = vcombine.high %v2139, %v2139
        %v2143 = vunpack.c.l.s4 1983009808
        %v2144 = vunpack.c.0.s8 %v2143
        %v2145 = vlaneseq
        %v2146 = vshrl.u32 %v2145, 7
        %v2147 = vsub.s32 %v2144, %v2146
        %v2148 = vrot.slane %v2020, %v2147
        %v2149 = vcombine.high %v2021, %v2021
        %v2151 = vunpack.c.l.s4 1983009808
        %v2152 = vunpack.c.0.s8 %v2151
        %v2153 = vlaneseq
        %v2154 = vshrl.u32 %v2153, 7
        %v2155 = vsub.s32 %v2152, %v2154
        %v2156 = vrot.slane %v2021, %v2155
        %v2158 = vunpack.c.l.s4 1983009808
        %v2159 = vunpack.c.0.s8 %v2158
        %v2160 = vlaneseq
        %v2161 = vshrl.u32 %v2160, 7
        %v2162 = vsub.s32 %v2159, %v2161
        %v2163 = vrot.slane %v2149, %v2162
        %v2164 = vcombine.high %v2156, %v2156
        %v2165 = vcombine.high %v2163, %v2163
        %v2167 = vunpack.c.l.s4 1983009808
        %v2168 = vunpack.c.0.s8 %v2167
        %v2169 = vlaneseq
        %v2170 = vshrl.u32 %v2169, 7
        %v2171 = vsub.s32 %v2168, %v2170
        %v2172 = vrot.slane %v2022, %v2171
        %v2173 = vcombine.high %v2023, %v2023
        %v2175 = vunpack.c.l.s4 1983009808
        %v2176 = vunpack.c.0.s8 %v2175
        %v2177 = vlaneseq
        %v2178 = vshrl.u32 %v2177, 7
        %v2179 = vsub.s32 %v2176, %v2178
        %v2180 = vrot.slane %v2023, %v2179
        %v2182 = vunpack.c.l.s4 1983009808
        %v2183 = vunpack.c.0.s8 %v2182
        %v2184 = vlaneseq
        %v2185 = vshrl.u32 %v2184, 7
        %v2186 = vsub.s32 %v2183, %v2185
        %v2187 = vrot.slane %v2173, %v2186
        %v2188 = vcombine.high %v2180, %v2180
        %v2189 = vcombine.high %v2187, %v2187
        %v2191 = vunpack.c.l.s4 1983009808
        %v2192 = vunpack.c.0.s8 %v2191
        %v2193 = vlaneseq
        %v2194 = vshrl.u32 %v2193, 7
        %v2195 = vsub.s32 %v2192, %v2194
        %v2196 = vrot.slane %v2024, %v2195
        %v2197 = vcombine.high %v2025, %v2025
        %v2199 = vunpack.c.l.s4 1983009808
        %v2200 = vunpack.c.0.s8 %v2199
        %v2201 = vlaneseq
        %v2202 = vshrl.u32 %v2201, 7
        %v2203 = vsub.s32 %v2200, %v2202
        %v2204 = vrot.slane %v2025, %v2203
        %v2206 = vunpack.c.l.s4 1983009808
        %v2207 = vunpack.c.0.s8 %v2206
        %v2208 = vlaneseq
        %v2209 = vshrl.u32 %v2208, 7
        %v2210 = vsub.s32 %v2207, %v2209
        %v2211 = vrot.slane %v2197, %v2210
        %v2212 = vcombine.high %v2204, %v2204
        %v2213 = vcombine.high %v2211, %v2211
        %v2215 = vunpack.c.l.s4 1983009808
        %v2216 = vunpack.c.0.s8 %v2215
        %v2217 = vlaneseq
        %v2218 = vshrl.u32 %v2217, 7
        %v2219 = vsub.s32 %v2216, %v2218
        %v2220 = vrot.slane %v2026, %v2219
        %v2221 = vcombine.high %v2027, %v2027
        %v2223 = vunpack.c.l.s4 1983009808
        %v2224 = vunpack.c.0.s8 %v2223
        %v2225 = vlaneseq
        %v2226 = vshrl.u32 %v2225, 7
        %v2227 = vsub.s32 %v2224, %v2226
        %v2228 = vrot.slane %v2027, %v2227
        %v2230 = vunpack.c.l.s4 1983009808
        %v2231 = vunpack.c.0.s8 %v2230
        %v2232 = vlaneseq
        %v2233 = vshrl.u32 %v2232, 7
        %v2234 = vsub.s32 %v2231, %v2233
        %v2235 = vrot.slane %v2221, %v2234
        %v2236 = vcombine.high %v2228, %v2228
        %v2237 = vcombine.high %v2235, %v2235
        %v2239 = vunpack.c.l.s4 1983009808
        %v2240 = vunpack.c.0.s8 %v2239
        %v2241 = vlaneseq
        %v2242 = vshrl.u32 %v2241, 7
        %v2243 = vsub.s32 %v2240, %v2242
        %v2244 = vrot.slane %v2028, %v2243
        %v2245 = vcombine.high %v2029, %v2029
        %v2247 = vunpack.c.l.s4 1983009808
        %v2248 = vunpack.c.0.s8 %v2247
        %v2249 = vlaneseq
        %v2250 = vshrl.u32 %v2249, 7
        %v2251 = vsub.s32 %v2248, %v2250
        %v2252 = vrot.slane %v2029, %v2251
        %v2254 = vunpack.c.l.s4 1983009808
        %v2255 = vunpack.c.0.s8 %v2254
        %v2256 = vlaneseq
        %v2257 = vshrl.u32 %v2256, 7
        %v2258 = vsub.s32 %v2255, %v2257
        %v2259 = vrot.slane %v2245, %v2258
        %v2260 = vcombine.high %v2252, %v2252
        %v2261 = vcombine.high %v2259, %v2259
        %v2263 = vunpack.c.l.s4 1983009808
        %v2264 = vunpack.c.0.s8 %v2263
        %v2265 = vlaneseq
        %v2266 = vshrl.u32 %v2265, 7
        %v2267 = vsub.s32 %v2264, %v2266
        %v2268 = vrot.slane %v2030, %v2267
        %v2269 = vcombine.high %v2031, %v2031
        %v2271 = vunpack.c.l.s4 1983009808
        %v2272 = vunpack.c.0.s8 %v2271
        %v2273 = vlaneseq
        %v2274 = vshrl.u32 %v2273, 7
        %v2275 = vsub.s32 %v2272, %v2274
        %v2276 = vrot.slane %v2031, %v2275
        %v2278 = vunpack.c.l.s4 1983009808
        %v2279 = vunpack.c.0.s8 %v2278
        %v2280 = vlaneseq
        %v2281 = vshrl.u32 %v2280, 7
        %v2282 = vsub.s32 %v2279, %v2281
        %v2283 = vrot.slane %v2269, %v2282
        %v2284 = vcombine.high %v2276, %v2276
        %v2285 = vcombine.high %v2283, %v2283
        %v2287 = vunpack.c.l.s4 1983009808
        %v2288 = vunpack.c.0.s8 %v2287
        %v2289 = vlaneseq
        %v2290 = vshrl.u32 %v2289, 7
        %v2291 = vsub.s32 %v2288, %v2290
        %v2292 = vrot.slane %v2032, %v2291
        %s2293 = scalar_lea.vmem %s1, 256
        %v2294 = vld [vmem:[%s2293] sm:$0xff]
        %v2295 = vld [vmem:[%s2293 + $0x8] sm:$0xff]
        %v2296 = vld [vmem:[%s2293 + $0x10] sm:$0xff]
        %v2297 = vld [vmem:[%s2293 + $0x18] sm:$0xff]
        %v2298 = vld [vmem:[%s2293 + $0x20] sm:$0xff]
        %v2299 = vld [vmem:[%s2293 + $0x28] sm:$0xff]
        %v2300 = vld [vmem:[%s2293 + $0x30] sm:$0xff]
        %v2301 = vld [vmem:[%s2293 + $0x38] sm:$0xff]
        %v2302 = vld [vmem:[%s2293 + $0x40] sm:$0xff]
        %v2303 = vld [vmem:[%s2293 + $0x48] sm:$0xff]
        %v2304 = vld [vmem:[%s2293 + $0x50] sm:$0xff]
        %v2305 = vld [vmem:[%s2293 + $0x58] sm:$0xff]
        %v2306 = vld [vmem:[%s2293 + $0x60] sm:$0xff]
        %v2307 = vld [vmem:[%s2293 + $0x68] sm:$0xff]
        %v2308 = vld [vmem:[%s2293 + $0x70] sm:$0xff]
        %v2309 = vld [vmem:[%s2293 + $0x78] sm:$0xff]
        %v2310 = vcombine.low %v2060, %v2068
        %v2311 = vcombine.low %v2067, %v2069
        %v2313 = vunpack.c.l.s4 1983009808
        %v2314 = vunpack.c.0.s8 %v2313
        %v2315 = vlaneseq
        %v2316 = vshrl.u32 %v2315, 7
        %v2317 = vsub.s32 %v2314, %v2316
        %v2318 = vrot.slane %v2310, %v2317
        %v2320 = vunpack.c.l.s4 1983009808
        %v2321 = vunpack.c.0.s8 %v2320
        %v2322 = vlaneseq
        %v2323 = vshrl.u32 %v2322, 7
        %v2324 = vsub.s32 %v2321, %v2323
        %v2325 = vrot.slane %v2311, %v2324
        %v2326 = vcombine.low %v2318, %v2325
        %v2327 = vcombine.low %v2076, %v2084
        %v2328 = vcombine.low %v2092, %v2091
        %v2330 = vunpack.c.l.s4 1983009808
        %v2331 = vunpack.c.0.s8 %v2330
        %v2332 = vlaneseq
        %v2333 = vshrl.u32 %v2332, 7
        %v2334 = vsub.s32 %v2331, %v2333
        %v2335 = vrot.slane %v2327, %v2334
        %v2337 = vunpack.c.l.s4 1983009808
        %v2338 = vunpack.c.0.s8 %v2337
        %v2339 = vlaneseq
        %v2340 = vshrl.u32 %v2339, 7
        %v2341 = vsub.s32 %v2338, %v2340
        %v2342 = vrot.slane %v2328, %v2341
        %v2343 = vcombine.low %v2335, %v2342
        %v2344 = vcombine.low %v2093, %v2100
        %v2345 = vcombine.low %v2108, %v2116
        %v2347 = vunpack.c.l.s4 1983009808
        %v2348 = vunpack.c.0.s8 %v2347
        %v2349 = vlaneseq
        %v2350 = vshrl.u32 %v2349, 7
        %v2351 = vsub.s32 %v2348, %v2350
        %v2352 = vrot.slane %v2344, %v2351
        %v2354 = vunpack.c.l.s4 1983009808
        %v2355 = vunpack.c.0.s8 %v2354
        %v2356 = vlaneseq
        %v2357 = vshrl.u32 %v2356, 7
        %v2358 = vsub.s32 %v2355, %v2357
        %v2359 = vrot.slane %v2345, %v2358
        %v2360 = vcombine.low %v2352, %v2359
        %v2361 = vcombine.low %v2115, %v2117
        %v2362 = vcombine.low %v2124, %v2132
        %v2364 = vunpack.c.l.s4 1983009808
        %v2365 = vunpack.c.0.s8 %v2364
        %v2366 = vlaneseq
        %v2367 = vshrl.u32 %v2366, 7
        %v2368 = vsub.s32 %v2365, %v2367
        %v2369 = vrot.slane %v2361, %v2368
        %v2371 = vunpack.c.l.s4 1983009808
        %v2372 = vunpack.c.0.s8 %v2371
        %v2373 = vlaneseq
        %v2374 = vshrl.u32 %v2373, 7
        %v2375 = vsub.s32 %v2372, %v2374
        %v2376 = vrot.slane %v2362, %v2375
        %v2377 = vcombine.low %v2369, %v2376
        %v2378 = vcombine.low %v2140, %v2139
        %v2379 = vcombine.low %v2141, %v2148
        %v2381 = vunpack.c.l.s4 1983009808
        %v2382 = vunpack.c.0.s8 %v2381
        %v2383 = vlaneseq
        %v2384 = vshrl.u32 %v2383, 7
        %v2385 = vsub.s32 %v2382, %v2384
        %v2386 = vrot.slane %v2378, %v2385
        %v2388 = vunpack.c.l.s4 1983009808
        %v2389 = vunpack.c.0.s8 %v2388
        %v2390 = vlaneseq
        %v2391 = vshrl.u32 %v2390, 7
        %v2392 = vsub.s32 %v2389, %v2391
        %v2393 = vrot.slane %v2379, %v2392
        %v2394 = vcombine.low %v2386, %v2393
        %v2395 = vcombine.low %v2156, %v2164
        %v2396 = vcombine.low %v2163, %v2165
        %v2398 = vunpack.c.l.s4 1983009808
        %v2399 = vunpack.c.0.s8 %v2398
        %v2400 = vlaneseq
        %v2401 = vshrl.u32 %v2400, 7
        %v2402 = vsub.s32 %v2399, %v2401
        %v2403 = vrot.slane %v2395, %v2402
        %v2405 = vunpack.c.l.s4 1983009808
        %v2406 = vunpack.c.0.s8 %v2405
        %v2407 = vlaneseq
        %v2408 = vshrl.u32 %v2407, 7
        %v2409 = vsub.s32 %v2406, %v2408
        %v2410 = vrot.slane %v2396, %v2409
        %v2411 = vcombine.low %v2403, %v2410
        %v2412 = vcombine.low %v2172, %v2180
        %v2413 = vcombine.low %v2188, %v2187
        %v2415 = vunpack.c.l.s4 1983009808
        %v2416 = vunpack.c.0.s8 %v2415
        %v2417 = vlaneseq
        %v2418 = vshrl.u32 %v2417, 7
        %v2419 = vsub.s32 %v2416, %v2418
        %v2420 = vrot.slane %v2412, %v2419
        %v2422 = vunpack.c.l.s4 1983009808
        %v2423 = vunpack.c.0.s8 %v2422
        %v2424 = vlaneseq
        %v2425 = vshrl.u32 %v2424, 7
        %v2426 = vsub.s32 %v2423, %v2425
        %v2427 = vrot.slane %v2413, %v2426
        %v2428 = vcombine.low %v2420, %v2427
        %v2429 = vcombine.low %v2189, %v2196
        %v2430 = vcombine.low %v2204, %v2212
        %v2432 = vunpack.c.l.s4 1983009808
        %v2433 = vunpack.c.0.s8 %v2432
        %v2434 = vlaneseq
        %v2435 = vshrl.u32 %v2434, 7
        %v2436 = vsub.s32 %v2433, %v2435
        %v2437 = vrot.slane %v2429, %v2436
        %v2439 = vunpack.c.l.s4 1983009808
        %v2440 = vunpack.c.0.s8 %v2439
        %v2441 = vlaneseq
        %v2442 = vshrl.u32 %v2441, 7
        %v2443 = vsub.s32 %v2440, %v2442
        %v2444 = vrot.slane %v2430, %v2443
        %v2445 = vcombine.low %v2437, %v2444
        %v2446 = vcombine.low %v2211, %v2213
        %v2447 = vcombine.low %v2220, %v2228
        %v2449 = vunpack.c.l.s4 1983009808
        %v2450 = vunpack.c.0.s8 %v2449
        %v2451 = vlaneseq
        %v2452 = vshrl.u32 %v2451, 7
        %v2453 = vsub.s32 %v2450, %v2452
        %v2454 = vrot.slane %v2446, %v2453
        %v2456 = vunpack.c.l.s4 1983009808
        %v2457 = vunpack.c.0.s8 %v2456
        %v2458 = vlaneseq
        %v2459 = vshrl.u32 %v2458, 7
        %v2460 = vsub.s32 %v2457, %v2459
        %v2461 = vrot.slane %v2447, %v2460
        %v2462 = vcombine.low %v2454, %v2461
        %v2463 = vcombine.low %v2236, %v2235
        %v2464 = vcombine.low %v2237, %v2244
        %v2466 = vunpack.c.l.s4 1983009808
        %v2467 = vunpack.c.0.s8 %v2466
        %v2468 = vlaneseq
        %v2469 = vshrl.u32 %v2468, 7
        %v2470 = vsub.s32 %v2467, %v2469
        %v2471 = vrot.slane %v2463, %v2470
        %v2473 = vunpack.c.l.s4 1983009808
        %v2474 = vunpack.c.0.s8 %v2473
        %v2475 = vlaneseq
        %v2476 = vshrl.u32 %v2475, 7
        %v2477 = vsub.s32 %v2474, %v2476
        %v2478 = vrot.slane %v2464, %v2477
        %v2479 = vcombine.low %v2471, %v2478
        %v2480 = vcombine.low %v2252, %v2260
        %v2481 = vcombine.low %v2259, %v2261
        %v2483 = vunpack.c.l.s4 1983009808
        %v2484 = vunpack.c.0.s8 %v2483
        %v2485 = vlaneseq
        %v2486 = vshrl.u32 %v2485, 7
        %v2487 = vsub.s32 %v2484, %v2486
        %v2488 = vrot.slane %v2480, %v2487
        %v2490 = vunpack.c.l.s4 1983009808
        %v2491 = vunpack.c.0.s8 %v2490
        %v2492 = vlaneseq
        %v2493 = vshrl.u32 %v2492, 7
        %v2494 = vsub.s32 %v2491, %v2493
        %v2495 = vrot.slane %v2481, %v2494
        %v2496 = vcombine.low %v2488, %v2495
        %v2497 = vcombine.low %v2268, %v2276
        %v2498 = vcombine.low %v2284, %v2283
        %v2500 = vunpack.c.l.s4 1983009808
        %v2501 = vunpack.c.0.s8 %v2500
        %v2502 = vlaneseq
        %v2503 = vshrl.u32 %v2502, 7
        %v2504 = vsub.s32 %v2501, %v2503
        %v2505 = vrot.slane %v2497, %v2504
        %v2507 = vunpack.c.l.s4 1983009808
        %v2508 = vunpack.c.0.s8 %v2507
        %v2509 = vlaneseq
        %v2510 = vshrl.u32 %v2509, 7
        %v2511 = vsub.s32 %v2508, %v2510
        %v2512 = vrot.slane %v2498, %v2511
        %v2513 = vcombine.low %v2505, %v2512
        %v2514 = vcombine.low %v2285, %v2292
        %v2516 = vunpack.c.l.s4 1983009808
        %v2517 = vunpack.c.0.s8 %v2516
        %v2518 = vlaneseq
        %v2519 = vshrl.u32 %v2518, 7
        %v2520 = vsub.s32 %v2517, %v2519
        %v2521 = vrot.slane %v2514, %v2520
        %2535 = vmatprep.subr.mxu0 0.0
        %2536 = vmatpush1.msra.mxu0 %v2309
        %2537 = vmatprep.subr.mxu0 0.0
        %2538 = vmatpush1.msra.mxu0 %v2308
        %2539 = vmatprep.subr.mxu0 0.0
        %2540 = vmatpush1.msra.mxu0 %v2307
        %2541 = vmatprep.subr.mxu0 0.0
        %2542 = vmatpush1.msra.mxu0 %v2306
        %2543 = vmatprep.subr.mxu0 0.0
        %2544 = vmatpush1.msra.mxu0 %v2305
        %2545 = vmatprep.subr.mxu0 0.0
        %2546 = vmatpush1.msra.mxu0 %v2304
        %2547 = vmatprep.subr.mxu0 0.0
        %2548 = vmatpush1.msra.mxu0 %v2303
        %2549 = vmatprep.subr.mxu0 0.0
        %2550 = vmatpush1.msra.mxu0 %v2302
        %2551 = vmatprep.subr.mxu0 0.0
        %2552 = vmatpush1.msra.mxu0 %v2301
        %2553 = vmatprep.subr.mxu0 0.0
        %2554 = vmatpush1.msra.mxu0 %v2300
        %2555 = vmatprep.subr.mxu0 0.0
        %2556 = vmatpush1.msra.mxu0 %v2299
        %2557 = vmatprep.subr.mxu0 0.0
        %2558 = vmatpush1.msra.mxu0 %v2298
        %2559 = vmatprep.subr.mxu0 0.0
        %2560 = vmatpush1.msra.mxu0 %v2297
        %2561 = vmatprep.subr.mxu0 0.0
        %2562 = vmatpush1.msra.mxu0 %v2296
        %2563 = vmatprep.subr.mxu0 0.0
        %2564 = vmatpush1.msra.mxu0 %v2295
        %2565 = vmatprep.subr.mxu0 0.0
        %2566 = vmatpush1.msra.mxu0 %v2294
        %2567 = vmatprep.subr.mxu0 0.0
        %2568 = vmatpush2.msra.mxu0 0.0
        %2569 = vmatprep.subr.mxu0 0.0
        %2570 = vmatpush2.msra.mxu0 0.0
        %2571 = vmatprep.subr.mxu0 0.0
        %2572 = vmatpush2.msra.mxu0 0.0
        %2573 = vmatprep.subr.mxu0 0.0
        %2574 = vmatpush2.msra.mxu0 0.0
        %2575 = vmatprep.subr.mxu0 0.0
        %2576 = vmatpush2.msra.mxu0 0.0
        %2577 = vmatprep.subr.mxu0 0.0
        %2578 = vmatpush2.msra.mxu0 0.0
        %2579 = vmatprep.subr.mxu0 0.0
        %2580 = vmatpush2.msra.mxu0 0.0
        %2581 = vmatprep.subr.mxu0 0.0
        %2582 = vmatpush2.msra.mxu0 0.0
        %2583 = vmatprep.subr.mxu0 0.0
        %2584 = vmatpush2.msra.mxu0 0.0
        %2585 = vmatprep.subr.mxu0 0.0
        %2586 = vmatpush2.msra.mxu0 0.0
        %2587 = vmatprep.subr.mxu0 0.0
        %2588 = vmatpush2.msra.mxu0 0.0
        %2589 = vmatprep.subr.mxu0 0.0
        %2590 = vmatpush2.msra.mxu0 0.0
        %2591 = vmatprep.subr.mxu0 0.0
        %2592 = vmatpush2.msra.mxu0 0.0
        %2593 = vmatprep.subr.mxu0 0.0
        %2594 = vmatpush2.msra.mxu0 0.0
        %2595 = vmatprep.subr.mxu0 0.0
        %2596 = vmatpush2.msra.mxu0 0.0
        %2597 = vmatprep.subr.mxu0 0.0
        %2598 = vmatpush2.msra.mxu0 0.0
        %2599 = vmatprep.mubr.f32.mxu0 0.0
        %2600 = vmatmul.mubr.f32.gmra.mxu0 %v2326
        %v2601 = vpop.f32.mrf.mxu0
        %v2602 = vadd.f32 0.0, %v2601
        %v2603 = vpop.f32.mrf.mxu0
        %2604 = vmatprep.mubr.f32.mxu0 0.0
        %2605 = vmatmul.mubr.f32.gmra.mxu0 %v2343
        %v2606 = vpop.f32.mrf.mxu0
        %v2607 = vadd.f32 0.0, %v2606
        %v2608 = vpop.f32.mrf.mxu0
        %2609 = vmatprep.mubr.f32.mxu0 0.0
        %2610 = vmatmul.mubr.f32.gmra.mxu0 %v2360
        %v2611 = vpop.f32.mrf.mxu0
        %v2612 = vadd.f32 0.0, %v2611
        %v2613 = vpop.f32.mrf.mxu0
        %2614 = vmatprep.mubr.f32.mxu0 0.0
        %2615 = vmatmul.mubr.f32.gmra.mxu0 %v2377
        %v2616 = vpop.f32.mrf.mxu0
        %v2617 = vadd.f32 0.0, %v2616
        %v2618 = vpop.f32.mrf.mxu0
        %2619 = vmatprep.mubr.f32.mxu0 0.0
        %2620 = vmatmul.mubr.f32.gmra.mxu0 %v2394
        %v2621 = vpop.f32.mrf.mxu0
        %v2622 = vadd.f32 0.0, %v2621
        %v2623 = vpop.f32.mrf.mxu0
        %2624 = vmatprep.mubr.f32.mxu0 0.0
        %2625 = vmatmul.mubr.f32.gmra.mxu0 %v2411
        %v2626 = vpop.f32.mrf.mxu0
        %v2627 = vadd.f32 0.0, %v2626
        %v2628 = vpop.f32.mrf.mxu0
        %2629 = vmatprep.mubr.f32.mxu0 0.0
        %2630 = vmatmul.mubr.f32.gmra.mxu0 %v2428
        %v2631 = vpop.f32.mrf.mxu0
        %v2632 = vadd.f32 0.0, %v2631
        %v2633 = vpop.f32.mrf.mxu0
        %2634 = vmatprep.mubr.f32.mxu0 0.0
        %2635 = vmatmul.mubr.f32.gmra.mxu0 %v2445
        %v2636 = vpop.f32.mrf.mxu0
        %v2637 = vadd.f32 0.0, %v2636
        %v2638 = vpop.f32.mrf.mxu0
        %2639 = vmatprep.mubr.f32.mxu0 0.0
        %2640 = vmatmul.mubr.f32.gmra.mxu0 %v2462
        %v2641 = vpop.f32.mrf.mxu0
        %v2642 = vadd.f32 0.0, %v2641
        %v2643 = vpop.f32.mrf.mxu0
        %2644 = vmatprep.mubr.f32.mxu0 0.0
        %2645 = vmatmul.mubr.f32.gmra.mxu0 %v2479
        %v2646 = vpop.f32.mrf.mxu0
        %v2647 = vadd.f32 0.0, %v2646
        %v2648 = vpop.f32.mrf.mxu0
        %2649 = vmatprep.mubr.f32.mxu0 0.0
        %2650 = vmatmul.mubr.f32.gmra.mxu0 %v2496
        %v2651 = vpop.f32.mrf.mxu0
        %v2652 = vadd.f32 0.0, %v2651
        %v2653 = vpop.f32.mrf.mxu0
        %2654 = vmatprep.mubr.f32.mxu0 0.0
        %2655 = vmatmul.mubr.f32.gmra.mxu0 %v2513
        %v2656 = vpop.f32.mrf.mxu0
        %v2657 = vadd.f32 0.0, %v2656
        %v2658 = vpop.f32.mrf.mxu0
        %2659 = vmatprep.mubr.f32.mxu0 0.0
        %2660 = vmatmul.mubr.f32.gmra.mxu0 %v2521
        %v2661 = vpop.f32.mrf.mxu0
        %v2662 = vadd.f32 0.0, %v2661
        %v2663 = vpop.f32.mrf.mxu0
        %2664 = vdwg.mxu0
        %v2665 = vadd.f32 %v1950, %v2602
        %v2666 = vadd.f32 %v1955, %v2607
        %v2667 = vadd.f32 %v1960, %v2612
        %v2668 = vadd.f32 %v1965, %v2617
        %v2669 = vadd.f32 %v1970, %v2622
        %v2670 = vadd.f32 %v1975, %v2627
        %v2671 = vadd.f32 %v1980, %v2632
        %v2672 = vadd.f32 %v1985, %v2637
        %v2673 = vadd.f32 %v1990, %v2642
        %v2674 = vadd.f32 %v1995, %v2647
        %v2675 = vadd.f32 %v2000, %v2652
        %v2676 = vadd.f32 %v2005, %v2657
        %v2677 = vadd.f32 %v2010, %v2662
        %s2678 = scalar_lea.vmem [#allocation2], 32
        %v2679 = vld [vmem:[%s2678] sm:$0xff]
        %v2680 = vld [vmem:[%s2678 + $0x8] sm:$0x3]
        %v2681 = vld [vmem:[%s2678 + $0x40] sm:$0xff]
        %v2682 = vld [vmem:[%s2678 + $0x48] sm:$0x3]
        %v2683 = vld [vmem:[%s2678 + $0x80] sm:$0xff]
        %v2684 = vld [vmem:[%s2678 + $0x88] sm:$0x3]
        %v2685 = vld [vmem:[%s2678 + $0xc0] sm:$0xff]
        %v2686 = vld [vmem:[%s2678 + $0xc8] sm:$0x3]
        %v2687 = vld [vmem:[%s2678 + $0x100] sm:$0xff]
        %v2688 = vld [vmem:[%s2678 + $0x108] sm:$0x3]
        %v2689 = vld [vmem:[%s2678 + $0x140] sm:$0xff]
        %v2690 = vld [vmem:[%s2678 + $0x148] sm:$0x3]
        %v2691 = vld [vmem:[%s2678 + $0x180] sm:$0xff]
        %v2692 = vld [vmem:[%s2678 + $0x188] sm:$0x3]
        %v2693 = vld [vmem:[%s2678 + $0x1c0] sm:$0xff]
        %v2694 = vld [vmem:[%s2678 + $0x1c8] sm:$0x3]
        %v2695 = vld [vmem:[%s2678 + $0x200] sm:$0xff]
        %v2696 = vld [vmem:[%s2678 + $0x208] sm:$0x3]
        %v2697 = vld [vmem:[%s2678 + $0x240] sm:$0xff]
        %v2698 = vld [vmem:[%s2678 + $0x248] sm:$0x3]
        %v2719 = vcombine.high %v2679, %v2679
        %v2721 = vunpack.c.l.s4 1983009808
        %v2722 = vunpack.c.0.s8 %v2721
        %v2723 = vlaneseq
        %v2724 = vshrl.u32 %v2723, 7
        %v2725 = vsub.s32 %v2722, %v2724
        %v2726 = vrot.slane %v2679, %v2725
        %v2728 = vunpack.c.l.s4 1983009808
        %v2729 = vunpack.c.0.s8 %v2728
        %v2730 = vlaneseq
        %v2731 = vshrl.u32 %v2730, 7
        %v2732 = vsub.s32 %v2729, %v2731
        %v2733 = vrot.slane %v2719, %v2732
        %v2734 = vcombine.high %v2726, %v2726
        %v2735 = vcombine.high %v2733, %v2733
        %v2737 = vunpack.c.l.s4 1983009808
        %v2738 = vunpack.c.0.s8 %v2737
        %v2739 = vlaneseq
        %v2740 = vshrl.u32 %v2739, 7
        %v2741 = vsub.s32 %v2738, %v2740
        %v2742 = vrot.slane %v2680, %v2741
        %v2743 = vcombine.high %v2681, %v2681
        %v2745 = vunpack.c.l.s4 1983009808
        %v2746 = vunpack.c.0.s8 %v2745
        %v2747 = vlaneseq
        %v2748 = vshrl.u32 %v2747, 7
        %v2749 = vsub.s32 %v2746, %v2748
        %v2750 = vrot.slane %v2681, %v2749
        %v2752 = vunpack.c.l.s4 1983009808
        %v2753 = vunpack.c.0.s8 %v2752
        %v2754 = vlaneseq
        %v2755 = vshrl.u32 %v2754, 7
        %v2756 = vsub.s32 %v2753, %v2755
        %v2757 = vrot.slane %v2743, %v2756
        %v2758 = vcombine.high %v2750, %v2750
        %v2759 = vcombine.high %v2757, %v2757
        %v2761 = vunpack.c.l.s4 1983009808
        %v2762 = vunpack.c.0.s8 %v2761
        %v2763 = vlaneseq
        %v2764 = vshrl.u32 %v2763, 7
        %v2765 = vsub.s32 %v2762, %v2764
        %v2766 = vrot.slane %v2682, %v2765
        %v2767 = vcombine.high %v2683, %v2683
        %v2769 = vunpack.c.l.s4 1983009808
        %v2770 = vunpack.c.0.s8 %v2769
        %v2771 = vlaneseq
        %v2772 = vshrl.u32 %v2771, 7
        %v2773 = vsub.s32 %v2770, %v2772
        %v2774 = vrot.slane %v2683, %v2773
        %v2776 = vunpack.c.l.s4 1983009808
        %v2777 = vunpack.c.0.s8 %v2776
        %v2778 = vlaneseq
        %v2779 = vshrl.u32 %v2778, 7
        %v2780 = vsub.s32 %v2777, %v2779
        %v2781 = vrot.slane %v2767, %v2780
        %v2782 = vcombine.high %v2774, %v2774
        %v2783 = vcombine.high %v2781, %v2781
        %v2785 = vunpack.c.l.s4 1983009808
        %v2786 = vunpack.c.0.s8 %v2785
        %v2787 = vlaneseq
        %v2788 = vshrl.u32 %v2787, 7
        %v2789 = vsub.s32 %v2786, %v2788
        %v2790 = vrot.slane %v2684, %v2789
        %v2791 = vcombine.high %v2685, %v2685
        %v2793 = vunpack.c.l.s4 1983009808
        %v2794 = vunpack.c.0.s8 %v2793
        %v2795 = vlaneseq
        %v2796 = vshrl.u32 %v2795, 7
        %v2797 = vsub.s32 %v2794, %v2796
        %v2798 = vrot.slane %v2685, %v2797
        %v2800 = vunpack.c.l.s4 1983009808
        %v2801 = vunpack.c.0.s8 %v2800
        %v2802 = vlaneseq
        %v2803 = vshrl.u32 %v2802, 7
        %v2804 = vsub.s32 %v2801, %v2803
        %v2805 = vrot.slane %v2791, %v2804
        %v2806 = vcombine.high %v2798, %v2798
        %v2807 = vcombine.high %v2805, %v2805
        %v2809 = vunpack.c.l.s4 1983009808
        %v2810 = vunpack.c.0.s8 %v2809
        %v2811 = vlaneseq
        %v2812 = vshrl.u32 %v2811, 7
        %v2813 = vsub.s32 %v2810, %v2812
        %v2814 = vrot.slane %v2686, %v2813
        %v2815 = vcombine.high %v2687, %v2687
        %v2817 = vunpack.c.l.s4 1983009808
        %v2818 = vunpack.c.0.s8 %v2817
        %v2819 = vlaneseq
        %v2820 = vshrl.u32 %v2819, 7
        %v2821 = vsub.s32 %v2818, %v2820
        %v2822 = vrot.slane %v2687, %v2821
        %v2824 = vunpack.c.l.s4 1983009808
        %v2825 = vunpack.c.0.s8 %v2824
        %v2826 = vlaneseq
        %v2827 = vshrl.u32 %v2826, 7
        %v2828 = vsub.s32 %v2825, %v2827
        %v2829 = vrot.slane %v2815, %v2828
        %v2830 = vcombine.high %v2822, %v2822
        %v2831 = vcombine.high %v2829, %v2829
        %v2833 = vunpack.c.l.s4 1983009808
        %v2834 = vunpack.c.0.s8 %v2833
        %v2835 = vlaneseq
        %v2836 = vshrl.u32 %v2835, 7
        %v2837 = vsub.s32 %v2834, %v2836
        %v2838 = vrot.slane %v2688, %v2837
        %v2839 = vcombine.high %v2689, %v2689
        %v2841 = vunpack.c.l.s4 1983009808
        %v2842 = vunpack.c.0.s8 %v2841
        %v2843 = vlaneseq
        %v2844 = vshrl.u32 %v2843, 7
        %v2845 = vsub.s32 %v2842, %v2844
        %v2846 = vrot.slane %v2689, %v2845
        %v2848 = vunpack.c.l.s4 1983009808
        %v2849 = vunpack.c.0.s8 %v2848
        %v2850 = vlaneseq
        %v2851 = vshrl.u32 %v2850, 7
        %v2852 = vsub.s32 %v2849, %v2851
        %v2853 = vrot.slane %v2839, %v2852
        %v2854 = vcombine.high %v2846, %v2846
        %v2855 = vcombine.high %v2853, %v2853
        %v2857 = vunpack.c.l.s4 1983009808
        %v2858 = vunpack.c.0.s8 %v2857
        %v2859 = vlaneseq
        %v2860 = vshrl.u32 %v2859, 7
        %v2861 = vsub.s32 %v2858, %v2860
        %v2862 = vrot.slane %v2690, %v2861
        %v2863 = vcombine.high %v2691, %v2691
        %v2865 = vunpack.c.l.s4 1983009808
        %v2866 = vunpack.c.0.s8 %v2865
        %v2867 = vlaneseq
        %v2868 = vshrl.u32 %v2867, 7
        %v2869 = vsub.s32 %v2866, %v2868
        %v2870 = vrot.slane %v2691, %v2869
        %v2872 = vunpack.c.l.s4 1983009808
        %v2873 = vunpack.c.0.s8 %v2872
        %v2874 = vlaneseq
        %v2875 = vshrl.u32 %v2874, 7
        %v2876 = vsub.s32 %v2873, %v2875
        %v2877 = vrot.slane %v2863, %v2876
        %v2878 = vcombine.high %v2870, %v2870
        %v2879 = vcombine.high %v2877, %v2877
        %v2881 = vunpack.c.l.s4 1983009808
        %v2882 = vunpack.c.0.s8 %v2881
        %v2883 = vlaneseq
        %v2884 = vshrl.u32 %v2883, 7
        %v2885 = vsub.s32 %v2882, %v2884
        %v2886 = vrot.slane %v2692, %v2885
        %v2887 = vcombine.high %v2693, %v2693
        %v2889 = vunpack.c.l.s4 1983009808
        %v2890 = vunpack.c.0.s8 %v2889
        %v2891 = vlaneseq
        %v2892 = vshrl.u32 %v2891, 7
        %v2893 = vsub.s32 %v2890, %v2892
        %v2894 = vrot.slane %v2693, %v2893
        %v2896 = vunpack.c.l.s4 1983009808
        %v2897 = vunpack.c.0.s8 %v2896
        %v2898 = vlaneseq
        %v2899 = vshrl.u32 %v2898, 7
        %v2900 = vsub.s32 %v2897, %v2899
        %v2901 = vrot.slane %v2887, %v2900
        %v2902 = vcombine.high %v2894, %v2894
        %v2903 = vcombine.high %v2901, %v2901
        %v2905 = vunpack.c.l.s4 1983009808
        %v2906 = vunpack.c.0.s8 %v2905
        %v2907 = vlaneseq
        %v2908 = vshrl.u32 %v2907, 7
        %v2909 = vsub.s32 %v2906, %v2908
        %v2910 = vrot.slane %v2694, %v2909
        %v2911 = vcombine.high %v2695, %v2695
        %v2913 = vunpack.c.l.s4 1983009808
        %v2914 = vunpack.c.0.s8 %v2913
        %v2915 = vlaneseq
        %v2916 = vshrl.u32 %v2915, 7
        %v2917 = vsub.s32 %v2914, %v2916
        %v2918 = vrot.slane %v2695, %v2917
        %v2920 = vunpack.c.l.s4 1983009808
        %v2921 = vunpack.c.0.s8 %v2920
        %v2922 = vlaneseq
        %v2923 = vshrl.u32 %v2922, 7
        %v2924 = vsub.s32 %v2921, %v2923
        %v2925 = vrot.slane %v2911, %v2924
        %v2926 = vcombine.high %v2918, %v2918
        %v2927 = vcombine.high %v2925, %v2925
        %v2929 = vunpack.c.l.s4 1983009808
        %v2930 = vunpack.c.0.s8 %v2929
        %v2931 = vlaneseq
        %v2932 = vshrl.u32 %v2931, 7
        %v2933 = vsub.s32 %v2930, %v2932
        %v2934 = vrot.slane %v2696, %v2933
        %v2935 = vcombine.high %v2697, %v2697
        %v2937 = vunpack.c.l.s4 1983009808
        %v2938 = vunpack.c.0.s8 %v2937
        %v2939 = vlaneseq
        %v2940 = vshrl.u32 %v2939, 7
        %v2941 = vsub.s32 %v2938, %v2940
        %v2942 = vrot.slane %v2697, %v2941
        %v2944 = vunpack.c.l.s4 1983009808
        %v2945 = vunpack.c.0.s8 %v2944
        %v2946 = vlaneseq
        %v2947 = vshrl.u32 %v2946, 7
        %v2948 = vsub.s32 %v2945, %v2947
        %v2949 = vrot.slane %v2935, %v2948
        %v2950 = vcombine.high %v2942, %v2942
        %v2951 = vcombine.high %v2949, %v2949
        %v2953 = vunpack.c.l.s4 1983009808
        %v2954 = vunpack.c.0.s8 %v2953
        %v2955 = vlaneseq
        %v2956 = vshrl.u32 %v2955, 7
        %v2957 = vsub.s32 %v2954, %v2956
        %v2958 = vrot.slane %v2698, %v2957
        %s2959 = scalar_lea.vmem %s1, 384
        %v2960 = vld [vmem:[%s2959] sm:$0xff]
        %v2961 = vld [vmem:[%s2959 + $0x8] sm:$0xff]
        %v2962 = vld [vmem:[%s2959 + $0x10] sm:$0xff]
        %v2963 = vld [vmem:[%s2959 + $0x18] sm:$0xff]
        %v2964 = vld [vmem:[%s2959 + $0x20] sm:$0xff]
        %v2965 = vld [vmem:[%s2959 + $0x28] sm:$0xff]
        %v2966 = vld [vmem:[%s2959 + $0x30] sm:$0xff]
        %v2967 = vld [vmem:[%s2959 + $0x38] sm:$0xff]
        %v2968 = vld [vmem:[%s2959 + $0x40] sm:$0xff]
        %v2969 = vld [vmem:[%s2959 + $0x48] sm:$0xff]
        %v2970 = vld [vmem:[%s2959 + $0x50] sm:$0xff]
        %v2971 = vld [vmem:[%s2959 + $0x58] sm:$0xff]
        %v2972 = vld [vmem:[%s2959 + $0x60] sm:$0xff]
        %v2973 = vld [vmem:[%s2959 + $0x68] sm:$0xff]
        %v2974 = vld [vmem:[%s2959 + $0x70] sm:$0xff]
        %v2975 = vld [vmem:[%s2959 + $0x78] sm:$0xff]
        %v2976 = vcombine.low %v2726, %v2734
        %v2977 = vcombine.low %v2733, %v2735
        %v2979 = vunpack.c.l.s4 1983009808
        %v2980 = vunpack.c.0.s8 %v2979
        %v2981 = vlaneseq
        %v2982 = vshrl.u32 %v2981, 7
        %v2983 = vsub.s32 %v2980, %v2982
        %v2984 = vrot.slane %v2976, %v2983
        %v2986 = vunpack.c.l.s4 1983009808
        %v2987 = vunpack.c.0.s8 %v2986
        %v2988 = vlaneseq
        %v2989 = vshrl.u32 %v2988, 7
        %v2990 = vsub.s32 %v2987, %v2989
        %v2991 = vrot.slane %v2977, %v2990
        %v2992 = vcombine.low %v2984, %v2991
        %v2993 = vcombine.low %v2742, %v2750
        %v2994 = vcombine.low %v2758, %v2757
        %v2996 = vunpack.c.l.s4 1983009808
        %v2997 = vunpack.c.0.s8 %v2996
        %v2998 = vlaneseq
        %v2999 = vshrl.u32 %v2998, 7
        %v3000 = vsub.s32 %v2997, %v2999
        %v3001 = vrot.slane %v2993, %v3000
        %v3003 = vunpack.c.l.s4 1983009808
        %v3004 = vunpack.c.0.s8 %v3003
        %v3005 = vlaneseq
        %v3006 = vshrl.u32 %v3005, 7
        %v3007 = vsub.s32 %v3004, %v3006
        %v3008 = vrot.slane %v2994, %v3007
        %v3009 = vcombine.low %v3001, %v3008
        %v3010 = vcombine.low %v2759, %v2766
        %v3011 = vcombine.low %v2774, %v2782
        %v3013 = vunpack.c.l.s4 1983009808
        %v3014 = vunpack.c.0.s8 %v3013
        %v3015 = vlaneseq
        %v3016 = vshrl.u32 %v3015, 7
        %v3017 = vsub.s32 %v3014, %v3016
        %v3018 = vrot.slane %v3010, %v3017
        %v3020 = vunpack.c.l.s4 1983009808
        %v3021 = vunpack.c.0.s8 %v3020
        %v3022 = vlaneseq
        %v3023 = vshrl.u32 %v3022, 7
        %v3024 = vsub.s32 %v3021, %v3023
        %v3025 = vrot.slane %v3011, %v3024
        %v3026 = vcombine.low %v3018, %v3025
        %v3027 = vcombine.low %v2781, %v2783
        %v3028 = vcombine.low %v2790, %v2798
        %v3030 = vunpack.c.l.s4 1983009808
        %v3031 = vunpack.c.0.s8 %v3030
        %v3032 = vlaneseq
        %v3033 = vshrl.u32 %v3032, 7
        %v3034 = vsub.s32 %v3031, %v3033
        %v3035 = vrot.slane %v3027, %v3034
        %v3037 = vunpack.c.l.s4 1983009808
        %v3038 = vunpack.c.0.s8 %v3037
        %v3039 = vlaneseq
        %v3040 = vshrl.u32 %v3039, 7
        %v3041 = vsub.s32 %v3038, %v3040
        %v3042 = vrot.slane %v3028, %v3041
        %v3043 = vcombine.low %v3035, %v3042
        %v3044 = vcombine.low %v2806, %v2805
        %v3045 = vcombine.low %v2807, %v2814
        %v3047 = vunpack.c.l.s4 1983009808
        %v3048 = vunpack.c.0.s8 %v3047
        %v3049 = vlaneseq
        %v3050 = vshrl.u32 %v3049, 7
        %v3051 = vsub.s32 %v3048, %v3050
        %v3052 = vrot.slane %v3044, %v3051
        %v3054 = vunpack.c.l.s4 1983009808
        %v3055 = vunpack.c.0.s8 %v3054
        %v3056 = vlaneseq
        %v3057 = vshrl.u32 %v3056, 7
        %v3058 = vsub.s32 %v3055, %v3057
        %v3059 = vrot.slane %v3045, %v3058
        %v3060 = vcombine.low %v3052, %v3059
        %v3061 = vcombine.low %v2822, %v2830
        %v3062 = vcombine.low %v2829, %v2831
        %v3064 = vunpack.c.l.s4 1983009808
        %v3065 = vunpack.c.0.s8 %v3064
        %v3066 = vlaneseq
        %v3067 = vshrl.u32 %v3066, 7
        %v3068 = vsub.s32 %v3065, %v3067
        %v3069 = vrot.slane %v3061, %v3068
        %v3071 = vunpack.c.l.s4 1983009808
        %v3072 = vunpack.c.0.s8 %v3071
        %v3073 = vlaneseq
        %v3074 = vshrl.u32 %v3073, 7
        %v3075 = vsub.s32 %v3072, %v3074
        %v3076 = vrot.slane %v3062, %v3075
        %v3077 = vcombine.low %v3069, %v3076
        %v3078 = vcombine.low %v2838, %v2846
        %v3079 = vcombine.low %v2854, %v2853
        %v3081 = vunpack.c.l.s4 1983009808
        %v3082 = vunpack.c.0.s8 %v3081
        %v3083 = vlaneseq
        %v3084 = vshrl.u32 %v3083, 7
        %v3085 = vsub.s32 %v3082, %v3084
        %v3086 = vrot.slane %v3078, %v3085
        %v3088 = vunpack.c.l.s4 1983009808
        %v3089 = vunpack.c.0.s8 %v3088
        %v3090 = vlaneseq
        %v3091 = vshrl.u32 %v3090, 7
        %v3092 = vsub.s32 %v3089, %v3091
        %v3093 = vrot.slane %v3079, %v3092
        %v3094 = vcombine.low %v3086, %v3093
        %v3095 = vcombine.low %v2855, %v2862
        %v3096 = vcombine.low %v2870, %v2878
        %v3098 = vunpack.c.l.s4 1983009808
        %v3099 = vunpack.c.0.s8 %v3098
        %v3100 = vlaneseq
        %v3101 = vshrl.u32 %v3100, 7
        %v3102 = vsub.s32 %v3099, %v3101
        %v3103 = vrot.slane %v3095, %v3102
        %v3105 = vunpack.c.l.s4 1983009808
        %v3106 = vunpack.c.0.s8 %v3105
        %v3107 = vlaneseq
        %v3108 = vshrl.u32 %v3107, 7
        %v3109 = vsub.s32 %v3106, %v3108
        %v3110 = vrot.slane %v3096, %v3109
        %v3111 = vcombine.low %v3103, %v3110
        %v3112 = vcombine.low %v2877, %v2879
        %v3113 = vcombine.low %v2886, %v2894
        %v3115 = vunpack.c.l.s4 1983009808
        %v3116 = vunpack.c.0.s8 %v3115
        %v3117 = vlaneseq
        %v3118 = vshrl.u32 %v3117, 7
        %v3119 = vsub.s32 %v3116, %v3118
        %v3120 = vrot.slane %v3112, %v3119
        %v3122 = vunpack.c.l.s4 1983009808
        %v3123 = vunpack.c.0.s8 %v3122
        %v3124 = vlaneseq
        %v3125 = vshrl.u32 %v3124, 7
        %v3126 = vsub.s32 %v3123, %v3125
        %v3127 = vrot.slane %v3113, %v3126
        %v3128 = vcombine.low %v3120, %v3127
        %v3129 = vcombine.low %v2902, %v2901
        %v3130 = vcombine.low %v2903, %v2910
        %v3132 = vunpack.c.l.s4 1983009808
        %v3133 = vunpack.c.0.s8 %v3132
        %v3134 = vlaneseq
        %v3135 = vshrl.u32 %v3134, 7
        %v3136 = vsub.s32 %v3133, %v3135
        %v3137 = vrot.slane %v3129, %v3136
        %v3139 = vunpack.c.l.s4 1983009808
        %v3140 = vunpack.c.0.s8 %v3139
        %v3141 = vlaneseq
        %v3142 = vshrl.u32 %v3141, 7
        %v3143 = vsub.s32 %v3140, %v3142
        %v3144 = vrot.slane %v3130, %v3143
        %v3145 = vcombine.low %v3137, %v3144
        %v3146 = vcombine.low %v2918, %v2926
        %v3147 = vcombine.low %v2925, %v2927
        %v3149 = vunpack.c.l.s4 1983009808
        %v3150 = vunpack.c.0.s8 %v3149
        %v3151 = vlaneseq
        %v3152 = vshrl.u32 %v3151, 7
        %v3153 = vsub.s32 %v3150, %v3152
        %v3154 = vrot.slane %v3146, %v3153
        %v3156 = vunpack.c.l.s4 1983009808
        %v3157 = vunpack.c.0.s8 %v3156
        %v3158 = vlaneseq
        %v3159 = vshrl.u32 %v3158, 7
        %v3160 = vsub.s32 %v3157, %v3159
        %v3161 = vrot.slane %v3147, %v3160
        %v3162 = vcombine.low %v3154, %v3161
        %v3163 = vcombine.low %v2934, %v2942
        %v3164 = vcombine.low %v2950, %v2949
        %v3166 = vunpack.c.l.s4 1983009808
        %v3167 = vunpack.c.0.s8 %v3166
        %v3168 = vlaneseq
        %v3169 = vshrl.u32 %v3168, 7
        %v3170 = vsub.s32 %v3167, %v3169
        %v3171 = vrot.slane %v3163, %v3170
        %v3173 = vunpack.c.l.s4 1983009808
        %v3174 = vunpack.c.0.s8 %v3173
        %v3175 = vlaneseq
        %v3176 = vshrl.u32 %v3175, 7
        %v3177 = vsub.s32 %v3174, %v3176
        %v3178 = vrot.slane %v3164, %v3177
        %v3179 = vcombine.low %v3171, %v3178
        %v3180 = vcombine.low %v2951, %v2958
        %v3182 = vunpack.c.l.s4 1983009808
        %v3183 = vunpack.c.0.s8 %v3182
        %v3184 = vlaneseq
        %v3185 = vshrl.u32 %v3184, 7
        %v3186 = vsub.s32 %v3183, %v3185
        %v3187 = vrot.slane %v3180, %v3186
        %3201 = vmatprep.subr.mxu0 0.0
        %3202 = vmatpush1.msra.mxu0 %v2975
        %3203 = vmatprep.subr.mxu0 0.0
        %3204 = vmatpush1.msra.mxu0 %v2974
        %3205 = vmatprep.subr.mxu0 0.0
        %3206 = vmatpush1.msra.mxu0 %v2973
        %3207 = vmatprep.subr.mxu0 0.0
        %3208 = vmatpush1.msra.mxu0 %v2972
        %3209 = vmatprep.subr.mxu0 0.0
        %3210 = vmatpush1.msra.mxu0 %v2971
        %3211 = vmatprep.subr.mxu0 0.0
        %3212 = vmatpush1.msra.mxu0 %v2970
        %3213 = vmatprep.subr.mxu0 0.0
        %3214 = vmatpush1.msra.mxu0 %v2969
        %3215 = vmatprep.subr.mxu0 0.0
        %3216 = vmatpush1.msra.mxu0 %v2968
        %3217 = vmatprep.subr.mxu0 0.0
        %3218 = vmatpush1.msra.mxu0 %v2967
        %3219 = vmatprep.subr.mxu0 0.0
        %3220 = vmatpush1.msra.mxu0 %v2966
        %3221 = vmatprep.subr.mxu0 0.0
        %3222 = vmatpush1.msra.mxu0 %v2965
        %3223 = vmatprep.subr.mxu0 0.0
        %3224 = vmatpush1.msra.mxu0 %v2964
        %3225 = vmatprep.subr.mxu0 0.0
        %3226 = vmatpush1.msra.mxu0 %v2963
        %3227 = vmatprep.subr.mxu0 0.0
        %3228 = vmatpush1.msra.mxu0 %v2962
        %3229 = vmatprep.subr.mxu0 0.0
        %3230 = vmatpush1.msra.mxu0 %v2961
        %3231 = vmatprep.subr.mxu0 0.0
        %3232 = vmatpush1.msra.mxu0 %v2960
        %3233 = vmatprep.subr.mxu0 0.0
        %3234 = vmatpush2.msra.mxu0 0.0
        %3235 = vmatprep.subr.mxu0 0.0
        %3236 = vmatpush2.msra.mxu0 0.0
        %3237 = vmatprep.subr.mxu0 0.0
        %3238 = vmatpush2.msra.mxu0 0.0
        %3239 = vmatprep.subr.mxu0 0.0
        %3240 = vmatpush2.msra.mxu0 0.0
        %3241 = vmatprep.subr.mxu0 0.0
        %3242 = vmatpush2.msra.mxu0 0.0
        %3243 = vmatprep.subr.mxu0 0.0
        %3244 = vmatpush2.msra.mxu0 0.0
        %3245 = vmatprep.subr.mxu0 0.0
        %3246 = vmatpush2.msra.mxu0 0.0
        %3247 = vmatprep.subr.mxu0 0.0
        %3248 = vmatpush2.msra.mxu0 0.0
        %3249 = vmatprep.subr.mxu0 0.0
        %3250 = vmatpush2.msra.mxu0 0.0
        %3251 = vmatprep.subr.mxu0 0.0
        %3252 = vmatpush2.msra.mxu0 0.0
        %3253 = vmatprep.subr.mxu0 0.0
        %3254 = vmatpush2.msra.mxu0 0.0
        %3255 = vmatprep.subr.mxu0 0.0
        %3256 = vmatpush2.msra.mxu0 0.0
        %3257 = vmatprep.subr.mxu0 0.0
        %3258 = vmatpush2.msra.mxu0 0.0
        %3259 = vmatprep.subr.mxu0 0.0
        %3260 = vmatpush2.msra.mxu0 0.0
        %3261 = vmatprep.subr.mxu0 0.0
        %3262 = vmatpush2.msra.mxu0 0.0
        %3263 = vmatprep.subr.mxu0 0.0
        %3264 = vmatpush2.msra.mxu0 0.0
        %3265 = vmatprep.mubr.f32.mxu0 0.0
        %3266 = vmatmul.mubr.f32.gmra.mxu0 %v2992
        %v3267 = vpop.f32.mrf.mxu0
        %v3268 = vadd.f32 0.0, %v3267
        %v3269 = vpop.f32.mrf.mxu0
        %3270 = vmatprep.mubr.f32.mxu0 0.0
        %3271 = vmatmul.mubr.f32.gmra.mxu0 %v3009
        %v3272 = vpop.f32.mrf.mxu0
        %v3273 = vadd.f32 0.0, %v3272
        %v3274 = vpop.f32.mrf.mxu0
        %3275 = vmatprep.mubr.f32.mxu0 0.0
        %3276 = vmatmul.mubr.f32.gmra.mxu0 %v3026
        %v3277 = vpop.f32.mrf.mxu0
        %v3278 = vadd.f32 0.0, %v3277
        %v3279 = vpop.f32.mrf.mxu0
        %3280 = vmatprep.mubr.f32.mxu0 0.0
        %3281 = vmatmul.mubr.f32.gmra.mxu0 %v3043
        %v3282 = vpop.f32.mrf.mxu0
        %v3283 = vadd.f32 0.0, %v3282
        %v3284 = vpop.f32.mrf.mxu0
        %3285 = vmatprep.mubr.f32.mxu0 0.0
        %3286 = vmatmul.mubr.f32.gmra.mxu0 %v3060
        %v3287 = vpop.f32.mrf.mxu0
        %v3288 = vadd.f32 0.0, %v3287
        %v3289 = vpop.f32.mrf.mxu0
        %3290 = vmatprep.mubr.f32.mxu0 0.0
        %3291 = vmatmul.mubr.f32.gmra.mxu0 %v3077
        %v3292 = vpop.f32.mrf.mxu0
        %v3293 = vadd.f32 0.0, %v3292
        %v3294 = vpop.f32.mrf.mxu0
        %3295 = vmatprep.mubr.f32.mxu0 0.0
        %3296 = vmatmul.mubr.f32.gmra.mxu0 %v3094
        %v3297 = vpop.f32.mrf.mxu0
        %v3298 = vadd.f32 0.0, %v3297
        %v3299 = vpop.f32.mrf.mxu0
        %3300 = vmatprep.mubr.f32.mxu0 0.0
        %3301 = vmatmul.mubr.f32.gmra.mxu0 %v3111
        %v3302 = vpop.f32.mrf.mxu0
        %v3303 = vadd.f32 0.0, %v3302
        %v3304 = vpop.f32.mrf.mxu0
        %3305 = vmatprep.mubr.f32.mxu0 0.0
        %3306 = vmatmul.mubr.f32.gmra.mxu0 %v3128
        %v3307 = vpop.f32.mrf.mxu0
        %v3308 = vadd.f32 0.0, %v3307
        %v3309 = vpop.f32.mrf.mxu0
        %3310 = vmatprep.mubr.f32.mxu0 0.0
        %3311 = vmatmul.mubr.f32.gmra.mxu0 %v3145
        %v3312 = vpop.f32.mrf.mxu0
        %v3313 = vadd.f32 0.0, %v3312
        %v3314 = vpop.f32.mrf.mxu0
        %3315 = vmatprep.mubr.f32.mxu0 0.0
        %3316 = vmatmul.mubr.f32.gmra.mxu0 %v3162
        %v3317 = vpop.f32.mrf.mxu0
        %v3318 = vadd.f32 0.0, %v3317
        %v3319 = vpop.f32.mrf.mxu0
        %3320 = vmatprep.mubr.f32.mxu0 0.0
        %3321 = vmatmul.mubr.f32.gmra.mxu0 %v3179
        %v3322 = vpop.f32.mrf.mxu0
        %v3323 = vadd.f32 0.0, %v3322
        %v3324 = vpop.f32.mrf.mxu0
        %3325 = vmatprep.mubr.f32.mxu0 0.0
        %3326 = vmatmul.mubr.f32.gmra.mxu0 %v3187
        %v3327 = vpop.f32.mrf.mxu0
        %v3328 = vadd.f32 0.0, %v3327
        %v3329 = vpop.f32.mrf.mxu0
        %3330 = vdwg.mxu0
        %v3331 = vadd.f32 %v2665, %v3268
        %v3332 = vadd.f32 %v2666, %v3273
        %v3333 = vadd.f32 %v2667, %v3278
        %v3334 = vadd.f32 %v2668, %v3283
        %v3335 = vadd.f32 %v2669, %v3288
        %v3336 = vadd.f32 %v2670, %v3293
        %v3337 = vadd.f32 %v2671, %v3298
        %v3338 = vadd.f32 %v2672, %v3303
        %v3339 = vadd.f32 %v2673, %v3308
        %v3340 = vadd.f32 %v2674, %v3313
        %v3341 = vadd.f32 %v2675, %v3318
        %v3342 = vadd.f32 %v2676, %v3323
        %v3343 = vadd.f32 %v2677, %v3328
        %s3344 = scalar_lea.vmem [#allocation2], 48
        %v3345 = vld [vmem:[%s3344] sm:$0xff]
        %v3346 = vld [vmem:[%s3344 + $0x8] sm:$0x3]
        %v3347 = vld [vmem:[%s3344 + $0x40] sm:$0xff]
        %v3348 = vld [vmem:[%s3344 + $0x48] sm:$0x3]
        %v3349 = vld [vmem:[%s3344 + $0x80] sm:$0xff]
        %v3350 = vld [vmem:[%s3344 + $0x88] sm:$0x3]
        %v3351 = vld [vmem:[%s3344 + $0xc0] sm:$0xff]
        %v3352 = vld [vmem:[%s3344 + $0xc8] sm:$0x3]
        %v3353 = vld [vmem:[%s3344 + $0x100] sm:$0xff]
        %v3354 = vld [vmem:[%s3344 + $0x108] sm:$0x3]
        %v3355 = vld [vmem:[%s3344 + $0x140] sm:$0xff]
        %v3356 = vld [vmem:[%s3344 + $0x148] sm:$0x3]
        %v3357 = vld [vmem:[%s3344 + $0x180] sm:$0xff]
        %v3358 = vld [vmem:[%s3344 + $0x188] sm:$0x3]
        %v3359 = vld [vmem:[%s3344 + $0x1c0] sm:$0xff]
        %v3360 = vld [vmem:[%s3344 + $0x1c8] sm:$0x3]
        %v3361 = vld [vmem:[%s3344 + $0x200] sm:$0xff]
        %v3362 = vld [vmem:[%s3344 + $0x208] sm:$0x3]
        %v3363 = vld [vmem:[%s3344 + $0x240] sm:$0xff]
        %v3364 = vld [vmem:[%s3344 + $0x248] sm:$0x3]
        %v3385 = vcombine.high %v3345, %v3345
        %v3387 = vunpack.c.l.s4 1983009808
        %v3388 = vunpack.c.0.s8 %v3387
        %v3389 = vlaneseq
        %v3390 = vshrl.u32 %v3389, 7
        %v3391 = vsub.s32 %v3388, %v3390
        %v3392 = vrot.slane %v3345, %v3391
        %v3394 = vunpack.c.l.s4 1983009808
        %v3395 = vunpack.c.0.s8 %v3394
        %v3396 = vlaneseq
        %v3397 = vshrl.u32 %v3396, 7
        %v3398 = vsub.s32 %v3395, %v3397
        %v3399 = vrot.slane %v3385, %v3398
        %v3400 = vcombine.high %v3392, %v3392
        %v3401 = vcombine.high %v3399, %v3399
        %v3403 = vunpack.c.l.s4 1983009808
        %v3404 = vunpack.c.0.s8 %v3403
        %v3405 = vlaneseq
        %v3406 = vshrl.u32 %v3405, 7
        %v3407 = vsub.s32 %v3404, %v3406
        %v3408 = vrot.slane %v3346, %v3407
        %v3409 = vcombine.high %v3347, %v3347
        %v3411 = vunpack.c.l.s4 1983009808
        %v3412 = vunpack.c.0.s8 %v3411
        %v3413 = vlaneseq
        %v3414 = vshrl.u32 %v3413, 7
        %v3415 = vsub.s32 %v3412, %v3414
        %v3416 = vrot.slane %v3347, %v3415
        %v3418 = vunpack.c.l.s4 1983009808
        %v3419 = vunpack.c.0.s8 %v3418
        %v3420 = vlaneseq
        %v3421 = vshrl.u32 %v3420, 7
        %v3422 = vsub.s32 %v3419, %v3421
        %v3423 = vrot.slane %v3409, %v3422
        %v3424 = vcombine.high %v3416, %v3416
        %v3425 = vcombine.high %v3423, %v3423
        %v3427 = vunpack.c.l.s4 1983009808
        %v3428 = vunpack.c.0.s8 %v3427
        %v3429 = vlaneseq
        %v3430 = vshrl.u32 %v3429, 7
        %v3431 = vsub.s32 %v3428, %v3430
        %v3432 = vrot.slane %v3348, %v3431
        %v3433 = vcombine.high %v3349, %v3349
        %v3435 = vunpack.c.l.s4 1983009808
        %v3436 = vunpack.c.0.s8 %v3435
        %v3437 = vlaneseq
        %v3438 = vshrl.u32 %v3437, 7
        %v3439 = vsub.s32 %v3436, %v3438
        %v3440 = vrot.slane %v3349, %v3439
        %v3442 = vunpack.c.l.s4 1983009808
        %v3443 = vunpack.c.0.s8 %v3442
        %v3444 = vlaneseq
        %v3445 = vshrl.u32 %v3444, 7
        %v3446 = vsub.s32 %v3443, %v3445
        %v3447 = vrot.slane %v3433, %v3446
        %v3448 = vcombine.high %v3440, %v3440
        %v3449 = vcombine.high %v3447, %v3447
        %v3451 = vunpack.c.l.s4 1983009808
        %v3452 = vunpack.c.0.s8 %v3451
        %v3453 = vlaneseq
        %v3454 = vshrl.u32 %v3453, 7
        %v3455 = vsub.s32 %v3452, %v3454
        %v3456 = vrot.slane %v3350, %v3455
        %v3457 = vcombine.high %v3351, %v3351
        %v3459 = vunpack.c.l.s4 1983009808
        %v3460 = vunpack.c.0.s8 %v3459
        %v3461 = vlaneseq
        %v3462 = vshrl.u32 %v3461, 7
        %v3463 = vsub.s32 %v3460, %v3462
        %v3464 = vrot.slane %v3351, %v3463
        %v3466 = vunpack.c.l.s4 1983009808
        %v3467 = vunpack.c.0.s8 %v3466
        %v3468 = vlaneseq
        %v3469 = vshrl.u32 %v3468, 7
        %v3470 = vsub.s32 %v3467, %v3469
        %v3471 = vrot.slane %v3457, %v3470
        %v3472 = vcombine.high %v3464, %v3464
        %v3473 = vcombine.high %v3471, %v3471
        %v3475 = vunpack.c.l.s4 1983009808
        %v3476 = vunpack.c.0.s8 %v3475
        %v3477 = vlaneseq
        %v3478 = vshrl.u32 %v3477, 7
        %v3479 = vsub.s32 %v3476, %v3478
        %v3480 = vrot.slane %v3352, %v3479
        %v3481 = vcombine.high %v3353, %v3353
        %v3483 = vunpack.c.l.s4 1983009808
        %v3484 = vunpack.c.0.s8 %v3483
        %v3485 = vlaneseq
        %v3486 = vshrl.u32 %v3485, 7
        %v3487 = vsub.s32 %v3484, %v3486
        %v3488 = vrot.slane %v3353, %v3487
        %v3490 = vunpack.c.l.s4 1983009808
        %v3491 = vunpack.c.0.s8 %v3490
        %v3492 = vlaneseq
        %v3493 = vshrl.u32 %v3492, 7
        %v3494 = vsub.s32 %v3491, %v3493
        %v3495 = vrot.slane %v3481, %v3494
        %v3496 = vcombine.high %v3488, %v3488
        %v3497 = vcombine.high %v3495, %v3495
        %v3499 = vunpack.c.l.s4 1983009808
        %v3500 = vunpack.c.0.s8 %v3499
        %v3501 = vlaneseq
        %v3502 = vshrl.u32 %v3501, 7
        %v3503 = vsub.s32 %v3500, %v3502
        %v3504 = vrot.slane %v3354, %v3503
        %v3505 = vcombine.high %v3355, %v3355
        %v3507 = vunpack.c.l.s4 1983009808
        %v3508 = vunpack.c.0.s8 %v3507
        %v3509 = vlaneseq
        %v3510 = vshrl.u32 %v3509, 7
        %v3511 = vsub.s32 %v3508, %v3510
        %v3512 = vrot.slane %v3355, %v3511
        %v3514 = vunpack.c.l.s4 1983009808
        %v3515 = vunpack.c.0.s8 %v3514
        %v3516 = vlaneseq
        %v3517 = vshrl.u32 %v3516, 7
        %v3518 = vsub.s32 %v3515, %v3517
        %v3519 = vrot.slane %v3505, %v3518
        %v3520 = vcombine.high %v3512, %v3512
        %v3521 = vcombine.high %v3519, %v3519
        %v3523 = vunpack.c.l.s4 1983009808
        %v3524 = vunpack.c.0.s8 %v3523
        %v3525 = vlaneseq
        %v3526 = vshrl.u32 %v3525, 7
        %v3527 = vsub.s32 %v3524, %v3526
        %v3528 = vrot.slane %v3356, %v3527
        %v3529 = vcombine.high %v3357, %v3357
        %v3531 = vunpack.c.l.s4 1983009808
        %v3532 = vunpack.c.0.s8 %v3531
        %v3533 = vlaneseq
        %v3534 = vshrl.u32 %v3533, 7
        %v3535 = vsub.s32 %v3532, %v3534
        %v3536 = vrot.slane %v3357, %v3535
        %v3538 = vunpack.c.l.s4 1983009808
        %v3539 = vunpack.c.0.s8 %v3538
        %v3540 = vlaneseq
        %v3541 = vshrl.u32 %v3540, 7
        %v3542 = vsub.s32 %v3539, %v3541
        %v3543 = vrot.slane %v3529, %v3542
        %v3544 = vcombine.high %v3536, %v3536
        %v3545 = vcombine.high %v3543, %v3543
        %v3547 = vunpack.c.l.s4 1983009808
        %v3548 = vunpack.c.0.s8 %v3547
        %v3549 = vlaneseq
        %v3550 = vshrl.u32 %v3549, 7
        %v3551 = vsub.s32 %v3548, %v3550
        %v3552 = vrot.slane %v3358, %v3551
        %v3553 = vcombine.high %v3359, %v3359
        %v3555 = vunpack.c.l.s4 1983009808
        %v3556 = vunpack.c.0.s8 %v3555
        %v3557 = vlaneseq
        %v3558 = vshrl.u32 %v3557, 7
        %v3559 = vsub.s32 %v3556, %v3558
        %v3560 = vrot.slane %v3359, %v3559
        %v3562 = vunpack.c.l.s4 1983009808
        %v3563 = vunpack.c.0.s8 %v3562
        %v3564 = vlaneseq
        %v3565 = vshrl.u32 %v3564, 7
        %v3566 = vsub.s32 %v3563, %v3565
        %v3567 = vrot.slane %v3553, %v3566
        %v3568 = vcombine.high %v3560, %v3560
        %v3569 = vcombine.high %v3567, %v3567
        %v3571 = vunpack.c.l.s4 1983009808
        %v3572 = vunpack.c.0.s8 %v3571
        %v3573 = vlaneseq
        %v3574 = vshrl.u32 %v3573, 7
        %v3575 = vsub.s32 %v3572, %v3574
        %v3576 = vrot.slane %v3360, %v3575
        %v3577 = vcombine.high %v3361, %v3361
        %v3579 = vunpack.c.l.s4 1983009808
        %v3580 = vunpack.c.0.s8 %v3579
        %v3581 = vlaneseq
        %v3582 = vshrl.u32 %v3581, 7
        %v3583 = vsub.s32 %v3580, %v3582
        %v3584 = vrot.slane %v3361, %v3583
        %v3586 = vunpack.c.l.s4 1983009808
        %v3587 = vunpack.c.0.s8 %v3586
        %v3588 = vlaneseq
        %v3589 = vshrl.u32 %v3588, 7
        %v3590 = vsub.s32 %v3587, %v3589
        %v3591 = vrot.slane %v3577, %v3590
        %v3592 = vcombine.high %v3584, %v3584
        %v3593 = vcombine.high %v3591, %v3591
        %v3595 = vunpack.c.l.s4 1983009808
        %v3596 = vunpack.c.0.s8 %v3595
        %v3597 = vlaneseq
        %v3598 = vshrl.u32 %v3597, 7
        %v3599 = vsub.s32 %v3596, %v3598
        %v3600 = vrot.slane %v3362, %v3599
        %v3601 = vcombine.high %v3363, %v3363
        %v3603 = vunpack.c.l.s4 1983009808
        %v3604 = vunpack.c.0.s8 %v3603
        %v3605 = vlaneseq
        %v3606 = vshrl.u32 %v3605, 7
        %v3607 = vsub.s32 %v3604, %v3606
        %v3608 = vrot.slane %v3363, %v3607
        %v3610 = vunpack.c.l.s4 1983009808
        %v3611 = vunpack.c.0.s8 %v3610
        %v3612 = vlaneseq
        %v3613 = vshrl.u32 %v3612, 7
        %v3614 = vsub.s32 %v3611, %v3613
        %v3615 = vrot.slane %v3601, %v3614
        %v3616 = vcombine.high %v3608, %v3608
        %v3617 = vcombine.high %v3615, %v3615
        %v3619 = vunpack.c.l.s4 1983009808
        %v3620 = vunpack.c.0.s8 %v3619
        %v3621 = vlaneseq
        %v3622 = vshrl.u32 %v3621, 7
        %v3623 = vsub.s32 %v3620, %v3622
        %v3624 = vrot.slane %v3364, %v3623
        %s3625 = scalar_lea.vmem %s1, 512
        %v3626 = vld [vmem:[%s3625] sm:$0xff]
        %v3627 = vld [vmem:[%s3625 + $0x8] sm:$0xff]
        %v3628 = vld [vmem:[%s3625 + $0x10] sm:$0xff]
        %v3629 = vld [vmem:[%s3625 + $0x18] sm:$0xff]
        %v3630 = vld [vmem:[%s3625 + $0x20] sm:$0xff]
        %v3631 = vld [vmem:[%s3625 + $0x28] sm:$0xff]
        %v3632 = vld [vmem:[%s3625 + $0x30] sm:$0xff]
        %v3633 = vld [vmem:[%s3625 + $0x38] sm:$0xff]
        %v3634 = vld [vmem:[%s3625 + $0x40] sm:$0xff]
        %v3635 = vld [vmem:[%s3625 + $0x48] sm:$0xff]
        %v3636 = vld [vmem:[%s3625 + $0x50] sm:$0xff]
        %v3637 = vld [vmem:[%s3625 + $0x58] sm:$0xff]
        %v3638 = vld [vmem:[%s3625 + $0x60] sm:$0xff]
        %v3639 = vld [vmem:[%s3625 + $0x68] sm:$0xff]
        %v3640 = vld [vmem:[%s3625 + $0x70] sm:$0xff]
        %v3641 = vld [vmem:[%s3625 + $0x78] sm:$0xff]
        %v3642 = vcombine.low %v3392, %v3400
        %v3643 = vcombine.low %v3399, %v3401
        %v3645 = vunpack.c.l.s4 1983009808
        %v3646 = vunpack.c.0.s8 %v3645
        %v3647 = vlaneseq
        %v3648 = vshrl.u32 %v3647, 7
        %v3649 = vsub.s32 %v3646, %v3648
        %v3650 = vrot.slane %v3642, %v3649
        %v3652 = vunpack.c.l.s4 1983009808
        %v3653 = vunpack.c.0.s8 %v3652
        %v3654 = vlaneseq
        %v3655 = vshrl.u32 %v3654, 7
        %v3656 = vsub.s32 %v3653, %v3655
        %v3657 = vrot.slane %v3643, %v3656
        %v3658 = vcombine.low %v3650, %v3657
        %v3659 = vcombine.low %v3408, %v3416
        %v3660 = vcombine.low %v3424, %v3423
        %v3662 = vunpack.c.l.s4 1983009808
        %v3663 = vunpack.c.0.s8 %v3662
        %v3664 = vlaneseq
        %v3665 = vshrl.u32 %v3664, 7
        %v3666 = vsub.s32 %v3663, %v3665
        %v3667 = vrot.slane %v3659, %v3666
        %v3669 = vunpack.c.l.s4 1983009808
        %v3670 = vunpack.c.0.s8 %v3669
        %v3671 = vlaneseq
        %v3672 = vshrl.u32 %v3671, 7
        %v3673 = vsub.s32 %v3670, %v3672
        %v3674 = vrot.slane %v3660, %v3673
        %v3675 = vcombine.low %v3667, %v3674
        %v3676 = vcombine.low %v3425, %v3432
        %v3677 = vcombine.low %v3440, %v3448
        %v3679 = vunpack.c.l.s4 1983009808
        %v3680 = vunpack.c.0.s8 %v3679
        %v3681 = vlaneseq
        %v3682 = vshrl.u32 %v3681, 7
        %v3683 = vsub.s32 %v3680, %v3682
        %v3684 = vrot.slane %v3676, %v3683
        %v3686 = vunpack.c.l.s4 1983009808
        %v3687 = vunpack.c.0.s8 %v3686
        %v3688 = vlaneseq
        %v3689 = vshrl.u32 %v3688, 7
        %v3690 = vsub.s32 %v3687, %v3689
        %v3691 = vrot.slane %v3677, %v3690
        %v3692 = vcombine.low %v3684, %v3691
        %v3693 = vcombine.low %v3447, %v3449
        %v3694 = vcombine.low %v3456, %v3464
        %v3696 = vunpack.c.l.s4 1983009808
        %v3697 = vunpack.c.0.s8 %v3696
        %v3698 = vlaneseq
        %v3699 = vshrl.u32 %v3698, 7
        %v3700 = vsub.s32 %v3697, %v3699
        %v3701 = vrot.slane %v3693, %v3700
        %v3703 = vunpack.c.l.s4 1983009808
        %v3704 = vunpack.c.0.s8 %v3703
        %v3705 = vlaneseq
        %v3706 = vshrl.u32 %v3705, 7
        %v3707 = vsub.s32 %v3704, %v3706
        %v3708 = vrot.slane %v3694, %v3707
        %v3709 = vcombine.low %v3701, %v3708
        %v3710 = vcombine.low %v3472, %v3471
        %v3711 = vcombine.low %v3473, %v3480
        %v3713 = vunpack.c.l.s4 1983009808
        %v3714 = vunpack.c.0.s8 %v3713
        %v3715 = vlaneseq
        %v3716 = vshrl.u32 %v3715, 7
        %v3717 = vsub.s32 %v3714, %v3716
        %v3718 = vrot.slane %v3710, %v3717
        %v3720 = vunpack.c.l.s4 1983009808
        %v3721 = vunpack.c.0.s8 %v3720
        %v3722 = vlaneseq
        %v3723 = vshrl.u32 %v3722, 7
        %v3724 = vsub.s32 %v3721, %v3723
        %v3725 = vrot.slane %v3711, %v3724
        %v3726 = vcombine.low %v3718, %v3725
        %v3727 = vcombine.low %v3488, %v3496
        %v3728 = vcombine.low %v3495, %v3497
        %v3730 = vunpack.c.l.s4 1983009808
        %v3731 = vunpack.c.0.s8 %v3730
        %v3732 = vlaneseq
        %v3733 = vshrl.u32 %v3732, 7
        %v3734 = vsub.s32 %v3731, %v3733
        %v3735 = vrot.slane %v3727, %v3734
        %v3737 = vunpack.c.l.s4 1983009808
        %v3738 = vunpack.c.0.s8 %v3737
        %v3739 = vlaneseq
        %v3740 = vshrl.u32 %v3739, 7
        %v3741 = vsub.s32 %v3738, %v3740
        %v3742 = vrot.slane %v3728, %v3741
        %v3743 = vcombine.low %v3735, %v3742
        %v3744 = vcombine.low %v3504, %v3512
        %v3745 = vcombine.low %v3520, %v3519
        %v3747 = vunpack.c.l.s4 1983009808
        %v3748 = vunpack.c.0.s8 %v3747
        %v3749 = vlaneseq
        %v3750 = vshrl.u32 %v3749, 7
        %v3751 = vsub.s32 %v3748, %v3750
        %v3752 = vrot.slane %v3744, %v3751
        %v3754 = vunpack.c.l.s4 1983009808
        %v3755 = vunpack.c.0.s8 %v3754
        %v3756 = vlaneseq
        %v3757 = vshrl.u32 %v3756, 7
        %v3758 = vsub.s32 %v3755, %v3757
        %v3759 = vrot.slane %v3745, %v3758
        %v3760 = vcombine.low %v3752, %v3759
        %v3761 = vcombine.low %v3521, %v3528
        %v3762 = vcombine.low %v3536, %v3544
        %v3764 = vunpack.c.l.s4 1983009808
        %v3765 = vunpack.c.0.s8 %v3764
        %v3766 = vlaneseq
        %v3767 = vshrl.u32 %v3766, 7
        %v3768 = vsub.s32 %v3765, %v3767
        %v3769 = vrot.slane %v3761, %v3768
        %v3771 = vunpack.c.l.s4 1983009808
        %v3772 = vunpack.c.0.s8 %v3771
        %v3773 = vlaneseq
        %v3774 = vshrl.u32 %v3773, 7
        %v3775 = vsub.s32 %v3772, %v3774
        %v3776 = vrot.slane %v3762, %v3775
        %v3777 = vcombine.low %v3769, %v3776
        %v3778 = vcombine.low %v3543, %v3545
        %v3779 = vcombine.low %v3552, %v3560
        %v3781 = vunpack.c.l.s4 1983009808
        %v3782 = vunpack.c.0.s8 %v3781
        %v3783 = vlaneseq
        %v3784 = vshrl.u32 %v3783, 7
        %v3785 = vsub.s32 %v3782, %v3784
        %v3786 = vrot.slane %v3778, %v3785
        %v3788 = vunpack.c.l.s4 1983009808
        %v3789 = vunpack.c.0.s8 %v3788
        %v3790 = vlaneseq
        %v3791 = vshrl.u32 %v3790, 7
        %v3792 = vsub.s32 %v3789, %v3791
        %v3793 = vrot.slane %v3779, %v3792
        %v3794 = vcombine.low %v3786, %v3793
        %v3795 = vcombine.low %v3568, %v3567
        %v3796 = vcombine.low %v3569, %v3576
        %v3798 = vunpack.c.l.s4 1983009808
        %v3799 = vunpack.c.0.s8 %v3798
        %v3800 = vlaneseq
        %v3801 = vshrl.u32 %v3800, 7
        %v3802 = vsub.s32 %v3799, %v3801
        %v3803 = vrot.slane %v3795, %v3802
        %v3805 = vunpack.c.l.s4 1983009808
        %v3806 = vunpack.c.0.s8 %v3805
        %v3807 = vlaneseq
        %v3808 = vshrl.u32 %v3807, 7
        %v3809 = vsub.s32 %v3806, %v3808
        %v3810 = vrot.slane %v3796, %v3809
        %v3811 = vcombine.low %v3803, %v3810
        %v3812 = vcombine.low %v3584, %v3592
        %v3813 = vcombine.low %v3591, %v3593
        %v3815 = vunpack.c.l.s4 1983009808
        %v3816 = vunpack.c.0.s8 %v3815
        %v3817 = vlaneseq
        %v3818 = vshrl.u32 %v3817, 7
        %v3819 = vsub.s32 %v3816, %v3818
        %v3820 = vrot.slane %v3812, %v3819
        %v3822 = vunpack.c.l.s4 1983009808
        %v3823 = vunpack.c.0.s8 %v3822
        %v3824 = vlaneseq
        %v3825 = vshrl.u32 %v3824, 7
        %v3826 = vsub.s32 %v3823, %v3825
        %v3827 = vrot.slane %v3813, %v3826
        %v3828 = vcombine.low %v3820, %v3827
        %v3829 = vcombine.low %v3600, %v3608
        %v3830 = vcombine.low %v3616, %v3615
        %v3832 = vunpack.c.l.s4 1983009808
        %v3833 = vunpack.c.0.s8 %v3832
        %v3834 = vlaneseq
        %v3835 = vshrl.u32 %v3834, 7
        %v3836 = vsub.s32 %v3833, %v3835
        %v3837 = vrot.slane %v3829, %v3836
        %v3839 = vunpack.c.l.s4 1983009808
        %v3840 = vunpack.c.0.s8 %v3839
        %v3841 = vlaneseq
        %v3842 = vshrl.u32 %v3841, 7
        %v3843 = vsub.s32 %v3840, %v3842
        %v3844 = vrot.slane %v3830, %v3843
        %v3845 = vcombine.low %v3837, %v3844
        %v3846 = vcombine.low %v3617, %v3624
        %v3848 = vunpack.c.l.s4 1983009808
        %v3849 = vunpack.c.0.s8 %v3848
        %v3850 = vlaneseq
        %v3851 = vshrl.u32 %v3850, 7
        %v3852 = vsub.s32 %v3849, %v3851
        %v3853 = vrot.slane %v3846, %v3852
        %3867 = vmatprep.subr.mxu0 0.0
        %3868 = vmatpush1.msra.mxu0 %v3641
        %3869 = vmatprep.subr.mxu0 0.0
        %3870 = vmatpush1.msra.mxu0 %v3640
        %3871 = vmatprep.subr.mxu0 0.0
        %3872 = vmatpush1.msra.mxu0 %v3639
        %3873 = vmatprep.subr.mxu0 0.0
        %3874 = vmatpush1.msra.mxu0 %v3638
        %3875 = vmatprep.subr.mxu0 0.0
        %3876 = vmatpush1.msra.mxu0 %v3637
        %3877 = vmatprep.subr.mxu0 0.0
        %3878 = vmatpush1.msra.mxu0 %v3636
        %3879 = vmatprep.subr.mxu0 0.0
        %3880 = vmatpush1.msra.mxu0 %v3635
        %3881 = vmatprep.subr.mxu0 0.0
        %3882 = vmatpush1.msra.mxu0 %v3634
        %3883 = vmatprep.subr.mxu0 0.0
        %3884 = vmatpush1.msra.mxu0 %v3633
        %3885 = vmatprep.subr.mxu0 0.0
        %3886 = vmatpush1.msra.mxu0 %v3632
        %3887 = vmatprep.subr.mxu0 0.0
        %3888 = vmatpush1.msra.mxu0 %v3631
        %3889 = vmatprep.subr.mxu0 0.0
        %3890 = vmatpush1.msra.mxu0 %v3630
        %3891 = vmatprep.subr.mxu0 0.0
        %3892 = vmatpush1.msra.mxu0 %v3629
        %3893 = vmatprep.subr.mxu0 0.0
        %3894 = vmatpush1.msra.mxu0 %v3628
        %3895 = vmatprep.subr.mxu0 0.0
        %3896 = vmatpush1.msra.mxu0 %v3627
        %3897 = vmatprep.subr.mxu0 0.0
        %3898 = vmatpush1.msra.mxu0 %v3626
        %3899 = vmatprep.subr.mxu0 0.0
        %3900 = vmatpush2.msra.mxu0 0.0
        %3901 = vmatprep.subr.mxu0 0.0
        %3902 = vmatpush2.msra.mxu0 0.0
        %3903 = vmatprep.subr.mxu0 0.0
        %3904 = vmatpush2.msra.mxu0 0.0
        %3905 = vmatprep.subr.mxu0 0.0
        %3906 = vmatpush2.msra.mxu0 0.0
        %3907 = vmatprep.subr.mxu0 0.0
        %3908 = vmatpush2.msra.mxu0 0.0
        %3909 = vmatprep.subr.mxu0 0.0
        %3910 = vmatpush2.msra.mxu0 0.0
        %3911 = vmatprep.subr.mxu0 0.0
        %3912 = vmatpush2.msra.mxu0 0.0
        %3913 = vmatprep.subr.mxu0 0.0
        %3914 = vmatpush2.msra.mxu0 0.0
        %3915 = vmatprep.subr.mxu0 0.0
        %3916 = vmatpush2.msra.mxu0 0.0
        %3917 = vmatprep.subr.mxu0 0.0
        %3918 = vmatpush2.msra.mxu0 0.0
        %3919 = vmatprep.subr.mxu0 0.0
        %3920 = vmatpush2.msra.mxu0 0.0
        %3921 = vmatprep.subr.mxu0 0.0
        %3922 = vmatpush2.msra.mxu0 0.0
        %3923 = vmatprep.subr.mxu0 0.0
        %3924 = vmatpush2.msra.mxu0 0.0
        %3925 = vmatprep.subr.mxu0 0.0
        %3926 = vmatpush2.msra.mxu0 0.0
        %3927 = vmatprep.subr.mxu0 0.0
        %3928 = vmatpush2.msra.mxu0 0.0
        %3929 = vmatprep.subr.mxu0 0.0
        %3930 = vmatpush2.msra.mxu0 0.0
        %3931 = vmatprep.mubr.f32.mxu0 0.0
        %3932 = vmatmul.mubr.f32.gmra.mxu0 %v3658
        %v3933 = vpop.f32.mrf.mxu0
        %v3934 = vadd.f32 0.0, %v3933
        %v3935 = vpop.f32.mrf.mxu0
        %3936 = vmatprep.mubr.f32.mxu0 0.0
        %3937 = vmatmul.mubr.f32.gmra.mxu0 %v3675
        %v3938 = vpop.f32.mrf.mxu0
        %v3939 = vadd.f32 0.0, %v3938
        %v3940 = vpop.f32.mrf.mxu0
        %3941 = vmatprep.mubr.f32.mxu0 0.0
        %3942 = vmatmul.mubr.f32.gmra.mxu0 %v3692
        %v3943 = vpop.f32.mrf.mxu0
        %v3944 = vadd.f32 0.0, %v3943
        %v3945 = vpop.f32.mrf.mxu0
        %3946 = vmatprep.mubr.f32.mxu0 0.0
        %3947 = vmatmul.mubr.f32.gmra.mxu0 %v3709
        %v3948 = vpop.f32.mrf.mxu0
        %v3949 = vadd.f32 0.0, %v3948
        %v3950 = vpop.f32.mrf.mxu0
        %3951 = vmatprep.mubr.f32.mxu0 0.0
        %3952 = vmatmul.mubr.f32.gmra.mxu0 %v3726
        %v3953 = vpop.f32.mrf.mxu0
        %v3954 = vadd.f32 0.0, %v3953
        %v3955 = vpop.f32.mrf.mxu0
        %3956 = vmatprep.mubr.f32.mxu0 0.0
        %3957 = vmatmul.mubr.f32.gmra.mxu0 %v3743
        %v3958 = vpop.f32.mrf.mxu0
        %v3959 = vadd.f32 0.0, %v3958
        %v3960 = vpop.f32.mrf.mxu0
        %3961 = vmatprep.mubr.f32.mxu0 0.0
        %3962 = vmatmul.mubr.f32.gmra.mxu0 %v3760
        %v3963 = vpop.f32.mrf.mxu0
        %v3964 = vadd.f32 0.0, %v3963
        %v3965 = vpop.f32.mrf.mxu0
        %3966 = vmatprep.mubr.f32.mxu0 0.0
        %3967 = vmatmul.mubr.f32.gmra.mxu0 %v3777
        %v3968 = vpop.f32.mrf.mxu0
        %v3969 = vadd.f32 0.0, %v3968
        %v3970 = vpop.f32.mrf.mxu0
        %3971 = vmatprep.mubr.f32.mxu0 0.0
        %3972 = vmatmul.mubr.f32.gmra.mxu0 %v3794
        %v3973 = vpop.f32.mrf.mxu0
        %v3974 = vadd.f32 0.0, %v3973
        %v3975 = vpop.f32.mrf.mxu0
        %3976 = vmatprep.mubr.f32.mxu0 0.0
        %3977 = vmatmul.mubr.f32.gmra.mxu0 %v3811
        %v3978 = vpop.f32.mrf.mxu0
        %v3979 = vadd.f32 0.0, %v3978
        %v3980 = vpop.f32.mrf.mxu0
        %3981 = vmatprep.mubr.f32.mxu0 0.0
        %3982 = vmatmul.mubr.f32.gmra.mxu0 %v3828
        %v3983 = vpop.f32.mrf.mxu0
        %v3984 = vadd.f32 0.0, %v3983
        %v3985 = vpop.f32.mrf.mxu0
        %3986 = vmatprep.mubr.f32.mxu0 0.0
        %3987 = vmatmul.mubr.f32.gmra.mxu0 %v3845
        %v3988 = vpop.f32.mrf.mxu0
        %v3989 = vadd.f32 0.0, %v3988
        %v3990 = vpop.f32.mrf.mxu0
        %3991 = vmatprep.mubr.f32.mxu0 0.0
        %3992 = vmatmul.mubr.f32.gmra.mxu0 %v3853
        %v3993 = vpop.f32.mrf.mxu0
        %v3994 = vadd.f32 0.0, %v3993
        %v3995 = vpop.f32.mrf.mxu0
        %3996 = vdwg.mxu0
        %v3997 = vadd.f32 %v3331, %v3934
        %v3998 = vadd.f32 %v3332, %v3939
        %v3999 = vadd.f32 %v3333, %v3944
        %v4000 = vadd.f32 %v3334, %v3949
        %v4001 = vadd.f32 %v3335, %v3954
        %v4002 = vadd.f32 %v3336, %v3959
        %v4003 = vadd.f32 %v3337, %v3964
        %v4004 = vadd.f32 %v3338, %v3969
        %v4005 = vadd.f32 %v3339, %v3974
        %v4006 = vadd.f32 %v3340, %v3979
        %v4007 = vadd.f32 %v3341, %v3984
        %v4008 = vadd.f32 %v3342, %v3989
        %v4009 = vadd.f32 %v3343, %v3994
        %v4010 = vld [vmem:[%s2678 + $0x1] sm:$0xff]
        %v4011 = vld [vmem:[%s2678 + $0x9] sm:$0x3]
        %v4012 = vld [vmem:[%s2678 + $0x41] sm:$0xff]
        %v4013 = vld [vmem:[%s2678 + $0x49] sm:$0x3]
        %v4014 = vld [vmem:[%s2678 + $0x81] sm:$0xff]
        %v4015 = vld [vmem:[%s2678 + $0x89] sm:$0x3]
        %v4016 = vld [vmem:[%s2678 + $0xc1] sm:$0xff]
        %v4017 = vld [vmem:[%s2678 + $0xc9] sm:$0x3]
        %v4018 = vld [vmem:[%s2678 + $0x101] sm:$0xff]
        %v4019 = vld [vmem:[%s2678 + $0x109] sm:$0x3]
        %v4020 = vld [vmem:[%s2678 + $0x141] sm:$0xff]
        %v4021 = vld [vmem:[%s2678 + $0x149] sm:$0x3]
        %v4022 = vld [vmem:[%s2678 + $0x181] sm:$0xff]
        %v4023 = vld [vmem:[%s2678 + $0x189] sm:$0x3]
        %v4024 = vld [vmem:[%s2678 + $0x1c1] sm:$0xff]
        %v4025 = vld [vmem:[%s2678 + $0x1c9] sm:$0x3]
        %v4026 = vld [vmem:[%s2678 + $0x201] sm:$0xff]
        %v4027 = vld [vmem:[%s2678 + $0x209] sm:$0x3]
        %v4028 = vld [vmem:[%s2678 + $0x241] sm:$0xff]
        %v4029 = vld [vmem:[%s2678 + $0x249] sm:$0x3]
        %v4050 = vcombine.high %v4010, %v4010
        %v4052 = vunpack.c.l.s4 1983009808
        %v4053 = vunpack.c.0.s8 %v4052
        %v4054 = vlaneseq
        %v4055 = vshrl.u32 %v4054, 7
        %v4056 = vsub.s32 %v4053, %v4055
        %v4057 = vrot.slane %v4010, %v4056
        %v4059 = vunpack.c.l.s4 1983009808
        %v4060 = vunpack.c.0.s8 %v4059
        %v4061 = vlaneseq
        %v4062 = vshrl.u32 %v4061, 7
        %v4063 = vsub.s32 %v4060, %v4062
        %v4064 = vrot.slane %v4050, %v4063
        %v4065 = vcombine.high %v4057, %v4057
        %v4066 = vcombine.high %v4064, %v4064
        %v4068 = vunpack.c.l.s4 1983009808
        %v4069 = vunpack.c.0.s8 %v4068
        %v4070 = vlaneseq
        %v4071 = vshrl.u32 %v4070, 7
        %v4072 = vsub.s32 %v4069, %v4071
        %v4073 = vrot.slane %v4011, %v4072
        %v4074 = vcombine.high %v4012, %v4012
        %v4076 = vunpack.c.l.s4 1983009808
        %v4077 = vunpack.c.0.s8 %v4076
        %v4078 = vlaneseq
        %v4079 = vshrl.u32 %v4078, 7
        %v4080 = vsub.s32 %v4077, %v4079
        %v4081 = vrot.slane %v4012, %v4080
        %v4083 = vunpack.c.l.s4 1983009808
        %v4084 = vunpack.c.0.s8 %v4083
        %v4085 = vlaneseq
        %v4086 = vshrl.u32 %v4085, 7
        %v4087 = vsub.s32 %v4084, %v4086
        %v4088 = vrot.slane %v4074, %v4087
        %v4089 = vcombine.high %v4081, %v4081
        %v4090 = vcombine.high %v4088, %v4088
        %v4092 = vunpack.c.l.s4 1983009808
        %v4093 = vunpack.c.0.s8 %v4092
        %v4094 = vlaneseq
        %v4095 = vshrl.u32 %v4094, 7
        %v4096 = vsub.s32 %v4093, %v4095
        %v4097 = vrot.slane %v4013, %v4096
        %v4098 = vcombine.high %v4014, %v4014
        %v4100 = vunpack.c.l.s4 1983009808
        %v4101 = vunpack.c.0.s8 %v4100
        %v4102 = vlaneseq
        %v4103 = vshrl.u32 %v4102, 7
        %v4104 = vsub.s32 %v4101, %v4103
        %v4105 = vrot.slane %v4014, %v4104
        %v4107 = vunpack.c.l.s4 1983009808
        %v4108 = vunpack.c.0.s8 %v4107
        %v4109 = vlaneseq
        %v4110 = vshrl.u32 %v4109, 7
        %v4111 = vsub.s32 %v4108, %v4110
        %v4112 = vrot.slane %v4098, %v4111
        %v4113 = vcombine.high %v4105, %v4105
        %v4114 = vcombine.high %v4112, %v4112
        %v4116 = vunpack.c.l.s4 1983009808
        %v4117 = vunpack.c.0.s8 %v4116
        %v4118 = vlaneseq
        %v4119 = vshrl.u32 %v4118, 7
        %v4120 = vsub.s32 %v4117, %v4119
        %v4121 = vrot.slane %v4015, %v4120
        %v4122 = vcombine.high %v4016, %v4016
        %v4124 = vunpack.c.l.s4 1983009808
        %v4125 = vunpack.c.0.s8 %v4124
        %v4126 = vlaneseq
        %v4127 = vshrl.u32 %v4126, 7
        %v4128 = vsub.s32 %v4125, %v4127
        %v4129 = vrot.slane %v4016, %v4128
        %v4131 = vunpack.c.l.s4 1983009808
        %v4132 = vunpack.c.0.s8 %v4131
        %v4133 = vlaneseq
        %v4134 = vshrl.u32 %v4133, 7
        %v4135 = vsub.s32 %v4132, %v4134
        %v4136 = vrot.slane %v4122, %v4135
        %v4137 = vcombine.high %v4129, %v4129
        %v4138 = vcombine.high %v4136, %v4136
        %v4140 = vunpack.c.l.s4 1983009808
        %v4141 = vunpack.c.0.s8 %v4140
        %v4142 = vlaneseq
        %v4143 = vshrl.u32 %v4142, 7
        %v4144 = vsub.s32 %v4141, %v4143
        %v4145 = vrot.slane %v4017, %v4144
        %v4146 = vcombine.high %v4018, %v4018
        %v4148 = vunpack.c.l.s4 1983009808
        %v4149 = vunpack.c.0.s8 %v4148
        %v4150 = vlaneseq
        %v4151 = vshrl.u32 %v4150, 7
        %v4152 = vsub.s32 %v4149, %v4151
        %v4153 = vrot.slane %v4018, %v4152
        %v4155 = vunpack.c.l.s4 1983009808
        %v4156 = vunpack.c.0.s8 %v4155
        %v4157 = vlaneseq
        %v4158 = vshrl.u32 %v4157, 7
        %v4159 = vsub.s32 %v4156, %v4158
        %v4160 = vrot.slane %v4146, %v4159
        %v4161 = vcombine.high %v4153, %v4153
        %v4162 = vcombine.high %v4160, %v4160
        %v4164 = vunpack.c.l.s4 1983009808
        %v4165 = vunpack.c.0.s8 %v4164
        %v4166 = vlaneseq
        %v4167 = vshrl.u32 %v4166, 7
        %v4168 = vsub.s32 %v4165, %v4167
        %v4169 = vrot.slane %v4019, %v4168
        %v4170 = vcombine.high %v4020, %v4020
        %v4172 = vunpack.c.l.s4 1983009808
        %v4173 = vunpack.c.0.s8 %v4172
        %v4174 = vlaneseq
        %v4175 = vshrl.u32 %v4174, 7
        %v4176 = vsub.s32 %v4173, %v4175
        %v4177 = vrot.slane %v4020, %v4176
        %v4179 = vunpack.c.l.s4 1983009808
        %v4180 = vunpack.c.0.s8 %v4179
        %v4181 = vlaneseq
        %v4182 = vshrl.u32 %v4181, 7
        %v4183 = vsub.s32 %v4180, %v4182
        %v4184 = vrot.slane %v4170, %v4183
        %v4185 = vcombine.high %v4177, %v4177
        %v4186 = vcombine.high %v4184, %v4184
        %v4188 = vunpack.c.l.s4 1983009808
        %v4189 = vunpack.c.0.s8 %v4188
        %v4190 = vlaneseq
        %v4191 = vshrl.u32 %v4190, 7
        %v4192 = vsub.s32 %v4189, %v4191
        %v4193 = vrot.slane %v4021, %v4192
        %v4194 = vcombine.high %v4022, %v4022
        %v4196 = vunpack.c.l.s4 1983009808
        %v4197 = vunpack.c.0.s8 %v4196
        %v4198 = vlaneseq
        %v4199 = vshrl.u32 %v4198, 7
        %v4200 = vsub.s32 %v4197, %v4199
        %v4201 = vrot.slane %v4022, %v4200
        %v4203 = vunpack.c.l.s4 1983009808
        %v4204 = vunpack.c.0.s8 %v4203
        %v4205 = vlaneseq
        %v4206 = vshrl.u32 %v4205, 7
        %v4207 = vsub.s32 %v4204, %v4206
        %v4208 = vrot.slane %v4194, %v4207
        %v4209 = vcombine.high %v4201, %v4201
        %v4210 = vcombine.high %v4208, %v4208
        %v4212 = vunpack.c.l.s4 1983009808
        %v4213 = vunpack.c.0.s8 %v4212
        %v4214 = vlaneseq
        %v4215 = vshrl.u32 %v4214, 7
        %v4216 = vsub.s32 %v4213, %v4215
        %v4217 = vrot.slane %v4023, %v4216
        %v4218 = vcombine.high %v4024, %v4024
        %v4220 = vunpack.c.l.s4 1983009808
        %v4221 = vunpack.c.0.s8 %v4220
        %v4222 = vlaneseq
        %v4223 = vshrl.u32 %v4222, 7
        %v4224 = vsub.s32 %v4221, %v4223
        %v4225 = vrot.slane %v4024, %v4224
        %v4227 = vunpack.c.l.s4 1983009808
        %v4228 = vunpack.c.0.s8 %v4227
        %v4229 = vlaneseq
        %v4230 = vshrl.u32 %v4229, 7
        %v4231 = vsub.s32 %v4228, %v4230
        %v4232 = vrot.slane %v4218, %v4231
        %v4233 = vcombine.high %v4225, %v4225
        %v4234 = vcombine.high %v4232, %v4232
        %v4236 = vunpack.c.l.s4 1983009808
        %v4237 = vunpack.c.0.s8 %v4236
        %v4238 = vlaneseq
        %v4239 = vshrl.u32 %v4238, 7
        %v4240 = vsub.s32 %v4237, %v4239
        %v4241 = vrot.slane %v4025, %v4240
        %v4242 = vcombine.high %v4026, %v4026
        %v4244 = vunpack.c.l.s4 1983009808
        %v4245 = vunpack.c.0.s8 %v4244
        %v4246 = vlaneseq
        %v4247 = vshrl.u32 %v4246, 7
        %v4248 = vsub.s32 %v4245, %v4247
        %v4249 = vrot.slane %v4026, %v4248
        %v4251 = vunpack.c.l.s4 1983009808
        %v4252 = vunpack.c.0.s8 %v4251
        %v4253 = vlaneseq
        %v4254 = vshrl.u32 %v4253, 7
        %v4255 = vsub.s32 %v4252, %v4254
        %v4256 = vrot.slane %v4242, %v4255
        %v4257 = vcombine.high %v4249, %v4249
        %v4258 = vcombine.high %v4256, %v4256
        %v4260 = vunpack.c.l.s4 1983009808
        %v4261 = vunpack.c.0.s8 %v4260
        %v4262 = vlaneseq
        %v4263 = vshrl.u32 %v4262, 7
        %v4264 = vsub.s32 %v4261, %v4263
        %v4265 = vrot.slane %v4027, %v4264
        %v4266 = vcombine.high %v4028, %v4028
        %v4268 = vunpack.c.l.s4 1983009808
        %v4269 = vunpack.c.0.s8 %v4268
        %v4270 = vlaneseq
        %v4271 = vshrl.u32 %v4270, 7
        %v4272 = vsub.s32 %v4269, %v4271
        %v4273 = vrot.slane %v4028, %v4272
        %v4275 = vunpack.c.l.s4 1983009808
        %v4276 = vunpack.c.0.s8 %v4275
        %v4277 = vlaneseq
        %v4278 = vshrl.u32 %v4277, 7
        %v4279 = vsub.s32 %v4276, %v4278
        %v4280 = vrot.slane %v4266, %v4279
        %v4281 = vcombine.high %v4273, %v4273
        %v4282 = vcombine.high %v4280, %v4280
        %v4284 = vunpack.c.l.s4 1983009808
        %v4285 = vunpack.c.0.s8 %v4284
        %v4286 = vlaneseq
        %v4287 = vshrl.u32 %v4286, 7
        %v4288 = vsub.s32 %v4285, %v4287
        %v4289 = vrot.slane %v4029, %v4288
        %s4290 = scalar_lea.vmem %s1, 640
        %v4291 = vld [vmem:[%s4290] sm:$0xff]
        %v4292 = vld [vmem:[%s4290 + $0x8] sm:$0xff]
        %v4293 = vld [vmem:[%s4290 + $0x10] sm:$0xff]
        %v4294 = vld [vmem:[%s4290 + $0x18] sm:$0xff]
        %v4295 = vld [vmem:[%s4290 + $0x20] sm:$0xff]
        %v4296 = vld [vmem:[%s4290 + $0x28] sm:$0xff]
        %v4297 = vld [vmem:[%s4290 + $0x30] sm:$0xff]
        %v4298 = vld [vmem:[%s4290 + $0x38] sm:$0xff]
        %v4299 = vld [vmem:[%s4290 + $0x40] sm:$0xff]
        %v4300 = vld [vmem:[%s4290 + $0x48] sm:$0xff]
        %v4301 = vld [vmem:[%s4290 + $0x50] sm:$0xff]
        %v4302 = vld [vmem:[%s4290 + $0x58] sm:$0xff]
        %v4303 = vld [vmem:[%s4290 + $0x60] sm:$0xff]
        %v4304 = vld [vmem:[%s4290 + $0x68] sm:$0xff]
        %v4305 = vld [vmem:[%s4290 + $0x70] sm:$0xff]
        %v4306 = vld [vmem:[%s4290 + $0x78] sm:$0xff]
        %v4307 = vcombine.low %v4057, %v4065
        %v4308 = vcombine.low %v4064, %v4066
        %v4310 = vunpack.c.l.s4 1983009808
        %v4311 = vunpack.c.0.s8 %v4310
        %v4312 = vlaneseq
        %v4313 = vshrl.u32 %v4312, 7
        %v4314 = vsub.s32 %v4311, %v4313
        %v4315 = vrot.slane %v4307, %v4314
        %v4317 = vunpack.c.l.s4 1983009808
        %v4318 = vunpack.c.0.s8 %v4317
        %v4319 = vlaneseq
        %v4320 = vshrl.u32 %v4319, 7
        %v4321 = vsub.s32 %v4318, %v4320
        %v4322 = vrot.slane %v4308, %v4321
        %v4323 = vcombine.low %v4315, %v4322
        %v4324 = vcombine.low %v4073, %v4081
        %v4325 = vcombine.low %v4089, %v4088
        %v4327 = vunpack.c.l.s4 1983009808
        %v4328 = vunpack.c.0.s8 %v4327
        %v4329 = vlaneseq
        %v4330 = vshrl.u32 %v4329, 7
        %v4331 = vsub.s32 %v4328, %v4330
        %v4332 = vrot.slane %v4324, %v4331
        %v4334 = vunpack.c.l.s4 1983009808
        %v4335 = vunpack.c.0.s8 %v4334
        %v4336 = vlaneseq
        %v4337 = vshrl.u32 %v4336, 7
        %v4338 = vsub.s32 %v4335, %v4337
        %v4339 = vrot.slane %v4325, %v4338
        %v4340 = vcombine.low %v4332, %v4339
        %v4341 = vcombine.low %v4090, %v4097
        %v4342 = vcombine.low %v4105, %v4113
        %v4344 = vunpack.c.l.s4 1983009808
        %v4345 = vunpack.c.0.s8 %v4344
        %v4346 = vlaneseq
        %v4347 = vshrl.u32 %v4346, 7
        %v4348 = vsub.s32 %v4345, %v4347
        %v4349 = vrot.slane %v4341, %v4348
        %v4351 = vunpack.c.l.s4 1983009808
        %v4352 = vunpack.c.0.s8 %v4351
        %v4353 = vlaneseq
        %v4354 = vshrl.u32 %v4353, 7
        %v4355 = vsub.s32 %v4352, %v4354
        %v4356 = vrot.slane %v4342, %v4355
        %v4357 = vcombine.low %v4349, %v4356
        %v4358 = vcombine.low %v4112, %v4114
        %v4359 = vcombine.low %v4121, %v4129
        %v4361 = vunpack.c.l.s4 1983009808
        %v4362 = vunpack.c.0.s8 %v4361
        %v4363 = vlaneseq
        %v4364 = vshrl.u32 %v4363, 7
        %v4365 = vsub.s32 %v4362, %v4364
        %v4366 = vrot.slane %v4358, %v4365
        %v4368 = vunpack.c.l.s4 1983009808
        %v4369 = vunpack.c.0.s8 %v4368
        %v4370 = vlaneseq
        %v4371 = vshrl.u32 %v4370, 7
        %v4372 = vsub.s32 %v4369, %v4371
        %v4373 = vrot.slane %v4359, %v4372
        %v4374 = vcombine.low %v4366, %v4373
        %v4375 = vcombine.low %v4137, %v4136
        %v4376 = vcombine.low %v4138, %v4145
        %v4378 = vunpack.c.l.s4 1983009808
        %v4379 = vunpack.c.0.s8 %v4378
        %v4380 = vlaneseq
        %v4381 = vshrl.u32 %v4380, 7
        %v4382 = vsub.s32 %v4379, %v4381
        %v4383 = vrot.slane %v4375, %v4382
        %v4385 = vunpack.c.l.s4 1983009808
        %v4386 = vunpack.c.0.s8 %v4385
        %v4387 = vlaneseq
        %v4388 = vshrl.u32 %v4387, 7
        %v4389 = vsub.s32 %v4386, %v4388
        %v4390 = vrot.slane %v4376, %v4389
        %v4391 = vcombine.low %v4383, %v4390
        %v4392 = vcombine.low %v4153, %v4161
        %v4393 = vcombine.low %v4160, %v4162
        %v4395 = vunpack.c.l.s4 1983009808
        %v4396 = vunpack.c.0.s8 %v4395
        %v4397 = vlaneseq
        %v4398 = vshrl.u32 %v4397, 7
        %v4399 = vsub.s32 %v4396, %v4398
        %v4400 = vrot.slane %v4392, %v4399
        %v4402 = vunpack.c.l.s4 1983009808
        %v4403 = vunpack.c.0.s8 %v4402
        %v4404 = vlaneseq
        %v4405 = vshrl.u32 %v4404, 7
        %v4406 = vsub.s32 %v4403, %v4405
        %v4407 = vrot.slane %v4393, %v4406
        %v4408 = vcombine.low %v4400, %v4407
        %v4409 = vcombine.low %v4169, %v4177
        %v4410 = vcombine.low %v4185, %v4184
        %v4412 = vunpack.c.l.s4 1983009808
        %v4413 = vunpack.c.0.s8 %v4412
        %v4414 = vlaneseq
        %v4415 = vshrl.u32 %v4414, 7
        %v4416 = vsub.s32 %v4413, %v4415
        %v4417 = vrot.slane %v4409, %v4416
        %v4419 = vunpack.c.l.s4 1983009808
        %v4420 = vunpack.c.0.s8 %v4419
        %v4421 = vlaneseq
        %v4422 = vshrl.u32 %v4421, 7
        %v4423 = vsub.s32 %v4420, %v4422
        %v4424 = vrot.slane %v4410, %v4423
        %v4425 = vcombine.low %v4417, %v4424
        %v4426 = vcombine.low %v4186, %v4193
        %v4427 = vcombine.low %v4201, %v4209
        %v4429 = vunpack.c.l.s4 1983009808
        %v4430 = vunpack.c.0.s8 %v4429
        %v4431 = vlaneseq
        %v4432 = vshrl.u32 %v4431, 7
        %v4433 = vsub.s32 %v4430, %v4432
        %v4434 = vrot.slane %v4426, %v4433
        %v4436 = vunpack.c.l.s4 1983009808
        %v4437 = vunpack.c.0.s8 %v4436
        %v4438 = vlaneseq
        %v4439 = vshrl.u32 %v4438, 7
        %v4440 = vsub.s32 %v4437, %v4439
        %v4441 = vrot.slane %v4427, %v4440
        %v4442 = vcombine.low %v4434, %v4441
        %v4443 = vcombine.low %v4208, %v4210
        %v4444 = vcombine.low %v4217, %v4225
        %v4446 = vunpack.c.l.s4 1983009808
        %v4447 = vunpack.c.0.s8 %v4446
        %v4448 = vlaneseq
        %v4449 = vshrl.u32 %v4448, 7
        %v4450 = vsub.s32 %v4447, %v4449
        %v4451 = vrot.slane %v4443, %v4450
        %v4453 = vunpack.c.l.s4 1983009808
        %v4454 = vunpack.c.0.s8 %v4453
        %v4455 = vlaneseq
        %v4456 = vshrl.u32 %v4455, 7
        %v4457 = vsub.s32 %v4454, %v4456
        %v4458 = vrot.slane %v4444, %v4457
        %v4459 = vcombine.low %v4451, %v4458
        %v4460 = vcombine.low %v4233, %v4232
        %v4461 = vcombine.low %v4234, %v4241
        %v4463 = vunpack.c.l.s4 1983009808
        %v4464 = vunpack.c.0.s8 %v4463
        %v4465 = vlaneseq
        %v4466 = vshrl.u32 %v4465, 7
        %v4467 = vsub.s32 %v4464, %v4466
        %v4468 = vrot.slane %v4460, %v4467
        %v4470 = vunpack.c.l.s4 1983009808
        %v4471 = vunpack.c.0.s8 %v4470
        %v4472 = vlaneseq
        %v4473 = vshrl.u32 %v4472, 7
        %v4474 = vsub.s32 %v4471, %v4473
        %v4475 = vrot.slane %v4461, %v4474
        %v4476 = vcombine.low %v4468, %v4475
        %v4477 = vcombine.low %v4249, %v4257
        %v4478 = vcombine.low %v4256, %v4258
        %v4480 = vunpack.c.l.s4 1983009808
        %v4481 = vunpack.c.0.s8 %v4480
        %v4482 = vlaneseq
        %v4483 = vshrl.u32 %v4482, 7
        %v4484 = vsub.s32 %v4481, %v4483
        %v4485 = vrot.slane %v4477, %v4484
        %v4487 = vunpack.c.l.s4 1983009808
        %v4488 = vunpack.c.0.s8 %v4487
        %v4489 = vlaneseq
        %v4490 = vshrl.u32 %v4489, 7
        %v4491 = vsub.s32 %v4488, %v4490
        %v4492 = vrot.slane %v4478, %v4491
        %v4493 = vcombine.low %v4485, %v4492
        %v4494 = vcombine.low %v4265, %v4273
        %v4495 = vcombine.low %v4281, %v4280
        %v4497 = vunpack.c.l.s4 1983009808
        %v4498 = vunpack.c.0.s8 %v4497
        %v4499 = vlaneseq
        %v4500 = vshrl.u32 %v4499, 7
        %v4501 = vsub.s32 %v4498, %v4500
        %v4502 = vrot.slane %v4494, %v4501
        %v4504 = vunpack.c.l.s4 1983009808
        %v4505 = vunpack.c.0.s8 %v4504
        %v4506 = vlaneseq
        %v4507 = vshrl.u32 %v4506, 7
        %v4508 = vsub.s32 %v4505, %v4507
        %v4509 = vrot.slane %v4495, %v4508
        %v4510 = vcombine.low %v4502, %v4509
        %v4511 = vcombine.low %v4282, %v4289
        %v4513 = vunpack.c.l.s4 1983009808
        %v4514 = vunpack.c.0.s8 %v4513
        %v4515 = vlaneseq
        %v4516 = vshrl.u32 %v4515, 7
        %v4517 = vsub.s32 %v4514, %v4516
        %v4518 = vrot.slane %v4511, %v4517
        %4532 = vmatprep.subr.mxu0 0.0
        %4533 = vmatpush1.msra.mxu0 %v4306
        %4534 = vmatprep.subr.mxu0 0.0
        %4535 = vmatpush1.msra.mxu0 %v4305
        %4536 = vmatprep.subr.mxu0 0.0
        %4537 = vmatpush1.msra.mxu0 %v4304
        %4538 = vmatprep.subr.mxu0 0.0
        %4539 = vmatpush1.msra.mxu0 %v4303
        %4540 = vmatprep.subr.mxu0 0.0
        %4541 = vmatpush1.msra.mxu0 %v4302
        %4542 = vmatprep.subr.mxu0 0.0
        %4543 = vmatpush1.msra.mxu0 %v4301
        %4544 = vmatprep.subr.mxu0 0.0
        %4545 = vmatpush1.msra.mxu0 %v4300
        %4546 = vmatprep.subr.mxu0 0.0
        %4547 = vmatpush1.msra.mxu0 %v4299
        %4548 = vmatprep.subr.mxu0 0.0
        %4549 = vmatpush1.msra.mxu0 %v4298
        %4550 = vmatprep.subr.mxu0 0.0
        %4551 = vmatpush1.msra.mxu0 %v4297
        %4552 = vmatprep.subr.mxu0 0.0
        %4553 = vmatpush1.msra.mxu0 %v4296
        %4554 = vmatprep.subr.mxu0 0.0
        %4555 = vmatpush1.msra.mxu0 %v4295
        %4556 = vmatprep.subr.mxu0 0.0
        %4557 = vmatpush1.msra.mxu0 %v4294
        %4558 = vmatprep.subr.mxu0 0.0
        %4559 = vmatpush1.msra.mxu0 %v4293
        %4560 = vmatprep.subr.mxu0 0.0
        %4561 = vmatpush1.msra.mxu0 %v4292
        %4562 = vmatprep.subr.mxu0 0.0
        %4563 = vmatpush1.msra.mxu0 %v4291
        %4564 = vmatprep.subr.mxu0 0.0
        %4565 = vmatpush2.msra.mxu0 0.0
        %4566 = vmatprep.subr.mxu0 0.0
        %4567 = vmatpush2.msra.mxu0 0.0
        %4568 = vmatprep.subr.mxu0 0.0
        %4569 = vmatpush2.msra.mxu0 0.0
        %4570 = vmatprep.subr.mxu0 0.0
        %4571 = vmatpush2.msra.mxu0 0.0
        %4572 = vmatprep.subr.mxu0 0.0
        %4573 = vmatpush2.msra.mxu0 0.0
        %4574 = vmatprep.subr.mxu0 0.0
        %4575 = vmatpush2.msra.mxu0 0.0
        %4576 = vmatprep.subr.mxu0 0.0
        %4577 = vmatpush2.msra.mxu0 0.0
        %4578 = vmatprep.subr.mxu0 0.0
        %4579 = vmatpush2.msra.mxu0 0.0
        %4580 = vmatprep.subr.mxu0 0.0
        %4581 = vmatpush2.msra.mxu0 0.0
        %4582 = vmatprep.subr.mxu0 0.0
        %4583 = vmatpush2.msra.mxu0 0.0
        %4584 = vmatprep.subr.mxu0 0.0
        %4585 = vmatpush2.msra.mxu0 0.0
        %4586 = vmatprep.subr.mxu0 0.0
        %4587 = vmatpush2.msra.mxu0 0.0
        %4588 = vmatprep.subr.mxu0 0.0
        %4589 = vmatpush2.msra.mxu0 0.0
        %4590 = vmatprep.subr.mxu0 0.0
        %4591 = vmatpush2.msra.mxu0 0.0
        %4592 = vmatprep.subr.mxu0 0.0
        %4593 = vmatpush2.msra.mxu0 0.0
        %4594 = vmatprep.subr.mxu0 0.0
        %4595 = vmatpush2.msra.mxu0 0.0
        %4596 = vmatprep.mubr.f32.mxu0 0.0
        %4597 = vmatmul.mubr.f32.gmra.mxu0 %v4323
        %v4598 = vpop.f32.mrf.mxu0
        %v4599 = vadd.f32 0.0, %v4598
        %v4600 = vpop.f32.mrf.mxu0
        %4601 = vmatprep.mubr.f32.mxu0 0.0
        %4602 = vmatmul.mubr.f32.gmra.mxu0 %v4340
        %v4603 = vpop.f32.mrf.mxu0
        %v4604 = vadd.f32 0.0, %v4603
        %v4605 = vpop.f32.mrf.mxu0
        %4606 = vmatprep.mubr.f32.mxu0 0.0
        %4607 = vmatmul.mubr.f32.gmra.mxu0 %v4357
        %v4608 = vpop.f32.mrf.mxu0
        %v4609 = vadd.f32 0.0, %v4608
        %v4610 = vpop.f32.mrf.mxu0
        %4611 = vmatprep.mubr.f32.mxu0 0.0
        %4612 = vmatmul.mubr.f32.gmra.mxu0 %v4374
        %v4613 = vpop.f32.mrf.mxu0
        %v4614 = vadd.f32 0.0, %v4613
        %v4615 = vpop.f32.mrf.mxu0
        %4616 = vmatprep.mubr.f32.mxu0 0.0
        %4617 = vmatmul.mubr.f32.gmra.mxu0 %v4391
        %v4618 = vpop.f32.mrf.mxu0
        %v4619 = vadd.f32 0.0, %v4618
        %v4620 = vpop.f32.mrf.mxu0
        %4621 = vmatprep.mubr.f32.mxu0 0.0
        %4622 = vmatmul.mubr.f32.gmra.mxu0 %v4408
        %v4623 = vpop.f32.mrf.mxu0
        %v4624 = vadd.f32 0.0, %v4623
        %v4625 = vpop.f32.mrf.mxu0
        %4626 = vmatprep.mubr.f32.mxu0 0.0
        %4627 = vmatmul.mubr.f32.gmra.mxu0 %v4425
        %v4628 = vpop.f32.mrf.mxu0
        %v4629 = vadd.f32 0.0, %v4628
        %v4630 = vpop.f32.mrf.mxu0
        %4631 = vmatprep.mubr.f32.mxu0 0.0
        %4632 = vmatmul.mubr.f32.gmra.mxu0 %v4442
        %v4633 = vpop.f32.mrf.mxu0
        %v4634 = vadd.f32 0.0, %v4633
        %v4635 = vpop.f32.mrf.mxu0
        %4636 = vmatprep.mubr.f32.mxu0 0.0
        %4637 = vmatmul.mubr.f32.gmra.mxu0 %v4459
        %v4638 = vpop.f32.mrf.mxu0
        %v4639 = vadd.f32 0.0, %v4638
        %v4640 = vpop.f32.mrf.mxu0
        %4641 = vmatprep.mubr.f32.mxu0 0.0
        %4642 = vmatmul.mubr.f32.gmra.mxu0 %v4476
        %v4643 = vpop.f32.mrf.mxu0
        %v4644 = vadd.f32 0.0, %v4643
        %v4645 = vpop.f32.mrf.mxu0
        %4646 = vmatprep.mubr.f32.mxu0 0.0
        %4647 = vmatmul.mubr.f32.gmra.mxu0 %v4493
        %v4648 = vpop.f32.mrf.mxu0
        %v4649 = vadd.f32 0.0, %v4648
        %v4650 = vpop.f32.mrf.mxu0
        %4651 = vmatprep.mubr.f32.mxu0 0.0
        %4652 = vmatmul.mubr.f32.gmra.mxu0 %v4510
        %v4653 = vpop.f32.mrf.mxu0
        %v4654 = vadd.f32 0.0, %v4653
        %v4655 = vpop.f32.mrf.mxu0
        %4656 = vmatprep.mubr.f32.mxu0 0.0
        %4657 = vmatmul.mubr.f32.gmra.mxu0 %v4518
        %v4658 = vpop.f32.mrf.mxu0
        %v4659 = vadd.f32 0.0, %v4658
        %v4660 = vpop.f32.mrf.mxu0
        %4661 = vdwg.mxu0
        %v4662 = vadd.f32 %v3997, %v4599
        %v4663 = vadd.f32 %v3998, %v4604
        %v4664 = vadd.f32 %v3999, %v4609
        %v4665 = vadd.f32 %v4000, %v4614
        %v4666 = vadd.f32 %v4001, %v4619
        %v4667 = vadd.f32 %v4002, %v4624
        %v4668 = vadd.f32 %v4003, %v4629
        %v4669 = vadd.f32 %v4004, %v4634
        %v4670 = vadd.f32 %v4005, %v4639
        %v4671 = vadd.f32 %v4006, %v4644
        %v4672 = vadd.f32 %v4007, %v4649
        %v4673 = vadd.f32 %v4008, %v4654
        %v4674 = vadd.f32 %v4009, %v4659
        %s4675 = scalar_lea.vmem [#allocation2], 64
        %v4676 = vld [vmem:[%s4675] sm:$0xff]
        %v4677 = vld [vmem:[%s4675 + $0x8] sm:$0x3]
        %v4678 = vld [vmem:[%s4675 + $0x40] sm:$0xff]
        %v4679 = vld [vmem:[%s4675 + $0x48] sm:$0x3]
        %v4680 = vld [vmem:[%s4675 + $0x80] sm:$0xff]
        %v4681 = vld [vmem:[%s4675 + $0x88] sm:$0x3]
        %v4682 = vld [vmem:[%s4675 + $0xc0] sm:$0xff]
        %v4683 = vld [vmem:[%s4675 + $0xc8] sm:$0x3]
        %v4684 = vld [vmem:[%s4675 + $0x100] sm:$0xff]
        %v4685 = vld [vmem:[%s4675 + $0x108] sm:$0x3]
        %v4686 = vld [vmem:[%s4675 + $0x140] sm:$0xff]
        %v4687 = vld [vmem:[%s4675 + $0x148] sm:$0x3]
        %v4688 = vld [vmem:[%s4675 + $0x180] sm:$0xff]
        %v4689 = vld [vmem:[%s4675 + $0x188] sm:$0x3]
        %v4690 = vld [vmem:[%s4675 + $0x1c0] sm:$0xff]
        %v4691 = vld [vmem:[%s4675 + $0x1c8] sm:$0x3]
        %v4692 = vld [vmem:[%s4675 + $0x200] sm:$0xff]
        %v4693 = vld [vmem:[%s4675 + $0x208] sm:$0x3]
        %v4694 = vld [vmem:[%s4675 + $0x240] sm:$0xff]
        %v4695 = vld [vmem:[%s4675 + $0x248] sm:$0x3]
        %v4716 = vcombine.high %v4676, %v4676
        %v4718 = vunpack.c.l.s4 1983009808
        %v4719 = vunpack.c.0.s8 %v4718
        %v4720 = vlaneseq
        %v4721 = vshrl.u32 %v4720, 7
        %v4722 = vsub.s32 %v4719, %v4721
        %v4723 = vrot.slane %v4676, %v4722
        %v4725 = vunpack.c.l.s4 1983009808
        %v4726 = vunpack.c.0.s8 %v4725
        %v4727 = vlaneseq
        %v4728 = vshrl.u32 %v4727, 7
        %v4729 = vsub.s32 %v4726, %v4728
        %v4730 = vrot.slane %v4716, %v4729
        %v4731 = vcombine.high %v4723, %v4723
        %v4732 = vcombine.high %v4730, %v4730
        %v4734 = vunpack.c.l.s4 1983009808
        %v4735 = vunpack.c.0.s8 %v4734
        %v4736 = vlaneseq
        %v4737 = vshrl.u32 %v4736, 7
        %v4738 = vsub.s32 %v4735, %v4737
        %v4739 = vrot.slane %v4677, %v4738
        %v4740 = vcombine.high %v4678, %v4678
        %v4742 = vunpack.c.l.s4 1983009808
        %v4743 = vunpack.c.0.s8 %v4742
        %v4744 = vlaneseq
        %v4745 = vshrl.u32 %v4744, 7
        %v4746 = vsub.s32 %v4743, %v4745
        %v4747 = vrot.slane %v4678, %v4746
        %v4749 = vunpack.c.l.s4 1983009808
        %v4750 = vunpack.c.0.s8 %v4749
        %v4751 = vlaneseq
        %v4752 = vshrl.u32 %v4751, 7
        %v4753 = vsub.s32 %v4750, %v4752
        %v4754 = vrot.slane %v4740, %v4753
        %v4755 = vcombine.high %v4747, %v4747
        %v4756 = vcombine.high %v4754, %v4754
        %v4758 = vunpack.c.l.s4 1983009808
        %v4759 = vunpack.c.0.s8 %v4758
        %v4760 = vlaneseq
        %v4761 = vshrl.u32 %v4760, 7
        %v4762 = vsub.s32 %v4759, %v4761
        %v4763 = vrot.slane %v4679, %v4762
        %v4764 = vcombine.high %v4680, %v4680
        %v4766 = vunpack.c.l.s4 1983009808
        %v4767 = vunpack.c.0.s8 %v4766
        %v4768 = vlaneseq
        %v4769 = vshrl.u32 %v4768, 7
        %v4770 = vsub.s32 %v4767, %v4769
        %v4771 = vrot.slane %v4680, %v4770
        %v4773 = vunpack.c.l.s4 1983009808
        %v4774 = vunpack.c.0.s8 %v4773
        %v4775 = vlaneseq
        %v4776 = vshrl.u32 %v4775, 7
        %v4777 = vsub.s32 %v4774, %v4776
        %v4778 = vrot.slane %v4764, %v4777
        %v4779 = vcombine.high %v4771, %v4771
        %v4780 = vcombine.high %v4778, %v4778
        %v4782 = vunpack.c.l.s4 1983009808
        %v4783 = vunpack.c.0.s8 %v4782
        %v4784 = vlaneseq
        %v4785 = vshrl.u32 %v4784, 7
        %v4786 = vsub.s32 %v4783, %v4785
        %v4787 = vrot.slane %v4681, %v4786
        %v4788 = vcombine.high %v4682, %v4682
        %v4790 = vunpack.c.l.s4 1983009808
        %v4791 = vunpack.c.0.s8 %v4790
        %v4792 = vlaneseq
        %v4793 = vshrl.u32 %v4792, 7
        %v4794 = vsub.s32 %v4791, %v4793
        %v4795 = vrot.slane %v4682, %v4794
        %v4797 = vunpack.c.l.s4 1983009808
        %v4798 = vunpack.c.0.s8 %v4797
        %v4799 = vlaneseq
        %v4800 = vshrl.u32 %v4799, 7
        %v4801 = vsub.s32 %v4798, %v4800
        %v4802 = vrot.slane %v4788, %v4801
        %v4803 = vcombine.high %v4795, %v4795
        %v4804 = vcombine.high %v4802, %v4802
        %v4806 = vunpack.c.l.s4 1983009808
        %v4807 = vunpack.c.0.s8 %v4806
        %v4808 = vlaneseq
        %v4809 = vshrl.u32 %v4808, 7
        %v4810 = vsub.s32 %v4807, %v4809
        %v4811 = vrot.slane %v4683, %v4810
        %v4812 = vcombine.high %v4684, %v4684
        %v4814 = vunpack.c.l.s4 1983009808
        %v4815 = vunpack.c.0.s8 %v4814
        %v4816 = vlaneseq
        %v4817 = vshrl.u32 %v4816, 7
        %v4818 = vsub.s32 %v4815, %v4817
        %v4819 = vrot.slane %v4684, %v4818
        %v4821 = vunpack.c.l.s4 1983009808
        %v4822 = vunpack.c.0.s8 %v4821
        %v4823 = vlaneseq
        %v4824 = vshrl.u32 %v4823, 7
        %v4825 = vsub.s32 %v4822, %v4824
        %v4826 = vrot.slane %v4812, %v4825
        %v4827 = vcombine.high %v4819, %v4819
        %v4828 = vcombine.high %v4826, %v4826
        %v4830 = vunpack.c.l.s4 1983009808
        %v4831 = vunpack.c.0.s8 %v4830
        %v4832 = vlaneseq
        %v4833 = vshrl.u32 %v4832, 7
        %v4834 = vsub.s32 %v4831, %v4833
        %v4835 = vrot.slane %v4685, %v4834
        %v4836 = vcombine.high %v4686, %v4686
        %v4838 = vunpack.c.l.s4 1983009808
        %v4839 = vunpack.c.0.s8 %v4838
        %v4840 = vlaneseq
        %v4841 = vshrl.u32 %v4840, 7
        %v4842 = vsub.s32 %v4839, %v4841
        %v4843 = vrot.slane %v4686, %v4842
        %v4845 = vunpack.c.l.s4 1983009808
        %v4846 = vunpack.c.0.s8 %v4845
        %v4847 = vlaneseq
        %v4848 = vshrl.u32 %v4847, 7
        %v4849 = vsub.s32 %v4846, %v4848
        %v4850 = vrot.slane %v4836, %v4849
        %v4851 = vcombine.high %v4843, %v4843
        %v4852 = vcombine.high %v4850, %v4850
        %v4854 = vunpack.c.l.s4 1983009808
        %v4855 = vunpack.c.0.s8 %v4854
        %v4856 = vlaneseq
        %v4857 = vshrl.u32 %v4856, 7
        %v4858 = vsub.s32 %v4855, %v4857
        %v4859 = vrot.slane %v4687, %v4858
        %v4860 = vcombine.high %v4688, %v4688
        %v4862 = vunpack.c.l.s4 1983009808
        %v4863 = vunpack.c.0.s8 %v4862
        %v4864 = vlaneseq
        %v4865 = vshrl.u32 %v4864, 7
        %v4866 = vsub.s32 %v4863, %v4865
        %v4867 = vrot.slane %v4688, %v4866
        %v4869 = vunpack.c.l.s4 1983009808
        %v4870 = vunpack.c.0.s8 %v4869
        %v4871 = vlaneseq
        %v4872 = vshrl.u32 %v4871, 7
        %v4873 = vsub.s32 %v4870, %v4872
        %v4874 = vrot.slane %v4860, %v4873
        %v4875 = vcombine.high %v4867, %v4867
        %v4876 = vcombine.high %v4874, %v4874
        %v4878 = vunpack.c.l.s4 1983009808
        %v4879 = vunpack.c.0.s8 %v4878
        %v4880 = vlaneseq
        %v4881 = vshrl.u32 %v4880, 7
        %v4882 = vsub.s32 %v4879, %v4881
        %v4883 = vrot.slane %v4689, %v4882
        %v4884 = vcombine.high %v4690, %v4690
        %v4886 = vunpack.c.l.s4 1983009808
        %v4887 = vunpack.c.0.s8 %v4886
        %v4888 = vlaneseq
        %v4889 = vshrl.u32 %v4888, 7
        %v4890 = vsub.s32 %v4887, %v4889
        %v4891 = vrot.slane %v4690, %v4890
        %v4893 = vunpack.c.l.s4 1983009808
        %v4894 = vunpack.c.0.s8 %v4893
        %v4895 = vlaneseq
        %v4896 = vshrl.u32 %v4895, 7
        %v4897 = vsub.s32 %v4894, %v4896
        %v4898 = vrot.slane %v4884, %v4897
        %v4899 = vcombine.high %v4891, %v4891
        %v4900 = vcombine.high %v4898, %v4898
        %v4902 = vunpack.c.l.s4 1983009808
        %v4903 = vunpack.c.0.s8 %v4902
        %v4904 = vlaneseq
        %v4905 = vshrl.u32 %v4904, 7
        %v4906 = vsub.s32 %v4903, %v4905
        %v4907 = vrot.slane %v4691, %v4906
        %v4908 = vcombine.high %v4692, %v4692
        %v4910 = vunpack.c.l.s4 1983009808
        %v4911 = vunpack.c.0.s8 %v4910
        %v4912 = vlaneseq
        %v4913 = vshrl.u32 %v4912, 7
        %v4914 = vsub.s32 %v4911, %v4913
        %v4915 = vrot.slane %v4692, %v4914
        %v4917 = vunpack.c.l.s4 1983009808
        %v4918 = vunpack.c.0.s8 %v4917
        %v4919 = vlaneseq
        %v4920 = vshrl.u32 %v4919, 7
        %v4921 = vsub.s32 %v4918, %v4920
        %v4922 = vrot.slane %v4908, %v4921
        %v4923 = vcombine.high %v4915, %v4915
        %v4924 = vcombine.high %v4922, %v4922
        %v4926 = vunpack.c.l.s4 1983009808
        %v4927 = vunpack.c.0.s8 %v4926
        %v4928 = vlaneseq
        %v4929 = vshrl.u32 %v4928, 7
        %v4930 = vsub.s32 %v4927, %v4929
        %v4931 = vrot.slane %v4693, %v4930
        %v4932 = vcombine.high %v4694, %v4694
        %v4934 = vunpack.c.l.s4 1983009808
        %v4935 = vunpack.c.0.s8 %v4934
        %v4936 = vlaneseq
        %v4937 = vshrl.u32 %v4936, 7
        %v4938 = vsub.s32 %v4935, %v4937
        %v4939 = vrot.slane %v4694, %v4938
        %v4941 = vunpack.c.l.s4 1983009808
        %v4942 = vunpack.c.0.s8 %v4941
        %v4943 = vlaneseq
        %v4944 = vshrl.u32 %v4943, 7
        %v4945 = vsub.s32 %v4942, %v4944
        %v4946 = vrot.slane %v4932, %v4945
        %v4947 = vcombine.high %v4939, %v4939
        %v4948 = vcombine.high %v4946, %v4946
        %v4950 = vunpack.c.l.s4 1983009808
        %v4951 = vunpack.c.0.s8 %v4950
        %v4952 = vlaneseq
        %v4953 = vshrl.u32 %v4952, 7
        %v4954 = vsub.s32 %v4951, %v4953
        %v4955 = vrot.slane %v4695, %v4954
        %s4956 = scalar_lea.vmem %s1, 768
        %v4957 = vld [vmem:[%s4956] sm:$0xff]
        %v4958 = vld [vmem:[%s4956 + $0x8] sm:$0xff]
        %v4959 = vld [vmem:[%s4956 + $0x10] sm:$0xff]
        %v4960 = vld [vmem:[%s4956 + $0x18] sm:$0xff]
        %v4961 = vld [vmem:[%s4956 + $0x20] sm:$0xff]
        %v4962 = vld [vmem:[%s4956 + $0x28] sm:$0xff]
        %v4963 = vld [vmem:[%s4956 + $0x30] sm:$0xff]
        %v4964 = vld [vmem:[%s4956 + $0x38] sm:$0xff]
        %v4965 = vld [vmem:[%s4956 + $0x40] sm:$0xff]
        %v4966 = vld [vmem:[%s4956 + $0x48] sm:$0xff]
        %v4967 = vld [vmem:[%s4956 + $0x50] sm:$0xff]
        %v4968 = vld [vmem:[%s4956 + $0x58] sm:$0xff]
        %v4969 = vld [vmem:[%s4956 + $0x60] sm:$0xff]
        %v4970 = vld [vmem:[%s4956 + $0x68] sm:$0xff]
        %v4971 = vld [vmem:[%s4956 + $0x70] sm:$0xff]
        %v4972 = vld [vmem:[%s4956 + $0x78] sm:$0xff]
        %v4973 = vcombine.low %v4723, %v4731
        %v4974 = vcombine.low %v4730, %v4732
        %v4976 = vunpack.c.l.s4 1983009808
        %v4977 = vunpack.c.0.s8 %v4976
        %v4978 = vlaneseq
        %v4979 = vshrl.u32 %v4978, 7
        %v4980 = vsub.s32 %v4977, %v4979
        %v4981 = vrot.slane %v4973, %v4980
        %v4983 = vunpack.c.l.s4 1983009808
        %v4984 = vunpack.c.0.s8 %v4983
        %v4985 = vlaneseq
        %v4986 = vshrl.u32 %v4985, 7
        %v4987 = vsub.s32 %v4984, %v4986
        %v4988 = vrot.slane %v4974, %v4987
        %v4989 = vcombine.low %v4981, %v4988
        %v4990 = vcombine.low %v4739, %v4747
        %v4991 = vcombine.low %v4755, %v4754
        %v4993 = vunpack.c.l.s4 1983009808
        %v4994 = vunpack.c.0.s8 %v4993
        %v4995 = vlaneseq
        %v4996 = vshrl.u32 %v4995, 7
        %v4997 = vsub.s32 %v4994, %v4996
        %v4998 = vrot.slane %v4990, %v4997
        %v5000 = vunpack.c.l.s4 1983009808
        %v5001 = vunpack.c.0.s8 %v5000
        %v5002 = vlaneseq
        %v5003 = vshrl.u32 %v5002, 7
        %v5004 = vsub.s32 %v5001, %v5003
        %v5005 = vrot.slane %v4991, %v5004
        %v5006 = vcombine.low %v4998, %v5005
        %v5007 = vcombine.low %v4756, %v4763
        %v5008 = vcombine.low %v4771, %v4779
        %v5010 = vunpack.c.l.s4 1983009808
        %v5011 = vunpack.c.0.s8 %v5010
        %v5012 = vlaneseq
        %v5013 = vshrl.u32 %v5012, 7
        %v5014 = vsub.s32 %v5011, %v5013
        %v5015 = vrot.slane %v5007, %v5014
        %v5017 = vunpack.c.l.s4 1983009808
        %v5018 = vunpack.c.0.s8 %v5017
        %v5019 = vlaneseq
        %v5020 = vshrl.u32 %v5019, 7
        %v5021 = vsub.s32 %v5018, %v5020
        %v5022 = vrot.slane %v5008, %v5021
        %v5023 = vcombine.low %v5015, %v5022
        %v5024 = vcombine.low %v4778, %v4780
        %v5025 = vcombine.low %v4787, %v4795
        %v5027 = vunpack.c.l.s4 1983009808
        %v5028 = vunpack.c.0.s8 %v5027
        %v5029 = vlaneseq
        %v5030 = vshrl.u32 %v5029, 7
        %v5031 = vsub.s32 %v5028, %v5030
        %v5032 = vrot.slane %v5024, %v5031
        %v5034 = vunpack.c.l.s4 1983009808
        %v5035 = vunpack.c.0.s8 %v5034
        %v5036 = vlaneseq
        %v5037 = vshrl.u32 %v5036, 7
        %v5038 = vsub.s32 %v5035, %v5037
        %v5039 = vrot.slane %v5025, %v5038
        %v5040 = vcombine.low %v5032, %v5039
        %v5041 = vcombine.low %v4803, %v4802
        %v5042 = vcombine.low %v4804, %v4811
        %v5044 = vunpack.c.l.s4 1983009808
        %v5045 = vunpack.c.0.s8 %v5044
        %v5046 = vlaneseq
        %v5047 = vshrl.u32 %v5046, 7
        %v5048 = vsub.s32 %v5045, %v5047
        %v5049 = vrot.slane %v5041, %v5048
        %v5051 = vunpack.c.l.s4 1983009808
        %v5052 = vunpack.c.0.s8 %v5051
        %v5053 = vlaneseq
        %v5054 = vshrl.u32 %v5053, 7
        %v5055 = vsub.s32 %v5052, %v5054
        %v5056 = vrot.slane %v5042, %v5055
        %v5057 = vcombine.low %v5049, %v5056
        %v5058 = vcombine.low %v4819, %v4827
        %v5059 = vcombine.low %v4826, %v4828
        %v5061 = vunpack.c.l.s4 1983009808
        %v5062 = vunpack.c.0.s8 %v5061
        %v5063 = vlaneseq
        %v5064 = vshrl.u32 %v5063, 7
        %v5065 = vsub.s32 %v5062, %v5064
        %v5066 = vrot.slane %v5058, %v5065
        %v5068 = vunpack.c.l.s4 1983009808
        %v5069 = vunpack.c.0.s8 %v5068
        %v5070 = vlaneseq
        %v5071 = vshrl.u32 %v5070, 7
        %v5072 = vsub.s32 %v5069, %v5071
        %v5073 = vrot.slane %v5059, %v5072
        %v5074 = vcombine.low %v5066, %v5073
        %v5075 = vcombine.low %v4835, %v4843
        %v5076 = vcombine.low %v4851, %v4850
        %v5078 = vunpack.c.l.s4 1983009808
        %v5079 = vunpack.c.0.s8 %v5078
        %v5080 = vlaneseq
        %v5081 = vshrl.u32 %v5080, 7
        %v5082 = vsub.s32 %v5079, %v5081
        %v5083 = vrot.slane %v5075, %v5082
        %v5085 = vunpack.c.l.s4 1983009808
        %v5086 = vunpack.c.0.s8 %v5085
        %v5087 = vlaneseq
        %v5088 = vshrl.u32 %v5087, 7
        %v5089 = vsub.s32 %v5086, %v5088
        %v5090 = vrot.slane %v5076, %v5089
        %v5091 = vcombine.low %v5083, %v5090
        %v5092 = vcombine.low %v4852, %v4859
        %v5093 = vcombine.low %v4867, %v4875
        %v5095 = vunpack.c.l.s4 1983009808
        %v5096 = vunpack.c.0.s8 %v5095
        %v5097 = vlaneseq
        %v5098 = vshrl.u32 %v5097, 7
        %v5099 = vsub.s32 %v5096, %v5098
        %v5100 = vrot.slane %v5092, %v5099
        %v5102 = vunpack.c.l.s4 1983009808
        %v5103 = vunpack.c.0.s8 %v5102
        %v5104 = vlaneseq
        %v5105 = vshrl.u32 %v5104, 7
        %v5106 = vsub.s32 %v5103, %v5105
        %v5107 = vrot.slane %v5093, %v5106
        %v5108 = vcombine.low %v5100, %v5107
        %v5109 = vcombine.low %v4874, %v4876
        %v5110 = vcombine.low %v4883, %v4891
        %v5112 = vunpack.c.l.s4 1983009808
        %v5113 = vunpack.c.0.s8 %v5112
        %v5114 = vlaneseq
        %v5115 = vshrl.u32 %v5114, 7
        %v5116 = vsub.s32 %v5113, %v5115
        %v5117 = vrot.slane %v5109, %v5116
        %v5119 = vunpack.c.l.s4 1983009808
        %v5120 = vunpack.c.0.s8 %v5119
        %v5121 = vlaneseq
        %v5122 = vshrl.u32 %v5121, 7
        %v5123 = vsub.s32 %v5120, %v5122
        %v5124 = vrot.slane %v5110, %v5123
        %v5125 = vcombine.low %v5117, %v5124
        %v5126 = vcombine.low %v4899, %v4898
        %v5127 = vcombine.low %v4900, %v4907
        %v5129 = vunpack.c.l.s4 1983009808
        %v5130 = vunpack.c.0.s8 %v5129
        %v5131 = vlaneseq
        %v5132 = vshrl.u32 %v5131, 7
        %v5133 = vsub.s32 %v5130, %v5132
        %v5134 = vrot.slane %v5126, %v5133
        %v5136 = vunpack.c.l.s4 1983009808
        %v5137 = vunpack.c.0.s8 %v5136
        %v5138 = vlaneseq
        %v5139 = vshrl.u32 %v5138, 7
        %v5140 = vsub.s32 %v5137, %v5139
        %v5141 = vrot.slane %v5127, %v5140
        %v5142 = vcombine.low %v5134, %v5141
        %v5143 = vcombine.low %v4915, %v4923
        %v5144 = vcombine.low %v4922, %v4924
        %v5146 = vunpack.c.l.s4 1983009808
        %v5147 = vunpack.c.0.s8 %v5146
        %v5148 = vlaneseq
        %v5149 = vshrl.u32 %v5148, 7
        %v5150 = vsub.s32 %v5147, %v5149
        %v5151 = vrot.slane %v5143, %v5150
        %v5153 = vunpack.c.l.s4 1983009808
        %v5154 = vunpack.c.0.s8 %v5153
        %v5155 = vlaneseq
        %v5156 = vshrl.u32 %v5155, 7
        %v5157 = vsub.s32 %v5154, %v5156
        %v5158 = vrot.slane %v5144, %v5157
        %v5159 = vcombine.low %v5151, %v5158
        %v5160 = vcombine.low %v4931, %v4939
        %v5161 = vcombine.low %v4947, %v4946
        %v5163 = vunpack.c.l.s4 1983009808
        %v5164 = vunpack.c.0.s8 %v5163
        %v5165 = vlaneseq
        %v5166 = vshrl.u32 %v5165, 7
        %v5167 = vsub.s32 %v5164, %v5166
        %v5168 = vrot.slane %v5160, %v5167
        %v5170 = vunpack.c.l.s4 1983009808
        %v5171 = vunpack.c.0.s8 %v5170
        %v5172 = vlaneseq
        %v5173 = vshrl.u32 %v5172, 7
        %v5174 = vsub.s32 %v5171, %v5173
        %v5175 = vrot.slane %v5161, %v5174
        %v5176 = vcombine.low %v5168, %v5175
        %v5177 = vcombine.low %v4948, %v4955
        %v5179 = vunpack.c.l.s4 1983009808
        %v5180 = vunpack.c.0.s8 %v5179
        %v5181 = vlaneseq
        %v5182 = vshrl.u32 %v5181, 7
        %v5183 = vsub.s32 %v5180, %v5182
        %v5184 = vrot.slane %v5177, %v5183
        %5198 = vmatprep.subr.mxu0 0.0
        %5199 = vmatpush1.msra.mxu0 %v4972
        %5200 = vmatprep.subr.mxu0 0.0
        %5201 = vmatpush1.msra.mxu0 %v4971
        %5202 = vmatprep.subr.mxu0 0.0
        %5203 = vmatpush1.msra.mxu0 %v4970
        %5204 = vmatprep.subr.mxu0 0.0
        %5205 = vmatpush1.msra.mxu0 %v4969
        %5206 = vmatprep.subr.mxu0 0.0
        %5207 = vmatpush1.msra.mxu0 %v4968
        %5208 = vmatprep.subr.mxu0 0.0
        %5209 = vmatpush1.msra.mxu0 %v4967
        %5210 = vmatprep.subr.mxu0 0.0
        %5211 = vmatpush1.msra.mxu0 %v4966
        %5212 = vmatprep.subr.mxu0 0.0
        %5213 = vmatpush1.msra.mxu0 %v4965
        %5214 = vmatprep.subr.mxu0 0.0
        %5215 = vmatpush1.msra.mxu0 %v4964
        %5216 = vmatprep.subr.mxu0 0.0
        %5217 = vmatpush1.msra.mxu0 %v4963
        %5218 = vmatprep.subr.mxu0 0.0
        %5219 = vmatpush1.msra.mxu0 %v4962
        %5220 = vmatprep.subr.mxu0 0.0
        %5221 = vmatpush1.msra.mxu0 %v4961
        %5222 = vmatprep.subr.mxu0 0.0
        %5223 = vmatpush1.msra.mxu0 %v4960
        %5224 = vmatprep.subr.mxu0 0.0
        %5225 = vmatpush1.msra.mxu0 %v4959
        %5226 = vmatprep.subr.mxu0 0.0
        %5227 = vmatpush1.msra.mxu0 %v4958
        %5228 = vmatprep.subr.mxu0 0.0
        %5229 = vmatpush1.msra.mxu0 %v4957
        %5230 = vmatprep.subr.mxu0 0.0
        %5231 = vmatpush2.msra.mxu0 0.0
        %5232 = vmatprep.subr.mxu0 0.0
        %5233 = vmatpush2.msra.mxu0 0.0
        %5234 = vmatprep.subr.mxu0 0.0
        %5235 = vmatpush2.msra.mxu0 0.0
        %5236 = vmatprep.subr.mxu0 0.0
        %5237 = vmatpush2.msra.mxu0 0.0
        %5238 = vmatprep.subr.mxu0 0.0
        %5239 = vmatpush2.msra.mxu0 0.0
        %5240 = vmatprep.subr.mxu0 0.0
        %5241 = vmatpush2.msra.mxu0 0.0
        %5242 = vmatprep.subr.mxu0 0.0
        %5243 = vmatpush2.msra.mxu0 0.0
        %5244 = vmatprep.subr.mxu0 0.0
        %5245 = vmatpush2.msra.mxu0 0.0
        %5246 = vmatprep.subr.mxu0 0.0
        %5247 = vmatpush2.msra.mxu0 0.0
        %5248 = vmatprep.subr.mxu0 0.0
        %5249 = vmatpush2.msra.mxu0 0.0
        %5250 = vmatprep.subr.mxu0 0.0
        %5251 = vmatpush2.msra.mxu0 0.0
        %5252 = vmatprep.subr.mxu0 0.0
        %5253 = vmatpush2.msra.mxu0 0.0
        %5254 = vmatprep.subr.mxu0 0.0
        %5255 = vmatpush2.msra.mxu0 0.0
        %5256 = vmatprep.subr.mxu0 0.0
        %5257 = vmatpush2.msra.mxu0 0.0
        %5258 = vmatprep.subr.mxu0 0.0
        %5259 = vmatpush2.msra.mxu0 0.0
        %5260 = vmatprep.subr.mxu0 0.0
        %5261 = vmatpush2.msra.mxu0 0.0
        %5262 = vmatprep.mubr.f32.mxu0 0.0
        %5263 = vmatmul.mubr.f32.gmra.mxu0 %v4989
        %v5264 = vpop.f32.mrf.mxu0
        %v5265 = vadd.f32 0.0, %v5264
        %v5266 = vpop.f32.mrf.mxu0
        %5267 = vmatprep.mubr.f32.mxu0 0.0
        %5268 = vmatmul.mubr.f32.gmra.mxu0 %v5006
        %v5269 = vpop.f32.mrf.mxu0
        %v5270 = vadd.f32 0.0, %v5269
        %v5271 = vpop.f32.mrf.mxu0
        %5272 = vmatprep.mubr.f32.mxu0 0.0
        %5273 = vmatmul.mubr.f32.gmra.mxu0 %v5023
        %v5274 = vpop.f32.mrf.mxu0
        %v5275 = vadd.f32 0.0, %v5274
        %v5276 = vpop.f32.mrf.mxu0
        %5277 = vmatprep.mubr.f32.mxu0 0.0
        %5278 = vmatmul.mubr.f32.gmra.mxu0 %v5040
        %v5279 = vpop.f32.mrf.mxu0
        %v5280 = vadd.f32 0.0, %v5279
        %v5281 = vpop.f32.mrf.mxu0
        %5282 = vmatprep.mubr.f32.mxu0 0.0
        %5283 = vmatmul.mubr.f32.gmra.mxu0 %v5057
        %v5284 = vpop.f32.mrf.mxu0
        %v5285 = vadd.f32 0.0, %v5284
        %v5286 = vpop.f32.mrf.mxu0
        %5287 = vmatprep.mubr.f32.mxu0 0.0
        %5288 = vmatmul.mubr.f32.gmra.mxu0 %v5074
        %v5289 = vpop.f32.mrf.mxu0
        %v5290 = vadd.f32 0.0, %v5289
        %v5291 = vpop.f32.mrf.mxu0
        %5292 = vmatprep.mubr.f32.mxu0 0.0
        %5293 = vmatmul.mubr.f32.gmra.mxu0 %v5091
        %v5294 = vpop.f32.mrf.mxu0
        %v5295 = vadd.f32 0.0, %v5294
        %v5296 = vpop.f32.mrf.mxu0
        %5297 = vmatprep.mubr.f32.mxu0 0.0
        %5298 = vmatmul.mubr.f32.gmra.mxu0 %v5108
        %v5299 = vpop.f32.mrf.mxu0
        %v5300 = vadd.f32 0.0, %v5299
        %v5301 = vpop.f32.mrf.mxu0
        %5302 = vmatprep.mubr.f32.mxu0 0.0
        %5303 = vmatmul.mubr.f32.gmra.mxu0 %v5125
        %v5304 = vpop.f32.mrf.mxu0
        %v5305 = vadd.f32 0.0, %v5304
        %v5306 = vpop.f32.mrf.mxu0
        %5307 = vmatprep.mubr.f32.mxu0 0.0
        %5308 = vmatmul.mubr.f32.gmra.mxu0 %v5142
        %v5309 = vpop.f32.mrf.mxu0
        %v5310 = vadd.f32 0.0, %v5309
        %v5311 = vpop.f32.mrf.mxu0
        %5312 = vmatprep.mubr.f32.mxu0 0.0
        %5313 = vmatmul.mubr.f32.gmra.mxu0 %v5159
        %v5314 = vpop.f32.mrf.mxu0
        %v5315 = vadd.f32 0.0, %v5314
        %v5316 = vpop.f32.mrf.mxu0
        %5317 = vmatprep.mubr.f32.mxu0 0.0
        %5318 = vmatmul.mubr.f32.gmra.mxu0 %v5176
        %v5319 = vpop.f32.mrf.mxu0
        %v5320 = vadd.f32 0.0, %v5319
        %v5321 = vpop.f32.mrf.mxu0
        %5322 = vmatprep.mubr.f32.mxu0 0.0
        %5323 = vmatmul.mubr.f32.gmra.mxu0 %v5184
        %v5324 = vpop.f32.mrf.mxu0
        %v5325 = vadd.f32 0.0, %v5324
        %v5326 = vpop.f32.mrf.mxu0
        %5327 = vdwg.mxu0
        %v5328 = vadd.f32 %v4662, %v5265
        %v5329 = vadd.f32 %v4663, %v5270
        %v5330 = vadd.f32 %v4664, %v5275
        %v5331 = vadd.f32 %v4665, %v5280
        %v5332 = vadd.f32 %v4666, %v5285
        %v5333 = vadd.f32 %v4667, %v5290
        %v5334 = vadd.f32 %v4668, %v5295
        %v5335 = vadd.f32 %v4669, %v5300
        %v5336 = vadd.f32 %v4670, %v5305
        %v5337 = vadd.f32 %v4671, %v5310
        %v5338 = vadd.f32 %v4672, %v5315
        %v5339 = vadd.f32 %v4673, %v5320
        %v5340 = vadd.f32 %v4674, %v5325
        %s5341 = scalar_lea.vmem [#allocation2], 80
        %v5342 = vld [vmem:[%s5341] sm:$0xff]
        %v5343 = vld [vmem:[%s5341 + $0x8] sm:$0x3]
        %v5344 = vld [vmem:[%s5341 + $0x40] sm:$0xff]
        %v5345 = vld [vmem:[%s5341 + $0x48] sm:$0x3]
        %v5346 = vld [vmem:[%s5341 + $0x80] sm:$0xff]
        %v5347 = vld [vmem:[%s5341 + $0x88] sm:$0x3]
        %v5348 = vld [vmem:[%s5341 + $0xc0] sm:$0xff]
        %v5349 = vld [vmem:[%s5341 + $0xc8] sm:$0x3]
        %v5350 = vld [vmem:[%s5341 + $0x100] sm:$0xff]
        %v5351 = vld [vmem:[%s5341 + $0x108] sm:$0x3]
        %v5352 = vld [vmem:[%s5341 + $0x140] sm:$0xff]
        %v5353 = vld [vmem:[%s5341 + $0x148] sm:$0x3]
        %v5354 = vld [vmem:[%s5341 + $0x180] sm:$0xff]
        %v5355 = vld [vmem:[%s5341 + $0x188] sm:$0x3]
        %v5356 = vld [vmem:[%s5341 + $0x1c0] sm:$0xff]
        %v5357 = vld [vmem:[%s5341 + $0x1c8] sm:$0x3]
        %v5358 = vld [vmem:[%s5341 + $0x200] sm:$0xff]
        %v5359 = vld [vmem:[%s5341 + $0x208] sm:$0x3]
        %v5360 = vld [vmem:[%s5341 + $0x240] sm:$0xff]
        %v5361 = vld [vmem:[%s5341 + $0x248] sm:$0x3]
        %v5382 = vcombine.high %v5342, %v5342
        %v5384 = vunpack.c.l.s4 1983009808
        %v5385 = vunpack.c.0.s8 %v5384
        %v5386 = vlaneseq
        %v5387 = vshrl.u32 %v5386, 7
        %v5388 = vsub.s32 %v5385, %v5387
        %v5389 = vrot.slane %v5342, %v5388
        %v5391 = vunpack.c.l.s4 1983009808
        %v5392 = vunpack.c.0.s8 %v5391
        %v5393 = vlaneseq
        %v5394 = vshrl.u32 %v5393, 7
        %v5395 = vsub.s32 %v5392, %v5394
        %v5396 = vrot.slane %v5382, %v5395
        %v5397 = vcombine.high %v5389, %v5389
        %v5398 = vcombine.high %v5396, %v5396
        %v5400 = vunpack.c.l.s4 1983009808
        %v5401 = vunpack.c.0.s8 %v5400
        %v5402 = vlaneseq
        %v5403 = vshrl.u32 %v5402, 7
        %v5404 = vsub.s32 %v5401, %v5403
        %v5405 = vrot.slane %v5343, %v5404
        %v5406 = vcombine.high %v5344, %v5344
        %v5408 = vunpack.c.l.s4 1983009808
        %v5409 = vunpack.c.0.s8 %v5408
        %v5410 = vlaneseq
        %v5411 = vshrl.u32 %v5410, 7
        %v5412 = vsub.s32 %v5409, %v5411
        %v5413 = vrot.slane %v5344, %v5412
        %v5415 = vunpack.c.l.s4 1983009808
        %v5416 = vunpack.c.0.s8 %v5415
        %v5417 = vlaneseq
        %v5418 = vshrl.u32 %v5417, 7
        %v5419 = vsub.s32 %v5416, %v5418
        %v5420 = vrot.slane %v5406, %v5419
        %v5421 = vcombine.high %v5413, %v5413
        %v5422 = vcombine.high %v5420, %v5420
        %v5424 = vunpack.c.l.s4 1983009808
        %v5425 = vunpack.c.0.s8 %v5424
        %v5426 = vlaneseq
        %v5427 = vshrl.u32 %v5426, 7
        %v5428 = vsub.s32 %v5425, %v5427
        %v5429 = vrot.slane %v5345, %v5428
        %v5430 = vcombine.high %v5346, %v5346
        %v5432 = vunpack.c.l.s4 1983009808
        %v5433 = vunpack.c.0.s8 %v5432
        %v5434 = vlaneseq
        %v5435 = vshrl.u32 %v5434, 7
        %v5436 = vsub.s32 %v5433, %v5435
        %v5437 = vrot.slane %v5346, %v5436
        %v5439 = vunpack.c.l.s4 1983009808
        %v5440 = vunpack.c.0.s8 %v5439
        %v5441 = vlaneseq
        %v5442 = vshrl.u32 %v5441, 7
        %v5443 = vsub.s32 %v5440, %v5442
        %v5444 = vrot.slane %v5430, %v5443
        %v5445 = vcombine.high %v5437, %v5437
        %v5446 = vcombine.high %v5444, %v5444
        %v5448 = vunpack.c.l.s4 1983009808
        %v5449 = vunpack.c.0.s8 %v5448
        %v5450 = vlaneseq
        %v5451 = vshrl.u32 %v5450, 7
        %v5452 = vsub.s32 %v5449, %v5451
        %v5453 = vrot.slane %v5347, %v5452
        %v5454 = vcombine.high %v5348, %v5348
        %v5456 = vunpack.c.l.s4 1983009808
        %v5457 = vunpack.c.0.s8 %v5456
        %v5458 = vlaneseq
        %v5459 = vshrl.u32 %v5458, 7
        %v5460 = vsub.s32 %v5457, %v5459
        %v5461 = vrot.slane %v5348, %v5460
        %v5463 = vunpack.c.l.s4 1983009808
        %v5464 = vunpack.c.0.s8 %v5463
        %v5465 = vlaneseq
        %v5466 = vshrl.u32 %v5465, 7
        %v5467 = vsub.s32 %v5464, %v5466
        %v5468 = vrot.slane %v5454, %v5467
        %v5469 = vcombine.high %v5461, %v5461
        %v5470 = vcombine.high %v5468, %v5468
        %v5472 = vunpack.c.l.s4 1983009808
        %v5473 = vunpack.c.0.s8 %v5472
        %v5474 = vlaneseq
        %v5475 = vshrl.u32 %v5474, 7
        %v5476 = vsub.s32 %v5473, %v5475
        %v5477 = vrot.slane %v5349, %v5476
        %v5478 = vcombine.high %v5350, %v5350
        %v5480 = vunpack.c.l.s4 1983009808
        %v5481 = vunpack.c.0.s8 %v5480
        %v5482 = vlaneseq
        %v5483 = vshrl.u32 %v5482, 7
        %v5484 = vsub.s32 %v5481, %v5483
        %v5485 = vrot.slane %v5350, %v5484
        %v5487 = vunpack.c.l.s4 1983009808
        %v5488 = vunpack.c.0.s8 %v5487
        %v5489 = vlaneseq
        %v5490 = vshrl.u32 %v5489, 7
        %v5491 = vsub.s32 %v5488, %v5490
        %v5492 = vrot.slane %v5478, %v5491
        %v5493 = vcombine.high %v5485, %v5485
        %v5494 = vcombine.high %v5492, %v5492
        %v5496 = vunpack.c.l.s4 1983009808
        %v5497 = vunpack.c.0.s8 %v5496
        %v5498 = vlaneseq
        %v5499 = vshrl.u32 %v5498, 7
        %v5500 = vsub.s32 %v5497, %v5499
        %v5501 = vrot.slane %v5351, %v5500
        %v5502 = vcombine.high %v5352, %v5352
        %v5504 = vunpack.c.l.s4 1983009808
        %v5505 = vunpack.c.0.s8 %v5504
        %v5506 = vlaneseq
        %v5507 = vshrl.u32 %v5506, 7
        %v5508 = vsub.s32 %v5505, %v5507
        %v5509 = vrot.slane %v5352, %v5508
        %v5511 = vunpack.c.l.s4 1983009808
        %v5512 = vunpack.c.0.s8 %v5511
        %v5513 = vlaneseq
        %v5514 = vshrl.u32 %v5513, 7
        %v5515 = vsub.s32 %v5512, %v5514
        %v5516 = vrot.slane %v5502, %v5515
        %v5517 = vcombine.high %v5509, %v5509
        %v5518 = vcombine.high %v5516, %v5516
        %v5520 = vunpack.c.l.s4 1983009808
        %v5521 = vunpack.c.0.s8 %v5520
        %v5522 = vlaneseq
        %v5523 = vshrl.u32 %v5522, 7
        %v5524 = vsub.s32 %v5521, %v5523
        %v5525 = vrot.slane %v5353, %v5524
        %v5526 = vcombine.high %v5354, %v5354
        %v5528 = vunpack.c.l.s4 1983009808
        %v5529 = vunpack.c.0.s8 %v5528
        %v5530 = vlaneseq
        %v5531 = vshrl.u32 %v5530, 7
        %v5532 = vsub.s32 %v5529, %v5531
        %v5533 = vrot.slane %v5354, %v5532
        %v5535 = vunpack.c.l.s4 1983009808
        %v5536 = vunpack.c.0.s8 %v5535
        %v5537 = vlaneseq
        %v5538 = vshrl.u32 %v5537, 7
        %v5539 = vsub.s32 %v5536, %v5538
        %v5540 = vrot.slane %v5526, %v5539
        %v5541 = vcombine.high %v5533, %v5533
        %v5542 = vcombine.high %v5540, %v5540
        %v5544 = vunpack.c.l.s4 1983009808
        %v5545 = vunpack.c.0.s8 %v5544
        %v5546 = vlaneseq
        %v5547 = vshrl.u32 %v5546, 7
        %v5548 = vsub.s32 %v5545, %v5547
        %v5549 = vrot.slane %v5355, %v5548
        %v5550 = vcombine.high %v5356, %v5356
        %v5552 = vunpack.c.l.s4 1983009808
        %v5553 = vunpack.c.0.s8 %v5552
        %v5554 = vlaneseq
        %v5555 = vshrl.u32 %v5554, 7
        %v5556 = vsub.s32 %v5553, %v5555
        %v5557 = vrot.slane %v5356, %v5556
        %v5559 = vunpack.c.l.s4 1983009808
        %v5560 = vunpack.c.0.s8 %v5559
        %v5561 = vlaneseq
        %v5562 = vshrl.u32 %v5561, 7
        %v5563 = vsub.s32 %v5560, %v5562
        %v5564 = vrot.slane %v5550, %v5563
        %v5565 = vcombine.high %v5557, %v5557
        %v5566 = vcombine.high %v5564, %v5564
        %v5568 = vunpack.c.l.s4 1983009808
        %v5569 = vunpack.c.0.s8 %v5568
        %v5570 = vlaneseq
        %v5571 = vshrl.u32 %v5570, 7
        %v5572 = vsub.s32 %v5569, %v5571
        %v5573 = vrot.slane %v5357, %v5572
        %v5574 = vcombine.high %v5358, %v5358
        %v5576 = vunpack.c.l.s4 1983009808
        %v5577 = vunpack.c.0.s8 %v5576
        %v5578 = vlaneseq
        %v5579 = vshrl.u32 %v5578, 7
        %v5580 = vsub.s32 %v5577, %v5579
        %v5581 = vrot.slane %v5358, %v5580
        %v5583 = vunpack.c.l.s4 1983009808
        %v5584 = vunpack.c.0.s8 %v5583
        %v5585 = vlaneseq
        %v5586 = vshrl.u32 %v5585, 7
        %v5587 = vsub.s32 %v5584, %v5586
        %v5588 = vrot.slane %v5574, %v5587
        %v5589 = vcombine.high %v5581, %v5581
        %v5590 = vcombine.high %v5588, %v5588
        %v5592 = vunpack.c.l.s4 1983009808
        %v5593 = vunpack.c.0.s8 %v5592
        %v5594 = vlaneseq
        %v5595 = vshrl.u32 %v5594, 7
        %v5596 = vsub.s32 %v5593, %v5595
        %v5597 = vrot.slane %v5359, %v5596
        %v5598 = vcombine.high %v5360, %v5360
        %v5600 = vunpack.c.l.s4 1983009808
        %v5601 = vunpack.c.0.s8 %v5600
        %v5602 = vlaneseq
        %v5603 = vshrl.u32 %v5602, 7
        %v5604 = vsub.s32 %v5601, %v5603
        %v5605 = vrot.slane %v5360, %v5604
        %v5607 = vunpack.c.l.s4 1983009808
        %v5608 = vunpack.c.0.s8 %v5607
        %v5609 = vlaneseq
        %v5610 = vshrl.u32 %v5609, 7
        %v5611 = vsub.s32 %v5608, %v5610
        %v5612 = vrot.slane %v5598, %v5611
        %v5613 = vcombine.high %v5605, %v5605
        %v5614 = vcombine.high %v5612, %v5612
        %v5616 = vunpack.c.l.s4 1983009808
        %v5617 = vunpack.c.0.s8 %v5616
        %v5618 = vlaneseq
        %v5619 = vshrl.u32 %v5618, 7
        %v5620 = vsub.s32 %v5617, %v5619
        %v5621 = vrot.slane %v5361, %v5620
        %s5622 = scalar_lea.vmem %s1, 896
        %v5623 = vld [vmem:[%s5622] sm:$0xff]
        %v5624 = vld [vmem:[%s5622 + $0x8] sm:$0xff]
        %v5625 = vld [vmem:[%s5622 + $0x10] sm:$0xff]
        %v5626 = vld [vmem:[%s5622 + $0x18] sm:$0xff]
        %v5627 = vld [vmem:[%s5622 + $0x20] sm:$0xff]
        %v5628 = vld [vmem:[%s5622 + $0x28] sm:$0xff]
        %v5629 = vld [vmem:[%s5622 + $0x30] sm:$0xff]
        %v5630 = vld [vmem:[%s5622 + $0x38] sm:$0xff]
        %v5631 = vld [vmem:[%s5622 + $0x40] sm:$0xff]
        %v5632 = vld [vmem:[%s5622 + $0x48] sm:$0xff]
        %v5633 = vld [vmem:[%s5622 + $0x50] sm:$0xff]
        %v5634 = vld [vmem:[%s5622 + $0x58] sm:$0xff]
        %v5635 = vld [vmem:[%s5622 + $0x60] sm:$0xff]
        %v5636 = vld [vmem:[%s5622 + $0x68] sm:$0xff]
        %v5637 = vld [vmem:[%s5622 + $0x70] sm:$0xff]
        %v5638 = vld [vmem:[%s5622 + $0x78] sm:$0xff]
        %v5639 = vcombine.low %v5389, %v5397
        %v5640 = vcombine.low %v5396, %v5398
        %v5642 = vunpack.c.l.s4 1983009808
        %v5643 = vunpack.c.0.s8 %v5642
        %v5644 = vlaneseq
        %v5645 = vshrl.u32 %v5644, 7
        %v5646 = vsub.s32 %v5643, %v5645
        %v5647 = vrot.slane %v5639, %v5646
        %v5649 = vunpack.c.l.s4 1983009808
        %v5650 = vunpack.c.0.s8 %v5649
        %v5651 = vlaneseq
        %v5652 = vshrl.u32 %v5651, 7
        %v5653 = vsub.s32 %v5650, %v5652
        %v5654 = vrot.slane %v5640, %v5653
        %v5655 = vcombine.low %v5647, %v5654
        %v5656 = vcombine.low %v5405, %v5413
        %v5657 = vcombine.low %v5421, %v5420
        %v5659 = vunpack.c.l.s4 1983009808
        %v5660 = vunpack.c.0.s8 %v5659
        %v5661 = vlaneseq
        %v5662 = vshrl.u32 %v5661, 7
        %v5663 = vsub.s32 %v5660, %v5662
        %v5664 = vrot.slane %v5656, %v5663
        %v5666 = vunpack.c.l.s4 1983009808
        %v5667 = vunpack.c.0.s8 %v5666
        %v5668 = vlaneseq
        %v5669 = vshrl.u32 %v5668, 7
        %v5670 = vsub.s32 %v5667, %v5669
        %v5671 = vrot.slane %v5657, %v5670
        %v5672 = vcombine.low %v5664, %v5671
        %v5673 = vcombine.low %v5422, %v5429
        %v5674 = vcombine.low %v5437, %v5445
        %v5676 = vunpack.c.l.s4 1983009808
        %v5677 = vunpack.c.0.s8 %v5676
        %v5678 = vlaneseq
        %v5679 = vshrl.u32 %v5678, 7
        %v5680 = vsub.s32 %v5677, %v5679
        %v5681 = vrot.slane %v5673, %v5680
        %v5683 = vunpack.c.l.s4 1983009808
        %v5684 = vunpack.c.0.s8 %v5683
        %v5685 = vlaneseq
        %v5686 = vshrl.u32 %v5685, 7
        %v5687 = vsub.s32 %v5684, %v5686
        %v5688 = vrot.slane %v5674, %v5687
        %v5689 = vcombine.low %v5681, %v5688
        %v5690 = vcombine.low %v5444, %v5446
        %v5691 = vcombine.low %v5453, %v5461
        %v5693 = vunpack.c.l.s4 1983009808
        %v5694 = vunpack.c.0.s8 %v5693
        %v5695 = vlaneseq
        %v5696 = vshrl.u32 %v5695, 7
        %v5697 = vsub.s32 %v5694, %v5696
        %v5698 = vrot.slane %v5690, %v5697
        %v5700 = vunpack.c.l.s4 1983009808
        %v5701 = vunpack.c.0.s8 %v5700
        %v5702 = vlaneseq
        %v5703 = vshrl.u32 %v5702, 7
        %v5704 = vsub.s32 %v5701, %v5703
        %v5705 = vrot.slane %v5691, %v5704
        %v5706 = vcombine.low %v5698, %v5705
        %v5707 = vcombine.low %v5469, %v5468
        %v5708 = vcombine.low %v5470, %v5477
        %v5710 = vunpack.c.l.s4 1983009808
        %v5711 = vunpack.c.0.s8 %v5710
        %v5712 = vlaneseq
        %v5713 = vshrl.u32 %v5712, 7
        %v5714 = vsub.s32 %v5711, %v5713
        %v5715 = vrot.slane %v5707, %v5714
        %v5717 = vunpack.c.l.s4 1983009808
        %v5718 = vunpack.c.0.s8 %v5717
        %v5719 = vlaneseq
        %v5720 = vshrl.u32 %v5719, 7
        %v5721 = vsub.s32 %v5718, %v5720
        %v5722 = vrot.slane %v5708, %v5721
        %v5723 = vcombine.low %v5715, %v5722
        %v5724 = vcombine.low %v5485, %v5493
        %v5725 = vcombine.low %v5492, %v5494
        %v5727 = vunpack.c.l.s4 1983009808
        %v5728 = vunpack.c.0.s8 %v5727
        %v5729 = vlaneseq
        %v5730 = vshrl.u32 %v5729, 7
        %v5731 = vsub.s32 %v5728, %v5730
        %v5732 = vrot.slane %v5724, %v5731
        %v5734 = vunpack.c.l.s4 1983009808
        %v5735 = vunpack.c.0.s8 %v5734
        %v5736 = vlaneseq
        %v5737 = vshrl.u32 %v5736, 7
        %v5738 = vsub.s32 %v5735, %v5737
        %v5739 = vrot.slane %v5725, %v5738
        %v5740 = vcombine.low %v5732, %v5739
        %v5741 = vcombine.low %v5501, %v5509
        %v5742 = vcombine.low %v5517, %v5516
        %v5744 = vunpack.c.l.s4 1983009808
        %v5745 = vunpack.c.0.s8 %v5744
        %v5746 = vlaneseq
        %v5747 = vshrl.u32 %v5746, 7
        %v5748 = vsub.s32 %v5745, %v5747
        %v5749 = vrot.slane %v5741, %v5748
        %v5751 = vunpack.c.l.s4 1983009808
        %v5752 = vunpack.c.0.s8 %v5751
        %v5753 = vlaneseq
        %v5754 = vshrl.u32 %v5753, 7
        %v5755 = vsub.s32 %v5752, %v5754
        %v5756 = vrot.slane %v5742, %v5755
        %v5757 = vcombine.low %v5749, %v5756
        %v5758 = vcombine.low %v5518, %v5525
        %v5759 = vcombine.low %v5533, %v5541
        %v5761 = vunpack.c.l.s4 1983009808
        %v5762 = vunpack.c.0.s8 %v5761
        %v5763 = vlaneseq
        %v5764 = vshrl.u32 %v5763, 7
        %v5765 = vsub.s32 %v5762, %v5764
        %v5766 = vrot.slane %v5758, %v5765
        %v5768 = vunpack.c.l.s4 1983009808
        %v5769 = vunpack.c.0.s8 %v5768
        %v5770 = vlaneseq
        %v5771 = vshrl.u32 %v5770, 7
        %v5772 = vsub.s32 %v5769, %v5771
        %v5773 = vrot.slane %v5759, %v5772
        %v5774 = vcombine.low %v5766, %v5773
        %v5775 = vcombine.low %v5540, %v5542
        %v5776 = vcombine.low %v5549, %v5557
        %v5778 = vunpack.c.l.s4 1983009808
        %v5779 = vunpack.c.0.s8 %v5778
        %v5780 = vlaneseq
        %v5781 = vshrl.u32 %v5780, 7
        %v5782 = vsub.s32 %v5779, %v5781
        %v5783 = vrot.slane %v5775, %v5782
        %v5785 = vunpack.c.l.s4 1983009808
        %v5786 = vunpack.c.0.s8 %v5785
        %v5787 = vlaneseq
        %v5788 = vshrl.u32 %v5787, 7
        %v5789 = vsub.s32 %v5786, %v5788
        %v5790 = vrot.slane %v5776, %v5789
        %v5791 = vcombine.low %v5783, %v5790
        %v5792 = vcombine.low %v5565, %v5564
        %v5793 = vcombine.low %v5566, %v5573
        %v5795 = vunpack.c.l.s4 1983009808
        %v5796 = vunpack.c.0.s8 %v5795
        %v5797 = vlaneseq
        %v5798 = vshrl.u32 %v5797, 7
        %v5799 = vsub.s32 %v5796, %v5798
        %v5800 = vrot.slane %v5792, %v5799
        %v5802 = vunpack.c.l.s4 1983009808
        %v5803 = vunpack.c.0.s8 %v5802
        %v5804 = vlaneseq
        %v5805 = vshrl.u32 %v5804, 7
        %v5806 = vsub.s32 %v5803, %v5805
        %v5807 = vrot.slane %v5793, %v5806
        %v5808 = vcombine.low %v5800, %v5807
        %v5809 = vcombine.low %v5581, %v5589
        %v5810 = vcombine.low %v5588, %v5590
        %v5812 = vunpack.c.l.s4 1983009808
        %v5813 = vunpack.c.0.s8 %v5812
        %v5814 = vlaneseq
        %v5815 = vshrl.u32 %v5814, 7
        %v5816 = vsub.s32 %v5813, %v5815
        %v5817 = vrot.slane %v5809, %v5816
        %v5819 = vunpack.c.l.s4 1983009808
        %v5820 = vunpack.c.0.s8 %v5819
        %v5821 = vlaneseq
        %v5822 = vshrl.u32 %v5821, 7
        %v5823 = vsub.s32 %v5820, %v5822
        %v5824 = vrot.slane %v5810, %v5823
        %v5825 = vcombine.low %v5817, %v5824
        %v5826 = vcombine.low %v5597, %v5605
        %v5827 = vcombine.low %v5613, %v5612
        %v5829 = vunpack.c.l.s4 1983009808
        %v5830 = vunpack.c.0.s8 %v5829
        %v5831 = vlaneseq
        %v5832 = vshrl.u32 %v5831, 7
        %v5833 = vsub.s32 %v5830, %v5832
        %v5834 = vrot.slane %v5826, %v5833
        %v5836 = vunpack.c.l.s4 1983009808
        %v5837 = vunpack.c.0.s8 %v5836
        %v5838 = vlaneseq
        %v5839 = vshrl.u32 %v5838, 7
        %v5840 = vsub.s32 %v5837, %v5839
        %v5841 = vrot.slane %v5827, %v5840
        %v5842 = vcombine.low %v5834, %v5841
        %v5843 = vcombine.low %v5614, %v5621
        %v5845 = vunpack.c.l.s4 1983009808
        %v5846 = vunpack.c.0.s8 %v5845
        %v5847 = vlaneseq
        %v5848 = vshrl.u32 %v5847, 7
        %v5849 = vsub.s32 %v5846, %v5848
        %v5850 = vrot.slane %v5843, %v5849
        %5864 = vmatprep.subr.mxu0 0.0
        %5865 = vmatpush1.msra.mxu0 %v5638
        %5866 = vmatprep.subr.mxu0 0.0
        %5867 = vmatpush1.msra.mxu0 %v5637
        %5868 = vmatprep.subr.mxu0 0.0
        %5869 = vmatpush1.msra.mxu0 %v5636
        %5870 = vmatprep.subr.mxu0 0.0
        %5871 = vmatpush1.msra.mxu0 %v5635
        %5872 = vmatprep.subr.mxu0 0.0
        %5873 = vmatpush1.msra.mxu0 %v5634
        %5874 = vmatprep.subr.mxu0 0.0
        %5875 = vmatpush1.msra.mxu0 %v5633
        %5876 = vmatprep.subr.mxu0 0.0
        %5877 = vmatpush1.msra.mxu0 %v5632
        %5878 = vmatprep.subr.mxu0 0.0
        %5879 = vmatpush1.msra.mxu0 %v5631
        %5880 = vmatprep.subr.mxu0 0.0
        %5881 = vmatpush1.msra.mxu0 %v5630
        %5882 = vmatprep.subr.mxu0 0.0
        %5883 = vmatpush1.msra.mxu0 %v5629
        %5884 = vmatprep.subr.mxu0 0.0
        %5885 = vmatpush1.msra.mxu0 %v5628
        %5886 = vmatprep.subr.mxu0 0.0
        %5887 = vmatpush1.msra.mxu0 %v5627
        %5888 = vmatprep.subr.mxu0 0.0
        %5889 = vmatpush1.msra.mxu0 %v5626
        %5890 = vmatprep.subr.mxu0 0.0
        %5891 = vmatpush1.msra.mxu0 %v5625
        %5892 = vmatprep.subr.mxu0 0.0
        %5893 = vmatpush1.msra.mxu0 %v5624
        %5894 = vmatprep.subr.mxu0 0.0
        %5895 = vmatpush1.msra.mxu0 %v5623
        %5896 = vmatprep.subr.mxu0 0.0
        %5897 = vmatpush2.msra.mxu0 0.0
        %5898 = vmatprep.subr.mxu0 0.0
        %5899 = vmatpush2.msra.mxu0 0.0
        %5900 = vmatprep.subr.mxu0 0.0
        %5901 = vmatpush2.msra.mxu0 0.0
        %5902 = vmatprep.subr.mxu0 0.0
        %5903 = vmatpush2.msra.mxu0 0.0
        %5904 = vmatprep.subr.mxu0 0.0
        %5905 = vmatpush2.msra.mxu0 0.0
        %5906 = vmatprep.subr.mxu0 0.0
        %5907 = vmatpush2.msra.mxu0 0.0
        %5908 = vmatprep.subr.mxu0 0.0
        %5909 = vmatpush2.msra.mxu0 0.0
        %5910 = vmatprep.subr.mxu0 0.0
        %5911 = vmatpush2.msra.mxu0 0.0
        %5912 = vmatprep.subr.mxu0 0.0
        %5913 = vmatpush2.msra.mxu0 0.0
        %5914 = vmatprep.subr.mxu0 0.0
        %5915 = vmatpush2.msra.mxu0 0.0
        %5916 = vmatprep.subr.mxu0 0.0
        %5917 = vmatpush2.msra.mxu0 0.0
        %5918 = vmatprep.subr.mxu0 0.0
        %5919 = vmatpush2.msra.mxu0 0.0
        %5920 = vmatprep.subr.mxu0 0.0
        %5921 = vmatpush2.msra.mxu0 0.0
        %5922 = vmatprep.subr.mxu0 0.0
        %5923 = vmatpush2.msra.mxu0 0.0
        %5924 = vmatprep.subr.mxu0 0.0
        %5925 = vmatpush2.msra.mxu0 0.0
        %5926 = vmatprep.subr.mxu0 0.0
        %5927 = vmatpush2.msra.mxu0 0.0
        %5928 = vmatprep.mubr.f32.mxu0 0.0
        %5929 = vmatmul.mubr.f32.gmra.mxu0 %v5655
        %v5930 = vpop.f32.mrf.mxu0
        %v5931 = vadd.f32 0.0, %v5930
        %v5932 = vpop.f32.mrf.mxu0
        %5933 = vmatprep.mubr.f32.mxu0 0.0
        %5934 = vmatmul.mubr.f32.gmra.mxu0 %v5672
        %v5935 = vpop.f32.mrf.mxu0
        %v5936 = vadd.f32 0.0, %v5935
        %v5937 = vpop.f32.mrf.mxu0
        %5938 = vmatprep.mubr.f32.mxu0 0.0
        %5939 = vmatmul.mubr.f32.gmra.mxu0 %v5689
        %v5940 = vpop.f32.mrf.mxu0
        %v5941 = vadd.f32 0.0, %v5940
        %v5942 = vpop.f32.mrf.mxu0
        %5943 = vmatprep.mubr.f32.mxu0 0.0
        %5944 = vmatmul.mubr.f32.gmra.mxu0 %v5706
        %v5945 = vpop.f32.mrf.mxu0
        %v5946 = vadd.f32 0.0, %v5945
        %v5947 = vpop.f32.mrf.mxu0
        %5948 = vmatprep.mubr.f32.mxu0 0.0
        %5949 = vmatmul.mubr.f32.gmra.mxu0 %v5723
        %v5950 = vpop.f32.mrf.mxu0
        %v5951 = vadd.f32 0.0, %v5950
        %v5952 = vpop.f32.mrf.mxu0
        %5953 = vmatprep.mubr.f32.mxu0 0.0
        %5954 = vmatmul.mubr.f32.gmra.mxu0 %v5740
        %v5955 = vpop.f32.mrf.mxu0
        %v5956 = vadd.f32 0.0, %v5955
        %v5957 = vpop.f32.mrf.mxu0
        %5958 = vmatprep.mubr.f32.mxu0 0.0
        %5959 = vmatmul.mubr.f32.gmra.mxu0 %v5757
        %v5960 = vpop.f32.mrf.mxu0
        %v5961 = vadd.f32 0.0, %v5960
        %v5962 = vpop.f32.mrf.mxu0
        %5963 = vmatprep.mubr.f32.mxu0 0.0
        %5964 = vmatmul.mubr.f32.gmra.mxu0 %v5774
        %v5965 = vpop.f32.mrf.mxu0
        %v5966 = vadd.f32 0.0, %v5965
        %v5967 = vpop.f32.mrf.mxu0
        %5968 = vmatprep.mubr.f32.mxu0 0.0
        %5969 = vmatmul.mubr.f32.gmra.mxu0 %v5791
        %v5970 = vpop.f32.mrf.mxu0
        %v5971 = vadd.f32 0.0, %v5970
        %v5972 = vpop.f32.mrf.mxu0
        %5973 = vmatprep.mubr.f32.mxu0 0.0
        %5974 = vmatmul.mubr.f32.gmra.mxu0 %v5808
        %v5975 = vpop.f32.mrf.mxu0
        %v5976 = vadd.f32 0.0, %v5975
        %v5977 = vpop.f32.mrf.mxu0
        %5978 = vmatprep.mubr.f32.mxu0 0.0
        %5979 = vmatmul.mubr.f32.gmra.mxu0 %v5825
        %v5980 = vpop.f32.mrf.mxu0
        %v5981 = vadd.f32 0.0, %v5980
        %v5982 = vpop.f32.mrf.mxu0
        %5983 = vmatprep.mubr.f32.mxu0 0.0
        %5984 = vmatmul.mubr.f32.gmra.mxu0 %v5842
        %v5985 = vpop.f32.mrf.mxu0
        %v5986 = vadd.f32 0.0, %v5985
        %v5987 = vpop.f32.mrf.mxu0
        %5988 = vmatprep.mubr.f32.mxu0 0.0
        %5989 = vmatmul.mubr.f32.gmra.mxu0 %v5850
        %v5990 = vpop.f32.mrf.mxu0
        %v5991 = vadd.f32 0.0, %v5990
        %v5992 = vpop.f32.mrf.mxu0
        %5993 = vdwg.mxu0
        %v5994 = vadd.f32 %v5328, %v5931
        %v5995 = vadd.f32 %v5329, %v5936
        %v5996 = vadd.f32 %v5330, %v5941
        %v5997 = vadd.f32 %v5331, %v5946
        %v5998 = vadd.f32 %v5332, %v5951
        %v5999 = vadd.f32 %v5333, %v5956
        %v6000 = vadd.f32 %v5334, %v5961
        %v6001 = vadd.f32 %v5335, %v5966
        %v6002 = vadd.f32 %v5336, %v5971
        %v6003 = vadd.f32 %v5337, %v5976
        %v6004 = vadd.f32 %v5338, %v5981
        %v6005 = vadd.f32 %v5339, %v5986
        %v6006 = vadd.f32 %v5340, %v5991
        %v6007 = vld [vmem:[%s4675 + $0x1] sm:$0xff]
        %v6008 = vld [vmem:[%s4675 + $0x9] sm:$0x3]
        %v6009 = vld [vmem:[%s4675 + $0x41] sm:$0xff]
        %v6010 = vld [vmem:[%s4675 + $0x49] sm:$0x3]
        %v6011 = vld [vmem:[%s4675 + $0x81] sm:$0xff]
        %v6012 = vld [vmem:[%s4675 + $0x89] sm:$0x3]
        %v6013 = vld [vmem:[%s4675 + $0xc1] sm:$0xff]
        %v6014 = vld [vmem:[%s4675 + $0xc9] sm:$0x3]
        %v6015 = vld [vmem:[%s4675 + $0x101] sm:$0xff]
        %v6016 = vld [vmem:[%s4675 + $0x109] sm:$0x3]
        %v6017 = vld [vmem:[%s4675 + $0x141] sm:$0xff]
        %v6018 = vld [vmem:[%s4675 + $0x149] sm:$0x3]
        %v6019 = vld [vmem:[%s4675 + $0x181] sm:$0xff]
        %v6020 = vld [vmem:[%s4675 + $0x189] sm:$0x3]
        %v6021 = vld [vmem:[%s4675 + $0x1c1] sm:$0xff]
        %v6022 = vld [vmem:[%s4675 + $0x1c9] sm:$0x3]
        %v6023 = vld [vmem:[%s4675 + $0x201] sm:$0xff]
        %v6024 = vld [vmem:[%s4675 + $0x209] sm:$0x3]
        %v6025 = vld [vmem:[%s4675 + $0x241] sm:$0xff]
        %v6026 = vld [vmem:[%s4675 + $0x249] sm:$0x3]
        %v6047 = vcombine.high %v6007, %v6007
        %v6049 = vunpack.c.l.s4 1983009808
        %v6050 = vunpack.c.0.s8 %v6049
        %v6051 = vlaneseq
        %v6052 = vshrl.u32 %v6051, 7
        %v6053 = vsub.s32 %v6050, %v6052
        %v6054 = vrot.slane %v6007, %v6053
        %v6056 = vunpack.c.l.s4 1983009808
        %v6057 = vunpack.c.0.s8 %v6056
        %v6058 = vlaneseq
        %v6059 = vshrl.u32 %v6058, 7
        %v6060 = vsub.s32 %v6057, %v6059
        %v6061 = vrot.slane %v6047, %v6060
        %v6062 = vcombine.high %v6054, %v6054
        %v6063 = vcombine.high %v6061, %v6061
        %v6065 = vunpack.c.l.s4 1983009808
        %v6066 = vunpack.c.0.s8 %v6065
        %v6067 = vlaneseq
        %v6068 = vshrl.u32 %v6067, 7
        %v6069 = vsub.s32 %v6066, %v6068
        %v6070 = vrot.slane %v6008, %v6069
        %v6071 = vcombine.high %v6009, %v6009
        %v6073 = vunpack.c.l.s4 1983009808
        %v6074 = vunpack.c.0.s8 %v6073
        %v6075 = vlaneseq
        %v6076 = vshrl.u32 %v6075, 7
        %v6077 = vsub.s32 %v6074, %v6076
        %v6078 = vrot.slane %v6009, %v6077
        %v6080 = vunpack.c.l.s4 1983009808
        %v6081 = vunpack.c.0.s8 %v6080
        %v6082 = vlaneseq
        %v6083 = vshrl.u32 %v6082, 7
        %v6084 = vsub.s32 %v6081, %v6083
        %v6085 = vrot.slane %v6071, %v6084
        %v6086 = vcombine.high %v6078, %v6078
        %v6087 = vcombine.high %v6085, %v6085
        %v6089 = vunpack.c.l.s4 1983009808
        %v6090 = vunpack.c.0.s8 %v6089
        %v6091 = vlaneseq
        %v6092 = vshrl.u32 %v6091, 7
        %v6093 = vsub.s32 %v6090, %v6092
        %v6094 = vrot.slane %v6010, %v6093
        %v6095 = vcombine.high %v6011, %v6011
        %v6097 = vunpack.c.l.s4 1983009808
        %v6098 = vunpack.c.0.s8 %v6097
        %v6099 = vlaneseq
        %v6100 = vshrl.u32 %v6099, 7
        %v6101 = vsub.s32 %v6098, %v6100
        %v6102 = vrot.slane %v6011, %v6101
        %v6104 = vunpack.c.l.s4 1983009808
        %v6105 = vunpack.c.0.s8 %v6104
        %v6106 = vlaneseq
        %v6107 = vshrl.u32 %v6106, 7
        %v6108 = vsub.s32 %v6105, %v6107
        %v6109 = vrot.slane %v6095, %v6108
        %v6110 = vcombine.high %v6102, %v6102
        %v6111 = vcombine.high %v6109, %v6109
        %v6113 = vunpack.c.l.s4 1983009808
        %v6114 = vunpack.c.0.s8 %v6113
        %v6115 = vlaneseq
        %v6116 = vshrl.u32 %v6115, 7
        %v6117 = vsub.s32 %v6114, %v6116
        %v6118 = vrot.slane %v6012, %v6117
        %v6119 = vcombine.high %v6013, %v6013
        %v6121 = vunpack.c.l.s4 1983009808
        %v6122 = vunpack.c.0.s8 %v6121
        %v6123 = vlaneseq
        %v6124 = vshrl.u32 %v6123, 7
        %v6125 = vsub.s32 %v6122, %v6124
        %v6126 = vrot.slane %v6013, %v6125
        %v6128 = vunpack.c.l.s4 1983009808
        %v6129 = vunpack.c.0.s8 %v6128
        %v6130 = vlaneseq
        %v6131 = vshrl.u32 %v6130, 7
        %v6132 = vsub.s32 %v6129, %v6131
        %v6133 = vrot.slane %v6119, %v6132
        %v6134 = vcombine.high %v6126, %v6126
        %v6135 = vcombine.high %v6133, %v6133
        %v6137 = vunpack.c.l.s4 1983009808
        %v6138 = vunpack.c.0.s8 %v6137
        %v6139 = vlaneseq
        %v6140 = vshrl.u32 %v6139, 7
        %v6141 = vsub.s32 %v6138, %v6140
        %v6142 = vrot.slane %v6014, %v6141
        %v6143 = vcombine.high %v6015, %v6015
        %v6145 = vunpack.c.l.s4 1983009808
        %v6146 = vunpack.c.0.s8 %v6145
        %v6147 = vlaneseq
        %v6148 = vshrl.u32 %v6147, 7
        %v6149 = vsub.s32 %v6146, %v6148
        %v6150 = vrot.slane %v6015, %v6149
        %v6152 = vunpack.c.l.s4 1983009808
        %v6153 = vunpack.c.0.s8 %v6152
        %v6154 = vlaneseq
        %v6155 = vshrl.u32 %v6154, 7
        %v6156 = vsub.s32 %v6153, %v6155
        %v6157 = vrot.slane %v6143, %v6156
        %v6158 = vcombine.high %v6150, %v6150
        %v6159 = vcombine.high %v6157, %v6157
        %v6161 = vunpack.c.l.s4 1983009808
        %v6162 = vunpack.c.0.s8 %v6161
        %v6163 = vlaneseq
        %v6164 = vshrl.u32 %v6163, 7
        %v6165 = vsub.s32 %v6162, %v6164
        %v6166 = vrot.slane %v6016, %v6165
        %v6167 = vcombine.high %v6017, %v6017
        %v6169 = vunpack.c.l.s4 1983009808
        %v6170 = vunpack.c.0.s8 %v6169
        %v6171 = vlaneseq
        %v6172 = vshrl.u32 %v6171, 7
        %v6173 = vsub.s32 %v6170, %v6172
        %v6174 = vrot.slane %v6017, %v6173
        %v6176 = vunpack.c.l.s4 1983009808
        %v6177 = vunpack.c.0.s8 %v6176
        %v6178 = vlaneseq
        %v6179 = vshrl.u32 %v6178, 7
        %v6180 = vsub.s32 %v6177, %v6179
        %v6181 = vrot.slane %v6167, %v6180
        %v6182 = vcombine.high %v6174, %v6174
        %v6183 = vcombine.high %v6181, %v6181
        %v6185 = vunpack.c.l.s4 1983009808
        %v6186 = vunpack.c.0.s8 %v6185
        %v6187 = vlaneseq
        %v6188 = vshrl.u32 %v6187, 7
        %v6189 = vsub.s32 %v6186, %v6188
        %v6190 = vrot.slane %v6018, %v6189
        %v6191 = vcombine.high %v6019, %v6019
        %v6193 = vunpack.c.l.s4 1983009808
        %v6194 = vunpack.c.0.s8 %v6193
        %v6195 = vlaneseq
        %v6196 = vshrl.u32 %v6195, 7
        %v6197 = vsub.s32 %v6194, %v6196
        %v6198 = vrot.slane %v6019, %v6197
        %v6200 = vunpack.c.l.s4 1983009808
        %v6201 = vunpack.c.0.s8 %v6200
        %v6202 = vlaneseq
        %v6203 = vshrl.u32 %v6202, 7
        %v6204 = vsub.s32 %v6201, %v6203
        %v6205 = vrot.slane %v6191, %v6204
        %v6206 = vcombine.high %v6198, %v6198
        %v6207 = vcombine.high %v6205, %v6205
        %v6209 = vunpack.c.l.s4 1983009808
        %v6210 = vunpack.c.0.s8 %v6209
        %v6211 = vlaneseq
        %v6212 = vshrl.u32 %v6211, 7
        %v6213 = vsub.s32 %v6210, %v6212
        %v6214 = vrot.slane %v6020, %v6213
        %v6215 = vcombine.high %v6021, %v6021
        %v6217 = vunpack.c.l.s4 1983009808
        %v6218 = vunpack.c.0.s8 %v6217
        %v6219 = vlaneseq
        %v6220 = vshrl.u32 %v6219, 7
        %v6221 = vsub.s32 %v6218, %v6220
        %v6222 = vrot.slane %v6021, %v6221
        %v6224 = vunpack.c.l.s4 1983009808
        %v6225 = vunpack.c.0.s8 %v6224
        %v6226 = vlaneseq
        %v6227 = vshrl.u32 %v6226, 7
        %v6228 = vsub.s32 %v6225, %v6227
        %v6229 = vrot.slane %v6215, %v6228
        %v6230 = vcombine.high %v6222, %v6222
        %v6231 = vcombine.high %v6229, %v6229
        %v6233 = vunpack.c.l.s4 1983009808
        %v6234 = vunpack.c.0.s8 %v6233
        %v6235 = vlaneseq
        %v6236 = vshrl.u32 %v6235, 7
        %v6237 = vsub.s32 %v6234, %v6236
        %v6238 = vrot.slane %v6022, %v6237
        %v6239 = vcombine.high %v6023, %v6023
        %v6241 = vunpack.c.l.s4 1983009808
        %v6242 = vunpack.c.0.s8 %v6241
        %v6243 = vlaneseq
        %v6244 = vshrl.u32 %v6243, 7
        %v6245 = vsub.s32 %v6242, %v6244
        %v6246 = vrot.slane %v6023, %v6245
        %v6248 = vunpack.c.l.s4 1983009808
        %v6249 = vunpack.c.0.s8 %v6248
        %v6250 = vlaneseq
        %v6251 = vshrl.u32 %v6250, 7
        %v6252 = vsub.s32 %v6249, %v6251
        %v6253 = vrot.slane %v6239, %v6252
        %v6254 = vcombine.high %v6246, %v6246
        %v6255 = vcombine.high %v6253, %v6253
        %v6257 = vunpack.c.l.s4 1983009808
        %v6258 = vunpack.c.0.s8 %v6257
        %v6259 = vlaneseq
        %v6260 = vshrl.u32 %v6259, 7
        %v6261 = vsub.s32 %v6258, %v6260
        %v6262 = vrot.slane %v6024, %v6261
        %v6263 = vcombine.high %v6025, %v6025
        %v6265 = vunpack.c.l.s4 1983009808
        %v6266 = vunpack.c.0.s8 %v6265
        %v6267 = vlaneseq
        %v6268 = vshrl.u32 %v6267, 7
        %v6269 = vsub.s32 %v6266, %v6268
        %v6270 = vrot.slane %v6025, %v6269
        %v6272 = vunpack.c.l.s4 1983009808
        %v6273 = vunpack.c.0.s8 %v6272
        %v6274 = vlaneseq
        %v6275 = vshrl.u32 %v6274, 7
        %v6276 = vsub.s32 %v6273, %v6275
        %v6277 = vrot.slane %v6263, %v6276
        %v6278 = vcombine.high %v6270, %v6270
        %v6279 = vcombine.high %v6277, %v6277
        %v6281 = vunpack.c.l.s4 1983009808
        %v6282 = vunpack.c.0.s8 %v6281
        %v6283 = vlaneseq
        %v6284 = vshrl.u32 %v6283, 7
        %v6285 = vsub.s32 %v6282, %v6284
        %v6286 = vrot.slane %v6026, %v6285
        %s6287 = scalar_lea.vmem %s1, 1024
        %v6288 = vld [vmem:[%s6287] sm:$0xff]
        %v6289 = vld [vmem:[%s6287 + $0x8] sm:$0xff]
        %v6290 = vld [vmem:[%s6287 + $0x10] sm:$0xff]
        %v6291 = vld [vmem:[%s6287 + $0x18] sm:$0xff]
        %v6292 = vld [vmem:[%s6287 + $0x20] sm:$0xff]
        %v6293 = vld [vmem:[%s6287 + $0x28] sm:$0xff]
        %v6294 = vld [vmem:[%s6287 + $0x30] sm:$0xff]
        %v6295 = vld [vmem:[%s6287 + $0x38] sm:$0xff]
        %v6296 = vld [vmem:[%s6287 + $0x40] sm:$0xff]
        %v6297 = vld [vmem:[%s6287 + $0x48] sm:$0xff]
        %v6298 = vld [vmem:[%s6287 + $0x50] sm:$0xff]
        %v6299 = vld [vmem:[%s6287 + $0x58] sm:$0xff]
        %v6300 = vld [vmem:[%s6287 + $0x60] sm:$0xff]
        %v6301 = vld [vmem:[%s6287 + $0x68] sm:$0xff]
        %v6302 = vld [vmem:[%s6287 + $0x70] sm:$0xff]
        %v6303 = vld [vmem:[%s6287 + $0x78] sm:$0xff]
        %v6304 = vcombine.low %v6054, %v6062
        %v6305 = vcombine.low %v6061, %v6063
        %v6307 = vunpack.c.l.s4 1983009808
        %v6308 = vunpack.c.0.s8 %v6307
        %v6309 = vlaneseq
        %v6310 = vshrl.u32 %v6309, 7
        %v6311 = vsub.s32 %v6308, %v6310
        %v6312 = vrot.slane %v6304, %v6311
        %v6314 = vunpack.c.l.s4 1983009808
        %v6315 = vunpack.c.0.s8 %v6314
        %v6316 = vlaneseq
        %v6317 = vshrl.u32 %v6316, 7
        %v6318 = vsub.s32 %v6315, %v6317
        %v6319 = vrot.slane %v6305, %v6318
        %v6320 = vcombine.low %v6312, %v6319
        %v6321 = vcombine.low %v6070, %v6078
        %v6322 = vcombine.low %v6086, %v6085
        %v6324 = vunpack.c.l.s4 1983009808
        %v6325 = vunpack.c.0.s8 %v6324
        %v6326 = vlaneseq
        %v6327 = vshrl.u32 %v6326, 7
        %v6328 = vsub.s32 %v6325, %v6327
        %v6329 = vrot.slane %v6321, %v6328
        %v6331 = vunpack.c.l.s4 1983009808
        %v6332 = vunpack.c.0.s8 %v6331
        %v6333 = vlaneseq
        %v6334 = vshrl.u32 %v6333, 7
        %v6335 = vsub.s32 %v6332, %v6334
        %v6336 = vrot.slane %v6322, %v6335
        %v6337 = vcombine.low %v6329, %v6336
        %v6338 = vcombine.low %v6087, %v6094
        %v6339 = vcombine.low %v6102, %v6110
        %v6341 = vunpack.c.l.s4 1983009808
        %v6342 = vunpack.c.0.s8 %v6341
        %v6343 = vlaneseq
        %v6344 = vshrl.u32 %v6343, 7
        %v6345 = vsub.s32 %v6342, %v6344
        %v6346 = vrot.slane %v6338, %v6345
        %v6348 = vunpack.c.l.s4 1983009808
        %v6349 = vunpack.c.0.s8 %v6348
        %v6350 = vlaneseq
        %v6351 = vshrl.u32 %v6350, 7
        %v6352 = vsub.s32 %v6349, %v6351
        %v6353 = vrot.slane %v6339, %v6352
        %v6354 = vcombine.low %v6346, %v6353
        %v6355 = vcombine.low %v6109, %v6111
        %v6356 = vcombine.low %v6118, %v6126
        %v6358 = vunpack.c.l.s4 1983009808
        %v6359 = vunpack.c.0.s8 %v6358
        %v6360 = vlaneseq
        %v6361 = vshrl.u32 %v6360, 7
        %v6362 = vsub.s32 %v6359, %v6361
        %v6363 = vrot.slane %v6355, %v6362
        %v6365 = vunpack.c.l.s4 1983009808
        %v6366 = vunpack.c.0.s8 %v6365
        %v6367 = vlaneseq
        %v6368 = vshrl.u32 %v6367, 7
        %v6369 = vsub.s32 %v6366, %v6368
        %v6370 = vrot.slane %v6356, %v6369
        %v6371 = vcombine.low %v6363, %v6370
        %v6372 = vcombine.low %v6134, %v6133
        %v6373 = vcombine.low %v6135, %v6142
        %v6375 = vunpack.c.l.s4 1983009808
        %v6376 = vunpack.c.0.s8 %v6375
        %v6377 = vlaneseq
        %v6378 = vshrl.u32 %v6377, 7
        %v6379 = vsub.s32 %v6376, %v6378
        %v6380 = vrot.slane %v6372, %v6379
        %v6382 = vunpack.c.l.s4 1983009808
        %v6383 = vunpack.c.0.s8 %v6382
        %v6384 = vlaneseq
        %v6385 = vshrl.u32 %v6384, 7
        %v6386 = vsub.s32 %v6383, %v6385
        %v6387 = vrot.slane %v6373, %v6386
        %v6388 = vcombine.low %v6380, %v6387
        %v6389 = vcombine.low %v6150, %v6158
        %v6390 = vcombine.low %v6157, %v6159
        %v6392 = vunpack.c.l.s4 1983009808
        %v6393 = vunpack.c.0.s8 %v6392
        %v6394 = vlaneseq
        %v6395 = vshrl.u32 %v6394, 7
        %v6396 = vsub.s32 %v6393, %v6395
        %v6397 = vrot.slane %v6389, %v6396
        %v6399 = vunpack.c.l.s4 1983009808
        %v6400 = vunpack.c.0.s8 %v6399
        %v6401 = vlaneseq
        %v6402 = vshrl.u32 %v6401, 7
        %v6403 = vsub.s32 %v6400, %v6402
        %v6404 = vrot.slane %v6390, %v6403
        %v6405 = vcombine.low %v6397, %v6404
        %v6406 = vcombine.low %v6166, %v6174
        %v6407 = vcombine.low %v6182, %v6181
        %v6409 = vunpack.c.l.s4 1983009808
        %v6410 = vunpack.c.0.s8 %v6409
        %v6411 = vlaneseq
        %v6412 = vshrl.u32 %v6411, 7
        %v6413 = vsub.s32 %v6410, %v6412
        %v6414 = vrot.slane %v6406, %v6413
        %v6416 = vunpack.c.l.s4 1983009808
        %v6417 = vunpack.c.0.s8 %v6416
        %v6418 = vlaneseq
        %v6419 = vshrl.u32 %v6418, 7
        %v6420 = vsub.s32 %v6417, %v6419
        %v6421 = vrot.slane %v6407, %v6420
        %v6422 = vcombine.low %v6414, %v6421
        %v6423 = vcombine.low %v6183, %v6190
        %v6424 = vcombine.low %v6198, %v6206
        %v6426 = vunpack.c.l.s4 1983009808
        %v6427 = vunpack.c.0.s8 %v6426
        %v6428 = vlaneseq
        %v6429 = vshrl.u32 %v6428, 7
        %v6430 = vsub.s32 %v6427, %v6429
        %v6431 = vrot.slane %v6423, %v6430
        %v6433 = vunpack.c.l.s4 1983009808
        %v6434 = vunpack.c.0.s8 %v6433
        %v6435 = vlaneseq
        %v6436 = vshrl.u32 %v6435, 7
        %v6437 = vsub.s32 %v6434, %v6436
        %v6438 = vrot.slane %v6424, %v6437
        %v6439 = vcombine.low %v6431, %v6438
        %v6440 = vcombine.low %v6205, %v6207
        %v6441 = vcombine.low %v6214, %v6222
        %v6443 = vunpack.c.l.s4 1983009808
        %v6444 = vunpack.c.0.s8 %v6443
        %v6445 = vlaneseq
        %v6446 = vshrl.u32 %v6445, 7
        %v6447 = vsub.s32 %v6444, %v6446
        %v6448 = vrot.slane %v6440, %v6447
        %v6450 = vunpack.c.l.s4 1983009808
        %v6451 = vunpack.c.0.s8 %v6450
        %v6452 = vlaneseq
        %v6453 = vshrl.u32 %v6452, 7
        %v6454 = vsub.s32 %v6451, %v6453
        %v6455 = vrot.slane %v6441, %v6454
        %v6456 = vcombine.low %v6448, %v6455
        %v6457 = vcombine.low %v6230, %v6229
        %v6458 = vcombine.low %v6231, %v6238
        %v6460 = vunpack.c.l.s4 1983009808
        %v6461 = vunpack.c.0.s8 %v6460
        %v6462 = vlaneseq
        %v6463 = vshrl.u32 %v6462, 7
        %v6464 = vsub.s32 %v6461, %v6463
        %v6465 = vrot.slane %v6457, %v6464
        %v6467 = vunpack.c.l.s4 1983009808
        %v6468 = vunpack.c.0.s8 %v6467
        %v6469 = vlaneseq
        %v6470 = vshrl.u32 %v6469, 7
        %v6471 = vsub.s32 %v6468, %v6470
        %v6472 = vrot.slane %v6458, %v6471
        %v6473 = vcombine.low %v6465, %v6472
        %v6474 = vcombine.low %v6246, %v6254
        %v6475 = vcombine.low %v6253, %v6255
        %v6477 = vunpack.c.l.s4 1983009808
        %v6478 = vunpack.c.0.s8 %v6477
        %v6479 = vlaneseq
        %v6480 = vshrl.u32 %v6479, 7
        %v6481 = vsub.s32 %v6478, %v6480
        %v6482 = vrot.slane %v6474, %v6481
        %v6484 = vunpack.c.l.s4 1983009808
        %v6485 = vunpack.c.0.s8 %v6484
        %v6486 = vlaneseq
        %v6487 = vshrl.u32 %v6486, 7
        %v6488 = vsub.s32 %v6485, %v6487
        %v6489 = vrot.slane %v6475, %v6488
        %v6490 = vcombine.low %v6482, %v6489
        %v6491 = vcombine.low %v6262, %v6270
        %v6492 = vcombine.low %v6278, %v6277
        %v6494 = vunpack.c.l.s4 1983009808
        %v6495 = vunpack.c.0.s8 %v6494
        %v6496 = vlaneseq
        %v6497 = vshrl.u32 %v6496, 7
        %v6498 = vsub.s32 %v6495, %v6497
        %v6499 = vrot.slane %v6491, %v6498
        %v6501 = vunpack.c.l.s4 1983009808
        %v6502 = vunpack.c.0.s8 %v6501
        %v6503 = vlaneseq
        %v6504 = vshrl.u32 %v6503, 7
        %v6505 = vsub.s32 %v6502, %v6504
        %v6506 = vrot.slane %v6492, %v6505
        %v6507 = vcombine.low %v6499, %v6506
        %v6508 = vcombine.low %v6279, %v6286
        %v6510 = vunpack.c.l.s4 1983009808
        %v6511 = vunpack.c.0.s8 %v6510
        %v6512 = vlaneseq
        %v6513 = vshrl.u32 %v6512, 7
        %v6514 = vsub.s32 %v6511, %v6513
        %v6515 = vrot.slane %v6508, %v6514
        %6529 = vmatprep.subr.mxu0 0.0
        %6530 = vmatpush1.msra.mxu0 %v6303
        %6531 = vmatprep.subr.mxu0 0.0
        %6532 = vmatpush1.msra.mxu0 %v6302
        %6533 = vmatprep.subr.mxu0 0.0
        %6534 = vmatpush1.msra.mxu0 %v6301
        %6535 = vmatprep.subr.mxu0 0.0
        %6536 = vmatpush1.msra.mxu0 %v6300
        %6537 = vmatprep.subr.mxu0 0.0
        %6538 = vmatpush1.msra.mxu0 %v6299
        %6539 = vmatprep.subr.mxu0 0.0
        %6540 = vmatpush1.msra.mxu0 %v6298
        %6541 = vmatprep.subr.mxu0 0.0
        %6542 = vmatpush1.msra.mxu0 %v6297
        %6543 = vmatprep.subr.mxu0 0.0
        %6544 = vmatpush1.msra.mxu0 %v6296
        %6545 = vmatprep.subr.mxu0 0.0
        %6546 = vmatpush1.msra.mxu0 %v6295
        %6547 = vmatprep.subr.mxu0 0.0
        %6548 = vmatpush1.msra.mxu0 %v6294
        %6549 = vmatprep.subr.mxu0 0.0
        %6550 = vmatpush1.msra.mxu0 %v6293
        %6551 = vmatprep.subr.mxu0 0.0
        %6552 = vmatpush1.msra.mxu0 %v6292
        %6553 = vmatprep.subr.mxu0 0.0
        %6554 = vmatpush1.msra.mxu0 %v6291
        %6555 = vmatprep.subr.mxu0 0.0
        %6556 = vmatpush1.msra.mxu0 %v6290
        %6557 = vmatprep.subr.mxu0 0.0
        %6558 = vmatpush1.msra.mxu0 %v6289
        %6559 = vmatprep.subr.mxu0 0.0
        %6560 = vmatpush1.msra.mxu0 %v6288
        %6561 = vmatprep.subr.mxu0 0.0
        %6562 = vmatpush2.msra.mxu0 0.0
        %6563 = vmatprep.subr.mxu0 0.0
        %6564 = vmatpush2.msra.mxu0 0.0
        %6565 = vmatprep.subr.mxu0 0.0
        %6566 = vmatpush2.msra.mxu0 0.0
        %6567 = vmatprep.subr.mxu0 0.0
        %6568 = vmatpush2.msra.mxu0 0.0
        %6569 = vmatprep.subr.mxu0 0.0
        %6570 = vmatpush2.msra.mxu0 0.0
        %6571 = vmatprep.subr.mxu0 0.0
        %6572 = vmatpush2.msra.mxu0 0.0
        %6573 = vmatprep.subr.mxu0 0.0
        %6574 = vmatpush2.msra.mxu0 0.0
        %6575 = vmatprep.subr.mxu0 0.0
        %6576 = vmatpush2.msra.mxu0 0.0
        %6577 = vmatprep.subr.mxu0 0.0
        %6578 = vmatpush2.msra.mxu0 0.0
        %6579 = vmatprep.subr.mxu0 0.0
        %6580 = vmatpush2.msra.mxu0 0.0
        %6581 = vmatprep.subr.mxu0 0.0
        %6582 = vmatpush2.msra.mxu0 0.0
        %6583 = vmatprep.subr.mxu0 0.0
        %6584 = vmatpush2.msra.mxu0 0.0
        %6585 = vmatprep.subr.mxu0 0.0
        %6586 = vmatpush2.msra.mxu0 0.0
        %6587 = vmatprep.subr.mxu0 0.0
        %6588 = vmatpush2.msra.mxu0 0.0
        %6589 = vmatprep.subr.mxu0 0.0
        %6590 = vmatpush2.msra.mxu0 0.0
        %6591 = vmatprep.subr.mxu0 0.0
        %6592 = vmatpush2.msra.mxu0 0.0
        %6593 = vmatprep.mubr.f32.mxu0 0.0
        %6594 = vmatmul.mubr.f32.gmra.mxu0 %v6320
        %v6595 = vpop.f32.mrf.mxu0
        %v6596 = vadd.f32 0.0, %v6595
        %v6597 = vpop.f32.mrf.mxu0
        %6598 = vmatprep.mubr.f32.mxu0 0.0
        %6599 = vmatmul.mubr.f32.gmra.mxu0 %v6337
        %v6600 = vpop.f32.mrf.mxu0
        %v6601 = vadd.f32 0.0, %v6600
        %v6602 = vpop.f32.mrf.mxu0
        %6603 = vmatprep.mubr.f32.mxu0 0.0
        %6604 = vmatmul.mubr.f32.gmra.mxu0 %v6354
        %v6605 = vpop.f32.mrf.mxu0
        %v6606 = vadd.f32 0.0, %v6605
        %v6607 = vpop.f32.mrf.mxu0
        %6608 = vmatprep.mubr.f32.mxu0 0.0
        %6609 = vmatmul.mubr.f32.gmra.mxu0 %v6371
        %v6610 = vpop.f32.mrf.mxu0
        %v6611 = vadd.f32 0.0, %v6610
        %v6612 = vpop.f32.mrf.mxu0
        %6613 = vmatprep.mubr.f32.mxu0 0.0
        %6614 = vmatmul.mubr.f32.gmra.mxu0 %v6388
        %v6615 = vpop.f32.mrf.mxu0
        %v6616 = vadd.f32 0.0, %v6615
        %v6617 = vpop.f32.mrf.mxu0
        %6618 = vmatprep.mubr.f32.mxu0 0.0
        %6619 = vmatmul.mubr.f32.gmra.mxu0 %v6405
        %v6620 = vpop.f32.mrf.mxu0
        %v6621 = vadd.f32 0.0, %v6620
        %v6622 = vpop.f32.mrf.mxu0
        %6623 = vmatprep.mubr.f32.mxu0 0.0
        %6624 = vmatmul.mubr.f32.gmra.mxu0 %v6422
        %v6625 = vpop.f32.mrf.mxu0
        %v6626 = vadd.f32 0.0, %v6625
        %v6627 = vpop.f32.mrf.mxu0
        %6628 = vmatprep.mubr.f32.mxu0 0.0
        %6629 = vmatmul.mubr.f32.gmra.mxu0 %v6439
        %v6630 = vpop.f32.mrf.mxu0
        %v6631 = vadd.f32 0.0, %v6630
        %v6632 = vpop.f32.mrf.mxu0
        %6633 = vmatprep.mubr.f32.mxu0 0.0
        %6634 = vmatmul.mubr.f32.gmra.mxu0 %v6456
        %v6635 = vpop.f32.mrf.mxu0
        %v6636 = vadd.f32 0.0, %v6635
        %v6637 = vpop.f32.mrf.mxu0
        %6638 = vmatprep.mubr.f32.mxu0 0.0
        %6639 = vmatmul.mubr.f32.gmra.mxu0 %v6473
        %v6640 = vpop.f32.mrf.mxu0
        %v6641 = vadd.f32 0.0, %v6640
        %v6642 = vpop.f32.mrf.mxu0
        %6643 = vmatprep.mubr.f32.mxu0 0.0
        %6644 = vmatmul.mubr.f32.gmra.mxu0 %v6490
        %v6645 = vpop.f32.mrf.mxu0
        %v6646 = vadd.f32 0.0, %v6645
        %v6647 = vpop.f32.mrf.mxu0
        %6648 = vmatprep.mubr.f32.mxu0 0.0
        %6649 = vmatmul.mubr.f32.gmra.mxu0 %v6507
        %v6650 = vpop.f32.mrf.mxu0
        %v6651 = vadd.f32 0.0, %v6650
        %v6652 = vpop.f32.mrf.mxu0
        %6653 = vmatprep.mubr.f32.mxu0 0.0
        %6654 = vmatmul.mubr.f32.gmra.mxu0 %v6515
        %v6655 = vpop.f32.mrf.mxu0
        %v6656 = vadd.f32 0.0, %v6655
        %v6657 = vpop.f32.mrf.mxu0
        %6658 = vdwg.mxu0
        %v6659 = vadd.f32 %v5994, %v6596
        %v6660 = vadd.f32 %v5995, %v6601
        %v6661 = vadd.f32 %v5996, %v6606
        %v6662 = vadd.f32 %v5997, %v6611
        %v6663 = vadd.f32 %v5998, %v6616
        %v6664 = vadd.f32 %v5999, %v6621
        %v6665 = vadd.f32 %v6000, %v6626
        %v6666 = vadd.f32 %v6001, %v6631
        %v6667 = vadd.f32 %v6002, %v6636
        %v6668 = vadd.f32 %v6003, %v6641
        %v6669 = vadd.f32 %v6004, %v6646
        %v6670 = vadd.f32 %v6005, %v6651
        %v6671 = vadd.f32 %v6006, %v6656
        %v6672 = vld [vmem:[%s2] sm:$0x1]
        %v6674 = vlaneseq
        %v6675 = vshrl.u32 %v6674, 7
        %v6676 = vsub.s32 0, %v6675
        %v6677 = vrot.slane %v6672, %v6676
        %v6679 = vadd.f32 %v6659, %v6677
        %v6680 = vadd.f32 %v6660, %v6677
        %v6681 = vadd.f32 %v6661, %v6677
        %v6682 = vadd.f32 %v6662, %v6677
        %v6683 = vadd.f32 %v6663, %v6677
        %v6684 = vadd.f32 %v6664, %v6677
        %v6685 = vadd.f32 %v6665, %v6677
        %v6686 = vadd.f32 %v6666, %v6677
        %v6687 = vadd.f32 %v6667, %v6677
        %v6688 = vadd.f32 %v6668, %v6677
        %v6689 = vadd.f32 %v6669, %v6677
        %v6690 = vadd.f32 %v6670, %v6677
        %v6691 = vadd.f32 %v6671, %v6677
        %v6692 = vsub.f32 0.0, %v6679
        %v6693 = vsub.f32 0.0, %v6680
        %v6694 = vsub.f32 0.0, %v6681
        %v6695 = vsub.f32 0.0, %v6682
        %v6696 = vsub.f32 0.0, %v6683
        %v6697 = vsub.f32 0.0, %v6684
        %v6698 = vsub.f32 0.0, %v6685
        %v6699 = vsub.f32 0.0, %v6686
        %v6700 = vsub.f32 0.0, %v6687
        %v6701 = vsub.f32 0.0, %v6688
        %v6702 = vsub.f32 0.0, %v6689
        %v6703 = vsub.f32 0.0, %v6690
        %v6704 = vsub.f32 0.0, %v6691
        %v6705 = vmul.f32 %v6692, 1.442695
        %v6706 = vpow.pop %v6705
        %v6707 = vmul.f32 %v6693, 1.442695
        %v6708 = vpow.pop %v6707
        %v6709 = vmul.f32 %v6694, 1.442695
        %v6710 = vpow.pop %v6709
        %v6711 = vmul.f32 %v6695, 1.442695
        %v6712 = vpow.pop %v6711
        %v6713 = vmul.f32 %v6696, 1.442695
        %v6714 = vpow.pop %v6713
        %v6715 = vmul.f32 %v6697, 1.442695
        %v6716 = vpow.pop %v6715
        %v6717 = vmul.f32 %v6698, 1.442695
        %v6718 = vpow.pop %v6717
        %v6719 = vmul.f32 %v6699, 1.442695
        %v6720 = vpow.pop %v6719
        %v6721 = vmul.f32 %v6700, 1.442695
        %v6722 = vpow.pop %v6721
        %v6723 = vmul.f32 %v6701, 1.442695
        %v6724 = vpow.pop %v6723
        %v6725 = vmul.f32 %v6702, 1.442695
        %v6726 = vpow.pop %v6725
        %v6727 = vmul.f32 %v6703, 1.442695
        %v6728 = vpow.pop %v6727
        %v6729 = vmul.f32 %v6704, 1.442695
        %v6730 = vpow.pop %v6729
        %v6731 = vadd.f32 %v6706, 1.0
        %v6732 = vadd.f32 %v6708, 1.0
        %v6733 = vadd.f32 %v6710, 1.0
        %v6734 = vadd.f32 %v6712, 1.0
        %v6735 = vadd.f32 %v6714, 1.0
        %v6736 = vadd.f32 %v6716, 1.0
        %v6737 = vadd.f32 %v6718, 1.0
        %v6738 = vadd.f32 %v6720, 1.0
        %v6739 = vadd.f32 %v6722, 1.0
        %v6740 = vadd.f32 %v6724, 1.0
        %v6741 = vadd.f32 %v6726, 1.0
        %v6742 = vadd.f32 %v6728, 1.0
        %v6743 = vadd.f32 %v6730, 1.0
        %v6744 = vrcp.pop %v6731
        %v6745 = vrcp.pop %v6732
        %v6746 = vrcp.pop %v6733
        %v6747 = vrcp.pop %v6734
        %v6748 = vrcp.pop %v6735
        %v6749 = vrcp.pop %v6736
        %v6750 = vrcp.pop %v6737
        %v6751 = vrcp.pop %v6738
        %v6752 = vrcp.pop %v6739
        %v6753 = vrcp.pop %v6740
        %v6754 = vrcp.pop %v6741
        %v6755 = vrcp.pop %v6742
        %v6756 = vrcp.pop %v6743
        %v6757 = vmul.f32 %v6679, %v6744
        %v6758 = vmul.f32 %v6680, %v6745
        %v6759 = vmul.f32 %v6681, %v6746
        %v6760 = vmul.f32 %v6682, %v6747
        %v6761 = vmul.f32 %v6683, %v6748
        %v6762 = vmul.f32 %v6684, %v6749
        %v6763 = vmul.f32 %v6685, %v6750
        %v6764 = vmul.f32 %v6686, %v6751
        %v6765 = vmul.f32 %v6687, %v6752
        %v6766 = vmul.f32 %v6688, %v6753
        %v6767 = vmul.f32 %v6689, %v6754
        %v6768 = vmul.f32 %v6690, %v6755
        %v6769 = vmul.f32 %v6691, %v6756
        %v6783 = vcombine.high %v6757, %v6757
        %v6785 = vunpack.c.l.s4 1983009808
        %v6786 = vunpack.c.0.s8 %v6785
        %v6787 = vlaneseq
        %v6788 = vshrl.u32 %v6787, 7
        %v6789 = vsub.s32 %v6786, %v6788
        %v6790 = vrot.slane %v6757, %v6789
        %v6792 = vunpack.c.l.s4 1983009808
        %v6793 = vunpack.c.0.s8 %v6792
        %v6794 = vlaneseq
        %v6795 = vshrl.u32 %v6794, 7
        %v6796 = vsub.s32 %v6793, %v6795
        %v6797 = vrot.slane %v6783, %v6796
        %v6798 = vcombine.high %v6790, %v6790
        %v6799 = vcombine.high %v6797, %v6797
        %v6800 = vcombine.high %v6758, %v6758
        %v6802 = vunpack.c.l.s4 1983009808
        %v6803 = vunpack.c.0.s8 %v6802
        %v6804 = vlaneseq
        %v6805 = vshrl.u32 %v6804, 7
        %v6806 = vsub.s32 %v6803, %v6805
        %v6807 = vrot.slane %v6758, %v6806
        %v6809 = vunpack.c.l.s4 1983009808
        %v6810 = vunpack.c.0.s8 %v6809
        %v6811 = vlaneseq
        %v6812 = vshrl.u32 %v6811, 7
        %v6813 = vsub.s32 %v6810, %v6812
        %v6814 = vrot.slane %v6800, %v6813
        %v6815 = vcombine.high %v6807, %v6807
        %v6816 = vcombine.high %v6814, %v6814
        %v6817 = vcombine.high %v6759, %v6759
        %v6819 = vunpack.c.l.s4 1983009808
        %v6820 = vunpack.c.0.s8 %v6819
        %v6821 = vlaneseq
        %v6822 = vshrl.u32 %v6821, 7
        %v6823 = vsub.s32 %v6820, %v6822
        %v6824 = vrot.slane %v6759, %v6823
        %v6826 = vunpack.c.l.s4 1983009808
        %v6827 = vunpack.c.0.s8 %v6826
        %v6828 = vlaneseq
        %v6829 = vshrl.u32 %v6828, 7
        %v6830 = vsub.s32 %v6827, %v6829
        %v6831 = vrot.slane %v6817, %v6830
        %v6832 = vcombine.high %v6824, %v6824
        %v6833 = vcombine.high %v6831, %v6831
        %v6834 = vcombine.high %v6760, %v6760
        %v6836 = vunpack.c.l.s4 1983009808
        %v6837 = vunpack.c.0.s8 %v6836
        %v6838 = vlaneseq
        %v6839 = vshrl.u32 %v6838, 7
        %v6840 = vsub.s32 %v6837, %v6839
        %v6841 = vrot.slane %v6760, %v6840
        %v6843 = vunpack.c.l.s4 1983009808
        %v6844 = vunpack.c.0.s8 %v6843
        %v6845 = vlaneseq
        %v6846 = vshrl.u32 %v6845, 7
        %v6847 = vsub.s32 %v6844, %v6846
        %v6848 = vrot.slane %v6834, %v6847
        %v6849 = vcombine.high %v6841, %v6841
        %v6850 = vcombine.high %v6848, %v6848
        %v6851 = vcombine.high %v6761, %v6761
        %v6853 = vunpack.c.l.s4 1983009808
        %v6854 = vunpack.c.0.s8 %v6853
        %v6855 = vlaneseq
        %v6856 = vshrl.u32 %v6855, 7
        %v6857 = vsub.s32 %v6854, %v6856
        %v6858 = vrot.slane %v6761, %v6857
        %v6860 = vunpack.c.l.s4 1983009808
        %v6861 = vunpack.c.0.s8 %v6860
        %v6862 = vlaneseq
        %v6863 = vshrl.u32 %v6862, 7
        %v6864 = vsub.s32 %v6861, %v6863
        %v6865 = vrot.slane %v6851, %v6864
        %v6866 = vcombine.high %v6858, %v6858
        %v6867 = vcombine.high %v6865, %v6865
        %v6868 = vcombine.high %v6762, %v6762
        %v6870 = vunpack.c.l.s4 1983009808
        %v6871 = vunpack.c.0.s8 %v6870
        %v6872 = vlaneseq
        %v6873 = vshrl.u32 %v6872, 7
        %v6874 = vsub.s32 %v6871, %v6873
        %v6875 = vrot.slane %v6762, %v6874
        %v6877 = vunpack.c.l.s4 1983009808
        %v6878 = vunpack.c.0.s8 %v6877
        %v6879 = vlaneseq
        %v6880 = vshrl.u32 %v6879, 7
        %v6881 = vsub.s32 %v6878, %v6880
        %v6882 = vrot.slane %v6868, %v6881
        %v6883 = vcombine.high %v6875, %v6875
        %v6884 = vcombine.high %v6882, %v6882
        %v6885 = vcombine.high %v6763, %v6763
        %v6887 = vunpack.c.l.s4 1983009808
        %v6888 = vunpack.c.0.s8 %v6887
        %v6889 = vlaneseq
        %v6890 = vshrl.u32 %v6889, 7
        %v6891 = vsub.s32 %v6888, %v6890
        %v6892 = vrot.slane %v6763, %v6891
        %v6894 = vunpack.c.l.s4 1983009808
        %v6895 = vunpack.c.0.s8 %v6894
        %v6896 = vlaneseq
        %v6897 = vshrl.u32 %v6896, 7
        %v6898 = vsub.s32 %v6895, %v6897
        %v6899 = vrot.slane %v6885, %v6898
        %v6900 = vcombine.high %v6892, %v6892
        %v6901 = vcombine.high %v6899, %v6899
        %v6902 = vcombine.high %v6764, %v6764
        %v6904 = vunpack.c.l.s4 1983009808
        %v6905 = vunpack.c.0.s8 %v6904
        %v6906 = vlaneseq
        %v6907 = vshrl.u32 %v6906, 7
        %v6908 = vsub.s32 %v6905, %v6907
        %v6909 = vrot.slane %v6764, %v6908
        %v6911 = vunpack.c.l.s4 1983009808
        %v6912 = vunpack.c.0.s8 %v6911
        %v6913 = vlaneseq
        %v6914 = vshrl.u32 %v6913, 7
        %v6915 = vsub.s32 %v6912, %v6914
        %v6916 = vrot.slane %v6902, %v6915
        %v6917 = vcombine.high %v6909, %v6909
        %v6918 = vcombine.high %v6916, %v6916
        %v6919 = vcombine.high %v6765, %v6765
        %v6921 = vunpack.c.l.s4 1983009808
        %v6922 = vunpack.c.0.s8 %v6921
        %v6923 = vlaneseq
        %v6924 = vshrl.u32 %v6923, 7
        %v6925 = vsub.s32 %v6922, %v6924
        %v6926 = vrot.slane %v6765, %v6925
        %v6928 = vunpack.c.l.s4 1983009808
        %v6929 = vunpack.c.0.s8 %v6928
        %v6930 = vlaneseq
        %v6931 = vshrl.u32 %v6930, 7
        %v6932 = vsub.s32 %v6929, %v6931
        %v6933 = vrot.slane %v6919, %v6932
        %v6934 = vcombine.high %v6926, %v6926
        %v6935 = vcombine.high %v6933, %v6933
        %v6936 = vcombine.high %v6766, %v6766
        %v6938 = vunpack.c.l.s4 1983009808
        %v6939 = vunpack.c.0.s8 %v6938
        %v6940 = vlaneseq
        %v6941 = vshrl.u32 %v6940, 7
        %v6942 = vsub.s32 %v6939, %v6941
        %v6943 = vrot.slane %v6766, %v6942
        %v6945 = vunpack.c.l.s4 1983009808
        %v6946 = vunpack.c.0.s8 %v6945
        %v6947 = vlaneseq
        %v6948 = vshrl.u32 %v6947, 7
        %v6949 = vsub.s32 %v6946, %v6948
        %v6950 = vrot.slane %v6936, %v6949
        %v6951 = vcombine.high %v6943, %v6943
        %v6952 = vcombine.high %v6950, %v6950
        %v6953 = vcombine.high %v6767, %v6767
        %v6955 = vunpack.c.l.s4 1983009808
        %v6956 = vunpack.c.0.s8 %v6955
        %v6957 = vlaneseq
        %v6958 = vshrl.u32 %v6957, 7
        %v6959 = vsub.s32 %v6956, %v6958
        %v6960 = vrot.slane %v6767, %v6959
        %v6962 = vunpack.c.l.s4 1983009808
        %v6963 = vunpack.c.0.s8 %v6962
        %v6964 = vlaneseq
        %v6965 = vshrl.u32 %v6964, 7
        %v6966 = vsub.s32 %v6963, %v6965
        %v6967 = vrot.slane %v6953, %v6966
        %v6968 = vcombine.high %v6960, %v6960
        %v6969 = vcombine.high %v6967, %v6967
        %v6970 = vcombine.high %v6768, %v6768
        %v6972 = vunpack.c.l.s4 1983009808
        %v6973 = vunpack.c.0.s8 %v6972
        %v6974 = vlaneseq
        %v6975 = vshrl.u32 %v6974, 7
        %v6976 = vsub.s32 %v6973, %v6975
        %v6977 = vrot.slane %v6768, %v6976
        %v6979 = vunpack.c.l.s4 1983009808
        %v6980 = vunpack.c.0.s8 %v6979
        %v6981 = vlaneseq
        %v6982 = vshrl.u32 %v6981, 7
        %v6983 = vsub.s32 %v6980, %v6982
        %v6984 = vrot.slane %v6970, %v6983
        %v6985 = vcombine.high %v6977, %v6977
        %v6986 = vcombine.high %v6984, %v6984
        %v6988 = vunpack.c.l.s4 1983009808
        %v6989 = vunpack.c.0.s8 %v6988
        %v6990 = vlaneseq
        %v6991 = vshrl.u32 %v6990, 7
        %v6992 = vsub.s32 %v6989, %v6991
        %v6993 = vrot.slane %v6769, %v6992
        %v6994 = vcombine.high %v6993, %v6993
        %s6995 = ssub.s32 %s384, 1
        %v6996 = vstv %s6995
        %v6997 = vadd.s32 %v6996, 1
        %v6998 = vadd.s32 %v6996, 2
        %v6999 = vadd.s32 %v6996, 3
        %v7000 = vadd.s32 %v6996, 4
        %v7001 = vadd.s32 %v6996, 5
        %v7002 = vadd.s32 %v6996, 6
        %v7003 = vadd.s32 %v6996, 7
        %v7004 = vadd.s32 %v6996, 8
        %v7005 = vadd.s32 %v6996, 9
        %v7006 = vlaneseq
        %v7007 = vshrl.u32 %v7006, 7
        %v7008 = vadd.s32 %v7007, 8
        %v7009 = vsub.s32 %v7007, 1
        %v7010 = vsub.s32 %v7008, 1
        %vm7011 = vcmp.ge.s32.totalorder %v6996, 0
        %vm7012 = vcmp.ge.s32.totalorder %v6997, 0
        %vm7013 = vcmp.ge.s32.totalorder %v6998, 0
        %vm7014 = vcmp.ge.s32.totalorder %v6999, 0
        %vm7015 = vcmp.ge.s32.totalorder %v7000, 0
        %vm7016 = vcmp.ge.s32.totalorder %v7001, 0
        %vm7017 = vcmp.ge.s32.totalorder %v7002, 0
        %vm7018 = vcmp.ge.s32.totalorder %v7003, 0
        %vm7019 = vcmp.ge.s32.totalorder %v7004, 0
        %vm7020 = vcmp.ge.s32.totalorder %v7005, 0
        %vm7021 = vcmp.lt.s32.totalorder %v6996, 8
        %vm7022 = vcmp.lt.s32.totalorder %v6997, 8
        %vm7023 = vcmp.lt.s32.totalorder %v6998, 8
        %vm7024 = vcmp.lt.s32.totalorder %v6999, 8
        %vm7025 = vcmp.lt.s32.totalorder %v7000, 8
        %vm7026 = vcmp.lt.s32.totalorder %v7001, 8
        %vm7027 = vcmp.lt.s32.totalorder %v7002, 8
        %vm7028 = vcmp.lt.s32.totalorder %v7003, 8
        %vm7029 = vcmp.lt.s32.totalorder %v7004, 8
        %vm7030 = vcmp.lt.s32.totalorder %v7005, 8
        %vm7031 = vmand %vm7011, %vm7021
        %vm7032 = vmand %vm7012, %vm7022
        %vm7033 = vmand %vm7013, %vm7023
        %vm7034 = vmand %vm7014, %vm7024
        %vm7035 = vmand %vm7015, %vm7025
        %vm7036 = vmand %vm7016, %vm7026
        %vm7037 = vmand %vm7017, %vm7027
        %vm7038 = vmand %vm7018, %vm7028
        %vm7039 = vmand %vm7019, %vm7029
        %vm7040 = vmand %vm7020, %vm7030
        %vm7041 = vcmp.ge.s32.totalorder %v7009, 0
        %vm7042 = vcmp.ge.s32.totalorder %v7010, 0
        %v7043 = vsel %vm7031, 1, 0
        %v7044 = vsel %vm7032, 1, 0
        %v7045 = vsel %vm7033, 1, 0
        %v7046 = vsel %vm7034, 1, 0
        %v7047 = vsel %vm7035, 1, 0
        %v7048 = vsel %vm7036, 1, 0
        %v7049 = vsel %vm7037, 1, 0
        %v7050 = vsel %vm7038, 1, 0
        %v7051 = vsel %vm7039, 1, 0
        %v7052 = vsel %vm7040, 1, 0
        %vm7053 = vcmp.eq.s32.totalorder %v7043, 1
        %vm7054 = vcmp.eq.s32.totalorder %v7044, 1
        %vm7055 = vcmp.eq.s32.totalorder %v7045, 1
        %vm7056 = vcmp.eq.s32.totalorder %v7046, 1
        %vm7057 = vcmp.eq.s32.totalorder %v7047, 1
        %vm7058 = vcmp.eq.s32.totalorder %v7048, 1
        %vm7059 = vcmp.eq.s32.totalorder %v7049, 1
        %vm7060 = vcmp.eq.s32.totalorder %v7050, 1
        %vm7061 = vcmp.eq.s32.totalorder %v7051, 1
        %vm7062 = vcmp.eq.s32.totalorder %v7052, 1
        %v7063 = vsel %vm7041, 1, 0
        %v7064 = vsel %vm7042, 1, 0
        %vm7065 = vcmp.eq.s32.totalorder %v7063, 1
        %vm7066 = vcmp.eq.s32.totalorder %v7064, 1
        %vm7067 = vmand %vm7053, %vm7065
        %vm7068 = vmand %vm7053, %vm7066
        %vm7069 = vmand %vm7054, %vm7065
        %vm7070 = vmand %vm7054, %vm7066
        %vm7071 = vmand %vm7055, %vm7065
        %vm7072 = vmand %vm7055, %vm7066
        %vm7073 = vmand %vm7056, %vm7065
        %vm7074 = vmand %vm7056, %vm7066
        %vm7075 = vmand %vm7057, %vm7065
        %vm7076 = vmand %vm7057, %vm7066
        %vm7077 = vmand %vm7058, %vm7065
        %vm7078 = vmand %vm7058, %vm7066
        %vm7079 = vmand %vm7059, %vm7065
        %vm7080 = vmand %vm7059, %vm7066
        %vm7081 = vmand %vm7060, %vm7065
        %vm7082 = vmand %vm7060, %vm7066
        %vm7083 = vmand %vm7061, %vm7065
        %vm7084 = vmand %vm7061, %vm7066
        %vm7085 = vmand %vm7062, %vm7065
        %vm7086 = vmand %vm7062, %vm7066
        %vm7087 = vcmp.lt.s32.totalorder %v7009, 8
        %vm7088 = vcmp.lt.s32.totalorder %v7010, 8
        %v7089 = vsel %vm7087, 1, 0
        %v7090 = vsel %vm7088, 1, 0
        %vm7091 = vcmp.eq.s32.totalorder %v7089, 1
        %vm7092 = vcmp.eq.s32.totalorder %v7090, 1
        %vm7093 = vmand %vm7067, %vm7091
        %vm7094 = vmand %vm7068, %vm7092
        %vm7095 = vmand %vm7069, %vm7091
        %vm7096 = vmand %vm7070, %vm7092
        %vm7097 = vmand %vm7071, %vm7091
        %vm7098 = vmand %vm7072, %vm7092
        %vm7099 = vmand %vm7073, %vm7091
        %vm7100 = vmand %vm7074, %vm7092
        %vm7101 = vmand %vm7075, %vm7091
        %vm7102 = vmand %vm7076, %vm7092
        %vm7103 = vmand %vm7077, %vm7091
        %vm7104 = vmand %vm7078, %vm7092
        %vm7105 = vmand %vm7079, %vm7091
        %vm7106 = vmand %vm7080, %vm7092
        %vm7107 = vmand %vm7081, %vm7091
        %vm7108 = vmand %vm7082, %vm7092
        %vm7109 = vmand %vm7083, %vm7091
        %vm7110 = vmand %vm7084, %vm7092
        %vm7111 = vmand %vm7085, %vm7091
        %vm7112 = vmand %vm7086, %vm7092
        %v7113 = vsel %vm7093, 1, 0
        %v7114 = vsel %vm7094, 1, 0
        %v7115 = vsel %vm7095, 1, 0
        %v7116 = vsel %vm7096, 1, 0
        %v7117 = vsel %vm7097, 1, 0
        %v7118 = vsel %vm7098, 1, 0
        %v7119 = vsel %vm7099, 1, 0
        %v7120 = vsel %vm7100, 1, 0
        %v7121 = vsel %vm7101, 1, 0
        %v7122 = vsel %vm7102, 1, 0
        %v7123 = vsel %vm7103, 1, 0
        %v7124 = vsel %vm7104, 1, 0
        %v7125 = vsel %vm7105, 1, 0
        %v7126 = vsel %vm7106, 1, 0
        %v7127 = vsel %vm7107, 1, 0
        %v7128 = vsel %vm7108, 1, 0
        %v7129 = vsel %vm7109, 1, 0
        %v7130 = vsel %vm7110, 1, 0
        %v7131 = vsel %vm7111, 1, 0
        %v7132 = vsel %vm7112, 1, 0
        %vm7133 = vcmp.eq.s32.totalorder %v7113, 1
        %vm7134 = vcmp.eq.s32.totalorder %v7114, 1
        %vm7135 = vcmp.eq.s32.totalorder %v7115, 1
        %vm7136 = vcmp.eq.s32.totalorder %v7116, 1
        %vm7137 = vcmp.eq.s32.totalorder %v7117, 1
        %vm7138 = vcmp.eq.s32.totalorder %v7118, 1
        %vm7139 = vcmp.eq.s32.totalorder %v7119, 1
        %vm7140 = vcmp.eq.s32.totalorder %v7120, 1
        %vm7141 = vcmp.eq.s32.totalorder %v7121, 1
        %vm7142 = vcmp.eq.s32.totalorder %v7122, 1
        %vm7143 = vcmp.eq.s32.totalorder %v7123, 1
        %vm7144 = vcmp.eq.s32.totalorder %v7124, 1
        %vm7145 = vcmp.eq.s32.totalorder %v7125, 1
        %vm7146 = vcmp.eq.s32.totalorder %v7126, 1
        %vm7147 = vcmp.eq.s32.totalorder %v7127, 1
        %vm7148 = vcmp.eq.s32.totalorder %v7128, 1
        %vm7149 = vcmp.eq.s32.totalorder %v7129, 1
        %vm7150 = vcmp.eq.s32.totalorder %v7130, 1
        %vm7151 = vcmp.eq.s32.totalorder %v7131, 1
        %vm7152 = vcmp.eq.s32.totalorder %v7132, 1
        %v7153 = vcombine.low %v6790, %v6798
        %v7154 = vcombine.low %v6797, %v6799
        %v7156 = vunpack.c.l.s4 1983009808
        %v7157 = vunpack.c.0.s8 %v7156
        %v7158 = vlaneseq
        %v7159 = vshrl.u32 %v7158, 7
        %v7160 = vsub.s32 %v7157, %v7159
        %v7161 = vrot.slane %v7153, %v7160
        %v7163 = vunpack.c.l.s4 1983009808
        %v7164 = vunpack.c.0.s8 %v7163
        %v7165 = vlaneseq
        %v7166 = vshrl.u32 %v7165, 7
        %v7167 = vsub.s32 %v7164, %v7166
        %v7168 = vrot.slane %v7154, %v7167
        %v7169 = vcombine.low %v7161, %v7168
        %v7171 = vunpack.c.l.s4 1983009808
        %v7172 = vunpack.c.0.s8 %v7171
        %v7173 = vlaneseq
        %v7174 = vshrl.u32 %v7173, 7
        %v7175 = vsub.s32 %v7172, %v7174
        %v7176 = vrot.slane %v6807, %v7175
        %v7177 = vcombine.low %v6815, %v6814
        %v7178 = vcombine.low %v6816, %v6824
        %v7180 = vunpack.c.l.s4 1983009808
        %v7181 = vunpack.c.0.s8 %v7180
        %v7182 = vlaneseq
        %v7183 = vshrl.u32 %v7182, 7
        %v7184 = vsub.s32 %v7181, %v7183
        %v7185 = vrot.slane %v7177, %v7184
        %v7187 = vunpack.c.l.s4 1983009808
        %v7188 = vunpack.c.0.s8 %v7187
        %v7189 = vlaneseq
        %v7190 = vshrl.u32 %v7189, 7
        %v7191 = vsub.s32 %v7188, %v7190
        %v7192 = vrot.slane %v7178, %v7191
        %v7193 = vcombine.low %v7185, %v7192
        %v7195 = vunpack.c.l.s4 1983009808
        %v7196 = vunpack.c.0.s8 %v7195
        %v7197 = vlaneseq
        %v7198 = vshrl.u32 %v7197, 7
        %v7199 = vsub.s32 %v7196, %v7198
        %v7200 = vrot.slane %v6832, %v7199
        %v7201 = vcombine.low %v6831, %v6833
        %v7202 = vcombine.low %v6841, %v6849
        %v7204 = vunpack.c.l.s4 1983009808
        %v7205 = vunpack.c.0.s8 %v7204
        %v7206 = vlaneseq
        %v7207 = vshrl.u32 %v7206, 7
        %v7208 = vsub.s32 %v7205, %v7207
        %v7209 = vrot.slane %v7201, %v7208
        %v7211 = vunpack.c.l.s4 1983009808
        %v7212 = vunpack.c.0.s8 %v7211
        %v7213 = vlaneseq
        %v7214 = vshrl.u32 %v7213, 7
        %v7215 = vsub.s32 %v7212, %v7214
        %v7216 = vrot.slane %v7202, %v7215
        %v7217 = vcombine.low %v7209, %v7216
        %v7219 = vunpack.c.l.s4 1983009808
        %v7220 = vunpack.c.0.s8 %v7219
        %v7221 = vlaneseq
        %v7222 = vshrl.u32 %v7221, 7
        %v7223 = vsub.s32 %v7220, %v7222
        %v7224 = vrot.slane %v6848, %v7223
        %v7225 = vcombine.low %v6850, %v6858
        %v7226 = vcombine.low %v6866, %v6865
        %v7228 = vunpack.c.l.s4 1983009808
        %v7229 = vunpack.c.0.s8 %v7228
        %v7230 = vlaneseq
        %v7231 = vshrl.u32 %v7230, 7
        %v7232 = vsub.s32 %v7229, %v7231
        %v7233 = vrot.slane %v7225, %v7232
        %v7235 = vunpack.c.l.s4 1983009808
        %v7236 = vunpack.c.0.s8 %v7235
        %v7237 = vlaneseq
        %v7238 = vshrl.u32 %v7237, 7
        %v7239 = vsub.s32 %v7236, %v7238
        %v7240 = vrot.slane %v7226, %v7239
        %v7241 = vcombine.low %v7233, %v7240
        %v7243 = vunpack.c.l.s4 1983009808
        %v7244 = vunpack.c.0.s8 %v7243
        %v7245 = vlaneseq
        %v7246 = vshrl.u32 %v7245, 7
        %v7247 = vsub.s32 %v7244, %v7246
        %v7248 = vrot.slane %v6867, %v7247
        %v7249 = vcombine.low %v6875, %v6883
        %v7250 = vcombine.low %v6882, %v6884
        %v7252 = vunpack.c.l.s4 1983009808
        %v7253 = vunpack.c.0.s8 %v7252
        %v7254 = vlaneseq
        %v7255 = vshrl.u32 %v7254, 7
        %v7256 = vsub.s32 %v7253, %v7255
        %v7257 = vrot.slane %v7249, %v7256
        %v7259 = vunpack.c.l.s4 1983009808
        %v7260 = vunpack.c.0.s8 %v7259
        %v7261 = vlaneseq
        %v7262 = vshrl.u32 %v7261, 7
        %v7263 = vsub.s32 %v7260, %v7262
        %v7264 = vrot.slane %v7250, %v7263
        %v7265 = vcombine.low %v7257, %v7264
        %v7267 = vunpack.c.l.s4 1983009808
        %v7268 = vunpack.c.0.s8 %v7267
        %v7269 = vlaneseq
        %v7270 = vshrl.u32 %v7269, 7
        %v7271 = vsub.s32 %v7268, %v7270
        %v7272 = vrot.slane %v6892, %v7271
        %v7273 = vcombine.low %v6900, %v6899
        %v7274 = vcombine.low %v6901, %v6909
        %v7276 = vunpack.c.l.s4 1983009808
        %v7277 = vunpack.c.0.s8 %v7276
        %v7278 = vlaneseq
        %v7279 = vshrl.u32 %v7278, 7
        %v7280 = vsub.s32 %v7277, %v7279
        %v7281 = vrot.slane %v7273, %v7280
        %v7283 = vunpack.c.l.s4 1983009808
        %v7284 = vunpack.c.0.s8 %v7283
        %v7285 = vlaneseq
        %v7286 = vshrl.u32 %v7285, 7
        %v7287 = vsub.s32 %v7284, %v7286
        %v7288 = vrot.slane %v7274, %v7287
        %v7289 = vcombine.low %v7281, %v7288
        %v7291 = vunpack.c.l.s4 1983009808
        %v7292 = vunpack.c.0.s8 %v7291
        %v7293 = vlaneseq
        %v7294 = vshrl.u32 %v7293, 7
        %v7295 = vsub.s32 %v7292, %v7294
        %v7296 = vrot.slane %v6917, %v7295
        %v7297 = vcombine.low %v6916, %v6918
        %v7298 = vcombine.low %v6926, %v6934
        %v7300 = vunpack.c.l.s4 1983009808
        %v7301 = vunpack.c.0.s8 %v7300
        %v7302 = vlaneseq
        %v7303 = vshrl.u32 %v7302, 7
        %v7304 = vsub.s32 %v7301, %v7303
        %v7305 = vrot.slane %v7297, %v7304
        %v7307 = vunpack.c.l.s4 1983009808
        %v7308 = vunpack.c.0.s8 %v7307
        %v7309 = vlaneseq
        %v7310 = vshrl.u32 %v7309, 7
        %v7311 = vsub.s32 %v7308, %v7310
        %v7312 = vrot.slane %v7298, %v7311
        %v7313 = vcombine.low %v7305, %v7312
        %v7315 = vunpack.c.l.s4 1983009808
        %v7316 = vunpack.c.0.s8 %v7315
        %v7317 = vlaneseq
        %v7318 = vshrl.u32 %v7317, 7
        %v7319 = vsub.s32 %v7316, %v7318
        %v7320 = vrot.slane %v6933, %v7319
        %v7321 = vcombine.low %v6935, %v6943
        %v7322 = vcombine.low %v6951, %v6950
        %v7324 = vunpack.c.l.s4 1983009808
        %v7325 = vunpack.c.0.s8 %v7324
        %v7326 = vlaneseq
        %v7327 = vshrl.u32 %v7326, 7
        %v7328 = vsub.s32 %v7325, %v7327
        %v7329 = vrot.slane %v7321, %v7328
        %v7331 = vunpack.c.l.s4 1983009808
        %v7332 = vunpack.c.0.s8 %v7331
        %v7333 = vlaneseq
        %v7334 = vshrl.u32 %v7333, 7
        %v7335 = vsub.s32 %v7332, %v7334
        %v7336 = vrot.slane %v7322, %v7335
        %v7337 = vcombine.low %v7329, %v7336
        %v7339 = vunpack.c.l.s4 1983009808
        %v7340 = vunpack.c.0.s8 %v7339
        %v7341 = vlaneseq
        %v7342 = vshrl.u32 %v7341, 7
        %v7343 = vsub.s32 %v7340, %v7342
        %v7344 = vrot.slane %v6952, %v7343
        %v7345 = vcombine.low %v6960, %v6968
        %v7346 = vcombine.low %v6967, %v6969
        %v7348 = vunpack.c.l.s4 1983009808
        %v7349 = vunpack.c.0.s8 %v7348
        %v7350 = vlaneseq
        %v7351 = vshrl.u32 %v7350, 7
        %v7352 = vsub.s32 %v7349, %v7351
        %v7353 = vrot.slane %v7345, %v7352
        %v7355 = vunpack.c.l.s4 1983009808
        %v7356 = vunpack.c.0.s8 %v7355
        %v7357 = vlaneseq
        %v7358 = vshrl.u32 %v7357, 7
        %v7359 = vsub.s32 %v7356, %v7358
        %v7360 = vrot.slane %v7346, %v7359
        %v7361 = vcombine.low %v7353, %v7360
        %v7363 = vunpack.c.l.s4 1983009808
        %v7364 = vunpack.c.0.s8 %v7363
        %v7365 = vlaneseq
        %v7366 = vshrl.u32 %v7365, 7
        %v7367 = vsub.s32 %v7364, %v7366
        %v7368 = vrot.slane %v6977, %v7367
        %v7369 = vcombine.low %v6985, %v6984
        %v7370 = vcombine.low %v6986, %v6993
        %v7372 = vunpack.c.l.s4 1983009808
        %v7373 = vunpack.c.0.s8 %v7372
        %v7374 = vlaneseq
        %v7375 = vshrl.u32 %v7374, 7
        %v7376 = vsub.s32 %v7373, %v7375
        %v7377 = vrot.slane %v7369, %v7376
        %v7379 = vunpack.c.l.s4 1983009808
        %v7380 = vunpack.c.0.s8 %v7379
        %v7381 = vlaneseq
        %v7382 = vshrl.u32 %v7381, 7
        %v7383 = vsub.s32 %v7380, %v7382
        %v7384 = vrot.slane %v7370, %v7383
        %v7385 = vcombine.low %v7377, %v7384
        %v7387 = vunpack.c.l.s4 1983009808
        %v7388 = vunpack.c.0.s8 %v7387
        %v7389 = vlaneseq
        %v7390 = vshrl.u32 %v7389, 7
        %v7391 = vsub.s32 %v7388, %v7390
        %v7392 = vrot.slane %v6994, %v7391
        %v7413 = vsel %vm7133, %v7169, 0.0
        %v7414 = vsel %vm7134, %v7176, 0.0
        %v7415 = vsel %vm7135, %v7193, 0.0
        %v7416 = vsel %vm7136, %v7200, 0.0
        %v7417 = vsel %vm7137, %v7217, 0.0
        %v7418 = vsel %vm7138, %v7224, 0.0
        %v7419 = vsel %vm7139, %v7241, 0.0
        %v7420 = vsel %vm7140, %v7248, 0.0
        %v7421 = vsel %vm7141, %v7265, 0.0
        %v7422 = vsel %vm7142, %v7272, 0.0
        %v7423 = vsel %vm7143, %v7289, 0.0
        %v7424 = vsel %vm7144, %v7296, 0.0
        %v7425 = vsel %vm7145, %v7313, 0.0
        %v7426 = vsel %vm7146, %v7320, 0.0
        %v7427 = vsel %vm7147, %v7337, 0.0
        %v7428 = vsel %vm7148, %v7344, 0.0
        %v7429 = vsel %vm7149, %v7361, 0.0
        %v7430 = vsel %vm7150, %v7368, 0.0
        %v7431 = vsel %vm7151, %v7385, 0.0
        %v7432 = vsel %vm7152, %v7392, 0.0
        %v7433 = vld [vmem:[%s3] sm:$0xff]
        %v7434 = vld [vmem:[%s3 + $0x8] sm:$0xff]
        %v7435 = vld [vmem:[%s3 + $0x10] sm:$0xff]
        %v7436 = vld [vmem:[%s3 + $0x18] sm:$0xff]
        %v7437 = vld [vmem:[%s3 + $0x20] sm:$0xff]
        %v7438 = vld [vmem:[%s3 + $0x28] sm:$0xff]
        %v7439 = vld [vmem:[%s3 + $0x30] sm:$0xff]
        %v7440 = vld [vmem:[%s3 + $0x38] sm:$0xff]
        %v7441 = vld [vmem:[%s3 + $0x40] sm:$0xff]
        %v7442 = vld [vmem:[%s3 + $0x48] sm:$0xff]
        %v7443 = vld [vmem:[%s3 + $0x50] sm:$0xff]
        %v7444 = vld [vmem:[%s3 + $0x58] sm:$0xff]
        %v7445 = vld [vmem:[%s3 + $0x60] sm:$0xff]
        %v7446 = vld [vmem:[%s3 + $0x68] sm:$0xff]
        %v7447 = vld [vmem:[%s3 + $0x70] sm:$0xff]
        %v7448 = vld [vmem:[%s3 + $0x78] sm:$0xff]
        %vm7465 = vcmask 1046528
        %v7466 = vrot.slane %v7413, 1
        %v7467 = vrot.slane %v7414, 1
        %v7468 = vsel %vm7465, %v7466, %v7467
        %v7469 = vrot.slane %v7415, 1
        %v7470 = vrot.slane %v7416, 1
        %v7471 = vsel %vm7465, %v7469, %v7470
        %v7472 = vrot.slane %v7417, 1
        %v7473 = vrot.slane %v7418, 1
        %v7474 = vsel %vm7465, %v7472, %v7473
        %v7475 = vrot.slane %v7419, 1
        %v7476 = vrot.slane %v7420, 1
        %v7477 = vsel %vm7465, %v7475, %v7476
        %v7478 = vrot.slane %v7421, 1
        %v7479 = vrot.slane %v7422, 1
        %v7480 = vsel %vm7465, %v7478, %v7479
        %v7481 = vrot.slane %v7423, 1
        %v7482 = vrot.slane %v7424, 1
        %v7483 = vsel %vm7465, %v7481, %v7482
        %v7484 = vrot.slane %v7425, 1
        %v7485 = vrot.slane %v7426, 1
        %v7486 = vsel %vm7465, %v7484, %v7485
        %v7487 = vrot.slane %v7427, 1
        %v7488 = vrot.slane %v7428, 1
        %v7489 = vsel %vm7465, %v7487, %v7488
        %s7498 = scalar_lea.vmem %s3, 128
        %v7499 = vld [vmem:[%s7498] sm:$0xff]
        %v7500 = vld [vmem:[%s7498 + $0x8] sm:$0xff]
        %v7501 = vld [vmem:[%s7498 + $0x10] sm:$0xff]
        %v7502 = vld [vmem:[%s7498 + $0x18] sm:$0xff]
        %v7503 = vld [vmem:[%s7498 + $0x20] sm:$0xff]
        %v7504 = vld [vmem:[%s7498 + $0x28] sm:$0xff]
        %v7505 = vld [vmem:[%s7498 + $0x30] sm:$0xff]
        %v7506 = vld [vmem:[%s7498 + $0x38] sm:$0xff]
        %v7507 = vld [vmem:[%s7498 + $0x40] sm:$0xff]
        %v7508 = vld [vmem:[%s7498 + $0x48] sm:$0xff]
        %v7509 = vld [vmem:[%s7498 + $0x50] sm:$0xff]
        %v7510 = vld [vmem:[%s7498 + $0x58] sm:$0xff]
        %v7511 = vld [vmem:[%s7498 + $0x60] sm:$0xff]
        %v7512 = vld [vmem:[%s7498 + $0x68] sm:$0xff]
        %v7513 = vld [vmem:[%s7498 + $0x70] sm:$0xff]
        %v7514 = vld [vmem:[%s7498 + $0x78] sm:$0xff]
        %7515 = vmatprep.subr.mxu0 0.0
        %7516 = vmatpush1.msra.mxu0 %v7514
        %7517 = vmatprep.subr.mxu0 0.0
        %7518 = vmatpush1.msra.mxu0 %v7513
        %7519 = vmatprep.subr.mxu0 0.0
        %7520 = vmatpush1.msra.mxu0 %v7512
        %7521 = vmatprep.subr.mxu0 0.0
        %7522 = vmatpush1.msra.mxu0 %v7511
        %7523 = vmatprep.subr.mxu0 0.0
        %7524 = vmatpush1.msra.mxu0 %v7510
        %7525 = vmatprep.subr.mxu0 0.0
        %7526 = vmatpush1.msra.mxu0 %v7509
        %7527 = vmatprep.subr.mxu0 0.0
        %7528 = vmatpush1.msra.mxu0 %v7508
        %7529 = vmatprep.subr.mxu0 0.0
        %7530 = vmatpush1.msra.mxu0 %v7507
        %7531 = vmatprep.subr.mxu0 0.0
        %7532 = vmatpush1.msra.mxu0 %v7506
        %7533 = vmatprep.subr.mxu0 0.0
        %7534 = vmatpush1.msra.mxu0 %v7505
        %7535 = vmatprep.subr.mxu0 0.0
        %7536 = vmatpush1.msra.mxu0 %v7504
        %7537 = vmatprep.subr.mxu0 0.0
        %7538 = vmatpush1.msra.mxu0 %v7503
        %7539 = vmatprep.subr.mxu0 0.0
        %7540 = vmatpush1.msra.mxu0 %v7502
        %7541 = vmatprep.subr.mxu0 0.0
        %7542 = vmatpush1.msra.mxu0 %v7501
        %7543 = vmatprep.subr.mxu0 0.0
        %7544 = vmatpush1.msra.mxu0 %v7500
        %7545 = vmatprep.subr.mxu0 0.0
        %7546 = vmatpush1.msra.mxu0 %v7499
        %7547 = vmatprep.subr.mxu0 0.0
        %7548 = vmatpush2.msra.mxu0 0.0
        %7549 = vmatprep.subr.mxu0 0.0
        %7550 = vmatpush2.msra.mxu0 0.0
        %7551 = vmatprep.subr.mxu0 0.0
        %7552 = vmatpush2.msra.mxu0 0.0
        %7553 = vmatprep.subr.mxu0 0.0
        %7554 = vmatpush2.msra.mxu0 0.0
        %7555 = vmatprep.subr.mxu0 0.0
        %7556 = vmatpush2.msra.mxu0 0.0
        %7557 = vmatprep.subr.mxu0 0.0
        %7558 = vmatpush2.msra.mxu0 0.0
        %7559 = vmatprep.subr.mxu0 0.0
        %7560 = vmatpush2.msra.mxu0 0.0
        %7561 = vmatprep.subr.mxu0 0.0
        %7562 = vmatpush2.msra.mxu0 0.0
        %7563 = vmatprep.subr.mxu0 0.0
        %7564 = vmatpush2.msra.mxu0 0.0
        %7565 = vmatprep.subr.mxu0 0.0
        %7566 = vmatpush2.msra.mxu0 0.0
        %7567 = vmatprep.subr.mxu0 0.0
        %7568 = vmatpush2.msra.mxu0 0.0
        %7569 = vmatprep.subr.mxu0 0.0
        %7570 = vmatpush2.msra.mxu0 0.0
        %7571 = vmatprep.subr.mxu0 0.0
        %7572 = vmatpush2.msra.mxu0 0.0
        %7573 = vmatprep.subr.mxu0 0.0
        %7574 = vmatpush2.msra.mxu0 0.0
        %7575 = vmatprep.subr.mxu0 0.0
        %7576 = vmatpush2.msra.mxu0 0.0
        %7577 = vmatprep.subr.mxu0 0.0
        %7578 = vmatpush2.msra.mxu0 0.0
        %7579 = vmatprep.mubr.f32.mxu0 0.0
        %7580 = vmatmul.mubr.f32.gmra.mxu0 %v7468
        %v7581 = vpop.f32.mrf.mxu0
        %v7582 = vadd.f32 0.0, %v7581
        %v7583 = vpop.f32.mrf.mxu0
        %7584 = vmatprep.mubr.f32.mxu0 0.0
        %7585 = vmatmul.mubr.f32.gmra.mxu0 %v7471
        %v7586 = vpop.f32.mrf.mxu0
        %v7587 = vadd.f32 0.0, %v7586
        %v7588 = vpop.f32.mrf.mxu0
        %7589 = vmatprep.mubr.f32.mxu0 0.0
        %7590 = vmatmul.mubr.f32.gmra.mxu0 %v7474
        %v7591 = vpop.f32.mrf.mxu0
        %v7592 = vadd.f32 0.0, %v7591
        %v7593 = vpop.f32.mrf.mxu0
        %7594 = vmatprep.mubr.f32.mxu0 0.0
        %7595 = vmatmul.mubr.f32.gmra.mxu0 %v7477
        %v7596 = vpop.f32.mrf.mxu0
        %v7597 = vadd.f32 0.0, %v7596
        %v7598 = vpop.f32.mrf.mxu0
        %7599 = vmatprep.mubr.f32.mxu0 0.0
        %7600 = vmatmul.mubr.f32.gmra.mxu0 %v7480
        %v7601 = vpop.f32.mrf.mxu0
        %v7602 = vadd.f32 0.0, %v7601
        %v7603 = vpop.f32.mrf.mxu0
        %7604 = vmatprep.mubr.f32.mxu0 0.0
        %7605 = vmatmul.mubr.f32.gmra.mxu0 %v7483
        %v7606 = vpop.f32.mrf.mxu0
        %v7607 = vadd.f32 0.0, %v7606
        %v7608 = vpop.f32.mrf.mxu0
        %7609 = vmatprep.mubr.f32.mxu0 0.0
        %7610 = vmatmul.mubr.f32.gmra.mxu0 %v7486
        %v7611 = vpop.f32.mrf.mxu0
        %v7612 = vadd.f32 0.0, %v7611
        %v7613 = vpop.f32.mrf.mxu0
        %7614 = vmatprep.mubr.f32.mxu0 0.0
        %7615 = vmatmul.mubr.f32.gmra.mxu0 %v7489
        %v7616 = vpop.f32.mrf.mxu0
        %v7617 = vadd.f32 0.0, %v7616
        %v7618 = vpop.f32.mrf.mxu0
        %7619 = vdwg.mxu0
        %7620 = vmatprep.subr.mxu0 0.0
        %7621 = vmatpush1.msra.mxu0 %v7448
        %7622 = vmatprep.subr.mxu0 0.0
        %7623 = vmatpush1.msra.mxu0 %v7447
        %7624 = vmatprep.subr.mxu0 0.0
        %7625 = vmatpush1.msra.mxu0 %v7446
        %7626 = vmatprep.subr.mxu0 0.0
        %7627 = vmatpush1.msra.mxu0 %v7445
        %7628 = vmatprep.subr.mxu0 0.0
        %7629 = vmatpush1.msra.mxu0 %v7444
        %7630 = vmatprep.subr.mxu0 0.0
        %7631 = vmatpush1.msra.mxu0 %v7443
        %7632 = vmatprep.subr.mxu0 0.0
        %7633 = vmatpush1.msra.mxu0 %v7442
        %7634 = vmatprep.subr.mxu0 0.0
        %7635 = vmatpush1.msra.mxu0 %v7441
        %7636 = vmatprep.subr.mxu0 0.0
        %7637 = vmatpush1.msra.mxu0 %v7440
        %7638 = vmatprep.subr.mxu0 0.0
        %7639 = vmatpush1.msra.mxu0 %v7439
        %7640 = vmatprep.subr.mxu0 0.0
        %7641 = vmatpush1.msra.mxu0 %v7438
        %7642 = vmatprep.subr.mxu0 0.0
        %7643 = vmatpush1.msra.mxu0 %v7437
        %7644 = vmatprep.subr.mxu0 0.0
        %7645 = vmatpush1.msra.mxu0 %v7436
        %7646 = vmatprep.subr.mxu0 0.0
        %7647 = vmatpush1.msra.mxu0 %v7435
        %7648 = vmatprep.subr.mxu0 0.0
        %7649 = vmatpush1.msra.mxu0 %v7434
        %7650 = vmatprep.subr.mxu0 0.0
        %7651 = vmatpush1.msra.mxu0 %v7433
        %7652 = vmatprep.subr.mxu0 0.0
        %7653 = vmatpush2.msra.mxu0 0.0
        %7654 = vmatprep.subr.mxu0 0.0
        %7655 = vmatpush2.msra.mxu0 0.0
        %7656 = vmatprep.subr.mxu0 0.0
        %7657 = vmatpush2.msra.mxu0 0.0
        %7658 = vmatprep.subr.mxu0 0.0
        %7659 = vmatpush2.msra.mxu0 0.0
        %7660 = vmatprep.subr.mxu0 0.0
        %7661 = vmatpush2.msra.mxu0 0.0
        %7662 = vmatprep.subr.mxu0 0.0
        %7663 = vmatpush2.msra.mxu0 0.0
        %7664 = vmatprep.subr.mxu0 0.0
        %7665 = vmatpush2.msra.mxu0 0.0
        %7666 = vmatprep.subr.mxu0 0.0
        %7667 = vmatpush2.msra.mxu0 0.0
        %7668 = vmatprep.subr.mxu0 0.0
        %7669 = vmatpush2.msra.mxu0 0.0
        %7670 = vmatprep.subr.mxu0 0.0
        %7671 = vmatpush2.msra.mxu0 0.0
        %7672 = vmatprep.subr.mxu0 0.0
        %7673 = vmatpush2.msra.mxu0 0.0
        %7674 = vmatprep.subr.mxu0 0.0
        %7675 = vmatpush2.msra.mxu0 0.0
        %7676 = vmatprep.subr.mxu0 0.0
        %7677 = vmatpush2.msra.mxu0 0.0
        %7678 = vmatprep.subr.mxu0 0.0
        %7679 = vmatpush2.msra.mxu0 0.0
        %7680 = vmatprep.subr.mxu0 0.0
        %7681 = vmatpush2.msra.mxu0 0.0
        %7682 = vmatprep.subr.mxu0 0.0
        %7683 = vmatpush2.msra.mxu0 0.0
        %7684 = vmatprep.mubr.f32.mxu0 0.0
        %7685 = vmatmul.mubr.f32.gmra.mxu0 %v7413
        %v7686 = vpop.f32.mrf.mxu0
        %v7687 = vadd.f32 %v7582, %v7686
        %v7688 = vpop.f32.mrf.mxu0
        %7689 = vmatprep.mubr.f32.mxu0 0.0
        %7690 = vmatmul.mubr.f32.gmra.mxu0 %v7415
        %v7691 = vpop.f32.mrf.mxu0
        %v7692 = vadd.f32 %v7587, %v7691
        %v7693 = vpop.f32.mrf.mxu0
        %7694 = vmatprep.mubr.f32.mxu0 0.0
        %7695 = vmatmul.mubr.f32.gmra.mxu0 %v7417
        %v7696 = vpop.f32.mrf.mxu0
        %v7697 = vadd.f32 %v7592, %v7696
        %v7698 = vpop.f32.mrf.mxu0
        %7699 = vmatprep.mubr.f32.mxu0 0.0
        %7700 = vmatmul.mubr.f32.gmra.mxu0 %v7419
        %v7701 = vpop.f32.mrf.mxu0
        %v7702 = vadd.f32 %v7597, %v7701
        %v7703 = vpop.f32.mrf.mxu0
        %7704 = vmatprep.mubr.f32.mxu0 0.0
        %7705 = vmatmul.mubr.f32.gmra.mxu0 %v7421
        %v7706 = vpop.f32.mrf.mxu0
        %v7707 = vadd.f32 %v7602, %v7706
        %v7708 = vpop.f32.mrf.mxu0
        %7709 = vmatprep.mubr.f32.mxu0 0.0
        %7710 = vmatmul.mubr.f32.gmra.mxu0 %v7423
        %v7711 = vpop.f32.mrf.mxu0
        %v7712 = vadd.f32 %v7607, %v7711
        %v7713 = vpop.f32.mrf.mxu0
        %7714 = vmatprep.mubr.f32.mxu0 0.0
        %7715 = vmatmul.mubr.f32.gmra.mxu0 %v7425
        %v7716 = vpop.f32.mrf.mxu0
        %v7717 = vadd.f32 %v7612, %v7716
        %v7718 = vpop.f32.mrf.mxu0
        %7719 = vmatprep.mubr.f32.mxu0 0.0
        %7720 = vmatmul.mubr.f32.gmra.mxu0 %v7427
        %v7721 = vpop.f32.mrf.mxu0
        %v7722 = vadd.f32 %v7617, %v7721
        %v7723 = vpop.f32.mrf.mxu0
        %7724 = vdwg.mxu0
        %vm7725 = vcmask 1045504
        %v7726 = vrot.slane %v7413, 2
        %v7727 = vrot.slane %v7414, 2
        %v7728 = vsel %vm7725, %v7726, %v7727
        %v7729 = vrot.slane %v7415, 2
        %v7730 = vrot.slane %v7416, 2
        %v7731 = vsel %vm7725, %v7729, %v7730
        %v7732 = vrot.slane %v7417, 2
        %v7733 = vrot.slane %v7418, 2
        %v7734 = vsel %vm7725, %v7732, %v7733
        %v7735 = vrot.slane %v7419, 2
        %v7736 = vrot.slane %v7420, 2
        %v7737 = vsel %vm7725, %v7735, %v7736
        %v7738 = vrot.slane %v7421, 2
        %v7739 = vrot.slane %v7422, 2
        %v7740 = vsel %vm7725, %v7738, %v7739
        %v7741 = vrot.slane %v7423, 2
        %v7742 = vrot.slane %v7424, 2
        %v7743 = vsel %vm7725, %v7741, %v7742
        %v7744 = vrot.slane %v7425, 2
        %v7745 = vrot.slane %v7426, 2
        %v7746 = vsel %vm7725, %v7744, %v7745
        %v7747 = vrot.slane %v7427, 2
        %v7748 = vrot.slane %v7428, 2
        %v7749 = vsel %vm7725, %v7747, %v7748
        %s7758 = scalar_lea.vmem %s3, 256
        %v7759 = vld [vmem:[%s7758] sm:$0xff]
        %v7760 = vld [vmem:[%s7758 + $0x8] sm:$0xff]
        %v7761 = vld [vmem:[%s7758 + $0x10] sm:$0xff]
        %v7762 = vld [vmem:[%s7758 + $0x18] sm:$0xff]
        %v7763 = vld [vmem:[%s7758 + $0x20] sm:$0xff]
        %v7764 = vld [vmem:[%s7758 + $0x28] sm:$0xff]
        %v7765 = vld [vmem:[%s7758 + $0x30] sm:$0xff]
        %v7766 = vld [vmem:[%s7758 + $0x38] sm:$0xff]
        %v7767 = vld [vmem:[%s7758 + $0x40] sm:$0xff]
        %v7768 = vld [vmem:[%s7758 + $0x48] sm:$0xff]
        %v7769 = vld [vmem:[%s7758 + $0x50] sm:$0xff]
        %v7770 = vld [vmem:[%s7758 + $0x58] sm:$0xff]
        %v7771 = vld [vmem:[%s7758 + $0x60] sm:$0xff]
        %v7772 = vld [vmem:[%s7758 + $0x68] sm:$0xff]
        %v7773 = vld [vmem:[%s7758 + $0x70] sm:$0xff]
        %v7774 = vld [vmem:[%s7758 + $0x78] sm:$0xff]
        %7775 = vmatprep.subr.mxu0 0.0
        %7776 = vmatpush1.msra.mxu0 %v7774
        %7777 = vmatprep.subr.mxu0 0.0
        %7778 = vmatpush1.msra.mxu0 %v7773
        %7779 = vmatprep.subr.mxu0 0.0
        %7780 = vmatpush1.msra.mxu0 %v7772
        %7781 = vmatprep.subr.mxu0 0.0
        %7782 = vmatpush1.msra.mxu0 %v7771
        %7783 = vmatprep.subr.mxu0 0.0
        %7784 = vmatpush1.msra.mxu0 %v7770
        %7785 = vmatprep.subr.mxu0 0.0
        %7786 = vmatpush1.msra.mxu0 %v7769
        %7787 = vmatprep.subr.mxu0 0.0
        %7788 = vmatpush1.msra.mxu0 %v7768
        %7789 = vmatprep.subr.mxu0 0.0
        %7790 = vmatpush1.msra.mxu0 %v7767
        %7791 = vmatprep.subr.mxu0 0.0
        %7792 = vmatpush1.msra.mxu0 %v7766
        %7793 = vmatprep.subr.mxu0 0.0
        %7794 = vmatpush1.msra.mxu0 %v7765
        %7795 = vmatprep.subr.mxu0 0.0
        %7796 = vmatpush1.msra.mxu0 %v7764
        %7797 = vmatprep.subr.mxu0 0.0
        %7798 = vmatpush1.msra.mxu0 %v7763
        %7799 = vmatprep.subr.mxu0 0.0
        %7800 = vmatpush1.msra.mxu0 %v7762
        %7801 = vmatprep.subr.mxu0 0.0
        %7802 = vmatpush1.msra.mxu0 %v7761
        %7803 = vmatprep.subr.mxu0 0.0
        %7804 = vmatpush1.msra.mxu0 %v7760
        %7805 = vmatprep.subr.mxu0 0.0
        %7806 = vmatpush1.msra.mxu0 %v7759
        %7807 = vmatprep.subr.mxu0 0.0
        %7808 = vmatpush2.msra.mxu0 0.0
        %7809 = vmatprep.subr.mxu0 0.0
        %7810 = vmatpush2.msra.mxu0 0.0
        %7811 = vmatprep.subr.mxu0 0.0
        %7812 = vmatpush2.msra.mxu0 0.0
        %7813 = vmatprep.subr.mxu0 0.0
        %7814 = vmatpush2.msra.mxu0 0.0
        %7815 = vmatprep.subr.mxu0 0.0
        %7816 = vmatpush2.msra.mxu0 0.0
        %7817 = vmatprep.subr.mxu0 0.0
        %7818 = vmatpush2.msra.mxu0 0.0
        %7819 = vmatprep.subr.mxu0 0.0
        %7820 = vmatpush2.msra.mxu0 0.0
        %7821 = vmatprep.subr.mxu0 0.0
        %7822 = vmatpush2.msra.mxu0 0.0
        %7823 = vmatprep.subr.mxu0 0.0
        %7824 = vmatpush2.msra.mxu0 0.0
        %7825 = vmatprep.subr.mxu0 0.0
        %7826 = vmatpush2.msra.mxu0 0.0
        %7827 = vmatprep.subr.mxu0 0.0
        %7828 = vmatpush2.msra.mxu0 0.0
        %7829 = vmatprep.subr.mxu0 0.0
        %7830 = vmatpush2.msra.mxu0 0.0
        %7831 = vmatprep.subr.mxu0 0.0
        %7832 = vmatpush2.msra.mxu0 0.0
        %7833 = vmatprep.subr.mxu0 0.0
        %7834 = vmatpush2.msra.mxu0 0.0
        %7835 = vmatprep.subr.mxu0 0.0
        %7836 = vmatpush2.msra.mxu0 0.0
        %7837 = vmatprep.subr.mxu0 0.0
        %7838 = vmatpush2.msra.mxu0 0.0
        %7839 = vmatprep.mubr.f32.mxu0 0.0
        %7840 = vmatmul.mubr.f32.gmra.mxu0 %v7728
        %v7841 = vpop.f32.mrf.mxu0
        %v7842 = vadd.f32 0.0, %v7841
        %v7843 = vpop.f32.mrf.mxu0
        %7844 = vmatprep.mubr.f32.mxu0 0.0
        %7845 = vmatmul.mubr.f32.gmra.mxu0 %v7731
        %v7846 = vpop.f32.mrf.mxu0
        %v7847 = vadd.f32 0.0, %v7846
        %v7848 = vpop.f32.mrf.mxu0
        %7849 = vmatprep.mubr.f32.mxu0 0.0
        %7850 = vmatmul.mubr.f32.gmra.mxu0 %v7734
        %v7851 = vpop.f32.mrf.mxu0
        %v7852 = vadd.f32 0.0, %v7851
        %v7853 = vpop.f32.mrf.mxu0
        %7854 = vmatprep.mubr.f32.mxu0 0.0
        %7855 = vmatmul.mubr.f32.gmra.mxu0 %v7737
        %v7856 = vpop.f32.mrf.mxu0
        %v7857 = vadd.f32 0.0, %v7856
        %v7858 = vpop.f32.mrf.mxu0
        %7859 = vmatprep.mubr.f32.mxu0 0.0
        %7860 = vmatmul.mubr.f32.gmra.mxu0 %v7740
        %v7861 = vpop.f32.mrf.mxu0
        %v7862 = vadd.f32 0.0, %v7861
        %v7863 = vpop.f32.mrf.mxu0
        %7864 = vmatprep.mubr.f32.mxu0 0.0
        %7865 = vmatmul.mubr.f32.gmra.mxu0 %v7743
        %v7866 = vpop.f32.mrf.mxu0
        %v7867 = vadd.f32 0.0, %v7866
        %v7868 = vpop.f32.mrf.mxu0
        %7869 = vmatprep.mubr.f32.mxu0 0.0
        %7870 = vmatmul.mubr.f32.gmra.mxu0 %v7746
        %v7871 = vpop.f32.mrf.mxu0
        %v7872 = vadd.f32 0.0, %v7871
        %v7873 = vpop.f32.mrf.mxu0
        %7874 = vmatprep.mubr.f32.mxu0 0.0
        %7875 = vmatmul.mubr.f32.gmra.mxu0 %v7749
        %v7876 = vpop.f32.mrf.mxu0
        %v7877 = vadd.f32 0.0, %v7876
        %v7878 = vpop.f32.mrf.mxu0
        %7879 = vdwg.mxu0
        %v7880 = vadd.f32 %v7687, %v7842
        %v7881 = vadd.f32 %v7692, %v7847
        %v7882 = vadd.f32 %v7697, %v7852
        %v7883 = vadd.f32 %v7702, %v7857
        %v7884 = vadd.f32 %v7707, %v7862
        %v7885 = vadd.f32 %v7712, %v7867
        %v7886 = vadd.f32 %v7717, %v7872
        %v7887 = vadd.f32 %v7722, %v7877
        %s7888 = scalar_lea.vmem %s3, 384
        %v7889 = vld [vmem:[%s7888] sm:$0xff]
        %v7890 = vld [vmem:[%s7888 + $0x8] sm:$0xff]
        %v7891 = vld [vmem:[%s7888 + $0x10] sm:$0xff]
        %v7892 = vld [vmem:[%s7888 + $0x18] sm:$0xff]
        %v7893 = vld [vmem:[%s7888 + $0x20] sm:$0xff]
        %v7894 = vld [vmem:[%s7888 + $0x28] sm:$0xff]
        %v7895 = vld [vmem:[%s7888 + $0x30] sm:$0xff]
        %v7896 = vld [vmem:[%s7888 + $0x38] sm:$0xff]
        %v7897 = vld [vmem:[%s7888 + $0x40] sm:$0xff]
        %v7898 = vld [vmem:[%s7888 + $0x48] sm:$0xff]
        %v7899 = vld [vmem:[%s7888 + $0x50] sm:$0xff]
        %v7900 = vld [vmem:[%s7888 + $0x58] sm:$0xff]
        %v7901 = vld [vmem:[%s7888 + $0x60] sm:$0xff]
        %v7902 = vld [vmem:[%s7888 + $0x68] sm:$0xff]
        %v7903 = vld [vmem:[%s7888 + $0x70] sm:$0xff]
        %v7904 = vld [vmem:[%s7888 + $0x78] sm:$0xff]
        %7905 = vmatprep.subr.mxu0 0.0
        %7906 = vmatpush1.msra.mxu0 %v7904
        %7907 = vmatprep.subr.mxu0 0.0
        %7908 = vmatpush1.msra.mxu0 %v7903
        %7909 = vmatprep.subr.mxu0 0.0
        %7910 = vmatpush1.msra.mxu0 %v7902
        %7911 = vmatprep.subr.mxu0 0.0
        %7912 = vmatpush1.msra.mxu0 %v7901
        %7913 = vmatprep.subr.mxu0 0.0
        %7914 = vmatpush1.msra.mxu0 %v7900
        %7915 = vmatprep.subr.mxu0 0.0
        %7916 = vmatpush1.msra.mxu0 %v7899
        %7917 = vmatprep.subr.mxu0 0.0
        %7918 = vmatpush1.msra.mxu0 %v7898
        %7919 = vmatprep.subr.mxu0 0.0
        %7920 = vmatpush1.msra.mxu0 %v7897
        %7921 = vmatprep.subr.mxu0 0.0
        %7922 = vmatpush1.msra.mxu0 %v7896
        %7923 = vmatprep.subr.mxu0 0.0
        %7924 = vmatpush1.msra.mxu0 %v7895
        %7925 = vmatprep.subr.mxu0 0.0
        %7926 = vmatpush1.msra.mxu0 %v7894
        %7927 = vmatprep.subr.mxu0 0.0
        %7928 = vmatpush1.msra.mxu0 %v7893
        %7929 = vmatprep.subr.mxu0 0.0
        %7930 = vmatpush1.msra.mxu0 %v7892
        %7931 = vmatprep.subr.mxu0 0.0
        %7932 = vmatpush1.msra.mxu0 %v7891
        %7933 = vmatprep.subr.mxu0 0.0
        %7934 = vmatpush1.msra.mxu0 %v7890
        %7935 = vmatprep.subr.mxu0 0.0
        %7936 = vmatpush1.msra.mxu0 %v7889
        %7937 = vmatprep.subr.mxu0 0.0
        %7938 = vmatpush2.msra.mxu0 0.0
        %7939 = vmatprep.subr.mxu0 0.0
        %7940 = vmatpush2.msra.mxu0 0.0
        %7941 = vmatprep.subr.mxu0 0.0
        %7942 = vmatpush2.msra.mxu0 0.0
        %7943 = vmatprep.subr.mxu0 0.0
        %7944 = vmatpush2.msra.mxu0 0.0
        %7945 = vmatprep.subr.mxu0 0.0
        %7946 = vmatpush2.msra.mxu0 0.0
        %7947 = vmatprep.subr.mxu0 0.0
        %7948 = vmatpush2.msra.mxu0 0.0
        %7949 = vmatprep.subr.mxu0 0.0
        %7950 = vmatpush2.msra.mxu0 0.0
        %7951 = vmatprep.subr.mxu0 0.0
        %7952 = vmatpush2.msra.mxu0 0.0
        %7953 = vmatprep.subr.mxu0 0.0
        %7954 = vmatpush2.msra.mxu0 0.0
        %7955 = vmatprep.subr.mxu0 0.0
        %7956 = vmatpush2.msra.mxu0 0.0
        %7957 = vmatprep.subr.mxu0 0.0
        %7958 = vmatpush2.msra.mxu0 0.0
        %7959 = vmatprep.subr.mxu0 0.0
        %7960 = vmatpush2.msra.mxu0 0.0
        %7961 = vmatprep.subr.mxu0 0.0
        %7962 = vmatpush2.msra.mxu0 0.0
        %7963 = vmatprep.subr.mxu0 0.0
        %7964 = vmatpush2.msra.mxu0 0.0
        %7965 = vmatprep.subr.mxu0 0.0
        %7966 = vmatpush2.msra.mxu0 0.0
        %7967 = vmatprep.subr.mxu0 0.0
        %7968 = vmatpush2.msra.mxu0 0.0
        %7969 = vmatprep.mubr.f32.mxu0 0.0
        %7970 = vmatmul.mubr.f32.gmra.mxu0 %v7415
        %v7971 = vpop.f32.mrf.mxu0
        %v7972 = vadd.f32 0.0, %v7971
        %v7973 = vpop.f32.mrf.mxu0
        %7974 = vmatprep.mubr.f32.mxu0 0.0
        %7975 = vmatmul.mubr.f32.gmra.mxu0 %v7417
        %v7976 = vpop.f32.mrf.mxu0
        %v7977 = vadd.f32 0.0, %v7976
        %v7978 = vpop.f32.mrf.mxu0
        %7979 = vmatprep.mubr.f32.mxu0 0.0
        %7980 = vmatmul.mubr.f32.gmra.mxu0 %v7419
        %v7981 = vpop.f32.mrf.mxu0
        %v7982 = vadd.f32 0.0, %v7981
        %v7983 = vpop.f32.mrf.mxu0
        %7984 = vmatprep.mubr.f32.mxu0 0.0
        %7985 = vmatmul.mubr.f32.gmra.mxu0 %v7421
        %v7986 = vpop.f32.mrf.mxu0
        %v7987 = vadd.f32 0.0, %v7986
        %v7988 = vpop.f32.mrf.mxu0
        %7989 = vmatprep.mubr.f32.mxu0 0.0
        %7990 = vmatmul.mubr.f32.gmra.mxu0 %v7423
        %v7991 = vpop.f32.mrf.mxu0
        %v7992 = vadd.f32 0.0, %v7991
        %v7993 = vpop.f32.mrf.mxu0
        %7994 = vmatprep.mubr.f32.mxu0 0.0
        %7995 = vmatmul.mubr.f32.gmra.mxu0 %v7425
        %v7996 = vpop.f32.mrf.mxu0
        %v7997 = vadd.f32 0.0, %v7996
        %v7998 = vpop.f32.mrf.mxu0
        %7999 = vmatprep.mubr.f32.mxu0 0.0
        %8000 = vmatmul.mubr.f32.gmra.mxu0 %v7427
        %v8001 = vpop.f32.mrf.mxu0
        %v8002 = vadd.f32 0.0, %v8001
        %v8003 = vpop.f32.mrf.mxu0
        %8004 = vmatprep.mubr.f32.mxu0 0.0
        %8005 = vmatmul.mubr.f32.gmra.mxu0 %v7429
        %v8006 = vpop.f32.mrf.mxu0
        %v8007 = vadd.f32 0.0, %v8006
        %v8008 = vpop.f32.mrf.mxu0
        %8009 = vdwg.mxu0
        %v8010 = vadd.f32 %v7880, %v7972
        %v8011 = vadd.f32 %v7881, %v7977
        %v8012 = vadd.f32 %v7882, %v7982
        %v8013 = vadd.f32 %v7883, %v7987
        %v8014 = vadd.f32 %v7884, %v7992
        %v8015 = vadd.f32 %v7885, %v7997
        %v8016 = vadd.f32 %v7886, %v8002
        %v8017 = vadd.f32 %v7887, %v8007
        %v8020 = vrot.slane %v7429, 1
        %v8021 = vrot.slane %v7430, 1
        %v8022 = vsel %vm7465, %v8020, %v8021
        %s8024 = scalar_lea.vmem %s3, 512
        %v8025 = vld [vmem:[%s8024] sm:$0xff]
        %v8026 = vld [vmem:[%s8024 + $0x8] sm:$0xff]
        %v8027 = vld [vmem:[%s8024 + $0x10] sm:$0xff]
        %v8028 = vld [vmem:[%s8024 + $0x18] sm:$0xff]
        %v8029 = vld [vmem:[%s8024 + $0x20] sm:$0xff]
        %v8030 = vld [vmem:[%s8024 + $0x28] sm:$0xff]
        %v8031 = vld [vmem:[%s8024 + $0x30] sm:$0xff]
        %v8032 = vld [vmem:[%s8024 + $0x38] sm:$0xff]
        %v8033 = vld [vmem:[%s8024 + $0x40] sm:$0xff]
        %v8034 = vld [vmem:[%s8024 + $0x48] sm:$0xff]
        %v8035 = vld [vmem:[%s8024 + $0x50] sm:$0xff]
        %v8036 = vld [vmem:[%s8024 + $0x58] sm:$0xff]
        %v8037 = vld [vmem:[%s8024 + $0x60] sm:$0xff]
        %v8038 = vld [vmem:[%s8024 + $0x68] sm:$0xff]
        %v8039 = vld [vmem:[%s8024 + $0x70] sm:$0xff]
        %v8040 = vld [vmem:[%s8024 + $0x78] sm:$0xff]
        %8041 = vmatprep.subr.mxu0 0.0
        %8042 = vmatpush1.msra.mxu0 %v8040
        %8043 = vmatprep.subr.mxu0 0.0
        %8044 = vmatpush1.msra.mxu0 %v8039
        %8045 = vmatprep.subr.mxu0 0.0
        %8046 = vmatpush1.msra.mxu0 %v8038
        %8047 = vmatprep.subr.mxu0 0.0
        %8048 = vmatpush1.msra.mxu0 %v8037
        %8049 = vmatprep.subr.mxu0 0.0
        %8050 = vmatpush1.msra.mxu0 %v8036
        %8051 = vmatprep.subr.mxu0 0.0
        %8052 = vmatpush1.msra.mxu0 %v8035
        %8053 = vmatprep.subr.mxu0 0.0
        %8054 = vmatpush1.msra.mxu0 %v8034
        %8055 = vmatprep.subr.mxu0 0.0
        %8056 = vmatpush1.msra.mxu0 %v8033
        %8057 = vmatprep.subr.mxu0 0.0
        %8058 = vmatpush1.msra.mxu0 %v8032
        %8059 = vmatprep.subr.mxu0 0.0
        %8060 = vmatpush1.msra.mxu0 %v8031
        %8061 = vmatprep.subr.mxu0 0.0
        %8062 = vmatpush1.msra.mxu0 %v8030
        %8063 = vmatprep.subr.mxu0 0.0
        %8064 = vmatpush1.msra.mxu0 %v8029
        %8065 = vmatprep.subr.mxu0 0.0
        %8066 = vmatpush1.msra.mxu0 %v8028
        %8067 = vmatprep.subr.mxu0 0.0
        %8068 = vmatpush1.msra.mxu0 %v8027
        %8069 = vmatprep.subr.mxu0 0.0
        %8070 = vmatpush1.msra.mxu0 %v8026
        %8071 = vmatprep.subr.mxu0 0.0
        %8072 = vmatpush1.msra.mxu0 %v8025
        %8073 = vmatprep.subr.mxu0 0.0
        %8074 = vmatpush2.msra.mxu0 0.0
        %8075 = vmatprep.subr.mxu0 0.0
        %8076 = vmatpush2.msra.mxu0 0.0
        %8077 = vmatprep.subr.mxu0 0.0
        %8078 = vmatpush2.msra.mxu0 0.0
        %8079 = vmatprep.subr.mxu0 0.0
        %8080 = vmatpush2.msra.mxu0 0.0
        %8081 = vmatprep.subr.mxu0 0.0
        %8082 = vmatpush2.msra.mxu0 0.0
        %8083 = vmatprep.subr.mxu0 0.0
        %8084 = vmatpush2.msra.mxu0 0.0
        %8085 = vmatprep.subr.mxu0 0.0
        %8086 = vmatpush2.msra.mxu0 0.0
        %8087 = vmatprep.subr.mxu0 0.0
        %8088 = vmatpush2.msra.mxu0 0.0
        %8089 = vmatprep.subr.mxu0 0.0
        %8090 = vmatpush2.msra.mxu0 0.0
        %8091 = vmatprep.subr.mxu0 0.0
        %8092 = vmatpush2.msra.mxu0 0.0
        %8093 = vmatprep.subr.mxu0 0.0
        %8094 = vmatpush2.msra.mxu0 0.0
        %8095 = vmatprep.subr.mxu0 0.0
        %8096 = vmatpush2.msra.mxu0 0.0
        %8097 = vmatprep.subr.mxu0 0.0
        %8098 = vmatpush2.msra.mxu0 0.0
        %8099 = vmatprep.subr.mxu0 0.0
        %8100 = vmatpush2.msra.mxu0 0.0
        %8101 = vmatprep.subr.mxu0 0.0
        %8102 = vmatpush2.msra.mxu0 0.0
        %8103 = vmatprep.subr.mxu0 0.0
        %8104 = vmatpush2.msra.mxu0 0.0
        %8105 = vmatprep.mubr.f32.mxu0 0.0
        %8106 = vmatmul.mubr.f32.gmra.mxu0 %v7471
        %v8107 = vpop.f32.mrf.mxu0
        %v8108 = vadd.f32 0.0, %v8107
        %v8109 = vpop.f32.mrf.mxu0
        %8110 = vmatprep.mubr.f32.mxu0 0.0
        %8111 = vmatmul.mubr.f32.gmra.mxu0 %v7474
        %v8112 = vpop.f32.mrf.mxu0
        %v8113 = vadd.f32 0.0, %v8112
        %v8114 = vpop.f32.mrf.mxu0
        %8115 = vmatprep.mubr.f32.mxu0 0.0
        %8116 = vmatmul.mubr.f32.gmra.mxu0 %v7477
        %v8117 = vpop.f32.mrf.mxu0
        %v8118 = vadd.f32 0.0, %v8117
        %v8119 = vpop.f32.mrf.mxu0
        %8120 = vmatprep.mubr.f32.mxu0 0.0
        %8121 = vmatmul.mubr.f32.gmra.mxu0 %v7480
        %v8122 = vpop.f32.mrf.mxu0
        %v8123 = vadd.f32 0.0, %v8122
        %v8124 = vpop.f32.mrf.mxu0
        %8125 = vmatprep.mubr.f32.mxu0 0.0
        %8126 = vmatmul.mubr.f32.gmra.mxu0 %v7483
        %v8127 = vpop.f32.mrf.mxu0
        %v8128 = vadd.f32 0.0, %v8127
        %v8129 = vpop.f32.mrf.mxu0
        %8130 = vmatprep.mubr.f32.mxu0 0.0
        %8131 = vmatmul.mubr.f32.gmra.mxu0 %v7486
        %v8132 = vpop.f32.mrf.mxu0
        %v8133 = vadd.f32 0.0, %v8132
        %v8134 = vpop.f32.mrf.mxu0
        %8135 = vmatprep.mubr.f32.mxu0 0.0
        %8136 = vmatmul.mubr.f32.gmra.mxu0 %v7489
        %v8137 = vpop.f32.mrf.mxu0
        %v8138 = vadd.f32 0.0, %v8137
        %v8139 = vpop.f32.mrf.mxu0
        %8140 = vmatprep.mubr.f32.mxu0 0.0
        %8141 = vmatmul.mubr.f32.gmra.mxu0 %v8022
        %v8142 = vpop.f32.mrf.mxu0
        %v8143 = vadd.f32 0.0, %v8142
        %v8144 = vpop.f32.mrf.mxu0
        %8145 = vdwg.mxu0
        %v8146 = vadd.f32 %v8010, %v8108
        %v8147 = vadd.f32 %v8011, %v8113
        %v8148 = vadd.f32 %v8012, %v8118
        %v8149 = vadd.f32 %v8013, %v8123
        %v8150 = vadd.f32 %v8014, %v8128
        %v8151 = vadd.f32 %v8015, %v8133
        %v8152 = vadd.f32 %v8016, %v8138
        %v8153 = vadd.f32 %v8017, %v8143
        %v8154 = vrot.slane %v7429, 2
        %v8155 = vrot.slane %v7430, 2
        %v8156 = vsel %vm7725, %v8154, %v8155
        %s8158 = scalar_lea.vmem %s3, 640
        %v8159 = vld [vmem:[%s8158] sm:$0xff]
        %v8160 = vld [vmem:[%s8158 + $0x8] sm:$0xff]
        %v8161 = vld [vmem:[%s8158 + $0x10] sm:$0xff]
        %v8162 = vld [vmem:[%s8158 + $0x18] sm:$0xff]
        %v8163 = vld [vmem:[%s8158 + $0x20] sm:$0xff]
        %v8164 = vld [vmem:[%s8158 + $0x28] sm:$0xff]
        %v8165 = vld [vmem:[%s8158 + $0x30] sm:$0xff]
        %v8166 = vld [vmem:[%s8158 + $0x38] sm:$0xff]
        %v8167 = vld [vmem:[%s8158 + $0x40] sm:$0xff]
        %v8168 = vld [vmem:[%s8158 + $0x48] sm:$0xff]
        %v8169 = vld [vmem:[%s8158 + $0x50] sm:$0xff]
        %v8170 = vld [vmem:[%s8158 + $0x58] sm:$0xff]
        %v8171 = vld [vmem:[%s8158 + $0x60] sm:$0xff]
        %v8172 = vld [vmem:[%s8158 + $0x68] sm:$0xff]
        %v8173 = vld [vmem:[%s8158 + $0x70] sm:$0xff]
        %v8174 = vld [vmem:[%s8158 + $0x78] sm:$0xff]
        %8175 = vmatprep.subr.mxu0 0.0
        %8176 = vmatpush1.msra.mxu0 %v8174
        %8177 = vmatprep.subr.mxu0 0.0
        %8178 = vmatpush1.msra.mxu0 %v8173
        %8179 = vmatprep.subr.mxu0 0.0
        %8180 = vmatpush1.msra.mxu0 %v8172
        %8181 = vmatprep.subr.mxu0 0.0
        %8182 = vmatpush1.msra.mxu0 %v8171
        %8183 = vmatprep.subr.mxu0 0.0
        %8184 = vmatpush1.msra.mxu0 %v8170
        %8185 = vmatprep.subr.mxu0 0.0
        %8186 = vmatpush1.msra.mxu0 %v8169
        %8187 = vmatprep.subr.mxu0 0.0
        %8188 = vmatpush1.msra.mxu0 %v8168
        %8189 = vmatprep.subr.mxu0 0.0
        %8190 = vmatpush1.msra.mxu0 %v8167
        %8191 = vmatprep.subr.mxu0 0.0
        %8192 = vmatpush1.msra.mxu0 %v8166
        %8193 = vmatprep.subr.mxu0 0.0
        %8194 = vmatpush1.msra.mxu0 %v8165
        %8195 = vmatprep.subr.mxu0 0.0
        %8196 = vmatpush1.msra.mxu0 %v8164
        %8197 = vmatprep.subr.mxu0 0.0
        %8198 = vmatpush1.msra.mxu0 %v8163
        %8199 = vmatprep.subr.mxu0 0.0
        %8200 = vmatpush1.msra.mxu0 %v8162
        %8201 = vmatprep.subr.mxu0 0.0
        %8202 = vmatpush1.msra.mxu0 %v8161
        %8203 = vmatprep.subr.mxu0 0.0
        %8204 = vmatpush1.msra.mxu0 %v8160
        %8205 = vmatprep.subr.mxu0 0.0
        %8206 = vmatpush1.msra.mxu0 %v8159
        %8207 = vmatprep.subr.mxu0 0.0
        %8208 = vmatpush2.msra.mxu0 0.0
        %8209 = vmatprep.subr.mxu0 0.0
        %8210 = vmatpush2.msra.mxu0 0.0
        %8211 = vmatprep.subr.mxu0 0.0
        %8212 = vmatpush2.msra.mxu0 0.0
        %8213 = vmatprep.subr.mxu0 0.0
        %8214 = vmatpush2.msra.mxu0 0.0
        %8215 = vmatprep.subr.mxu0 0.0
        %8216 = vmatpush2.msra.mxu0 0.0
        %8217 = vmatprep.subr.mxu0 0.0
        %8218 = vmatpush2.msra.mxu0 0.0
        %8219 = vmatprep.subr.mxu0 0.0
        %8220 = vmatpush2.msra.mxu0 0.0
        %8221 = vmatprep.subr.mxu0 0.0
        %8222 = vmatpush2.msra.mxu0 0.0
        %8223 = vmatprep.subr.mxu0 0.0
        %8224 = vmatpush2.msra.mxu0 0.0
        %8225 = vmatprep.subr.mxu0 0.0
        %8226 = vmatpush2.msra.mxu0 0.0
        %8227 = vmatprep.subr.mxu0 0.0
        %8228 = vmatpush2.msra.mxu0 0.0
        %8229 = vmatprep.subr.mxu0 0.0
        %8230 = vmatpush2.msra.mxu0 0.0
        %8231 = vmatprep.subr.mxu0 0.0
        %8232 = vmatpush2.msra.mxu0 0.0
        %8233 = vmatprep.subr.mxu0 0.0
        %8234 = vmatpush2.msra.mxu0 0.0
        %8235 = vmatprep.subr.mxu0 0.0
        %8236 = vmatpush2.msra.mxu0 0.0
        %8237 = vmatprep.subr.mxu0 0.0
        %8238 = vmatpush2.msra.mxu0 0.0
        %8239 = vmatprep.mubr.f32.mxu0 0.0
        %8240 = vmatmul.mubr.f32.gmra.mxu0 %v7731
        %v8241 = vpop.f32.mrf.mxu0
        %v8242 = vadd.f32 0.0, %v8241
        %v8243 = vpop.f32.mrf.mxu0
        %8244 = vmatprep.mubr.f32.mxu0 0.0
        %8245 = vmatmul.mubr.f32.gmra.mxu0 %v7734
        %v8246 = vpop.f32.mrf.mxu0
        %v8247 = vadd.f32 0.0, %v8246
        %v8248 = vpop.f32.mrf.mxu0
        %8249 = vmatprep.mubr.f32.mxu0 0.0
        %8250 = vmatmul.mubr.f32.gmra.mxu0 %v7737
        %v8251 = vpop.f32.mrf.mxu0
        %v8252 = vadd.f32 0.0, %v8251
        %v8253 = vpop.f32.mrf.mxu0
        %8254 = vmatprep.mubr.f32.mxu0 0.0
        %8255 = vmatmul.mubr.f32.gmra.mxu0 %v7740
        %v8256 = vpop.f32.mrf.mxu0
        %v8257 = vadd.f32 0.0, %v8256
        %v8258 = vpop.f32.mrf.mxu0
        %8259 = vmatprep.mubr.f32.mxu0 0.0
        %8260 = vmatmul.mubr.f32.gmra.mxu0 %v7743
        %v8261 = vpop.f32.mrf.mxu0
        %v8262 = vadd.f32 0.0, %v8261
        %v8263 = vpop.f32.mrf.mxu0
        %8264 = vmatprep.mubr.f32.mxu0 0.0
        %8265 = vmatmul.mubr.f32.gmra.mxu0 %v7746
        %v8266 = vpop.f32.mrf.mxu0
        %v8267 = vadd.f32 0.0, %v8266
        %v8268 = vpop.f32.mrf.mxu0
        %8269 = vmatprep.mubr.f32.mxu0 0.0
        %8270 = vmatmul.mubr.f32.gmra.mxu0 %v7749
        %v8271 = vpop.f32.mrf.mxu0
        %v8272 = vadd.f32 0.0, %v8271
        %v8273 = vpop.f32.mrf.mxu0
        %8274 = vmatprep.mubr.f32.mxu0 0.0
        %8275 = vmatmul.mubr.f32.gmra.mxu0 %v8156
        %v8276 = vpop.f32.mrf.mxu0
        %v8277 = vadd.f32 0.0, %v8276
        %v8278 = vpop.f32.mrf.mxu0
        %8279 = vdwg.mxu0
        %v8280 = vadd.f32 %v8146, %v8242
        %v8281 = vadd.f32 %v8147, %v8247
        %v8282 = vadd.f32 %v8148, %v8252
        %v8283 = vadd.f32 %v8149, %v8257
        %v8284 = vadd.f32 %v8150, %v8262
        %v8285 = vadd.f32 %v8151, %v8267
        %v8286 = vadd.f32 %v8152, %v8272
        %v8287 = vadd.f32 %v8153, %v8277
        %s8288 = scalar_lea.vmem %s3, 768
        %v8289 = vld [vmem:[%s8288] sm:$0xff]
        %v8290 = vld [vmem:[%s8288 + $0x8] sm:$0xff]
        %v8291 = vld [vmem:[%s8288 + $0x10] sm:$0xff]
        %v8292 = vld [vmem:[%s8288 + $0x18] sm:$0xff]
        %v8293 = vld [vmem:[%s8288 + $0x20] sm:$0xff]
        %v8294 = vld [vmem:[%s8288 + $0x28] sm:$0xff]
        %v8295 = vld [vmem:[%s8288 + $0x30] sm:$0xff]
        %v8296 = vld [vmem:[%s8288 + $0x38] sm:$0xff]
        %v8297 = vld [vmem:[%s8288 + $0x40] sm:$0xff]
        %v8298 = vld [vmem:[%s8288 + $0x48] sm:$0xff]
        %v8299 = vld [vmem:[%s8288 + $0x50] sm:$0xff]
        %v8300 = vld [vmem:[%s8288 + $0x58] sm:$0xff]
        %v8301 = vld [vmem:[%s8288 + $0x60] sm:$0xff]
        %v8302 = vld [vmem:[%s8288 + $0x68] sm:$0xff]
        %v8303 = vld [vmem:[%s8288 + $0x70] sm:$0xff]
        %v8304 = vld [vmem:[%s8288 + $0x78] sm:$0xff]
        %8305 = vmatprep.subr.mxu0 0.0
        %8306 = vmatpush1.msra.mxu0 %v8304
        %8307 = vmatprep.subr.mxu0 0.0
        %8308 = vmatpush1.msra.mxu0 %v8303
        %8309 = vmatprep.subr.mxu0 0.0
        %8310 = vmatpush1.msra.mxu0 %v8302
        %8311 = vmatprep.subr.mxu0 0.0
        %8312 = vmatpush1.msra.mxu0 %v8301
        %8313 = vmatprep.subr.mxu0 0.0
        %8314 = vmatpush1.msra.mxu0 %v8300
        %8315 = vmatprep.subr.mxu0 0.0
        %8316 = vmatpush1.msra.mxu0 %v8299
        %8317 = vmatprep.subr.mxu0 0.0
        %8318 = vmatpush1.msra.mxu0 %v8298
        %8319 = vmatprep.subr.mxu0 0.0
        %8320 = vmatpush1.msra.mxu0 %v8297
        %8321 = vmatprep.subr.mxu0 0.0
        %8322 = vmatpush1.msra.mxu0 %v8296
        %8323 = vmatprep.subr.mxu0 0.0
        %8324 = vmatpush1.msra.mxu0 %v8295
        %8325 = vmatprep.subr.mxu0 0.0
        %8326 = vmatpush1.msra.mxu0 %v8294
        %8327 = vmatprep.subr.mxu0 0.0
        %8328 = vmatpush1.msra.mxu0 %v8293
        %8329 = vmatprep.subr.mxu0 0.0
        %8330 = vmatpush1.msra.mxu0 %v8292
        %8331 = vmatprep.subr.mxu0 0.0
        %8332 = vmatpush1.msra.mxu0 %v8291
        %8333 = vmatprep.subr.mxu0 0.0
        %8334 = vmatpush1.msra.mxu0 %v8290
        %8335 = vmatprep.subr.mxu0 0.0
        %8336 = vmatpush1.msra.mxu0 %v8289
        %8337 = vmatprep.subr.mxu0 0.0
        %8338 = vmatpush2.msra.mxu0 0.0
        %8339 = vmatprep.subr.mxu0 0.0
        %8340 = vmatpush2.msra.mxu0 0.0
        %8341 = vmatprep.subr.mxu0 0.0
        %8342 = vmatpush2.msra.mxu0 0.0
        %8343 = vmatprep.subr.mxu0 0.0
        %8344 = vmatpush2.msra.mxu0 0.0
        %8345 = vmatprep.subr.mxu0 0.0
        %8346 = vmatpush2.msra.mxu0 0.0
        %8347 = vmatprep.subr.mxu0 0.0
        %8348 = vmatpush2.msra.mxu0 0.0
        %8349 = vmatprep.subr.mxu0 0.0
        %8350 = vmatpush2.msra.mxu0 0.0
        %8351 = vmatprep.subr.mxu0 0.0
        %8352 = vmatpush2.msra.mxu0 0.0
        %8353 = vmatprep.subr.mxu0 0.0
        %8354 = vmatpush2.msra.mxu0 0.0
        %8355 = vmatprep.subr.mxu0 0.0
        %8356 = vmatpush2.msra.mxu0 0.0
        %8357 = vmatprep.subr.mxu0 0.0
        %8358 = vmatpush2.msra.mxu0 0.0
        %8359 = vmatprep.subr.mxu0 0.0
        %8360 = vmatpush2.msra.mxu0 0.0
        %8361 = vmatprep.subr.mxu0 0.0
        %8362 = vmatpush2.msra.mxu0 0.0
        %8363 = vmatprep.subr.mxu0 0.0
        %8364 = vmatpush2.msra.mxu0 0.0
        %8365 = vmatprep.subr.mxu0 0.0
        %8366 = vmatpush2.msra.mxu0 0.0
        %8367 = vmatprep.subr.mxu0 0.0
        %8368 = vmatpush2.msra.mxu0 0.0
        %8369 = vmatprep.mubr.f32.mxu0 0.0
        %8370 = vmatmul.mubr.f32.gmra.mxu0 %v7417
        %v8371 = vpop.f32.mrf.mxu0
        %v8372 = vadd.f32 0.0, %v8371
        %v8373 = vpop.f32.mrf.mxu0
        %8374 = vmatprep.mubr.f32.mxu0 0.0
        %8375 = vmatmul.mubr.f32.gmra.mxu0 %v7419
        %v8376 = vpop.f32.mrf.mxu0
        %v8377 = vadd.f32 0.0, %v8376
        %v8378 = vpop.f32.mrf.mxu0
        %8379 = vmatprep.mubr.f32.mxu0 0.0
        %8380 = vmatmul.mubr.f32.gmra.mxu0 %v7421
        %v8381 = vpop.f32.mrf.mxu0
        %v8382 = vadd.f32 0.0, %v8381
        %v8383 = vpop.f32.mrf.mxu0
        %8384 = vmatprep.mubr.f32.mxu0 0.0
        %8385 = vmatmul.mubr.f32.gmra.mxu0 %v7423
        %v8386 = vpop.f32.mrf.mxu0
        %v8387 = vadd.f32 0.0, %v8386
        %v8388 = vpop.f32.mrf.mxu0
        %8389 = vmatprep.mubr.f32.mxu0 0.0
        %8390 = vmatmul.mubr.f32.gmra.mxu0 %v7425
        %v8391 = vpop.f32.mrf.mxu0
        %v8392 = vadd.f32 0.0, %v8391
        %v8393 = vpop.f32.mrf.mxu0
        %8394 = vmatprep.mubr.f32.mxu0 0.0
        %8395 = vmatmul.mubr.f32.gmra.mxu0 %v7427
        %v8396 = vpop.f32.mrf.mxu0
        %v8397 = vadd.f32 0.0, %v8396
        %v8398 = vpop.f32.mrf.mxu0
        %8399 = vmatprep.mubr.f32.mxu0 0.0
        %8400 = vmatmul.mubr.f32.gmra.mxu0 %v7429
        %v8401 = vpop.f32.mrf.mxu0
        %v8402 = vadd.f32 0.0, %v8401
        %v8403 = vpop.f32.mrf.mxu0
        %8404 = vmatprep.mubr.f32.mxu0 0.0
        %8405 = vmatmul.mubr.f32.gmra.mxu0 %v7431
        %v8406 = vpop.f32.mrf.mxu0
        %v8407 = vadd.f32 0.0, %v8406
        %v8408 = vpop.f32.mrf.mxu0
        %8409 = vdwg.mxu0
        %v8410 = vadd.f32 %v8280, %v8372
        %v8411 = vadd.f32 %v8281, %v8377
        %v8412 = vadd.f32 %v8282, %v8382
        %v8413 = vadd.f32 %v8283, %v8387
        %v8414 = vadd.f32 %v8284, %v8392
        %v8415 = vadd.f32 %v8285, %v8397
        %v8416 = vadd.f32 %v8286, %v8402
        %v8417 = vadd.f32 %v8287, %v8407
        %v8420 = vrot.slane %v7431, 1
        %v8421 = vrot.slane %v7432, 1
        %v8422 = vsel %vm7465, %v8420, %v8421
        %s8424 = scalar_lea.vmem %s3, 896
        %v8425 = vld [vmem:[%s8424] sm:$0xff]
        %v8426 = vld [vmem:[%s8424 + $0x8] sm:$0xff]
        %v8427 = vld [vmem:[%s8424 + $0x10] sm:$0xff]
        %v8428 = vld [vmem:[%s8424 + $0x18] sm:$0xff]
        %v8429 = vld [vmem:[%s8424 + $0x20] sm:$0xff]
        %v8430 = vld [vmem:[%s8424 + $0x28] sm:$0xff]
        %v8431 = vld [vmem:[%s8424 + $0x30] sm:$0xff]
        %v8432 = vld [vmem:[%s8424 + $0x38] sm:$0xff]
        %v8433 = vld [vmem:[%s8424 + $0x40] sm:$0xff]
        %v8434 = vld [vmem:[%s8424 + $0x48] sm:$0xff]
        %v8435 = vld [vmem:[%s8424 + $0x50] sm:$0xff]
        %v8436 = vld [vmem:[%s8424 + $0x58] sm:$0xff]
        %v8437 = vld [vmem:[%s8424 + $0x60] sm:$0xff]
        %v8438 = vld [vmem:[%s8424 + $0x68] sm:$0xff]
        %v8439 = vld [vmem:[%s8424 + $0x70] sm:$0xff]
        %v8440 = vld [vmem:[%s8424 + $0x78] sm:$0xff]
        %8441 = vmatprep.subr.mxu0 0.0
        %8442 = vmatpush1.msra.mxu0 %v8440
        %8443 = vmatprep.subr.mxu0 0.0
        %8444 = vmatpush1.msra.mxu0 %v8439
        %8445 = vmatprep.subr.mxu0 0.0
        %8446 = vmatpush1.msra.mxu0 %v8438
        %8447 = vmatprep.subr.mxu0 0.0
        %8448 = vmatpush1.msra.mxu0 %v8437
        %8449 = vmatprep.subr.mxu0 0.0
        %8450 = vmatpush1.msra.mxu0 %v8436
        %8451 = vmatprep.subr.mxu0 0.0
        %8452 = vmatpush1.msra.mxu0 %v8435
        %8453 = vmatprep.subr.mxu0 0.0
        %8454 = vmatpush1.msra.mxu0 %v8434
        %8455 = vmatprep.subr.mxu0 0.0
        %8456 = vmatpush1.msra.mxu0 %v8433
        %8457 = vmatprep.subr.mxu0 0.0
        %8458 = vmatpush1.msra.mxu0 %v8432
        %8459 = vmatprep.subr.mxu0 0.0
        %8460 = vmatpush1.msra.mxu0 %v8431
        %8461 = vmatprep.subr.mxu0 0.0
        %8462 = vmatpush1.msra.mxu0 %v8430
        %8463 = vmatprep.subr.mxu0 0.0
        %8464 = vmatpush1.msra.mxu0 %v8429
        %8465 = vmatprep.subr.mxu0 0.0
        %8466 = vmatpush1.msra.mxu0 %v8428
        %8467 = vmatprep.subr.mxu0 0.0
        %8468 = vmatpush1.msra.mxu0 %v8427
        %8469 = vmatprep.subr.mxu0 0.0
        %8470 = vmatpush1.msra.mxu0 %v8426
        %8471 = vmatprep.subr.mxu0 0.0
        %8472 = vmatpush1.msra.mxu0 %v8425
        %8473 = vmatprep.subr.mxu0 0.0
        %8474 = vmatpush2.msra.mxu0 0.0
        %8475 = vmatprep.subr.mxu0 0.0
        %8476 = vmatpush2.msra.mxu0 0.0
        %8477 = vmatprep.subr.mxu0 0.0
        %8478 = vmatpush2.msra.mxu0 0.0
        %8479 = vmatprep.subr.mxu0 0.0
        %8480 = vmatpush2.msra.mxu0 0.0
        %8481 = vmatprep.subr.mxu0 0.0
        %8482 = vmatpush2.msra.mxu0 0.0
        %8483 = vmatprep.subr.mxu0 0.0
        %8484 = vmatpush2.msra.mxu0 0.0
        %8485 = vmatprep.subr.mxu0 0.0
        %8486 = vmatpush2.msra.mxu0 0.0
        %8487 = vmatprep.subr.mxu0 0.0
        %8488 = vmatpush2.msra.mxu0 0.0
        %8489 = vmatprep.subr.mxu0 0.0
        %8490 = vmatpush2.msra.mxu0 0.0
        %8491 = vmatprep.subr.mxu0 0.0
        %8492 = vmatpush2.msra.mxu0 0.0
        %8493 = vmatprep.subr.mxu0 0.0
        %8494 = vmatpush2.msra.mxu0 0.0
        %8495 = vmatprep.subr.mxu0 0.0
        %8496 = vmatpush2.msra.mxu0 0.0
        %8497 = vmatprep.subr.mxu0 0.0
        %8498 = vmatpush2.msra.mxu0 0.0
        %8499 = vmatprep.subr.mxu0 0.0
        %8500 = vmatpush2.msra.mxu0 0.0
        %8501 = vmatprep.subr.mxu0 0.0
        %8502 = vmatpush2.msra.mxu0 0.0
        %8503 = vmatprep.subr.mxu0 0.0
        %8504 = vmatpush2.msra.mxu0 0.0
        %8505 = vmatprep.mubr.f32.mxu0 0.0
        %8506 = vmatmul.mubr.f32.gmra.mxu0 %v7474
        %v8507 = vpop.f32.mrf.mxu0
        %v8508 = vadd.f32 0.0, %v8507
        %v8509 = vpop.f32.mrf.mxu0
        %8510 = vmatprep.mubr.f32.mxu0 0.0
        %8511 = vmatmul.mubr.f32.gmra.mxu0 %v7477
        %v8512 = vpop.f32.mrf.mxu0
        %v8513 = vadd.f32 0.0, %v8512
        %v8514 = vpop.f32.mrf.mxu0
        %8515 = vmatprep.mubr.f32.mxu0 0.0
        %8516 = vmatmul.mubr.f32.gmra.mxu0 %v7480
        %v8517 = vpop.f32.mrf.mxu0
        %v8518 = vadd.f32 0.0, %v8517
        %v8519 = vpop.f32.mrf.mxu0
        %8520 = vmatprep.mubr.f32.mxu0 0.0
        %8521 = vmatmul.mubr.f32.gmra.mxu0 %v7483
        %v8522 = vpop.f32.mrf.mxu0
        %v8523 = vadd.f32 0.0, %v8522
        %v8524 = vpop.f32.mrf.mxu0
        %8525 = vmatprep.mubr.f32.mxu0 0.0
        %8526 = vmatmul.mubr.f32.gmra.mxu0 %v7486
        %v8527 = vpop.f32.mrf.mxu0
        %v8528 = vadd.f32 0.0, %v8527
        %v8529 = vpop.f32.mrf.mxu0
        %8530 = vmatprep.mubr.f32.mxu0 0.0
        %8531 = vmatmul.mubr.f32.gmra.mxu0 %v7489
        %v8532 = vpop.f32.mrf.mxu0
        %v8533 = vadd.f32 0.0, %v8532
        %v8534 = vpop.f32.mrf.mxu0
        %8535 = vmatprep.mubr.f32.mxu0 0.0
        %8536 = vmatmul.mubr.f32.gmra.mxu0 %v8022
        %v8537 = vpop.f32.mrf.mxu0
        %v8538 = vadd.f32 0.0, %v8537
        %v8539 = vpop.f32.mrf.mxu0
        %8540 = vmatprep.mubr.f32.mxu0 0.0
        %8541 = vmatmul.mubr.f32.gmra.mxu0 %v8422
        %v8542 = vpop.f32.mrf.mxu0
        %v8543 = vadd.f32 0.0, %v8542
        %v8544 = vpop.f32.mrf.mxu0
        %8545 = vdwg.mxu0
        %v8546 = vadd.f32 %v8410, %v8508
        %v8547 = vadd.f32 %v8411, %v8513
        %v8548 = vadd.f32 %v8412, %v8518
        %v8549 = vadd.f32 %v8413, %v8523
        %v8550 = vadd.f32 %v8414, %v8528
        %v8551 = vadd.f32 %v8415, %v8533
        %v8552 = vadd.f32 %v8416, %v8538
        %v8553 = vadd.f32 %v8417, %v8543
        %v8554 = vrot.slane %v7431, 2
        %v8555 = vrot.slane %v7432, 2
        %v8556 = vsel %vm7725, %v8554, %v8555
        %s8558 = scalar_lea.vmem %s3, 1024
        %v8559 = vld [vmem:[%s8558] sm:$0xff]
        %v8560 = vld [vmem:[%s8558 + $0x8] sm:$0xff]
        %v8561 = vld [vmem:[%s8558 + $0x10] sm:$0xff]
        %v8562 = vld [vmem:[%s8558 + $0x18] sm:$0xff]
        %v8563 = vld [vmem:[%s8558 + $0x20] sm:$0xff]
        %v8564 = vld [vmem:[%s8558 + $0x28] sm:$0xff]
        %v8565 = vld [vmem:[%s8558 + $0x30] sm:$0xff]
        %v8566 = vld [vmem:[%s8558 + $0x38] sm:$0xff]
        %v8567 = vld [vmem:[%s8558 + $0x40] sm:$0xff]
        %v8568 = vld [vmem:[%s8558 + $0x48] sm:$0xff]
        %v8569 = vld [vmem:[%s8558 + $0x50] sm:$0xff]
        %v8570 = vld [vmem:[%s8558 + $0x58] sm:$0xff]
        %v8571 = vld [vmem:[%s8558 + $0x60] sm:$0xff]
        %v8572 = vld [vmem:[%s8558 + $0x68] sm:$0xff]
        %v8573 = vld [vmem:[%s8558 + $0x70] sm:$0xff]
        %v8574 = vld [vmem:[%s8558 + $0x78] sm:$0xff]
        %8575 = vmatprep.subr.mxu0 0.0
        %8576 = vmatpush1.msra.mxu0 %v8574
        %8577 = vmatprep.subr.mxu0 0.0
        %8578 = vmatpush1.msra.mxu0 %v8573
        %8579 = vmatprep.subr.mxu0 0.0
        %8580 = vmatpush1.msra.mxu0 %v8572
        %8581 = vmatprep.subr.mxu0 0.0
        %8582 = vmatpush1.msra.mxu0 %v8571
        %8583 = vmatprep.subr.mxu0 0.0
        %8584 = vmatpush1.msra.mxu0 %v8570
        %8585 = vmatprep.subr.mxu0 0.0
        %8586 = vmatpush1.msra.mxu0 %v8569
        %8587 = vmatprep.subr.mxu0 0.0
        %8588 = vmatpush1.msra.mxu0 %v8568
        %8589 = vmatprep.subr.mxu0 0.0
        %8590 = vmatpush1.msra.mxu0 %v8567
        %8591 = vmatprep.subr.mxu0 0.0
        %8592 = vmatpush1.msra.mxu0 %v8566
        %8593 = vmatprep.subr.mxu0 0.0
        %8594 = vmatpush1.msra.mxu0 %v8565
        %8595 = vmatprep.subr.mxu0 0.0
        %8596 = vmatpush1.msra.mxu0 %v8564
        %8597 = vmatprep.subr.mxu0 0.0
        %8598 = vmatpush1.msra.mxu0 %v8563
        %8599 = vmatprep.subr.mxu0 0.0
        %8600 = vmatpush1.msra.mxu0 %v8562
        %8601 = vmatprep.subr.mxu0 0.0
        %8602 = vmatpush1.msra.mxu0 %v8561
        %8603 = vmatprep.subr.mxu0 0.0
        %8604 = vmatpush1.msra.mxu0 %v8560
        %8605 = vmatprep.subr.mxu0 0.0
        %8606 = vmatpush1.msra.mxu0 %v8559
        %8607 = vmatprep.subr.mxu0 0.0
        %8608 = vmatpush2.msra.mxu0 0.0
        %8609 = vmatprep.subr.mxu0 0.0
        %8610 = vmatpush2.msra.mxu0 0.0
        %8611 = vmatprep.subr.mxu0 0.0
        %8612 = vmatpush2.msra.mxu0 0.0
        %8613 = vmatprep.subr.mxu0 0.0
        %8614 = vmatpush2.msra.mxu0 0.0
        %8615 = vmatprep.subr.mxu0 0.0
        %8616 = vmatpush2.msra.mxu0 0.0
        %8617 = vmatprep.subr.mxu0 0.0
        %8618 = vmatpush2.msra.mxu0 0.0
        %8619 = vmatprep.subr.mxu0 0.0
        %8620 = vmatpush2.msra.mxu0 0.0
        %8621 = vmatprep.subr.mxu0 0.0
        %8622 = vmatpush2.msra.mxu0 0.0
        %8623 = vmatprep.subr.mxu0 0.0
        %8624 = vmatpush2.msra.mxu0 0.0
        %8625 = vmatprep.subr.mxu0 0.0
        %8626 = vmatpush2.msra.mxu0 0.0
        %8627 = vmatprep.subr.mxu0 0.0
        %8628 = vmatpush2.msra.mxu0 0.0
        %8629 = vmatprep.subr.mxu0 0.0
        %8630 = vmatpush2.msra.mxu0 0.0
        %8631 = vmatprep.subr.mxu0 0.0
        %8632 = vmatpush2.msra.mxu0 0.0
        %8633 = vmatprep.subr.mxu0 0.0
        %8634 = vmatpush2.msra.mxu0 0.0
        %8635 = vmatprep.subr.mxu0 0.0
        %8636 = vmatpush2.msra.mxu0 0.0
        %8637 = vmatprep.subr.mxu0 0.0
        %8638 = vmatpush2.msra.mxu0 0.0
        %8639 = vmatprep.mubr.f32.mxu0 0.0
        %8640 = vmatmul.mubr.f32.gmra.mxu0 %v7734
        %v8641 = vpop.f32.mrf.mxu0
        %v8642 = vadd.f32 0.0, %v8641
        %v8643 = vpop.f32.mrf.mxu0
        %8644 = vmatprep.mubr.f32.mxu0 0.0
        %8645 = vmatmul.mubr.f32.gmra.mxu0 %v7737
        %v8646 = vpop.f32.mrf.mxu0
        %v8647 = vadd.f32 0.0, %v8646
        %v8648 = vpop.f32.mrf.mxu0
        %8649 = vmatprep.mubr.f32.mxu0 0.0
        %8650 = vmatmul.mubr.f32.gmra.mxu0 %v7740
        %v8651 = vpop.f32.mrf.mxu0
        %v8652 = vadd.f32 0.0, %v8651
        %v8653 = vpop.f32.mrf.mxu0
        %8654 = vmatprep.mubr.f32.mxu0 0.0
        %8655 = vmatmul.mubr.f32.gmra.mxu0 %v7743
        %v8656 = vpop.f32.mrf.mxu0
        %v8657 = vadd.f32 0.0, %v8656
        %v8658 = vpop.f32.mrf.mxu0
        %8659 = vmatprep.mubr.f32.mxu0 0.0
        %8660 = vmatmul.mubr.f32.gmra.mxu0 %v7746
        %v8661 = vpop.f32.mrf.mxu0
        %v8662 = vadd.f32 0.0, %v8661
        %v8663 = vpop.f32.mrf.mxu0
        %8664 = vmatprep.mubr.f32.mxu0 0.0
        %8665 = vmatmul.mubr.f32.gmra.mxu0 %v7749
        %v8666 = vpop.f32.mrf.mxu0
        %v8667 = vadd.f32 0.0, %v8666
        %v8668 = vpop.f32.mrf.mxu0
        %8669 = vmatprep.mubr.f32.mxu0 0.0
        %8670 = vmatmul.mubr.f32.gmra.mxu0 %v8156
        %v8671 = vpop.f32.mrf.mxu0
        %v8672 = vadd.f32 0.0, %v8671
        %v8673 = vpop.f32.mrf.mxu0
        %8674 = vmatprep.mubr.f32.mxu0 0.0
        %8675 = vmatmul.mubr.f32.gmra.mxu0 %v8556
        %v8676 = vpop.f32.mrf.mxu0
        %v8677 = vadd.f32 0.0, %v8676
        %v8678 = vpop.f32.mrf.mxu0
        %8679 = vdwg.mxu0
        %v8680 = vadd.f32 %v8546, %v8642
        %v8681 = vadd.f32 %v8547, %v8647
        %v8682 = vadd.f32 %v8548, %v8652
        %v8683 = vadd.f32 %v8549, %v8657
        %v8684 = vadd.f32 %v8550, %v8662
        %v8685 = vadd.f32 %v8551, %v8667
        %v8686 = vadd.f32 %v8552, %v8672
        %v8687 = vadd.f32 %v8553, %v8677
        %v8688 = vld [vmem:[%s4] sm:$0x1]
        %v8690 = vlaneseq
        %v8691 = vshrl.u32 %v8690, 7
        %v8692 = vsub.s32 0, %v8691
        %v8693 = vrot.slane %v8688, %v8692
        %v8695 = vadd.f32 %v8680, %v8693
        %v8696 = vadd.f32 %v8681, %v8693
        %v8697 = vadd.f32 %v8682, %v8693
        %v8698 = vadd.f32 %v8683, %v8693
        %v8699 = vadd.f32 %v8684, %v8693
        %v8700 = vadd.f32 %v8685, %v8693
        %v8701 = vadd.f32 %v8686, %v8693
        %v8702 = vadd.f32 %v8687, %v8693
        %v8703 = vld [vmem:[#allocation4] sm:$0xff]
        %v8704 = vld [vmem:[#allocation4 + $0x8] sm:$0xff]
        %v8705 = vld [vmem:[#allocation4 + $0x10] sm:$0xff]
        %v8706 = vld [vmem:[#allocation4 + $0x18] sm:$0xff]
        %v8707 = vld [vmem:[#allocation4 + $0x20] sm:$0xff]
        %v8708 = vld [vmem:[#allocation4 + $0x28] sm:$0xff]
        %v8709 = vld [vmem:[#allocation4 + $0x30] sm:$0xff]
        %v8710 = vld [vmem:[#allocation4 + $0x38] sm:$0xff]
        %v8711 = vld [vmem:[#allocation4 + $0x40] sm:$0xff]
        %v8712 = vld [vmem:[#allocation4 + $0x48] sm:$0xff]
        %v8713 = vld [vmem:[#allocation4 + $0x50] sm:$0xff]
        %v8714 = vld [vmem:[#allocation4 + $0x58] sm:$0xff]
        %v8715 = vld [vmem:[#allocation4 + $0x60] sm:$0xff]
        %v8716 = vld [vmem:[#allocation4 + $0x68] sm:$0xff]
        %v8717 = vld [vmem:[#allocation4 + $0x70] sm:$0xff]
        %v8718 = vld [vmem:[#allocation4 + $0x78] sm:$0xff]
        %v8719 = vld [vmem:[%s6] sm:$0x1]
        %v8721 = vlaneseq
        %v8722 = vshrl.u32 %v8721, 7
        %v8723 = vsub.s32 0, %v8722
        %v8724 = vrot.slane %v8719, %v8723
        %8726 = vmatprep.subr.mxu0 0.0
        %8727 = vmatpush1.msra.mxu0 %v8718
        %8728 = vmatprep.subr.mxu0 0.0
        %8729 = vmatpush1.msra.mxu0 %v8717
        %8730 = vmatprep.subr.mxu0 0.0
        %8731 = vmatpush1.msra.mxu0 %v8716
        %8732 = vmatprep.subr.mxu0 0.0
        %8733 = vmatpush1.msra.mxu0 %v8715
        %8734 = vmatprep.subr.mxu0 0.0
        %8735 = vmatpush1.msra.mxu0 %v8714
        %8736 = vmatprep.subr.mxu0 0.0
        %8737 = vmatpush1.msra.mxu0 %v8713
        %8738 = vmatprep.subr.mxu0 0.0
        %8739 = vmatpush1.msra.mxu0 %v8712
        %8740 = vmatprep.subr.mxu0 0.0
        %8741 = vmatpush1.msra.mxu0 %v8711
        %8742 = vmatprep.subr.mxu0 0.0
        %8743 = vmatpush1.msra.mxu0 %v8710
        %8744 = vmatprep.subr.mxu0 0.0
        %8745 = vmatpush1.msra.mxu0 %v8709
        %8746 = vmatprep.subr.mxu0 0.0
        %8747 = vmatpush1.msra.mxu0 %v8708
        %8748 = vmatprep.subr.mxu0 0.0
        %8749 = vmatpush1.msra.mxu0 %v8707
        %8750 = vmatprep.subr.mxu0 0.0
        %8751 = vmatpush1.msra.mxu0 %v8706
        %8752 = vmatprep.subr.mxu0 0.0
        %8753 = vmatpush1.msra.mxu0 %v8705
        %8754 = vmatprep.subr.mxu0 0.0
        %8755 = vmatpush1.msra.mxu0 %v8704
        %8756 = vmatprep.subr.mxu0 0.0
        %8757 = vmatpush1.msra.mxu0 %v8703
        %8758 = vmatprep.subr.mxu0 0.0
        %8759 = vmatpush2.msra.mxu0 0.0
        %8760 = vmatprep.subr.mxu0 0.0
        %8761 = vmatpush2.msra.mxu0 0.0
        %8762 = vmatprep.subr.mxu0 0.0
        %8763 = vmatpush2.msra.mxu0 0.0
        %8764 = vmatprep.subr.mxu0 0.0
        %8765 = vmatpush2.msra.mxu0 0.0
        %8766 = vmatprep.subr.mxu0 0.0
        %8767 = vmatpush2.msra.mxu0 0.0
        %8768 = vmatprep.subr.mxu0 0.0
        %8769 = vmatpush2.msra.mxu0 0.0
        %8770 = vmatprep.subr.mxu0 0.0
        %8771 = vmatpush2.msra.mxu0 0.0
        %8772 = vmatprep.subr.mxu0 0.0
        %8773 = vmatpush2.msra.mxu0 0.0
        %8774 = vmatprep.subr.mxu0 0.0
        %8775 = vmatpush2.msra.mxu0 0.0
        %8776 = vmatprep.subr.mxu0 0.0
        %8777 = vmatpush2.msra.mxu0 0.0
        %8778 = vmatprep.subr.mxu0 0.0
        %8779 = vmatpush2.msra.mxu0 0.0
        %8780 = vmatprep.subr.mxu0 0.0
        %8781 = vmatpush2.msra.mxu0 0.0
        %8782 = vmatprep.subr.mxu0 0.0
        %8783 = vmatpush2.msra.mxu0 0.0
        %8784 = vmatprep.subr.mxu0 0.0
        %8785 = vmatpush2.msra.mxu0 0.0
        %8786 = vmatprep.subr.mxu0 0.0
        %8787 = vmatpush2.msra.mxu0 0.0
        %8788 = vmatprep.subr.mxu0 0.0
        %8789 = vmatpush2.msra.mxu0 0.0
        %8790 = vmatprep.mubr.f32.mxu0 0.0
        %8791 = vmatmul.mubr.f32.gmra.mxu0 %v8695
        %v8792 = vpop.f32.mrf.mxu0
        %v8793 = vadd.f32 %v8724, %v8792
        %v8794 = vpop.f32.mrf.mxu0
        %8795 = vmatprep.mubr.f32.mxu0 0.0
        %8796 = vmatmul.mubr.f32.gmra.mxu0 %v8696
        %v8797 = vpop.f32.mrf.mxu0
        %v8798 = vadd.f32 %v8724, %v8797
        %v8799 = vpop.f32.mrf.mxu0
        %8800 = vmatprep.mubr.f32.mxu0 0.0
        %8801 = vmatmul.mubr.f32.gmra.mxu0 %v8697
        %v8802 = vpop.f32.mrf.mxu0
        %v8803 = vadd.f32 %v8724, %v8802
        %v8804 = vpop.f32.mrf.mxu0
        %8805 = vmatprep.mubr.f32.mxu0 0.0
        %8806 = vmatmul.mubr.f32.gmra.mxu0 %v8698
        %v8807 = vpop.f32.mrf.mxu0
        %v8808 = vadd.f32 %v8724, %v8807
        %v8809 = vpop.f32.mrf.mxu0
        %8810 = vmatprep.mubr.f32.mxu0 0.0
        %8811 = vmatmul.mubr.f32.gmra.mxu0 %v8699
        %v8812 = vpop.f32.mrf.mxu0
        %v8813 = vadd.f32 %v8724, %v8812
        %v8814 = vpop.f32.mrf.mxu0
        %8815 = vmatprep.mubr.f32.mxu0 0.0
        %8816 = vmatmul.mubr.f32.gmra.mxu0 %v8700
        %v8817 = vpop.f32.mrf.mxu0
        %v8818 = vadd.f32 %v8724, %v8817
        %v8819 = vpop.f32.mrf.mxu0
        %8820 = vmatprep.mubr.f32.mxu0 0.0
        %8821 = vmatmul.mubr.f32.gmra.mxu0 %v8701
        %v8822 = vpop.f32.mrf.mxu0
        %v8823 = vadd.f32 %v8724, %v8822
        %v8824 = vpop.f32.mrf.mxu0
        %8825 = vmatprep.mubr.f32.mxu0 0.0
        %8826 = vmatmul.mubr.f32.gmra.mxu0 %v8702
        %v8827 = vpop.f32.mrf.mxu0
        %v8828 = vadd.f32 %v8724, %v8827
        %v8829 = vpop.f32.mrf.mxu0
        %8830 = vdwg.mxu0
        %v8831 = vmax.f32 %v8793, 0.0
        %v8832 = vmax.f32 %v8798, 0.0
        %v8833 = vmax.f32 %v8803, 0.0
        %v8834 = vmax.f32 %v8808, 0.0
        %v8835 = vmax.f32 %v8813, 0.0
        %v8836 = vmax.f32 %v8818, 0.0
        %v8837 = vmax.f32 %v8823, 0.0
        %v8838 = vmax.f32 %v8828, 0.0
        %v8839 = vld [vmem:[%s4675 + $0x1] sm:$0xff]
        %v8840 = vld [vmem:[%s4675 + $0x41] sm:$0xff]
        %v8841 = vld [vmem:[%s4675 + $0x81] sm:$0xff]
        %v8842 = vld [vmem:[%s4675 + $0xc1] sm:$0xff]
        %v8843 = vld [vmem:[%s4675 + $0x101] sm:$0xff]
        %v8844 = vld [vmem:[%s4675 + $0x141] sm:$0xff]
        %v8845 = vld [vmem:[%s4675 + $0x181] sm:$0xff]
        %v8846 = vld [vmem:[%s4675 + $0x1c1] sm:$0xff]
        %v8847 = vld [vmem:[%s7] sm:$0x1]
        %v8849 = vlaneseq
        %v8850 = vshrl.u32 %v8849, 7
        %v8851 = vsub.s32 0, %v8850
        %v8852 = vrot.slane %v8847, %v8851
        %v8854 = vmul.f32 %v8839, %v8852
        %v8855 = vmul.f32 %v8840, %v8852
        %v8856 = vmul.f32 %v8841, %v8852
        %v8857 = vmul.f32 %v8842, %v8852
        %v8858 = vmul.f32 %v8843, %v8852
        %v8859 = vmul.f32 %v8844, %v8852
        %v8860 = vmul.f32 %v8845, %v8852
        %v8861 = vmul.f32 %v8846, %v8852
        %v8862 = vadd.f32 %v8854, 0.0
        %v8863 = vadd.f32 %v8855, 0.0
        %v8864 = vadd.f32 %v8856, 0.0
        %v8865 = vadd.f32 %v8857, 0.0
        %v8866 = vadd.f32 %v8858, 0.0
        %v8867 = vadd.f32 %v8859, 0.0
        %v8868 = vadd.f32 %v8860, 0.0
        %v8869 = vadd.f32 %v8861, 0.0
        %v8870 = vld [vmem:[%s5341 + $0x1] sm:$0xff]
        %v8871 = vld [vmem:[%s5341 + $0x41] sm:$0xff]
        %v8872 = vld [vmem:[%s5341 + $0x81] sm:$0xff]
        %v8873 = vld [vmem:[%s5341 + $0xc1] sm:$0xff]
        %v8874 = vld [vmem:[%s5341 + $0x101] sm:$0xff]
        %v8875 = vld [vmem:[%s5341 + $0x141] sm:$0xff]
        %v8876 = vld [vmem:[%s5341 + $0x181] sm:$0xff]
        %v8877 = vld [vmem:[%s5341 + $0x1c1] sm:$0xff]
        %s8878 = scalar_lea.vmem %s7, 1
        %v8879 = vld [vmem:[%s8878] sm:$0x1]
        %v8881 = vlaneseq
        %v8882 = vshrl.u32 %v8881, 7
        %v8883 = vsub.s32 0, %v8882
        %v8884 = vrot.slane %v8879, %v8883
        %v8886 = vmul.f32 %v8870, %v8884
        %v8887 = vmul.f32 %v8871, %v8884
        %v8888 = vmul.f32 %v8872, %v8884
        %v8889 = vmul.f32 %v8873, %v8884
        %v8890 = vmul.f32 %v8874, %v8884
        %v8891 = vmul.f32 %v8875, %v8884
        %v8892 = vmul.f32 %v8876, %v8884
        %v8893 = vmul.f32 %v8877, %v8884
        %v8894 = vadd.f32 %v8862, %v8886
        %v8895 = vadd.f32 %v8863, %v8887
        %v8896 = vadd.f32 %v8864, %v8888
        %v8897 = vadd.f32 %v8865, %v8889
        %v8898 = vadd.f32 %v8866, %v8890
        %v8899 = vadd.f32 %v8867, %v8891
        %v8900 = vadd.f32 %v8868, %v8892
        %v8901 = vadd.f32 %v8869, %v8893
        %v8902 = vld [vmem:[%s4675 + $0x2] sm:$0xff]
        %v8903 = vld [vmem:[%s4675 + $0x42] sm:$0xff]
        %v8904 = vld [vmem:[%s4675 + $0x82] sm:$0xff]
        %v8905 = vld [vmem:[%s4675 + $0xc2] sm:$0xff]
        %v8906 = vld [vmem:[%s4675 + $0x102] sm:$0xff]
        %v8907 = vld [vmem:[%s4675 + $0x142] sm:$0xff]
        %v8908 = vld [vmem:[%s4675 + $0x182] sm:$0xff]
        %v8909 = vld [vmem:[%s4675 + $0x1c2] sm:$0xff]
        %s8910 = scalar_lea.vmem %s7, 2
        %v8911 = vld [vmem:[%s8910] sm:$0x1]
        %v8913 = vlaneseq
        %v8914 = vshrl.u32 %v8913, 7
        %v8915 = vsub.s32 0, %v8914
        %v8916 = vrot.slane %v8911, %v8915
        %v8918 = vmul.f32 %v8902, %v8916
        %v8919 = vmul.f32 %v8903, %v8916
        %v8920 = vmul.f32 %v8904, %v8916
        %v8921 = vmul.f32 %v8905, %v8916
        %v8922 = vmul.f32 %v8906, %v8916
        %v8923 = vmul.f32 %v8907, %v8916
        %v8924 = vmul.f32 %v8908, %v8916
        %v8925 = vmul.f32 %v8909, %v8916
        %v8926 = vadd.f32 %v8894, %v8918
        %v8927 = vadd.f32 %v8895, %v8919
        %v8928 = vadd.f32 %v8896, %v8920
        %v8929 = vadd.f32 %v8897, %v8921
        %v8930 = vadd.f32 %v8898, %v8922
        %v8931 = vadd.f32 %v8899, %v8923
        %v8932 = vadd.f32 %v8900, %v8924
        %v8933 = vadd.f32 %v8901, %v8925
        %s8934 = scalar_lea.vmem [#allocation2], 96
        %v8935 = vld [vmem:[%s8934 + $0x1] sm:$0xff]
        %v8936 = vld [vmem:[%s8934 + $0x41] sm:$0xff]
        %v8937 = vld [vmem:[%s8934 + $0x81] sm:$0xff]
        %v8938 = vld [vmem:[%s8934 + $0xc1] sm:$0xff]
        %v8939 = vld [vmem:[%s8934 + $0x101] sm:$0xff]
        %v8940 = vld [vmem:[%s8934 + $0x141] sm:$0xff]
        %v8941 = vld [vmem:[%s8934 + $0x181] sm:$0xff]
        %v8942 = vld [vmem:[%s8934 + $0x1c1] sm:$0xff]
        %s8943 = scalar_lea.vmem %s7, 3
        %v8944 = vld [vmem:[%s8943] sm:$0x1]
        %v8946 = vlaneseq
        %v8947 = vshrl.u32 %v8946, 7
        %v8948 = vsub.s32 0, %v8947
        %v8949 = vrot.slane %v8944, %v8948
        %v8951 = vmul.f32 %v8935, %v8949
        %v8952 = vmul.f32 %v8936, %v8949
        %v8953 = vmul.f32 %v8937, %v8949
        %v8954 = vmul.f32 %v8938, %v8949
        %v8955 = vmul.f32 %v8939, %v8949
        %v8956 = vmul.f32 %v8940, %v8949
        %v8957 = vmul.f32 %v8941, %v8949
        %v8958 = vmul.f32 %v8942, %v8949
        %v8959 = vadd.f32 %v8926, %v8951
        %v8960 = vadd.f32 %v8927, %v8952
        %v8961 = vadd.f32 %v8928, %v8953
        %v8962 = vadd.f32 %v8929, %v8954
        %v8963 = vadd.f32 %v8930, %v8955
        %v8964 = vadd.f32 %v8931, %v8956
        %v8965 = vadd.f32 %v8932, %v8957
        %v8966 = vadd.f32 %v8933, %v8958
        %s8967 = scalar_lea.vmem [#allocation2], 112
        %v8968 = vld [vmem:[%s8967 + $0x1] sm:$0xff]
        %v8969 = vld [vmem:[%s8967 + $0x41] sm:$0xff]
        %v8970 = vld [vmem:[%s8967 + $0x81] sm:$0xff]
        %v8971 = vld [vmem:[%s8967 + $0xc1] sm:$0xff]
        %v8972 = vld [vmem:[%s8967 + $0x101] sm:$0xff]
        %v8973 = vld [vmem:[%s8967 + $0x141] sm:$0xff]
        %v8974 = vld [vmem:[%s8967 + $0x181] sm:$0xff]
        %v8975 = vld [vmem:[%s8967 + $0x1c1] sm:$0xff]
        %s8976 = scalar_lea.vmem %s7, 4
        %v8977 = vld [vmem:[%s8976] sm:$0x1]
        %v8979 = vlaneseq
        %v8980 = vshrl.u32 %v8979, 7
        %v8981 = vsub.s32 0, %v8980
        %v8982 = vrot.slane %v8977, %v8981
        %v8984 = vmul.f32 %v8968, %v8982
        %v8985 = vmul.f32 %v8969, %v8982
        %v8986 = vmul.f32 %v8970, %v8982
        %v8987 = vmul.f32 %v8971, %v8982
        %v8988 = vmul.f32 %v8972, %v8982
        %v8989 = vmul.f32 %v8973, %v8982
        %v8990 = vmul.f32 %v8974, %v8982
        %v8991 = vmul.f32 %v8975, %v8982
        %v8992 = vadd.f32 %v8959, %v8984
        %v8993 = vadd.f32 %v8960, %v8985
        %v8994 = vadd.f32 %v8961, %v8986
        %v8995 = vadd.f32 %v8962, %v8987
        %v8996 = vadd.f32 %v8963, %v8988
        %v8997 = vadd.f32 %v8964, %v8989
        %v8998 = vadd.f32 %v8965, %v8990
        %v8999 = vadd.f32 %v8966, %v8991
        %v9000 = vld [vmem:[%s8934 + $0x2] sm:$0xff]
        %v9001 = vld [vmem:[%s8934 + $0x42] sm:$0xff]
        %v9002 = vld [vmem:[%s8934 + $0x82] sm:$0xff]
        %v9003 = vld [vmem:[%s8934 + $0xc2] sm:$0xff]
        %v9004 = vld [vmem:[%s8934 + $0x102] sm:$0xff]
        %v9005 = vld [vmem:[%s8934 + $0x142] sm:$0xff]
        %v9006 = vld [vmem:[%s8934 + $0x182] sm:$0xff]
        %v9007 = vld [vmem:[%s8934 + $0x1c2] sm:$0xff]
        %s9008 = scalar_lea.vmem %s7, 5
        %v9009 = vld [vmem:[%s9008] sm:$0x1]
        %v9011 = vlaneseq
        %v9012 = vshrl.u32 %v9011, 7
        %v9013 = vsub.s32 0, %v9012
        %v9014 = vrot.slane %v9009, %v9013
        %v9016 = vmul.f32 %v9000, %v9014
        %v9017 = vmul.f32 %v9001, %v9014
        %v9018 = vmul.f32 %v9002, %v9014
        %v9019 = vmul.f32 %v9003, %v9014
        %v9020 = vmul.f32 %v9004, %v9014
        %v9021 = vmul.f32 %v9005, %v9014
        %v9022 = vmul.f32 %v9006, %v9014
        %v9023 = vmul.f32 %v9007, %v9014
        %v9024 = vadd.f32 %v8992, %v9016
        %v9025 = vadd.f32 %v8993, %v9017
        %v9026 = vadd.f32 %v8994, %v9018
        %v9027 = vadd.f32 %v8995, %v9019
        %v9028 = vadd.f32 %v8996, %v9020
        %v9029 = vadd.f32 %v8997, %v9021
        %v9030 = vadd.f32 %v8998, %v9022
        %v9031 = vadd.f32 %v8999, %v9023
        %s9032 = scalar_lea.vmem [#allocation2], 128
        %v9033 = vld [vmem:[%s9032 + $0x1] sm:$0xff]
        %v9034 = vld [vmem:[%s9032 + $0x41] sm:$0xff]
        %v9035 = vld [vmem:[%s9032 + $0x81] sm:$0xff]
        %v9036 = vld [vmem:[%s9032 + $0xc1] sm:$0xff]
        %v9037 = vld [vmem:[%s9032 + $0x101] sm:$0xff]
        %v9038 = vld [vmem:[%s9032 + $0x141] sm:$0xff]
        %v9039 = vld [vmem:[%s9032 + $0x181] sm:$0xff]
        %v9040 = vld [vmem:[%s9032 + $0x1c1] sm:$0xff]
        %s9041 = scalar_lea.vmem %s7, 6
        %v9042 = vld [vmem:[%s9041] sm:$0x1]
        %v9044 = vlaneseq
        %v9045 = vshrl.u32 %v9044, 7
        %v9046 = vsub.s32 0, %v9045
        %v9047 = vrot.slane %v9042, %v9046
        %v9049 = vmul.f32 %v9033, %v9047
        %v9050 = vmul.f32 %v9034, %v9047
        %v9051 = vmul.f32 %v9035, %v9047
        %v9052 = vmul.f32 %v9036, %v9047
        %v9053 = vmul.f32 %v9037, %v9047
        %v9054 = vmul.f32 %v9038, %v9047
        %v9055 = vmul.f32 %v9039, %v9047
        %v9056 = vmul.f32 %v9040, %v9047
        %v9057 = vadd.f32 %v9024, %v9049
        %v9058 = vadd.f32 %v9025, %v9050
        %v9059 = vadd.f32 %v9026, %v9051
        %v9060 = vadd.f32 %v9027, %v9052
        %v9061 = vadd.f32 %v9028, %v9053
        %v9062 = vadd.f32 %v9029, %v9054
        %v9063 = vadd.f32 %v9030, %v9055
        %v9064 = vadd.f32 %v9031, %v9056
        %s9065 = scalar_lea.vmem [#allocation2], 144
        %v9066 = vld [vmem:[%s9065 + $0x1] sm:$0xff]
        %v9067 = vld [vmem:[%s9065 + $0x41] sm:$0xff]
        %v9068 = vld [vmem:[%s9065 + $0x81] sm:$0xff]
        %v9069 = vld [vmem:[%s9065 + $0xc1] sm:$0xff]
        %v9070 = vld [vmem:[%s9065 + $0x101] sm:$0xff]
        %v9071 = vld [vmem:[%s9065 + $0x141] sm:$0xff]
        %v9072 = vld [vmem:[%s9065 + $0x181] sm:$0xff]
        %v9073 = vld [vmem:[%s9065 + $0x1c1] sm:$0xff]
        %s9074 = scalar_lea.vmem %s7, 7
        %v9075 = vld [vmem:[%s9074] sm:$0x1]
        %v9077 = vlaneseq
        %v9078 = vshrl.u32 %v9077, 7
        %v9079 = vsub.s32 0, %v9078
        %v9080 = vrot.slane %v9075, %v9079
        %v9082 = vmul.f32 %v9066, %v9080
        %v9083 = vmul.f32 %v9067, %v9080
        %v9084 = vmul.f32 %v9068, %v9080
        %v9085 = vmul.f32 %v9069, %v9080
        %v9086 = vmul.f32 %v9070, %v9080
        %v9087 = vmul.f32 %v9071, %v9080
        %v9088 = vmul.f32 %v9072, %v9080
        %v9089 = vmul.f32 %v9073, %v9080
        %v9090 = vadd.f32 %v9057, %v9082
        %v9091 = vadd.f32 %v9058, %v9083
        %v9092 = vadd.f32 %v9059, %v9084
        %v9093 = vadd.f32 %v9060, %v9085
        %v9094 = vadd.f32 %v9061, %v9086
        %v9095 = vadd.f32 %v9062, %v9087
        %v9096 = vadd.f32 %v9063, %v9088
        %v9097 = vadd.f32 %v9064, %v9089
        %v9098 = vld [vmem:[%s9032 + $0x2] sm:$0xff]
        %v9099 = vld [vmem:[%s9032 + $0x42] sm:$0xff]
        %v9100 = vld [vmem:[%s9032 + $0x82] sm:$0xff]
        %v9101 = vld [vmem:[%s9032 + $0xc2] sm:$0xff]
        %v9102 = vld [vmem:[%s9032 + $0x102] sm:$0xff]
        %v9103 = vld [vmem:[%s9032 + $0x142] sm:$0xff]
        %v9104 = vld [vmem:[%s9032 + $0x182] sm:$0xff]
        %v9105 = vld [vmem:[%s9032 + $0x1c2] sm:$0xff]
        %s9106 = scalar_lea.vmem %s7, 8
        %v9107 = vld [vmem:[%s9106] sm:$0x1]
        %v9109 = vlaneseq
        %v9110 = vshrl.u32 %v9109, 7
        %v9111 = vsub.s32 0, %v9110
        %v9112 = vrot.slane %v9107, %v9111
        %v9114 = vmul.f32 %v9098, %v9112
        %v9115 = vmul.f32 %v9099, %v9112
        %v9116 = vmul.f32 %v9100, %v9112
        %v9117 = vmul.f32 %v9101, %v9112
        %v9118 = vmul.f32 %v9102, %v9112
        %v9119 = vmul.f32 %v9103, %v9112
        %v9120 = vmul.f32 %v9104, %v9112
        %v9121 = vmul.f32 %v9105, %v9112
        %v9122 = vadd.f32 %v9090, %v9114
        %v9123 = vadd.f32 %v9091, %v9115
        %v9124 = vadd.f32 %v9092, %v9116
        %v9125 = vadd.f32 %v9093, %v9117
        %v9126 = vadd.f32 %v9094, %v9118
        %v9127 = vadd.f32 %v9095, %v9119
        %v9128 = vadd.f32 %v9096, %v9120
        %v9129 = vadd.f32 %v9097, %v9121
        %v9130 = vld [vmem:[%s8] sm:$0x1]
        %v9132 = vlaneseq
        %v9133 = vshrl.u32 %v9132, 7
        %v9134 = vsub.s32 0, %v9133
        %v9135 = vrot.slane %v9130, %v9134
        %v9137 = vadd.f32 %v9122, %v9135
        %v9138 = vadd.f32 %v9123, %v9135
        %v9139 = vadd.f32 %v9124, %v9135
        %v9140 = vadd.f32 %v9125, %v9135
        %v9141 = vadd.f32 %v9126, %v9135
        %v9142 = vadd.f32 %v9127, %v9135
        %v9143 = vadd.f32 %v9128, %v9135
        %v9144 = vadd.f32 %v9129, %v9135
        %v9145 = vsub.f32 0.0, %v9137
        %v9146 = vsub.f32 0.0, %v9138
        %v9147 = vsub.f32 0.0, %v9139
        %v9148 = vsub.f32 0.0, %v9140
        %v9149 = vsub.f32 0.0, %v9141
        %v9150 = vsub.f32 0.0, %v9142
        %v9151 = vsub.f32 0.0, %v9143
        %v9152 = vsub.f32 0.0, %v9144
        %v9153 = vmul.f32 %v9145, 1.442695
        %v9154 = vpow.pop %v9153
        %v9155 = vmul.f32 %v9146, 1.442695
        %v9156 = vpow.pop %v9155
        %v9157 = vmul.f32 %v9147, 1.442695
        %v9158 = vpow.pop %v9157
        %v9159 = vmul.f32 %v9148, 1.442695
        %v9160 = vpow.pop %v9159
        %v9161 = vmul.f32 %v9149, 1.442695
        %v9162 = vpow.pop %v9161
        %v9163 = vmul.f32 %v9150, 1.442695
        %v9164 = vpow.pop %v9163
        %v9165 = vmul.f32 %v9151, 1.442695
        %v9166 = vpow.pop %v9165
        %v9167 = vmul.f32 %v9152, 1.442695
        %v9168 = vpow.pop %v9167
        %v9169 = vadd.f32 %v9154, 1.0
        %v9170 = vadd.f32 %v9156, 1.0
        %v9171 = vadd.f32 %v9158, 1.0
        %v9172 = vadd.f32 %v9160, 1.0
        %v9173 = vadd.f32 %v9162, 1.0
        %v9174 = vadd.f32 %v9164, 1.0
        %v9175 = vadd.f32 %v9166, 1.0
        %v9176 = vadd.f32 %v9168, 1.0
        %v9177 = vrcp.pop %v9169
        %v9178 = vrcp.pop %v9170
        %v9179 = vrcp.pop %v9171
        %v9180 = vrcp.pop %v9172
        %v9181 = vrcp.pop %v9173
        %v9182 = vrcp.pop %v9174
        %v9183 = vrcp.pop %v9175
        %v9184 = vrcp.pop %v9176
        %v9185 = vmul.f32 %v9137, %v9177
        %v9186 = vmul.f32 %v9138, %v9178
        %v9187 = vmul.f32 %v9139, %v9179
        %v9188 = vmul.f32 %v9140, %v9180
        %v9189 = vmul.f32 %v9141, %v9181
        %v9190 = vmul.f32 %v9142, %v9182
        %v9191 = vmul.f32 %v9143, %v9183
        %v9192 = vmul.f32 %v9144, %v9184
        %v9193 = vld [vmem:[#allocation7] sm:$0xff]
        %v9194 = vld [vmem:[#allocation7 + $0x8] sm:$0xff]
        %v9195 = vld [vmem:[#allocation7 + $0x10] sm:$0xff]
        %v9196 = vld [vmem:[#allocation7 + $0x18] sm:$0xff]
        %v9197 = vld [vmem:[#allocation7 + $0x20] sm:$0xff]
        %v9198 = vld [vmem:[#allocation7 + $0x28] sm:$0xff]
        %v9199 = vld [vmem:[#allocation7 + $0x30] sm:$0xff]
        %v9200 = vld [vmem:[#allocation7 + $0x38] sm:$0xff]
        %v9201 = vld [vmem:[#allocation7 + $0x40] sm:$0xff]
        %v9202 = vld [vmem:[#allocation7 + $0x48] sm:$0xff]
        %v9203 = vld [vmem:[#allocation7 + $0x50] sm:$0xff]
        %v9204 = vld [vmem:[#allocation7 + $0x58] sm:$0xff]
        %v9205 = vld [vmem:[#allocation7 + $0x60] sm:$0xff]
        %v9206 = vld [vmem:[#allocation7 + $0x68] sm:$0xff]
        %v9207 = vld [vmem:[#allocation7 + $0x70] sm:$0xff]
        %v9208 = vld [vmem:[#allocation7 + $0x78] sm:$0xff]
        %v9209 = vld [vmem:[%s10] sm:$0x1]
        %v9211 = vlaneseq
        %v9212 = vshrl.u32 %v9211, 7
        %v9213 = vsub.s32 0, %v9212
        %v9214 = vrot.slane %v9209, %v9213
        %9216 = vmatprep.subr.mxu0 0.0
        %9217 = vmatpush1.msra.mxu0 %v9208
        %9218 = vmatprep.subr.mxu0 0.0
        %9219 = vmatpush1.msra.mxu0 %v9207
        %9220 = vmatprep.subr.mxu0 0.0
        %9221 = vmatpush1.msra.mxu0 %v9206
        %9222 = vmatprep.subr.mxu0 0.0
        %9223 = vmatpush1.msra.mxu0 %v9205
        %9224 = vmatprep.subr.mxu0 0.0
        %9225 = vmatpush1.msra.mxu0 %v9204
        %9226 = vmatprep.subr.mxu0 0.0
        %9227 = vmatpush1.msra.mxu0 %v9203
        %9228 = vmatprep.subr.mxu0 0.0
        %9229 = vmatpush1.msra.mxu0 %v9202
        %9230 = vmatprep.subr.mxu0 0.0
        %9231 = vmatpush1.msra.mxu0 %v9201
        %9232 = vmatprep.subr.mxu0 0.0
        %9233 = vmatpush1.msra.mxu0 %v9200
        %9234 = vmatprep.subr.mxu0 0.0
        %9235 = vmatpush1.msra.mxu0 %v9199
        %9236 = vmatprep.subr.mxu0 0.0
        %9237 = vmatpush1.msra.mxu0 %v9198
        %9238 = vmatprep.subr.mxu0 0.0
        %9239 = vmatpush1.msra.mxu0 %v9197
        %9240 = vmatprep.subr.mxu0 0.0
        %9241 = vmatpush1.msra.mxu0 %v9196
        %9242 = vmatprep.subr.mxu0 0.0
        %9243 = vmatpush1.msra.mxu0 %v9195
        %9244 = vmatprep.subr.mxu0 0.0
        %9245 = vmatpush1.msra.mxu0 %v9194
        %9246 = vmatprep.subr.mxu0 0.0
        %9247 = vmatpush1.msra.mxu0 %v9193
        %9248 = vmatprep.subr.mxu0 0.0
        %9249 = vmatpush2.msra.mxu0 0.0
        %9250 = vmatprep.subr.mxu0 0.0
        %9251 = vmatpush2.msra.mxu0 0.0
        %9252 = vmatprep.subr.mxu0 0.0
        %9253 = vmatpush2.msra.mxu0 0.0
        %9254 = vmatprep.subr.mxu0 0.0
        %9255 = vmatpush2.msra.mxu0 0.0
        %9256 = vmatprep.subr.mxu0 0.0
        %9257 = vmatpush2.msra.mxu0 0.0
        %9258 = vmatprep.subr.mxu0 0.0
        %9259 = vmatpush2.msra.mxu0 0.0
        %9260 = vmatprep.subr.mxu0 0.0
        %9261 = vmatpush2.msra.mxu0 0.0
        %9262 = vmatprep.subr.mxu0 0.0
        %9263 = vmatpush2.msra.mxu0 0.0
        %9264 = vmatprep.subr.mxu0 0.0
        %9265 = vmatpush2.msra.mxu0 0.0
        %9266 = vmatprep.subr.mxu0 0.0
        %9267 = vmatpush2.msra.mxu0 0.0
        %9268 = vmatprep.subr.mxu0 0.0
        %9269 = vmatpush2.msra.mxu0 0.0
        %9270 = vmatprep.subr.mxu0 0.0
        %9271 = vmatpush2.msra.mxu0 0.0
        %9272 = vmatprep.subr.mxu0 0.0
        %9273 = vmatpush2.msra.mxu0 0.0
        %9274 = vmatprep.subr.mxu0 0.0
        %9275 = vmatpush2.msra.mxu0 0.0
        %9276 = vmatprep.subr.mxu0 0.0
        %9277 = vmatpush2.msra.mxu0 0.0
        %9278 = vmatprep.subr.mxu0 0.0
        %9279 = vmatpush2.msra.mxu0 0.0
        %9280 = vmatprep.mubr.f32.mxu0 0.0
        %9281 = vmatmul.mubr.f32.gmra.mxu0 %v9185
        %v9282 = vpop.f32.mrf.mxu0
        %v9283 = vadd.f32 %v9214, %v9282
        %v9284 = vpop.f32.mrf.mxu0
        %9285 = vmatprep.mubr.f32.mxu0 0.0
        %9286 = vmatmul.mubr.f32.gmra.mxu0 %v9186
        %v9287 = vpop.f32.mrf.mxu0
        %v9288 = vadd.f32 %v9214, %v9287
        %v9289 = vpop.f32.mrf.mxu0
        %9290 = vmatprep.mubr.f32.mxu0 0.0
        %9291 = vmatmul.mubr.f32.gmra.mxu0 %v9187
        %v9292 = vpop.f32.mrf.mxu0
        %v9293 = vadd.f32 %v9214, %v9292
        %v9294 = vpop.f32.mrf.mxu0
        %9295 = vmatprep.mubr.f32.mxu0 0.0
        %9296 = vmatmul.mubr.f32.gmra.mxu0 %v9188
        %v9297 = vpop.f32.mrf.mxu0
        %v9298 = vadd.f32 %v9214, %v9297
        %v9299 = vpop.f32.mrf.mxu0
        %9300 = vmatprep.mubr.f32.mxu0 0.0
        %9301 = vmatmul.mubr.f32.gmra.mxu0 %v9189
        %v9302 = vpop.f32.mrf.mxu0
        %v9303 = vadd.f32 %v9214, %v9302
        %v9304 = vpop.f32.mrf.mxu0
        %9305 = vmatprep.mubr.f32.mxu0 0.0
        %9306 = vmatmul.mubr.f32.gmra.mxu0 %v9190
        %v9307 = vpop.f32.mrf.mxu0
        %v9308 = vadd.f32 %v9214, %v9307
        %v9309 = vpop.f32.mrf.mxu0
        %9310 = vmatprep.mubr.f32.mxu0 0.0
        %9311 = vmatmul.mubr.f32.gmra.mxu0 %v9191
        %v9312 = vpop.f32.mrf.mxu0
        %v9313 = vadd.f32 %v9214, %v9312
        %v9314 = vpop.f32.mrf.mxu0
        %9315 = vmatprep.mubr.f32.mxu0 0.0
        %9316 = vmatmul.mubr.f32.gmra.mxu0 %v9192
        %v9317 = vpop.f32.mrf.mxu0
        %v9318 = vadd.f32 %v9214, %v9317
        %v9319 = vpop.f32.mrf.mxu0
        %9320 = vdwg.mxu0
        %v9321 = vmax.f32 %v9283, 0.0
        %v9322 = vmax.f32 %v9288, 0.0
        %v9323 = vmax.f32 %v9293, 0.0
        %v9324 = vmax.f32 %v9298, 0.0
        %v9325 = vmax.f32 %v9303, 0.0
        %v9326 = vmax.f32 %v9308, 0.0
        %v9327 = vmax.f32 %v9313, 0.0
        %v9328 = vmax.f32 %v9318, 0.0
        %v9329 = vadd.f32 %v8831, %v9321
        %v9330 = vadd.f32 %v8832, %v9322
        %v9331 = vadd.f32 %v8833, %v9323
        %v9332 = vadd.f32 %v8834, %v9324
        %v9333 = vadd.f32 %v8835, %v9325
        %v9334 = vadd.f32 %v8836, %v9326
        %v9335 = vadd.f32 %v8837, %v9327
        %v9336 = vadd.f32 %v8838, %v9328
        %v9337 = vmax.f32 %v9329, 0.0
        %v9338 = vmax.f32 %v9330, 0.0
        %v9339 = vmax.f32 %v9331, 0.0
        %v9340 = vmax.f32 %v9332, 0.0
        %v9341 = vmax.f32 %v9333, 0.0
        %v9342 = vmax.f32 %v9334, 0.0
        %v9343 = vmax.f32 %v9335, 0.0
        %v9344 = vmax.f32 %v9336, 0.0
        %9345 = vst [vmem:[%s382] sm:$0xff] %v9337
        %9346 = vst [vmem:[%s382 + $0x8] sm:$0xff] %v9338
        %9347 = vst [vmem:[%s382 + $0x10] sm:$0xff] %v9339
        %9348 = vst [vmem:[%s382 + $0x18] sm:$0xff] %v9340
        %9349 = vst [vmem:[%s382 + $0x20] sm:$0xff] %v9341
        %9350 = vst [vmem:[%s382 + $0x28] sm:$0xff] %v9342
        %9351 = vst [vmem:[%s382 + $0x30] sm:$0xff] %v9343
        %9352 = vst [vmem:[%s382 + $0x38] sm:$0xff] %v9344
        %s9353 = sand.u32 %s259, 1
        %s9354 = scalar_lea.sflag [#allocation6], %s9353
        %s9355 = sand.u32 %s259, 1
        %s9356 = smul.addr %s9355, 64
        %s9357 = scalar_lea.vmem [#allocation9], %s9356
        // Predicated region
        $region106: #{tpu_custom_call.1} parent=59 // pred_check
          %p9358 = pneg %p269
        $region107: #{tpu_custom_call.1} parent=59 // pred_check_branch
          %9360 = sbr.rel (%p9358) target = $region109
        $region108: #{tpu_custom_call.1} parent=59 // pred_region
          %s9361 = smul.u32 8, %s32
          %s9363 = ssub.s32 1024, 1024
          %9364 = vsyncadd %s9354, %s9363
          %s9365 = smul.addr %s31, 8
          %s9366 = sadd.s32 %s9361, %s9365
          %s9367 = smul.addr %s9366, 128
          %s9368 = scalar_lea.hbm %s11, %s9367
          %s9369 = sshll.u32 %s9357, 4
          %s9370 = int_to_ptr.vmem [resolvable:$true] %s9369
          %9375 = dma.vmem_to_hbm [thread:$0]  %s9370, 1024, %s9368, %s9354, 128, 128, 8
        $region109: #{tpu_custom_call.1} parent=59 // pred_fallthru
          _
      $region60: #{tpu_custom_call.1} parent=5 // pred_fallthru
        _
      %p9376 = scmp.le.s32.totalorder 2, %s22
      // Predicated region
      $region110: #{tpu_custom_call.1} parent=5 // pred_check
        %p9377 = pneg %p9376
      $region111: #{tpu_custom_call.1} parent=5 // pred_check_branch
        %9379 = sbr.rel (%p9377) target = $region113
      $region112: #{tpu_custom_call.1} parent=5 // pred_region
        %s9380 = ssub.s32 %s22, 2
        // Predicated region
        $region114: #{tpu_custom_call.1} parent=112 // pred_check
          %p9381 = pneg %p275
        $region115: #{tpu_custom_call.1} parent=112 // pred_check_branch
          %9383 = sbr.rel (%p9381) target = $region117
        $region116: #{tpu_custom_call.1} parent=112 // pred_region
          %s9384 = sand.u32 %s260, 1
          %s9385 = scalar_lea.sflag [#allocation6], %s9384
          %s9386 = sand.u32 %s260, 1
          %s9387 = smul.addr %s9386, 64
          %s9388 = scalar_lea.vmem [#allocation9], %s9387
          %9389 = dma.done %s9385, 1024
        $region117: #{tpu_custom_call.1} parent=112 // pred_fallthru
          _
      $region113: #{tpu_custom_call.1} parent=5 // pred_fallthru
        _
    $region6: #{tpu_custom_call.1} parent=1 // loop_footer
      %s26 = sadd.s32 1, %s22
    $region7: #{tpu_custom_call.1} parent=1 // loop_footer_branch
      %21 = sbr.rel target = $region3
    $region8: #{tpu_custom_call.1} parent=1 // loop_exit
      _
    %9390 = vsyncpa [#allocation5], 1
    %s9391 = scalar_lea.sflag [#allocation5], 1
    %9392 = vsyncpa %s9391, 1
    %9393 = vsyncpa [#allocation8], 1
    %9394 = vsyncpa [#allocation6], 1
    %s9395 = scalar_lea.sflag [#allocation6], 1
    %9396 = vsyncpa %s9395, 1
  %9397 = vsyncmov [#allocation3]
  %s9398 = vpop.sfrf %9397
  %p9399 = scmp.eq.s32.totalorder %s9398, 0
  %p9400 = pneg %p9399
  %9402 = shalt.err (%p9400)

</llo_original>
